<compile_context>
chip_gen: v7x
topology: tpu7x:2x2x1
jax: 0.10.0
libtpu: 0.0.40
codegen_flags: <defaults>
</compile_context>

<pallas_src>
import numpy as np
import jax
import jax.numpy as jnp
from jax.experimental import pallas as pl
from jax.experimental.pallas import tpu as pltpu

N_OUT_CH = 20
KSIZE = 5
K2 = KSIZE * KSIZE                   # 25 conv taps
IMG = 28
CONV_OUT = IMG - KSIZE + 1           # 24
POOL_OUT = CONV_OUT // 2             # 12
POOLED = POOL_OUT * POOL_OUT         # 144 pooled positions
FC_IN = POOLED * N_OUT_CH            # 2880
FC_OUT = 10
BLOCK_B = 128                        # images per grid step (= lane width)

ROW_BLK = N_OUT_CH * POOL_OUT        # 240 rows per pool-candidate block (c*12+px)
W_ROWS = 4 * ROW_BLK                 # 960 = (2x2 pool candidates) x 240
K_COLS = (2 + KSIZE - 1) * IMG       # 168 = 6 image rows x 28 cols feed one pool row

# ---- static index maps for the host-built Toeplitz conv weight (numpy, trace-time)
_rows = np.arange(W_ROWS)
_g = (_rows // ROW_BLK) // 2         # conv-row offset within the pool window (dy)
_dx = (_rows // ROW_BLK) % 2         # conv-col offset within the pool window (dx)
_c = (_rows % ROW_BLK) // POOL_OUT   # output channel
_px = _rows % POOL_OUT               # pooled x position
_ks = np.arange(K_COLS)
_rp = _ks // IMG                     # image row within the 6-row slab
_col = _ks % IMG                     # image column
_ky = _rp[None, :] - _g[:, None]                       # (960, 168)
_kx = _col[None, :] - (2 * _px + _dx)[:, None]         # (960, 168)
_VALID = (_ky >= 0) & (_ky < KSIZE) & (_kx >= 0) & (_kx < KSIZE)
_C_MAP = np.tile(_c[:, None], (1, K_COLS)).astype(np.int32)
_T_MAP = np.where(_VALID,
                  np.clip(_ky, 0, KSIZE - 1) * KSIZE + np.clip(_kx, 0, KSIZE - 1),
                  0).astype(np.int32)


def _cnn_fused_kernel(img_ref, w_ref, bvec_ref, fcw_ref, fcb_ref, out_ref):
    """Fused conv(5x5)+bias+ReLU+maxpool(2x2)+FC for one 128-image tile.

    img_ref : (784, B)        raw images, pixel-major rows, batch on lanes
    w_ref   : (960, 168)      Toeplitz conv weight; rows = (pool-cand, c, px)
    bvec_ref: (240, 1)        conv bias expanded to (c, px) rows
    fcw_ref : (12, 10, 240)   fc weight, permuted to (pool-row, out, (c, px))
    fcb_ref : (10, 1)         fc bias
    out_ref : (10, B)         logits, transposed (batch on lanes)
    """
    w = w_ref[...]                                        # (960, 168)
    bvec = bvec_ref[...]                                  # (240, 1)
    acc = jnp.zeros(out_ref.shape, jnp.float32)           # (10, B)

    for py in range(POOL_OUT):                            # 12 static iterations
        # 6 image rows (2*py .. 2*py+5) feed pool row py; start is 8-aligned (56*py).
        x_slab = img_ref[pl.ds(py * 2 * IMG, K_COLS), :]  # (168, B)
        conv = jnp.dot(w, x_slab,
                       preferred_element_type=jnp.float32)            # (960, B)
        # 2x2 max-pool: the four candidates live in aligned 240-row blocks.
        pooled = jnp.maximum(
            jnp.maximum(conv[0:ROW_BLK], conv[ROW_BLK:2 * ROW_BLK]),
            jnp.maximum(conv[2 * ROW_BLK:3 * ROW_BLK], conv[3 * ROW_BLK:]))
        # bias + ReLU hoisted after the pool max (exact: relu(x+b) monotone in x)
        act = jnp.maximum(pooled + bvec, 0.0)                          # (240, B)
        # FC partial for this pool row; consumes channel-major act directly.
        acc = acc + jnp.dot(fcw_ref[py], act,
                            preferred_element_type=jnp.float32)        # (10, B)

    out_ref[...] = (acc + fcb_ref[...]).astype(out_ref.dtype)


@jax.jit
def cnn_forward(x, conv_w, conv_b, fc_w, fc_b):
    n = x.shape[0]
    n_pad = pl.cdiv(n, BLOCK_B) * BLOCK_B

    x2 = x.reshape(n, IMG * IMG).astype(jnp.float32)
    if n_pad != n:
        x2 = jnp.pad(x2, ((0, n_pad - n), (0, 0)))
    img_t = x2.T                                          # (784, n_pad)

    # Toeplitz conv weight: W[row, k] = conv_w[c, ky, kx] on the valid taps, 0 else.
    cw2d = conv_w.reshape(N_OUT_CH, K2).astype(jnp.float32)
    w = jnp.where(_VALID, cw2d[_C_MAP, _T_MAP], 0.0)      # (960, 168)

    bvec = jnp.repeat(conv_b.astype(jnp.float32), POOL_OUT).reshape(ROW_BLK, 1)

    # fc weight permuted to (pool-row, out, c*12+px) so it matches the pooled rows.
    fcw = (fc_w.astype(jnp.float32)
           .reshape(FC_OUT, N_OUT_CH, POOL_OUT, POOL_OUT)
           .transpose(2, 0, 1, 3)
           .reshape(POOL_OUT, FC_OUT, ROW_BLK))           # (12, 10, 240)
    fcb = fc_b.astype(jnp.float32).reshape(FC_OUT, 1)

    out_t = pl.pallas_call(
        _cnn_fused_kernel,
        out_shape=jax.ShapeDtypeStruct((FC_OUT, n_pad), jnp.float32),
        grid=(n_pad // BLOCK_B,),
        in_specs=[
            pl.BlockSpec((IMG * IMG, BLOCK_B), lambda i: (0, i)),
            pl.BlockSpec((W_ROWS, K_COLS), lambda i: (0, 0)),
            pl.BlockSpec((ROW_BLK, 1), lambda i: (0, 0)),
            pl.BlockSpec((POOL_OUT, FC_OUT, ROW_BLK), lambda i: (0, 0, 0)),
            pl.BlockSpec((FC_OUT, 1), lambda i: (0, 0)),
        ],
        out_specs=pl.BlockSpec((FC_OUT, BLOCK_B), lambda i: (0, i)),
        compiler_params=pltpu.CompilerParams(dimension_semantics=("parallel",)),
    )(img_t, w, bvec, fcw, fcb)

    return out_t.T[:n]                                    # (n, 10)


def _reference(x, conv_w, conv_b, fc_w, fc_b):
    conv = jax.lax.conv_general_dilated(
        x, conv_w, window_strides=(1, 1), padding="VALID",
        dimension_numbers=("NCHW", "OIHW", "NCHW")) + conv_b.reshape(1, -1, 1, 1)
    relu = jnp.maximum(conv, 0.0)
    pool = jnp.max(relu.reshape(x.shape[0], N_OUT_CH, POOL_OUT, 2, POOL_OUT, 2),
                   axis=(3, 5))
    flat = pool.reshape(x.shape[0], -1)
    return flat @ fc_w.T + fc_b


if __name__ == "__main__":
    key = jax.random.PRNGKey(0)
    kx, kw, kb, kfw, kfb = jax.random.split(key, 5)

    # Spatial size must be 28 so that 12*12*20 matches the Linear layer.
    batch = 16
    x = jax.random.normal(kx, (batch, 1, IMG, IMG), dtype=jnp.float32)

    conv_w = 0.1 * jax.random.normal(kw, (N_OUT_CH, 1, KSIZE, KSIZE), dtype=jnp.float32)
    conv_b = 0.1 * jax.random.normal(kb, (N_OUT_CH,), dtype=jnp.float32)
    fc_w = 0.01 * jax.random.normal(kfw, (FC_OUT, FC_IN), dtype=jnp.float32)
    fc_b = 0.01 * jax.random.normal(kfb, (FC_OUT,), dtype=jnp.float32)

    out = jax.block_until_ready(cnn_forward(x, conv_w, conv_b, fc_w, fc_b))
    ref = jax.block_until_ready(_reference(x, conv_w, conv_b, fc_w, fc_b))

    assert out.shape == (batch, FC_OUT)
    assert jnp.allclose(out, ref, atol=5e-3, rtol=5e-3), "mismatch vs. JAX reference"

    print("KERNEL_OK")
</pallas_src>

<mosaic_0001>
module attributes {stable_mosaic.version = 11 : i64} {
  func.func @_cnn_fused_kernel(%arg0: i32, %arg1: memref<784x128xf32, #tpu.memory_space<vmem>>, %arg2: memref<960x168xf32, #tpu.memory_space<vmem>>, %arg3: memref<240x1xf32, #tpu.memory_space<vmem>>, %arg4: memref<12x10x240xf32, #tpu.memory_space<vmem>>, %arg5: memref<10x1xf32, #tpu.memory_space<vmem>>, %arg6: memref<10x128xf32, #tpu.memory_space<vmem>>) attributes {dimension_semantics = [#tpu.dimension_semantics<parallel>], iteration_bounds = array<i64: 1>, scalar_prefetch = 0 : i64, scratch_operands = 0 : i64, tpu.core_type = #tpu.core_type<tc>, window_params = [{transform_indices = @transform_0, window_bounds = array<i64: 784, 128>}, {pipeline_mode = #tpu.pipeline_mode<synchronous>, transform_indices = @transform_1, window_bounds = array<i64: 960, 168>}, {pipeline_mode = #tpu.pipeline_mode<synchronous>, transform_indices = @transform_2, window_bounds = array<i64: 240, 1>}, {pipeline_mode = #tpu.pipeline_mode<synchronous>, transform_indices = @transform_3, window_bounds = array<i64: 12, 10, 240>}, {pipeline_mode = #tpu.pipeline_mode<synchronous>, transform_indices = @transform_4, window_bounds = array<i64: 10, 1>}, {transform_indices = @transform_5, window_bounds = array<i64: 10, 128>}]} {
    %c0 = arith.constant 0 : index
    %c0_0 = arith.constant 0 : index
    %0 = vector.load %arg2[%c0, %c0_0] : memref<960x168xf32, #tpu.memory_space<vmem>>, vector<960x168xf32>
    %c0_1 = arith.constant 0 : index
    %c0_2 = arith.constant 0 : index
    %1 = vector.load %arg3[%c0_1, %c0_2] : memref<240x1xf32, #tpu.memory_space<vmem>>, vector<240x1xf32>
    %cst = arith.constant 0.000000e+00 : f32
    %2 = vector.broadcast %cst : f32 to vector<10x128xf32>
    %c0_3 = arith.constant 0 : index
    %c0_4 = arith.constant 0 : index
    %3 = vector.load %arg1[%c0_3, %c0_4] : memref<784x128xf32, #tpu.memory_space<vmem>>, vector<168x128xf32>
    %cst_5 = arith.constant dense<0.000000e+00> : vector<960x128xf32>
    %4 = tpu.matmul %0, %3, %cst_5 {dimension_numbers = #tpu.dot_dimension_numbers<[1], [0], [0], [1], [0, 0, 1, 1], [], []>} : vector<960x168xf32>, vector<168x128xf32>, vector<960x128xf32> -> vector<960x128xf32>
    %5 = vector.extract_strided_slice %4 {offsets = [0, 0], sizes = [240, 128], strides = [1, 1]} : vector<960x128xf32> to vector<240x128xf32>
    %6 = vector.extract_strided_slice %4 {offsets = [240, 0], sizes = [240, 128], strides = [1, 1]} : vector<960x128xf32> to vector<240x128xf32>
    %7 = arith.maximumf %5, %6 : vector<240x128xf32>
    %8 = vector.extract_strided_slice %4 {offsets = [480, 0], sizes = [240, 128], strides = [1, 1]} : vector<960x128xf32> to vector<240x128xf32>
    %9 = vector.extract_strided_slice %4 {offsets = [720, 0], sizes = [240, 128], strides = [1, 1]} : vector<960x128xf32> to vector<240x128xf32>
    %10 = arith.maximumf %8, %9 : vector<240x128xf32>
    %11 = arith.maximumf %7, %10 : vector<240x128xf32>
    %12 = vector.broadcast %1 : vector<240x1xf32> to vector<240x128xf32>
    %13 = arith.addf %11, %12 : vector<240x128xf32>
    %cst_6 = arith.constant 0.000000e+00 : f32
    %14 = vector.broadcast %cst_6 : f32 to vector<240x128xf32>
    %15 = arith.maximumf %13, %14 : vector<240x128xf32>
    %c0_7 = arith.constant 0 : index
    %c0_8 = arith.constant 0 : index
    %c0_9 = arith.constant 0 : index
    %16 = vector.load %arg4[%c0_7, %c0_8, %c0_9] : memref<12x10x240xf32, #tpu.memory_space<vmem>>, vector<1x10x240xf32>
    %17 = vector.shape_cast %16 : vector<1x10x240xf32> to vector<10x240xf32>
    %cst_10 = arith.constant dense<0.000000e+00> : vector<10x128xf32>
    %18 = tpu.matmul %17, %15, %cst_10 {dimension_numbers = #tpu.dot_dimension_numbers<[1], [0], [0], [1], [0, 0, 1, 1], [], []>} : vector<10x240xf32>, vector<240x128xf32>, vector<10x128xf32> -> vector<10x128xf32>
    %19 = arith.addf %2, %18 : vector<10x128xf32>
    %c56 = arith.constant 56 : index
    %c0_11 = arith.constant 0 : index
    %20 = vector.load %arg1[%c56, %c0_11] : memref<784x128xf32, #tpu.memory_space<vmem>>, vector<168x128xf32>
    %cst_12 = arith.constant dense<0.000000e+00> : vector<960x128xf32>
    %21 = tpu.matmul %0, %20, %cst_12 {dimension_numbers = #tpu.dot_dimension_numbers<[1], [0], [0], [1], [0, 0, 1, 1], [], []>} : vector<960x168xf32>, vector<168x128xf32>, vector<960x128xf32> -> vector<960x128xf32>
    %22 = vector.extract_strided_slice %21 {offsets = [0, 0], sizes = [240, 128], strides = [1, 1]} : vector<960x128xf32> to vector<240x128xf32>
    %23 = vector.extract_strided_slice %21 {offsets = [240, 0], sizes = [240, 128], strides = [1, 1]} : vector<960x128xf32> to vector<240x128xf32>
    %24 = arith.maximumf %22, %23 : vector<240x128xf32>
    %25 = vector.extract_strided_slice %21 {offsets = [480, 0], sizes = [240, 128], strides = [1, 1]} : vector<960x128xf32> to vector<240x128xf32>
    %26 = vector.extract_strided_slice %21 {offsets = [720, 0], sizes = [240, 128], strides = [1, 1]} : vector<960x128xf32> to vector<240x128xf32>
    %27 = arith.maximumf %25, %26 : vector<240x128xf32>
    %28 = arith.maximumf %24, %27 : vector<240x128xf32>
    %29 = vector.broadcast %1 : vector<240x1xf32> to vector<240x128xf32>
    %30 = arith.addf %28, %29 : vector<240x128xf32>
    %cst_13 = arith.constant 0.000000e+00 : f32
    %31 = vector.broadcast %cst_13 : f32 to vector<240x128xf32>
    %32 = arith.maximumf %30, %31 : vector<240x128xf32>
    %c1 = arith.constant 1 : index
    %c0_14 = arith.constant 0 : index
    %c0_15 = arith.constant 0 : index
    %33 = vector.load %arg4[%c1, %c0_14, %c0_15] : memref<12x10x240xf32, #tpu.memory_space<vmem>>, vector<1x10x240xf32>
    %34 = vector.shape_cast %33 : vector<1x10x240xf32> to vector<10x240xf32>
    %cst_16 = arith.constant dense<0.000000e+00> : vector<10x128xf32>
    %35 = tpu.matmul %34, %32, %cst_16 {dimension_numbers = #tpu.dot_dimension_numbers<[1], [0], [0], [1], [0, 0, 1, 1], [], []>} : vector<10x240xf32>, vector<240x128xf32>, vector<10x128xf32> -> vector<10x128xf32>
    %36 = arith.addf %19, %35 : vector<10x128xf32>
    %c112 = arith.constant 112 : index
    %c0_17 = arith.constant 0 : index
    %37 = vector.load %arg1[%c112, %c0_17] : memref<784x128xf32, #tpu.memory_space<vmem>>, vector<168x128xf32>
    %cst_18 = arith.constant dense<0.000000e+00> : vector<960x128xf32>
    %38 = tpu.matmul %0, %37, %cst_18 {dimension_numbers = #tpu.dot_dimension_numbers<[1], [0], [0], [1], [0, 0, 1, 1], [], []>} : vector<960x168xf32>, vector<168x128xf32>, vector<960x128xf32> -> vector<960x128xf32>
    %39 = vector.extract_strided_slice %38 {offsets = [0, 0], sizes = [240, 128], strides = [1, 1]} : vector<960x128xf32> to vector<240x128xf32>
    %40 = vector.extract_strided_slice %38 {offsets = [240, 0], sizes = [240, 128], strides = [1, 1]} : vector<960x128xf32> to vector<240x128xf32>
    %41 = arith.maximumf %39, %40 : vector<240x128xf32>
    %42 = vector.extract_strided_slice %38 {offsets = [480, 0], sizes = [240, 128], strides = [1, 1]} : vector<960x128xf32> to vector<240x128xf32>
    %43 = vector.extract_strided_slice %38 {offsets = [720, 0], sizes = [240, 128], strides = [1, 1]} : vector<960x128xf32> to vector<240x128xf32>
    %44 = arith.maximumf %42, %43 : vector<240x128xf32>
    %45 = arith.maximumf %41, %44 : vector<240x128xf32>
    %46 = vector.broadcast %1 : vector<240x1xf32> to vector<240x128xf32>
    %47 = arith.addf %45, %46 : vector<240x128xf32>
    %cst_19 = arith.constant 0.000000e+00 : f32
    %48 = vector.broadcast %cst_19 : f32 to vector<240x128xf32>
    %49 = arith.maximumf %47, %48 : vector<240x128xf32>
    %c2 = arith.constant 2 : index
    %c0_20 = arith.constant 0 : index
    %c0_21 = arith.constant 0 : index
    %50 = vector.load %arg4[%c2, %c0_20, %c0_21] : memref<12x10x240xf32, #tpu.memory_space<vmem>>, vector<1x10x240xf32>
    %51 = vector.shape_cast %50 : vector<1x10x240xf32> to vector<10x240xf32>
    %cst_22 = arith.constant dense<0.000000e+00> : vector<10x128xf32>
    %52 = tpu.matmul %51, %49, %cst_22 {dimension_numbers = #tpu.dot_dimension_numbers<[1], [0], [0], [1], [0, 0, 1, 1], [], []>} : vector<10x240xf32>, vector<240x128xf32>, vector<10x128xf32> -> vector<10x128xf32>
    %53 = arith.addf %36, %52 : vector<10x128xf32>
    %c168 = arith.constant 168 : index
    %c0_23 = arith.constant 0 : index
    %54 = vector.load %arg1[%c168, %c0_23] : memref<784x128xf32, #tpu.memory_space<vmem>>, vector<168x128xf32>
    %cst_24 = arith.constant dense<0.000000e+00> : vector<960x128xf32>
    %55 = tpu.matmul %0, %54, %cst_24 {dimension_numbers = #tpu.dot_dimension_numbers<[1], [0], [0], [1], [0, 0, 1, 1], [], []>} : vector<960x168xf32>, vector<168x128xf32>, vector<960x128xf32> -> vector<960x128xf32>
    %56 = vector.extract_strided_slice %55 {offsets = [0, 0], sizes = [240, 128], strides = [1, 1]} : vector<960x128xf32> to vector<240x128xf32>
    %57 = vector.extract_strided_slice %55 {offsets = [240, 0], sizes = [240, 128], strides = [1, 1]} : vector<960x128xf32> to vector<240x128xf32>
    %58 = arith.maximumf %56, %57 : vector<240x128xf32>
    %59 = vector.extract_strided_slice %55 {offsets = [480, 0], sizes = [240, 128], strides = [1, 1]} : vector<960x128xf32> to vector<240x128xf32>
    %60 = vector.extract_strided_slice %55 {offsets = [720, 0], sizes = [240, 128], strides = [1, 1]} : vector<960x128xf32> to vector<240x128xf32>
    %61 = arith.maximumf %59, %60 : vector<240x128xf32>
    %62 = arith.maximumf %58, %61 : vector<240x128xf32>
    %63 = vector.broadcast %1 : vector<240x1xf32> to vector<240x128xf32>
    %64 = arith.addf %62, %63 : vector<240x128xf32>
    %cst_25 = arith.constant 0.000000e+00 : f32
    %65 = vector.broadcast %cst_25 : f32 to vector<240x128xf32>
    %66 = arith.maximumf %64, %65 : vector<240x128xf32>
    %c3 = arith.constant 3 : index
    %c0_26 = arith.constant 0 : index
    %c0_27 = arith.constant 0 : index
    %67 = vector.load %arg4[%c3, %c0_26, %c0_27] : memref<12x10x240xf32, #tpu.memory_space<vmem>>, vector<1x10x240xf32>
    %68 = vector.shape_cast %67 : vector<1x10x240xf32> to vector<10x240xf32>
    %cst_28 = arith.constant dense<0.000000e+00> : vector<10x128xf32>
    %69 = tpu.matmul %68, %66, %cst_28 {dimension_numbers = #tpu.dot_dimension_numbers<[1], [0], [0], [1], [0, 0, 1, 1], [], []>} : vector<10x240xf32>, vector<240x128xf32>, vector<10x128xf32> -> vector<10x128xf32>
    %70 = arith.addf %53, %69 : vector<10x128xf32>
    %c224 = arith.constant 224 : index
    %c0_29 = arith.constant 0 : index
    %71 = vector.load %arg1[%c224, %c0_29] : memref<784x128xf32, #tpu.memory_space<vmem>>, vector<168x128xf32>
    %cst_30 = arith.constant dense<0.000000e+00> : vector<960x128xf32>
    %72 = tpu.matmul %0, %71, %cst_30 {dimension_numbers = #tpu.dot_dimension_numbers<[1], [0], [0], [1], [0, 0, 1, 1], [], []>} : vector<960x168xf32>, vector<168x128xf32>, vector<960x128xf32> -> vector<960x128xf32>
    %73 = vector.extract_strided_slice %72 {offsets = [0, 0], sizes = [240, 128], strides = [1, 1]} : vector<960x128xf32> to vector<240x128xf32>
    %74 = vector.extract_strided_slice %72 {offsets = [240, 0], sizes = [240, 128], strides = [1, 1]} : vector<960x128xf32> to vector<240x128xf32>
    %75 = arith.maximumf %73, %74 : vector<240x128xf32>
    %76 = vector.extract_strided_slice %72 {offsets = [480, 0], sizes = [240, 128], strides = [1, 1]} : vector<960x128xf32> to vector<240x128xf32>
    %77 = vector.extract_strided_slice %72 {offsets = [720, 0], sizes = [240, 128], strides = [1, 1]} : vector<960x128xf32> to vector<240x128xf32>
    %78 = arith.maximumf %76, %77 : vector<240x128xf32>
    %79 = arith.maximumf %75, %78 : vector<240x128xf32>
    %80 = vector.broadcast %1 : vector<240x1xf32> to vector<240x128xf32>
    %81 = arith.addf %79, %80 : vector<240x128xf32>
    %cst_31 = arith.constant 0.000000e+00 : f32
    %82 = vector.broadcast %cst_31 : f32 to vector<240x128xf32>
    %83 = arith.maximumf %81, %82 : vector<240x128xf32>
    %c4 = arith.constant 4 : index
    %c0_32 = arith.constant 0 : index
    %c0_33 = arith.constant 0 : index
    %84 = vector.load %arg4[%c4, %c0_32, %c0_33] : memref<12x10x240xf32, #tpu.memory_space<vmem>>, vector<1x10x240xf32>
    %85 = vector.shape_cast %84 : vector<1x10x240xf32> to vector<10x240xf32>
    %cst_34 = arith.constant dense<0.000000e+00> : vector<10x128xf32>
    %86 = tpu.matmul %85, %83, %cst_34 {dimension_numbers = #tpu.dot_dimension_numbers<[1], [0], [0], [1], [0, 0, 1, 1], [], []>} : vector<10x240xf32>, vector<240x128xf32>, vector<10x128xf32> -> vector<10x128xf32>
    %87 = arith.addf %70, %86 : vector<10x128xf32>
    %c280 = arith.constant 280 : index
    %c0_35 = arith.constant 0 : index
    %88 = vector.load %arg1[%c280, %c0_35] : memref<784x128xf32, #tpu.memory_space<vmem>>, vector<168x128xf32>
    %cst_36 = arith.constant dense<0.000000e+00> : vector<960x128xf32>
    %89 = tpu.matmul %0, %88, %cst_36 {dimension_numbers = #tpu.dot_dimension_numbers<[1], [0], [0], [1], [0, 0, 1, 1], [], []>} : vector<960x168xf32>, vector<168x128xf32>, vector<960x128xf32> -> vector<960x128xf32>
    %90 = vector.extract_strided_slice %89 {offsets = [0, 0], sizes = [240, 128], strides = [1, 1]} : vector<960x128xf32> to vector<240x128xf32>
    %91 = vector.extract_strided_slice %89 {offsets = [240, 0], sizes = [240, 128], strides = [1, 1]} : vector<960x128xf32> to vector<240x128xf32>
    %92 = arith.maximumf %90, %91 : vector<240x128xf32>
    %93 = vector.extract_strided_slice %89 {offsets = [480, 0], sizes = [240, 128], strides = [1, 1]} : vector<960x128xf32> to vector<240x128xf32>
    %94 = vector.extract_strided_slice %89 {offsets = [720, 0], sizes = [240, 128], strides = [1, 1]} : vector<960x128xf32> to vector<240x128xf32>
    %95 = arith.maximumf %93, %94 : vector<240x128xf32>
    %96 = arith.maximumf %92, %95 : vector<240x128xf32>
    %97 = vector.broadcast %1 : vector<240x1xf32> to vector<240x128xf32>
    %98 = arith.addf %96, %97 : vector<240x128xf32>
    %cst_37 = arith.constant 0.000000e+00 : f32
    %99 = vector.broadcast %cst_37 : f32 to vector<240x128xf32>
    %100 = arith.maximumf %98, %99 : vector<240x128xf32>
    %c5 = arith.constant 5 : index
    %c0_38 = arith.constant 0 : index
    %c0_39 = arith.constant 0 : index
    %101 = vector.load %arg4[%c5, %c0_38, %c0_39] : memref<12x10x240xf32, #tpu.memory_space<vmem>>, vector<1x10x240xf32>
    %102 = vector.shape_cast %101 : vector<1x10x240xf32> to vector<10x240xf32>
    %cst_40 = arith.constant dense<0.000000e+00> : vector<10x128xf32>
    %103 = tpu.matmul %102, %100, %cst_40 {dimension_numbers = #tpu.dot_dimension_numbers<[1], [0], [0], [1], [0, 0, 1, 1], [], []>} : vector<10x240xf32>, vector<240x128xf32>, vector<10x128xf32> -> vector<10x128xf32>
    %104 = arith.addf %87, %103 : vector<10x128xf32>
    %c336 = arith.constant 336 : index
    %c0_41 = arith.constant 0 : index
    %105 = vector.load %arg1[%c336, %c0_41] : memref<784x128xf32, #tpu.memory_space<vmem>>, vector<168x128xf32>
    %cst_42 = arith.constant dense<0.000000e+00> : vector<960x128xf32>
    %106 = tpu.matmul %0, %105, %cst_42 {dimension_numbers = #tpu.dot_dimension_numbers<[1], [0], [0], [1], [0, 0, 1, 1], [], []>} : vector<960x168xf32>, vector<168x128xf32>, vector<960x128xf32> -> vector<960x128xf32>
    %107 = vector.extract_strided_slice %106 {offsets = [0, 0], sizes = [240, 128], strides = [1, 1]} : vector<960x128xf32> to vector<240x128xf32>
    %108 = vector.extract_strided_slice %106 {offsets = [240, 0], sizes = [240, 128], strides = [1, 1]} : vector<960x128xf32> to vector<240x128xf32>
    %109 = arith.maximumf %107, %108 : vector<240x128xf32>
    %110 = vector.extract_strided_slice %106 {offsets = [480, 0], sizes = [240, 128], strides = [1, 1]} : vector<960x128xf32> to vector<240x128xf32>
    %111 = vector.extract_strided_slice %106 {offsets = [720, 0], sizes = [240, 128], strides = [1, 1]} : vector<960x128xf32> to vector<240x128xf32>
    %112 = arith.maximumf %110, %111 : vector<240x128xf32>
    %113 = arith.maximumf %109, %112 : vector<240x128xf32>
    %114 = vector.broadcast %1 : vector<240x1xf32> to vector<240x128xf32>
    %115 = arith.addf %113, %114 : vector<240x128xf32>
    %cst_43 = arith.constant 0.000000e+00 : f32
    %116 = vector.broadcast %cst_43 : f32 to vector<240x128xf32>
    %117 = arith.maximumf %115, %116 : vector<240x128xf32>
    %c6 = arith.constant 6 : index
    %c0_44 = arith.constant 0 : index
    %c0_45 = arith.constant 0 : index
    %118 = vector.load %arg4[%c6, %c0_44, %c0_45] : memref<12x10x240xf32, #tpu.memory_space<vmem>>, vector<1x10x240xf32>
    %119 = vector.shape_cast %118 : vector<1x10x240xf32> to vector<10x240xf32>
    %cst_46 = arith.constant dense<0.000000e+00> : vector<10x128xf32>
    %120 = tpu.matmul %119, %117, %cst_46 {dimension_numbers = #tpu.dot_dimension_numbers<[1], [0], [0], [1], [0, 0, 1, 1], [], []>} : vector<10x240xf32>, vector<240x128xf32>, vector<10x128xf32> -> vector<10x128xf32>
    %121 = arith.addf %104, %120 : vector<10x128xf32>
    %c392 = arith.constant 392 : index
    %c0_47 = arith.constant 0 : index
    %122 = vector.load %arg1[%c392, %c0_47] : memref<784x128xf32, #tpu.memory_space<vmem>>, vector<168x128xf32>
    %cst_48 = arith.constant dense<0.000000e+00> : vector<960x128xf32>
    %123 = tpu.matmul %0, %122, %cst_48 {dimension_numbers = #tpu.dot_dimension_numbers<[1], [0], [0], [1], [0, 0, 1, 1], [], []>} : vector<960x168xf32>, vector<168x128xf32>, vector<960x128xf32> -> vector<960x128xf32>
    %124 = vector.extract_strided_slice %123 {offsets = [0, 0], sizes = [240, 128], strides = [1, 1]} : vector<960x128xf32> to vector<240x128xf32>
    %125 = vector.extract_strided_slice %123 {offsets = [240, 0], sizes = [240, 128], strides = [1, 1]} : vector<960x128xf32> to vector<240x128xf32>
    %126 = arith.maximumf %124, %125 : vector<240x128xf32>
    %127 = vector.extract_strided_slice %123 {offsets = [480, 0], sizes = [240, 128], strides = [1, 1]} : vector<960x128xf32> to vector<240x128xf32>
    %128 = vector.extract_strided_slice %123 {offsets = [720, 0], sizes = [240, 128], strides = [1, 1]} : vector<960x128xf32> to vector<240x128xf32>
    %129 = arith.maximumf %127, %128 : vector<240x128xf32>
    %130 = arith.maximumf %126, %129 : vector<240x128xf32>
    %131 = vector.broadcast %1 : vector<240x1xf32> to vector<240x128xf32>
    %132 = arith.addf %130, %131 : vector<240x128xf32>
    %cst_49 = arith.constant 0.000000e+00 : f32
    %133 = vector.broadcast %cst_49 : f32 to vector<240x128xf32>
    %134 = arith.maximumf %132, %133 : vector<240x128xf32>
    %c7 = arith.constant 7 : index
    %c0_50 = arith.constant 0 : index
    %c0_51 = arith.constant 0 : index
    %135 = vector.load %arg4[%c7, %c0_50, %c0_51] : memref<12x10x240xf32, #tpu.memory_space<vmem>>, vector<1x10x240xf32>
    %136 = vector.shape_cast %135 : vector<1x10x240xf32> to vector<10x240xf32>
    %cst_52 = arith.constant dense<0.000000e+00> : vector<10x128xf32>
    %137 = tpu.matmul %136, %134, %cst_52 {dimension_numbers = #tpu.dot_dimension_numbers<[1], [0], [0], [1], [0, 0, 1, 1], [], []>} : vector<10x240xf32>, vector<240x128xf32>, vector<10x128xf32> -> vector<10x128xf32>
    %138 = arith.addf %121, %137 : vector<10x128xf32>
    %c448 = arith.constant 448 : index
    %c0_53 = arith.constant 0 : index
    %139 = vector.load %arg1[%c448, %c0_53] : memref<784x128xf32, #tpu.memory_space<vmem>>, vector<168x128xf32>
    %cst_54 = arith.constant dense<0.000000e+00> : vector<960x128xf32>
    %140 = tpu.matmul %0, %139, %cst_54 {dimension_numbers = #tpu.dot_dimension_numbers<[1], [0], [0], [1], [0, 0, 1, 1], [], []>} : vector<960x168xf32>, vector<168x128xf32>, vector<960x128xf32> -> vector<960x128xf32>
    %141 = vector.extract_strided_slice %140 {offsets = [0, 0], sizes = [240, 128], strides = [1, 1]} : vector<960x128xf32> to vector<240x128xf32>
    %142 = vector.extract_strided_slice %140 {offsets = [240, 0], sizes = [240, 128], strides = [1, 1]} : vector<960x128xf32> to vector<240x128xf32>
    %143 = arith.maximumf %141, %142 : vector<240x128xf32>
    %144 = vector.extract_strided_slice %140 {offsets = [480, 0], sizes = [240, 128], strides = [1, 1]} : vector<960x128xf32> to vector<240x128xf32>
    %145 = vector.extract_strided_slice %140 {offsets = [720, 0], sizes = [240, 128], strides = [1, 1]} : vector<960x128xf32> to vector<240x128xf32>
    %146 = arith.maximumf %144, %145 : vector<240x128xf32>
    %147 = arith.maximumf %143, %146 : vector<240x128xf32>
    %148 = vector.broadcast %1 : vector<240x1xf32> to vector<240x128xf32>
    %149 = arith.addf %147, %148 : vector<240x128xf32>
    %cst_55 = arith.constant 0.000000e+00 : f32
    %150 = vector.broadcast %cst_55 : f32 to vector<240x128xf32>
    %151 = arith.maximumf %149, %150 : vector<240x128xf32>
    %c8 = arith.constant 8 : index
    %c0_56 = arith.constant 0 : index
    %c0_57 = arith.constant 0 : index
    %152 = vector.load %arg4[%c8, %c0_56, %c0_57] : memref<12x10x240xf32, #tpu.memory_space<vmem>>, vector<1x10x240xf32>
    %153 = vector.shape_cast %152 : vector<1x10x240xf32> to vector<10x240xf32>
    %cst_58 = arith.constant dense<0.000000e+00> : vector<10x128xf32>
    %154 = tpu.matmul %153, %151, %cst_58 {dimension_numbers = #tpu.dot_dimension_numbers<[1], [0], [0], [1], [0, 0, 1, 1], [], []>} : vector<10x240xf32>, vector<240x128xf32>, vector<10x128xf32> -> vector<10x128xf32>
    %155 = arith.addf %138, %154 : vector<10x128xf32>
    %c504 = arith.constant 504 : index
    %c0_59 = arith.constant 0 : index
    %156 = vector.load %arg1[%c504, %c0_59] : memref<784x128xf32, #tpu.memory_space<vmem>>, vector<168x128xf32>
    %cst_60 = arith.constant dense<0.000000e+00> : vector<960x128xf32>
    %157 = tpu.matmul %0, %156, %cst_60 {dimension_numbers = #tpu.dot_dimension_numbers<[1], [0], [0], [1], [0, 0, 1, 1], [], []>} : vector<960x168xf32>, vector<168x128xf32>, vector<960x128xf32> -> vector<960x128xf32>
    %158 = vector.extract_strided_slice %157 {offsets = [0, 0], sizes = [240, 128], strides = [1, 1]} : vector<960x128xf32> to vector<240x128xf32>
    %159 = vector.extract_strided_slice %157 {offsets = [240, 0], sizes = [240, 128], strides = [1, 1]} : vector<960x128xf32> to vector<240x128xf32>
    %160 = arith.maximumf %158, %159 : vector<240x128xf32>
    %161 = vector.extract_strided_slice %157 {offsets = [480, 0], sizes = [240, 128], strides = [1, 1]} : vector<960x128xf32> to vector<240x128xf32>
    %162 = vector.extract_strided_slice %157 {offsets = [720, 0], sizes = [240, 128], strides = [1, 1]} : vector<960x128xf32> to vector<240x128xf32>
    %163 = arith.maximumf %161, %162 : vector<240x128xf32>
    %164 = arith.maximumf %160, %163 : vector<240x128xf32>
    %165 = vector.broadcast %1 : vector<240x1xf32> to vector<240x128xf32>
    %166 = arith.addf %164, %165 : vector<240x128xf32>
    %cst_61 = arith.constant 0.000000e+00 : f32
    %167 = vector.broadcast %cst_61 : f32 to vector<240x128xf32>
    %168 = arith.maximumf %166, %167 : vector<240x128xf32>
    %c9 = arith.constant 9 : index
    %c0_62 = arith.constant 0 : index
    %c0_63 = arith.constant 0 : index
    %169 = vector.load %arg4[%c9, %c0_62, %c0_63] : memref<12x10x240xf32, #tpu.memory_space<vmem>>, vector<1x10x240xf32>
    %170 = vector.shape_cast %169 : vector<1x10x240xf32> to vector<10x240xf32>
    %cst_64 = arith.constant dense<0.000000e+00> : vector<10x128xf32>
    %171 = tpu.matmul %170, %168, %cst_64 {dimension_numbers = #tpu.dot_dimension_numbers<[1], [0], [0], [1], [0, 0, 1, 1], [], []>} : vector<10x240xf32>, vector<240x128xf32>, vector<10x128xf32> -> vector<10x128xf32>
    %172 = arith.addf %155, %171 : vector<10x128xf32>
    %c560 = arith.constant 560 : index
    %c0_65 = arith.constant 0 : index
    %173 = vector.load %arg1[%c560, %c0_65] : memref<784x128xf32, #tpu.memory_space<vmem>>, vector<168x128xf32>
    %cst_66 = arith.constant dense<0.000000e+00> : vector<960x128xf32>
    %174 = tpu.matmul %0, %173, %cst_66 {dimension_numbers = #tpu.dot_dimension_numbers<[1], [0], [0], [1], [0, 0, 1, 1], [], []>} : vector<960x168xf32>, vector<168x128xf32>, vector<960x128xf32> -> vector<960x128xf32>
    %175 = vector.extract_strided_slice %174 {offsets = [0, 0], sizes = [240, 128], strides = [1, 1]} : vector<960x128xf32> to vector<240x128xf32>
    %176 = vector.extract_strided_slice %174 {offsets = [240, 0], sizes = [240, 128], strides = [1, 1]} : vector<960x128xf32> to vector<240x128xf32>
    %177 = arith.maximumf %175, %176 : vector<240x128xf32>
    %178 = vector.extract_strided_slice %174 {offsets = [480, 0], sizes = [240, 128], strides = [1, 1]} : vector<960x128xf32> to vector<240x128xf32>
    %179 = vector.extract_strided_slice %174 {offsets = [720, 0], sizes = [240, 128], strides = [1, 1]} : vector<960x128xf32> to vector<240x128xf32>
    %180 = arith.maximumf %178, %179 : vector<240x128xf32>
    %181 = arith.maximumf %177, %180 : vector<240x128xf32>
    %182 = vector.broadcast %1 : vector<240x1xf32> to vector<240x128xf32>
    %183 = arith.addf %181, %182 : vector<240x128xf32>
    %cst_67 = arith.constant 0.000000e+00 : f32
    %184 = vector.broadcast %cst_67 : f32 to vector<240x128xf32>
    %185 = arith.maximumf %183, %184 : vector<240x128xf32>
    %c10 = arith.constant 10 : index
    %c0_68 = arith.constant 0 : index
    %c0_69 = arith.constant 0 : index
    %186 = vector.load %arg4[%c10, %c0_68, %c0_69] : memref<12x10x240xf32, #tpu.memory_space<vmem>>, vector<1x10x240xf32>
    %187 = vector.shape_cast %186 : vector<1x10x240xf32> to vector<10x240xf32>
    %cst_70 = arith.constant dense<0.000000e+00> : vector<10x128xf32>
    %188 = tpu.matmul %187, %185, %cst_70 {dimension_numbers = #tpu.dot_dimension_numbers<[1], [0], [0], [1], [0, 0, 1, 1], [], []>} : vector<10x240xf32>, vector<240x128xf32>, vector<10x128xf32> -> vector<10x128xf32>
    %189 = arith.addf %172, %188 : vector<10x128xf32>
    %c616 = arith.constant 616 : index
    %c0_71 = arith.constant 0 : index
    %190 = vector.load %arg1[%c616, %c0_71] : memref<784x128xf32, #tpu.memory_space<vmem>>, vector<168x128xf32>
    %cst_72 = arith.constant dense<0.000000e+00> : vector<960x128xf32>
    %191 = tpu.matmul %0, %190, %cst_72 {dimension_numbers = #tpu.dot_dimension_numbers<[1], [0], [0], [1], [0, 0, 1, 1], [], []>} : vector<960x168xf32>, vector<168x128xf32>, vector<960x128xf32> -> vector<960x128xf32>
    %192 = vector.extract_strided_slice %191 {offsets = [0, 0], sizes = [240, 128], strides = [1, 1]} : vector<960x128xf32> to vector<240x128xf32>
    %193 = vector.extract_strided_slice %191 {offsets = [240, 0], sizes = [240, 128], strides = [1, 1]} : vector<960x128xf32> to vector<240x128xf32>
    %194 = arith.maximumf %192, %193 : vector<240x128xf32>
    %195 = vector.extract_strided_slice %191 {offsets = [480, 0], sizes = [240, 128], strides = [1, 1]} : vector<960x128xf32> to vector<240x128xf32>
    %196 = vector.extract_strided_slice %191 {offsets = [720, 0], sizes = [240, 128], strides = [1, 1]} : vector<960x128xf32> to vector<240x128xf32>
    %197 = arith.maximumf %195, %196 : vector<240x128xf32>
    %198 = arith.maximumf %194, %197 : vector<240x128xf32>
    %199 = vector.broadcast %1 : vector<240x1xf32> to vector<240x128xf32>
    %200 = arith.addf %198, %199 : vector<240x128xf32>
    %cst_73 = arith.constant 0.000000e+00 : f32
    %201 = vector.broadcast %cst_73 : f32 to vector<240x128xf32>
    %202 = arith.maximumf %200, %201 : vector<240x128xf32>
    %c11 = arith.constant 11 : index
    %c0_74 = arith.constant 0 : index
    %c0_75 = arith.constant 0 : index
    %203 = vector.load %arg4[%c11, %c0_74, %c0_75] : memref<12x10x240xf32, #tpu.memory_space<vmem>>, vector<1x10x240xf32>
    %204 = vector.shape_cast %203 : vector<1x10x240xf32> to vector<10x240xf32>
    %cst_76 = arith.constant dense<0.000000e+00> : vector<10x128xf32>
    %205 = tpu.matmul %204, %202, %cst_76 {dimension_numbers = #tpu.dot_dimension_numbers<[1], [0], [0], [1], [0, 0, 1, 1], [], []>} : vector<10x240xf32>, vector<240x128xf32>, vector<10x128xf32> -> vector<10x128xf32>
    %206 = arith.addf %189, %205 : vector<10x128xf32>
    %c0_77 = arith.constant 0 : index
    %c0_78 = arith.constant 0 : index
    %207 = vector.load %arg5[%c0_77, %c0_78] : memref<10x1xf32, #tpu.memory_space<vmem>>, vector<10x1xf32>
    %208 = vector.broadcast %207 : vector<10x1xf32> to vector<10x128xf32>
    %209 = arith.addf %206, %208 : vector<10x128xf32>
    %c0_79 = arith.constant 0 : index
    %c0_80 = arith.constant 0 : index
    %210 = vector.load %arg6[%c0_79, %c0_80] : memref<10x128xf32, #tpu.memory_space<vmem>>, vector<10x128xf32>
    tpu.vector_store %arg6[%c0_79, %c0_80], %209 {strides = array<i32>} : memref<10x128xf32, #tpu.memory_space<vmem>>, vector<10x128xf32>,
    return
  }
  func.func @transform_0(%arg0: i32) -> (i32, i32) {
    %c0_i32 = arith.constant 0 : i32
    %c0_i32_0 = arith.constant 0 : i32
    return %c0_i32, %arg0 : i32, i32
  }
  func.func @transform_1(%arg0: i32) -> (i32, i32) {
    %c0_i32 = arith.constant 0 : i32
    %c0_i32_0 = arith.constant 0 : i32
    %c0_i32_1 = arith.constant 0 : i32
    return %c0_i32, %c0_i32_0 : i32, i32
  }
  func.func @transform_2(%arg0: i32) -> (i32, i32) {
    %c0_i32 = arith.constant 0 : i32
    %c0_i32_0 = arith.constant 0 : i32
    %c0_i32_1 = arith.constant 0 : i32
    return %c0_i32, %c0_i32_0 : i32, i32
  }
  func.func @transform_3(%arg0: i32) -> (i32, i32, i32) {
    %c0_i32 = arith.constant 0 : i32
    %c0_i32_0 = arith.constant 0 : i32
    %c0_i32_1 = arith.constant 0 : i32
    %c0_i32_2 = arith.constant 0 : i32
    return %c0_i32, %c0_i32_0, %c0_i32_1 : i32, i32, i32
  }
  func.func @transform_4(%arg0: i32) -> (i32, i32) {
    %c0_i32 = arith.constant 0 : i32
    %c0_i32_0 = arith.constant 0 : i32
    %c0_i32_1 = arith.constant 0 : i32
    return %c0_i32, %c0_i32_0 : i32, i32
  }
  func.func @transform_5(%arg0: i32) -> (i32, i32) {
    %c0_i32 = arith.constant 0 : i32
    %c0_i32_0 = arith.constant 0 : i32
    return %c0_i32, %arg0 : i32, i32
  }
}

</mosaic_0001>

<llo_original>
// kernel: cnn_forward.1
$region0: #{cnn_forward.1}
  #allocation0 [shape = 'u32[]', space=smem, size = 0x4, offset = 0x4, fixed_abs, tag = 'smem constant byte address 0x4 - core index']
  #allocation1 [shape = 'u32[144,128]{1,0:T(1,128)}', space=vmem, size = 0x12000, scoped, tag = 'internal scratch']
  %s0 = inlined_call_operand.vmem [shape: f32[784,128], index: 0, kind: input, shape index: {}]
  %s1 = inlined_call_operand.vmem [shape: f32[960,168], index: 1, kind: input, shape index: {}]
  %s2 = inlined_call_operand.vmem [shape: f32[240,1], index: 2, kind: input, shape index: {}]
  %s3 = inlined_call_operand.vmem [shape: f32[12,10,240], index: 3, kind: input, shape index: {}]
  %s4 = inlined_call_operand.vmem [shape: f32[10,1], index: 4, kind: input, shape index: {}]
  %s5 = inlined_call_operand.vmem [shape: f32[10,128], index: 5, kind: output, shape index: {}]
  %s6 = sld [smem:[#allocation0]]
  $region30: #{cnn_forward.1} parent=0
    _
  %s8 = ssub.s32 1, %s6
  %s9 = scalar_select 0, %s8, %s6
  // Predicated region
  $region2: #{cnn_forward.1} parent=0 // pred_check
    _
  $region3: #{cnn_forward.1} parent=0 // pred_check_branch
    %11 = sbr.rel (0) target = $region5
  $region4: #{cnn_forward.1} parent=0 // pred_region
    _
  $region5: #{cnn_forward.1} parent=0 // pred_fallthru
    _
  // Predicated region
  $region6: #{cnn_forward.1} parent=0 // pred_check
    _
  $region7: #{cnn_forward.1} parent=0 // pred_check_branch
    %13 = sbr.rel (0) target = $region9
  $region8: #{cnn_forward.1} parent=0 // pred_region
    _
  $region9: #{cnn_forward.1} parent=0 // pred_fallthru
    _
  // Predicated region
  $region10: #{cnn_forward.1} parent=0 // pred_check
    _
  $region11: #{cnn_forward.1} parent=0 // pred_check_branch
    %15 = sbr.rel (0) target = $region13
  $region12: #{cnn_forward.1} parent=0 // pred_region
    _
  $region13: #{cnn_forward.1} parent=0 // pred_fallthru
    _
  // Predicated region
  $region14: #{cnn_forward.1} parent=0 // pred_check
    _
  $region15: #{cnn_forward.1} parent=0 // pred_check_branch
    %17 = sbr.rel (0) target = $region17
  $region16: #{cnn_forward.1} parent=0 // pred_region
    _
  $region17: #{cnn_forward.1} parent=0 // pred_fallthru
    _
  // Predicated region
  $region18: #{cnn_forward.1} parent=0 // pred_check
    _
  $region19: #{cnn_forward.1} parent=0 // pred_check_branch
    %19 = sbr.rel (0) target = $region21
  $region20: #{cnn_forward.1} parent=0 // pred_region
    _
  $region21: #{cnn_forward.1} parent=0 // pred_fallthru
    _
  %v20 = vld [vmem:[%s1] sm:$0xff]
  %v21 = vld [vmem:[%s1 + $0x8] sm:$0xff]
  %v22 = vld [vmem:[%s1 + $0x10] sm:$0xff]
  %v23 = vld [vmem:[%s1 + $0x18] sm:$0xff]
  %v24 = vld [vmem:[%s1 + $0x20] sm:$0xff]
  %v25 = vld [vmem:[%s1 + $0x28] sm:$0xff]
  %v26 = vld [vmem:[%s1 + $0x30] sm:$0xff]
  %v27 = vld [vmem:[%s1 + $0x38] sm:$0xff]
  %v28 = vld [vmem:[%s1 + $0x40] sm:$0xff]
  %v29 = vld [vmem:[%s1 + $0x48] sm:$0xff]
  %v30 = vld [vmem:[%s1 + $0x50] sm:$0xff]
  %v31 = vld [vmem:[%s1 + $0x58] sm:$0xff]
  %v32 = vld [vmem:[%s1 + $0x60] sm:$0xff]
  %v33 = vld [vmem:[%s1 + $0x68] sm:$0xff]
  %v34 = vld [vmem:[%s1 + $0x70] sm:$0xff]
  %v35 = vld [vmem:[%s1 + $0x78] sm:$0xff]
  %v36 = vld [vmem:[%s1 + $0x80] sm:$0xff]
  %v37 = vld [vmem:[%s1 + $0x88] sm:$0xff]
  %v38 = vld [vmem:[%s1 + $0x90] sm:$0xff]
  %v39 = vld [vmem:[%s1 + $0x98] sm:$0xff]
  %v40 = vld [vmem:[%s1 + $0xa0] sm:$0xff]
  %v41 = vld [vmem:[%s1 + $0xa8] sm:$0xff]
  %v42 = vld [vmem:[%s1 + $0xb0] sm:$0xff]
  %v43 = vld [vmem:[%s1 + $0xb8] sm:$0xff]
  %v44 = vld [vmem:[%s1 + $0xc0] sm:$0xff]
  %v45 = vld [vmem:[%s1 + $0xc8] sm:$0xff]
  %v46 = vld [vmem:[%s1 + $0xd0] sm:$0xff]
  %v47 = vld [vmem:[%s1 + $0xd8] sm:$0xff]
  %v48 = vld [vmem:[%s1 + $0xe0] sm:$0xff]
  %v49 = vld [vmem:[%s1 + $0xe8] sm:$0xff]
  %v50 = vld [vmem:[%s1 + $0xf0] sm:$0xff]
  %v51 = vld [vmem:[%s1 + $0xf8] sm:$0xff]
  %v52 = vld [vmem:[%s1 + $0x100] sm:$0xff]
  %v53 = vld [vmem:[%s1 + $0x108] sm:$0xff]
  %v54 = vld [vmem:[%s1 + $0x110] sm:$0xff]
  %v55 = vld [vmem:[%s1 + $0x118] sm:$0xff]
  %v56 = vld [vmem:[%s1 + $0x120] sm:$0xff]
  %v57 = vld [vmem:[%s1 + $0x128] sm:$0xff]
  %v58 = vld [vmem:[%s1 + $0x130] sm:$0xff]
  %v59 = vld [vmem:[%s1 + $0x138] sm:$0xff]
  %v60 = vld [vmem:[%s1 + $0x140] sm:$0xff]
  %v61 = vld [vmem:[%s1 + $0x148] sm:$0xff]
  %v62 = vld [vmem:[%s1 + $0x150] sm:$0xff]
  %v63 = vld [vmem:[%s1 + $0x158] sm:$0xff]
  %v64 = vld [vmem:[%s1 + $0x160] sm:$0xff]
  %v65 = vld [vmem:[%s1 + $0x168] sm:$0xff]
  %v66 = vld [vmem:[%s1 + $0x170] sm:$0xff]
  %v67 = vld [vmem:[%s1 + $0x178] sm:$0xff]
  %v68 = vld [vmem:[%s1 + $0x180] sm:$0xff]
  %v69 = vld [vmem:[%s1 + $0x188] sm:$0xff]
  %v70 = vld [vmem:[%s1 + $0x190] sm:$0xff]
  %v71 = vld [vmem:[%s1 + $0x198] sm:$0xff]
  %v72 = vld [vmem:[%s1 + $0x1a0] sm:$0xff]
  %v73 = vld [vmem:[%s1 + $0x1a8] sm:$0xff]
  %v74 = vld [vmem:[%s1 + $0x1b0] sm:$0xff]
  %v75 = vld [vmem:[%s1 + $0x1b8] sm:$0xff]
  %v76 = vld [vmem:[%s1 + $0x1c0] sm:$0xff]
  %v77 = vld [vmem:[%s1 + $0x1c8] sm:$0xff]
  %v78 = vld [vmem:[%s1 + $0x1d0] sm:$0xff]
  %v79 = vld [vmem:[%s1 + $0x1d8] sm:$0xff]
  %v80 = vld [vmem:[%s1 + $0x1e0] sm:$0xff]
  %v81 = vld [vmem:[%s1 + $0x1e8] sm:$0xff]
  %v82 = vld [vmem:[%s1 + $0x1f0] sm:$0xff]
  %v83 = vld [vmem:[%s1 + $0x1f8] sm:$0xff]
  %v84 = vld [vmem:[%s1 + $0x200] sm:$0xff]
  %v85 = vld [vmem:[%s1 + $0x208] sm:$0xff]
  %v86 = vld [vmem:[%s1 + $0x210] sm:$0xff]
  %v87 = vld [vmem:[%s1 + $0x218] sm:$0xff]
  %v88 = vld [vmem:[%s1 + $0x220] sm:$0xff]
  %v89 = vld [vmem:[%s1 + $0x228] sm:$0xff]
  %v90 = vld [vmem:[%s1 + $0x230] sm:$0xff]
  %v91 = vld [vmem:[%s1 + $0x238] sm:$0xff]
  %v92 = vld [vmem:[%s1 + $0x240] sm:$0xff]
  %v93 = vld [vmem:[%s1 + $0x248] sm:$0xff]
  %v94 = vld [vmem:[%s1 + $0x250] sm:$0xff]
  %v95 = vld [vmem:[%s1 + $0x258] sm:$0xff]
  %v96 = vld [vmem:[%s1 + $0x260] sm:$0xff]
  %v97 = vld [vmem:[%s1 + $0x268] sm:$0xff]
  %v98 = vld [vmem:[%s1 + $0x270] sm:$0xff]
  %v99 = vld [vmem:[%s1 + $0x278] sm:$0xff]
  %v100 = vld [vmem:[%s1 + $0x280] sm:$0xff]
  %v101 = vld [vmem:[%s1 + $0x288] sm:$0xff]
  %v102 = vld [vmem:[%s1 + $0x290] sm:$0xff]
  %v103 = vld [vmem:[%s1 + $0x298] sm:$0xff]
  %v104 = vld [vmem:[%s1 + $0x2a0] sm:$0xff]
  %v105 = vld [vmem:[%s1 + $0x2a8] sm:$0xff]
  %v106 = vld [vmem:[%s1 + $0x2b0] sm:$0xff]
  %v107 = vld [vmem:[%s1 + $0x2b8] sm:$0xff]
  %v108 = vld [vmem:[%s1 + $0x2c0] sm:$0xff]
  %v109 = vld [vmem:[%s1 + $0x2c8] sm:$0xff]
  %v110 = vld [vmem:[%s1 + $0x2d0] sm:$0xff]
  %v111 = vld [vmem:[%s1 + $0x2d8] sm:$0xff]
  %v112 = vld [vmem:[%s1 + $0x2e0] sm:$0xff]
  %v113 = vld [vmem:[%s1 + $0x2e8] sm:$0xff]
  %v114 = vld [vmem:[%s1 + $0x2f0] sm:$0xff]
  %v115 = vld [vmem:[%s1 + $0x2f8] sm:$0xff]
  %v116 = vld [vmem:[%s1 + $0x300] sm:$0xff]
  %v117 = vld [vmem:[%s1 + $0x308] sm:$0xff]
  %v118 = vld [vmem:[%s1 + $0x310] sm:$0xff]
  %v119 = vld [vmem:[%s1 + $0x318] sm:$0xff]
  %v120 = vld [vmem:[%s1 + $0x320] sm:$0xff]
  %v121 = vld [vmem:[%s1 + $0x328] sm:$0xff]
  %v122 = vld [vmem:[%s1 + $0x330] sm:$0xff]
  %v123 = vld [vmem:[%s1 + $0x338] sm:$0xff]
  %v124 = vld [vmem:[%s1 + $0x340] sm:$0xff]
  %v125 = vld [vmem:[%s1 + $0x348] sm:$0xff]
  %v126 = vld [vmem:[%s1 + $0x350] sm:$0xff]
  %v127 = vld [vmem:[%s1 + $0x358] sm:$0xff]
  %v128 = vld [vmem:[%s1 + $0x360] sm:$0xff]
  %v129 = vld [vmem:[%s1 + $0x368] sm:$0xff]
  %v130 = vld [vmem:[%s1 + $0x370] sm:$0xff]
  %v131 = vld [vmem:[%s1 + $0x378] sm:$0xff]
  %v132 = vld [vmem:[%s1 + $0x380] sm:$0xff]
  %v133 = vld [vmem:[%s1 + $0x388] sm:$0xff]
  %v134 = vld [vmem:[%s1 + $0x390] sm:$0xff]
  %v135 = vld [vmem:[%s1 + $0x398] sm:$0xff]
  %v136 = vld [vmem:[%s1 + $0x3a0] sm:$0xff]
  %v137 = vld [vmem:[%s1 + $0x3a8] sm:$0xff]
  %v138 = vld [vmem:[%s1 + $0x3b0] sm:$0xff]
  %v139 = vld [vmem:[%s1 + $0x3b8] sm:$0xff]
  %v140 = vld [vmem:[%s1 + $0x3c0] sm:$0xff]
  %v141 = vld [vmem:[%s1 + $0x3c8] sm:$0xff]
  %v142 = vld [vmem:[%s1 + $0x3d0] sm:$0xff]
  %v143 = vld [vmem:[%s1 + $0x3d8] sm:$0xff]
  %v144 = vld [vmem:[%s1 + $0x3e0] sm:$0xff]
  %v145 = vld [vmem:[%s1 + $0x3e8] sm:$0xff]
  %v146 = vld [vmem:[%s1 + $0x3f0] sm:$0xff]
  %v147 = vld [vmem:[%s1 + $0x3f8] sm:$0xff]
  %v148 = vld [vmem:[%s1 + $0x400] sm:$0xff]
  %v149 = vld [vmem:[%s1 + $0x408] sm:$0xff]
  %v150 = vld [vmem:[%s1 + $0x410] sm:$0xff]
  %v151 = vld [vmem:[%s1 + $0x418] sm:$0xff]
  %v152 = vld [vmem:[%s1 + $0x420] sm:$0xff]
  %v153 = vld [vmem:[%s1 + $0x428] sm:$0xff]
  %v154 = vld [vmem:[%s1 + $0x430] sm:$0xff]
  %v155 = vld [vmem:[%s1 + $0x438] sm:$0xff]
  %v156 = vld [vmem:[%s1 + $0x440] sm:$0xff]
  %v157 = vld [vmem:[%s1 + $0x448] sm:$0xff]
  %v158 = vld [vmem:[%s1 + $0x450] sm:$0xff]
  %v159 = vld [vmem:[%s1 + $0x458] sm:$0xff]
  %v160 = vld [vmem:[%s1 + $0x460] sm:$0xff]
  %v161 = vld [vmem:[%s1 + $0x468] sm:$0xff]
  %v162 = vld [vmem:[%s1 + $0x470] sm:$0xff]
  %v163 = vld [vmem:[%s1 + $0x478] sm:$0xff]
  %v164 = vld [vmem:[%s1 + $0x480] sm:$0xff]
  %v165 = vld [vmem:[%s1 + $0x488] sm:$0xff]
  %v166 = vld [vmem:[%s1 + $0x490] sm:$0xff]
  %v167 = vld [vmem:[%s1 + $0x498] sm:$0xff]
  %v168 = vld [vmem:[%s1 + $0x4a0] sm:$0xff]
  %v169 = vld [vmem:[%s1 + $0x4a8] sm:$0xff]
  %v170 = vld [vmem:[%s1 + $0x4b0] sm:$0xff]
  %v171 = vld [vmem:[%s1 + $0x4b8] sm:$0xff]
  %v172 = vld [vmem:[%s1 + $0x4c0] sm:$0xff]
  %v173 = vld [vmem:[%s1 + $0x4c8] sm:$0xff]
  %v174 = vld [vmem:[%s1 + $0x4d0] sm:$0xff]
  %v175 = vld [vmem:[%s1 + $0x4d8] sm:$0xff]
  %v176 = vld [vmem:[%s1 + $0x4e0] sm:$0xff]
  %v177 = vld [vmem:[%s1 + $0x4e8] sm:$0xff]
  %v178 = vld [vmem:[%s1 + $0x4f0] sm:$0xff]
  %v179 = vld [vmem:[%s1 + $0x4f8] sm:$0xff]
  %v180 = vld [vmem:[%s1 + $0x500] sm:$0xff]
  %v181 = vld [vmem:[%s1 + $0x508] sm:$0xff]
  %v182 = vld [vmem:[%s1 + $0x510] sm:$0xff]
  %v183 = vld [vmem:[%s1 + $0x518] sm:$0xff]
  %v184 = vld [vmem:[%s1 + $0x520] sm:$0xff]
  %v185 = vld [vmem:[%s1 + $0x528] sm:$0xff]
  %v186 = vld [vmem:[%s1 + $0x530] sm:$0xff]
  %v187 = vld [vmem:[%s1 + $0x538] sm:$0xff]
  %v188 = vld [vmem:[%s1 + $0x540] sm:$0xff]
  %v189 = vld [vmem:[%s1 + $0x548] sm:$0xff]
  %v190 = vld [vmem:[%s1 + $0x550] sm:$0xff]
  %v191 = vld [vmem:[%s1 + $0x558] sm:$0xff]
  %v192 = vld [vmem:[%s1 + $0x560] sm:$0xff]
  %v193 = vld [vmem:[%s1 + $0x568] sm:$0xff]
  %v194 = vld [vmem:[%s1 + $0x570] sm:$0xff]
  %v195 = vld [vmem:[%s1 + $0x578] sm:$0xff]
  %v196 = vld [vmem:[%s1 + $0x580] sm:$0xff]
  %v197 = vld [vmem:[%s1 + $0x588] sm:$0xff]
  %v198 = vld [vmem:[%s1 + $0x590] sm:$0xff]
  %v199 = vld [vmem:[%s1 + $0x598] sm:$0xff]
  %v200 = vld [vmem:[%s1 + $0x5a0] sm:$0xff]
  %v201 = vld [vmem:[%s1 + $0x5a8] sm:$0xff]
  %v202 = vld [vmem:[%s1 + $0x5b0] sm:$0xff]
  %v203 = vld [vmem:[%s1 + $0x5b8] sm:$0xff]
  %v204 = vld [vmem:[%s1 + $0x5c0] sm:$0xff]
  %v205 = vld [vmem:[%s1 + $0x5c8] sm:$0xff]
  %v206 = vld [vmem:[%s1 + $0x5d0] sm:$0xff]
  %v207 = vld [vmem:[%s1 + $0x5d8] sm:$0xff]
  %v208 = vld [vmem:[%s1 + $0x5e0] sm:$0xff]
  %v209 = vld [vmem:[%s1 + $0x5e8] sm:$0xff]
  %v210 = vld [vmem:[%s1 + $0x5f0] sm:$0xff]
  %v211 = vld [vmem:[%s1 + $0x5f8] sm:$0xff]
  %v212 = vld [vmem:[%s1 + $0x600] sm:$0xff]
  %v213 = vld [vmem:[%s1 + $0x608] sm:$0xff]
  %v214 = vld [vmem:[%s1 + $0x610] sm:$0xff]
  %v215 = vld [vmem:[%s1 + $0x618] sm:$0xff]
  %v216 = vld [vmem:[%s1 + $0x620] sm:$0xff]
  %v217 = vld [vmem:[%s1 + $0x628] sm:$0xff]
  %v218 = vld [vmem:[%s1 + $0x630] sm:$0xff]
  %v219 = vld [vmem:[%s1 + $0x638] sm:$0xff]
  %v220 = vld [vmem:[%s1 + $0x640] sm:$0xff]
  %v221 = vld [vmem:[%s1 + $0x648] sm:$0xff]
  %v222 = vld [vmem:[%s1 + $0x650] sm:$0xff]
  %v223 = vld [vmem:[%s1 + $0x658] sm:$0xff]
  %v224 = vld [vmem:[%s1 + $0x660] sm:$0xff]
  %v225 = vld [vmem:[%s1 + $0x668] sm:$0xff]
  %v226 = vld [vmem:[%s1 + $0x670] sm:$0xff]
  %v227 = vld [vmem:[%s1 + $0x678] sm:$0xff]
  %v228 = vld [vmem:[%s1 + $0x680] sm:$0xff]
  %v229 = vld [vmem:[%s1 + $0x688] sm:$0xff]
  %v230 = vld [vmem:[%s1 + $0x690] sm:$0xff]
  %v231 = vld [vmem:[%s1 + $0x698] sm:$0xff]
  %v232 = vld [vmem:[%s1 + $0x6a0] sm:$0xff]
  %v233 = vld [vmem:[%s1 + $0x6a8] sm:$0xff]
  %v234 = vld [vmem:[%s1 + $0x6b0] sm:$0xff]
  %v235 = vld [vmem:[%s1 + $0x6b8] sm:$0xff]
  %v236 = vld [vmem:[%s1 + $0x6c0] sm:$0xff]
  %v237 = vld [vmem:[%s1 + $0x6c8] sm:$0xff]
  %v238 = vld [vmem:[%s1 + $0x6d0] sm:$0xff]
  %v239 = vld [vmem:[%s1 + $0x6d8] sm:$0xff]
  %v240 = vld [vmem:[%s1 + $0x6e0] sm:$0xff]
  %v241 = vld [vmem:[%s1 + $0x6e8] sm:$0xff]
  %v242 = vld [vmem:[%s1 + $0x6f0] sm:$0xff]
  %v243 = vld [vmem:[%s1 + $0x6f8] sm:$0xff]
  %v244 = vld [vmem:[%s1 + $0x700] sm:$0xff]
  %v245 = vld [vmem:[%s1 + $0x708] sm:$0xff]
  %v246 = vld [vmem:[%s1 + $0x710] sm:$0xff]
  %v247 = vld [vmem:[%s1 + $0x718] sm:$0xff]
  %v248 = vld [vmem:[%s1 + $0x720] sm:$0xff]
  %v249 = vld [vmem:[%s1 + $0x728] sm:$0xff]
  %v250 = vld [vmem:[%s1 + $0x730] sm:$0xff]
  %v251 = vld [vmem:[%s1 + $0x738] sm:$0xff]
  %v252 = vld [vmem:[%s1 + $0x740] sm:$0xff]
  %v253 = vld [vmem:[%s1 + $0x748] sm:$0xff]
  %v254 = vld [vmem:[%s1 + $0x750] sm:$0xff]
  %v255 = vld [vmem:[%s1 + $0x758] sm:$0xff]
  %v256 = vld [vmem:[%s1 + $0x760] sm:$0xff]
  %v257 = vld [vmem:[%s1 + $0x768] sm:$0xff]
  %v258 = vld [vmem:[%s1 + $0x770] sm:$0xff]
  %v259 = vld [vmem:[%s1 + $0x778] sm:$0xff]
  %v260 = vld [vmem:[%s2] sm:$0xff]
  %v261 = vld [vmem:[%s2 + $0x8] sm:$0xff]
  %v262 = vld [vmem:[%s2 + $0x10] sm:$0xff]
  %v263 = vld [vmem:[%s2 + $0x18] sm:$0xff]
  %v264 = vld [vmem:[%s2 + $0x20] sm:$0xff]
  %v265 = vld [vmem:[%s2 + $0x28] sm:$0xff]
  %v266 = vld [vmem:[%s2 + $0x30] sm:$0xff]
  %v267 = vld [vmem:[%s2 + $0x38] sm:$0xff]
  %v268 = vld [vmem:[%s2 + $0x40] sm:$0xff]
  %v269 = vld [vmem:[%s2 + $0x48] sm:$0xff]
  %v270 = vld [vmem:[%s2 + $0x50] sm:$0xff]
  %v271 = vld [vmem:[%s2 + $0x58] sm:$0xff]
  %v272 = vld [vmem:[%s2 + $0x60] sm:$0xff]
  %v273 = vld [vmem:[%s2 + $0x68] sm:$0xff]
  %v274 = vld [vmem:[%s2 + $0x70] sm:$0xff]
  %v275 = vld [vmem:[%s2 + $0x78] sm:$0xff]
  %v276 = vld [vmem:[%s2 + $0x80] sm:$0xff]
  %v277 = vld [vmem:[%s2 + $0x88] sm:$0xff]
  %v278 = vld [vmem:[%s2 + $0x90] sm:$0xff]
  %v279 = vld [vmem:[%s2 + $0x98] sm:$0xff]
  %v280 = vld [vmem:[%s2 + $0xa0] sm:$0xff]
  %v281 = vld [vmem:[%s2 + $0xa8] sm:$0xff]
  %v282 = vld [vmem:[%s2 + $0xb0] sm:$0xff]
  %v283 = vld [vmem:[%s2 + $0xb8] sm:$0xff]
  %v284 = vld [vmem:[%s2 + $0xc0] sm:$0xff]
  %v285 = vld [vmem:[%s2 + $0xc8] sm:$0xff]
  %v286 = vld [vmem:[%s2 + $0xd0] sm:$0xff]
  %v287 = vld [vmem:[%s2 + $0xd8] sm:$0xff]
  %v288 = vld [vmem:[%s2 + $0xe0] sm:$0xff]
  %v289 = vld [vmem:[%s2 + $0xe8] sm:$0xff]
  %v290 = vld [vmem:[%s0] sm:$0xff]
  %v291 = vld [vmem:[%s0 + $0x8] sm:$0xff]
  %v292 = vld [vmem:[%s0 + $0x10] sm:$0xff]
  %v293 = vld [vmem:[%s0 + $0x18] sm:$0xff]
  %v294 = vld [vmem:[%s0 + $0x20] sm:$0xff]
  %v295 = vld [vmem:[%s0 + $0x28] sm:$0xff]
  %v296 = vld [vmem:[%s0 + $0x30] sm:$0xff]
  %v297 = vld [vmem:[%s0 + $0x38] sm:$0xff]
  %v298 = vld [vmem:[%s0 + $0x40] sm:$0xff]
  %v299 = vld [vmem:[%s0 + $0x48] sm:$0xff]
  %v300 = vld [vmem:[%s0 + $0x50] sm:$0xff]
  %v301 = vld [vmem:[%s0 + $0x58] sm:$0xff]
  %v302 = vld [vmem:[%s0 + $0x60] sm:$0xff]
  %v303 = vld [vmem:[%s0 + $0x68] sm:$0xff]
  %v304 = vld [vmem:[%s0 + $0x70] sm:$0xff]
  %v305 = vld [vmem:[%s0 + $0x78] sm:$0xff]
  %v306 = vld [vmem:[%s0 + $0x80] sm:$0xff]
  %v307 = vld [vmem:[%s0 + $0x88] sm:$0xff]
  %v308 = vld [vmem:[%s0 + $0x90] sm:$0xff]
  %v309 = vld [vmem:[%s0 + $0x98] sm:$0xff]
  %v310 = vld [vmem:[%s0 + $0xa0] sm:$0xff]
  %vm311 = vcmask 326656
  %v313 = vsel %vm311, %v21, 0
  %v316 = vsel %vm311, %v23, 0
  %v319 = vsel %vm311, %v25, 0
  %v322 = vsel %vm311, %v27, 0
  %v325 = vsel %vm311, %v29, 0
  %v328 = vsel %vm311, %v31, 0
  %v331 = vsel %vm311, %v33, 0
  %v334 = vsel %vm311, %v35, 0
  %v337 = vsel %vm311, %v37, 0
  %v340 = vsel %vm311, %v39, 0
  %v343 = vsel %vm311, %v41, 0
  %v346 = vsel %vm311, %v43, 0
  %v349 = vsel %vm311, %v45, 0
  %v352 = vsel %vm311, %v47, 0
  %v355 = vsel %vm311, %v49, 0
  %v358 = vsel %vm311, %v51, 0
  %v361 = vsel %vm311, %v53, 0
  %v364 = vsel %vm311, %v55, 0
  %v367 = vsel %vm311, %v57, 0
  %v370 = vsel %vm311, %v59, 0
  %v373 = vsel %vm311, %v61, 0
  %v376 = vsel %vm311, %v63, 0
  %v379 = vsel %vm311, %v65, 0
  %v382 = vsel %vm311, %v67, 0
  %v385 = vsel %vm311, %v69, 0
  %v388 = vsel %vm311, %v71, 0
  %v391 = vsel %vm311, %v73, 0
  %v394 = vsel %vm311, %v75, 0
  %v397 = vsel %vm311, %v77, 0
  %v400 = vsel %vm311, %v79, 0
  %v403 = vsel %vm311, %v81, 0
  %v406 = vsel %vm311, %v83, 0
  %v409 = vsel %vm311, %v85, 0
  %v412 = vsel %vm311, %v87, 0
  %v415 = vsel %vm311, %v89, 0
  %v418 = vsel %vm311, %v91, 0
  %v421 = vsel %vm311, %v93, 0
  %v424 = vsel %vm311, %v95, 0
  %v427 = vsel %vm311, %v97, 0
  %v430 = vsel %vm311, %v99, 0
  %v433 = vsel %vm311, %v101, 0
  %v436 = vsel %vm311, %v103, 0
  %v439 = vsel %vm311, %v105, 0
  %v442 = vsel %vm311, %v107, 0
  %v445 = vsel %vm311, %v109, 0
  %v448 = vsel %vm311, %v111, 0
  %v451 = vsel %vm311, %v113, 0
  %v454 = vsel %vm311, %v115, 0
  %v457 = vsel %vm311, %v117, 0
  %v460 = vsel %vm311, %v119, 0
  %v463 = vsel %vm311, %v121, 0
  %v466 = vsel %vm311, %v123, 0
  %v469 = vsel %vm311, %v125, 0
  %v472 = vsel %vm311, %v127, 0
  %v475 = vsel %vm311, %v129, 0
  %v478 = vsel %vm311, %v131, 0
  %v481 = vsel %vm311, %v133, 0
  %v484 = vsel %vm311, %v135, 0
  %v487 = vsel %vm311, %v137, 0
  %v490 = vsel %vm311, %v139, 0
  %v493 = vsel %vm311, %v141, 0
  %v496 = vsel %vm311, %v143, 0
  %v499 = vsel %vm311, %v145, 0
  %v502 = vsel %vm311, %v147, 0
  %v505 = vsel %vm311, %v149, 0
  %v508 = vsel %vm311, %v151, 0
  %v511 = vsel %vm311, %v153, 0
  %v514 = vsel %vm311, %v155, 0
  %v517 = vsel %vm311, %v157, 0
  %v520 = vsel %vm311, %v159, 0
  %v523 = vsel %vm311, %v161, 0
  %v526 = vsel %vm311, %v163, 0
  %v529 = vsel %vm311, %v165, 0
  %v532 = vsel %vm311, %v167, 0
  %v535 = vsel %vm311, %v169, 0
  %v538 = vsel %vm311, %v171, 0
  %v541 = vsel %vm311, %v173, 0
  %v544 = vsel %vm311, %v175, 0
  %v547 = vsel %vm311, %v177, 0
  %v550 = vsel %vm311, %v179, 0
  %v553 = vsel %vm311, %v181, 0
  %v556 = vsel %vm311, %v183, 0
  %v559 = vsel %vm311, %v185, 0
  %v562 = vsel %vm311, %v187, 0
  %v565 = vsel %vm311, %v189, 0
  %v568 = vsel %vm311, %v191, 0
  %v571 = vsel %vm311, %v193, 0
  %v574 = vsel %vm311, %v195, 0
  %v577 = vsel %vm311, %v197, 0
  %v580 = vsel %vm311, %v199, 0
  %v583 = vsel %vm311, %v201, 0
  %v586 = vsel %vm311, %v203, 0
  %v589 = vsel %vm311, %v205, 0
  %v592 = vsel %vm311, %v207, 0
  %v595 = vsel %vm311, %v209, 0
  %v598 = vsel %vm311, %v211, 0
  %v601 = vsel %vm311, %v213, 0
  %v604 = vsel %vm311, %v215, 0
  %v607 = vsel %vm311, %v217, 0
  %v610 = vsel %vm311, %v219, 0
  %v613 = vsel %vm311, %v221, 0
  %v616 = vsel %vm311, %v223, 0
  %v619 = vsel %vm311, %v225, 0
  %v622 = vsel %vm311, %v227, 0
  %v625 = vsel %vm311, %v229, 0
  %v628 = vsel %vm311, %v231, 0
  %v631 = vsel %vm311, %v233, 0
  %v634 = vsel %vm311, %v235, 0
  %v637 = vsel %vm311, %v237, 0
  %v640 = vsel %vm311, %v239, 0
  %v643 = vsel %vm311, %v241, 0
  %v646 = vsel %vm311, %v243, 0
  %v649 = vsel %vm311, %v245, 0
  %v652 = vsel %vm311, %v247, 0
  %v655 = vsel %vm311, %v249, 0
  %v658 = vsel %vm311, %v251, 0
  %v661 = vsel %vm311, %v253, 0
  %v664 = vsel %vm311, %v255, 0
  %v667 = vsel %vm311, %v257, 0
  %v670 = vsel %vm311, %v259, 0
  %672 = vmatprep.subr.mxu0 0.0
  %673 = vmatpush1.msra.mxu0 %v290
  %674 = vmatprep.subr.mxu0 0.0
  %675 = vmatpush1.msra.mxu0 %v291
  %676 = vmatprep.subr.mxu0 0.0
  %677 = vmatpush1.msra.mxu0 %v292
  %678 = vmatprep.subr.mxu0 0.0
  %679 = vmatpush1.msra.mxu0 %v293
  %680 = vmatprep.subr.mxu0 0.0
  %681 = vmatpush1.msra.mxu0 %v294
  %682 = vmatprep.subr.mxu0 0.0
  %683 = vmatpush1.msra.mxu0 %v295
  %684 = vmatprep.subr.mxu0 0.0
  %685 = vmatpush1.msra.mxu0 %v296
  %686 = vmatprep.subr.mxu0 0.0
  %687 = vmatpush1.msra.mxu0 %v297
  %688 = vmatprep.subr.mxu0 0.0
  %689 = vmatpush1.msra.mxu0 %v298
  %690 = vmatprep.subr.mxu0 0.0
  %691 = vmatpush1.msra.mxu0 %v299
  %692 = vmatprep.subr.mxu0 0.0
  %693 = vmatpush1.msra.mxu0 %v300
  %694 = vmatprep.subr.mxu0 0.0
  %695 = vmatpush1.msra.mxu0 %v301
  %696 = vmatprep.subr.mxu0 0.0
  %697 = vmatpush1.msra.mxu0 %v302
  %698 = vmatprep.subr.mxu0 0.0
  %699 = vmatpush1.msra.mxu0 %v303
  %700 = vmatprep.subr.mxu0 0.0
  %701 = vmatpush1.msra.mxu0 %v304
  %702 = vmatprep.subr.mxu0 0.0
  %703 = vmatpush1.msra.mxu0 %v305
  %704 = vmatprep.subr.mxu0 0.0
  %705 = vmatpush1.msra.mxu0 %v306
  %706 = vmatprep.subr.mxu0 0.0
  %707 = vmatpush1.msra.mxu0 %v307
  %708 = vmatprep.subr.mxu0 0.0
  %709 = vmatpush1.msra.mxu0 %v308
  %710 = vmatprep.subr.mxu0 0.0
  %711 = vmatpush1.msra.mxu0 %v309
  %712 = vmatprep.subr.mxu0 0.0
  %713 = vmatpush1.msra.mxu0 %v310
  %714 = vmatprep.subr.mxu0 0.0
  %715 = vmatpush1.msra.mxu0 0.0
  %716 = vmatprep.subr.mxu0 0.0
  %717 = vmatpush1.msra.mxu0 0.0
  %718 = vmatprep.subr.mxu0 0.0
  %719 = vmatpush1.msra.mxu0 0.0
  %720 = vmatprep.subr.mxu0 0.0
  %721 = vmatpush1.msra.mxu0 0.0
  %722 = vmatprep.subr.mxu0 0.0
  %723 = vmatpush1.msra.mxu0 0.0
  %724 = vmatprep.subr.mxu0 0.0
  %725 = vmatpush1.msra.mxu0 0.0
  %726 = vmatprep.subr.mxu0 0.0
  %727 = vmatpush1.msra.mxu0 0.0
  %728 = vmatprep.subr.mxu0 0.0
  %729 = vmatpush1.msra.mxu0 0.0
  %730 = vmatprep.subr.mxu0 0.0
  %731 = vmatpush1.msra.mxu0 0.0
  %732 = vmatprep.subr.mxu0 0.0
  %733 = vmatpush1.msra.mxu0 0.0
  %734 = vmatprep.subr.mxu0 0.0
  %735 = vmatpush1.msra.mxu0 0.0
  %736 = vmatprep.mubr.f32.mxu0 %v313
  %737 = vmatmul.mubr.f32.gmra.mrb[0].mxu0 %v20
  %v738 = vpop.f32.mrb[0].mxu0
  %v739 = vadd.f32 0.0, %v738
  %v740 = vpop.f32.mrb[0].mxu0
  %741 = vmatprep.mubr.f32.mxu0 %v316
  %742 = vmatmul.mubr.f32.gmra.mrb[0].mxu0 %v22
  %v743 = vpop.f32.mrb[0].mxu0
  %v744 = vadd.f32 0.0, %v743
  %v745 = vpop.f32.mrb[0].mxu0
  %746 = vmatprep.mubr.f32.mxu0 %v319
  %747 = vmatmul.mubr.f32.gmra.mrb[0].mxu0 %v24
  %v748 = vpop.f32.mrb[0].mxu0
  %v749 = vadd.f32 0.0, %v748
  %v750 = vpop.f32.mrb[0].mxu0
  %751 = vmatprep.mubr.f32.mxu0 %v322
  %752 = vmatmul.mubr.f32.gmra.mrb[0].mxu0 %v26
  %v753 = vpop.f32.mrb[0].mxu0
  %v754 = vadd.f32 0.0, %v753
  %v755 = vpop.f32.mrb[0].mxu0
  %756 = vmatprep.mubr.f32.mxu0 %v325
  %757 = vmatmul.mubr.f32.gmra.mrb[0].mxu0 %v28
  %v758 = vpop.f32.mrb[0].mxu0
  %v759 = vadd.f32 0.0, %v758
  %v760 = vpop.f32.mrb[0].mxu0
  %761 = vmatprep.mubr.f32.mxu0 %v328
  %762 = vmatmul.mubr.f32.gmra.mrb[0].mxu0 %v30
  %v763 = vpop.f32.mrb[0].mxu0
  %v764 = vadd.f32 0.0, %v763
  %v765 = vpop.f32.mrb[0].mxu0
  %766 = vmatprep.mubr.f32.mxu0 %v331
  %767 = vmatmul.mubr.f32.gmra.mrb[0].mxu0 %v32
  %v768 = vpop.f32.mrb[0].mxu0
  %v769 = vadd.f32 0.0, %v768
  %v770 = vpop.f32.mrb[0].mxu0
  %771 = vmatprep.mubr.f32.mxu0 %v334
  %772 = vmatmul.mubr.f32.gmra.mrb[0].mxu0 %v34
  %v773 = vpop.f32.mrb[0].mxu0
  %v774 = vadd.f32 0.0, %v773
  %v775 = vpop.f32.mrb[0].mxu0
  %776 = vmatprep.mubr.f32.mxu0 %v337
  %777 = vmatmul.mubr.f32.gmra.mrb[0].mxu0 %v36
  %v778 = vpop.f32.mrb[0].mxu0
  %v779 = vadd.f32 0.0, %v778
  %v780 = vpop.f32.mrb[0].mxu0
  %781 = vmatprep.mubr.f32.mxu0 %v340
  %782 = vmatmul.mubr.f32.gmra.mrb[0].mxu0 %v38
  %v783 = vpop.f32.mrb[0].mxu0
  %v784 = vadd.f32 0.0, %v783
  %v785 = vpop.f32.mrb[0].mxu0
  %786 = vmatprep.mubr.f32.mxu0 %v343
  %787 = vmatmul.mubr.f32.gmra.mrb[0].mxu0 %v40
  %v788 = vpop.f32.mrb[0].mxu0
  %v789 = vadd.f32 0.0, %v788
  %v790 = vpop.f32.mrb[0].mxu0
  %791 = vmatprep.mubr.f32.mxu0 %v346
  %792 = vmatmul.mubr.f32.gmra.mrb[0].mxu0 %v42
  %v793 = vpop.f32.mrb[0].mxu0
  %v794 = vadd.f32 0.0, %v793
  %v795 = vpop.f32.mrb[0].mxu0
  %796 = vmatprep.mubr.f32.mxu0 %v349
  %797 = vmatmul.mubr.f32.gmra.mrb[0].mxu0 %v44
  %v798 = vpop.f32.mrb[0].mxu0
  %v799 = vadd.f32 0.0, %v798
  %v800 = vpop.f32.mrb[0].mxu0
  %801 = vmatprep.mubr.f32.mxu0 %v352
  %802 = vmatmul.mubr.f32.gmra.mrb[0].mxu0 %v46
  %v803 = vpop.f32.mrb[0].mxu0
  %v804 = vadd.f32 0.0, %v803
  %v805 = vpop.f32.mrb[0].mxu0
  %806 = vmatprep.mubr.f32.mxu0 %v355
  %807 = vmatmul.mubr.f32.gmra.mrb[0].mxu0 %v48
  %v808 = vpop.f32.mrb[0].mxu0
  %v809 = vadd.f32 0.0, %v808
  %v810 = vpop.f32.mrb[0].mxu0
  %811 = vmatprep.mubr.f32.mxu0 %v358
  %812 = vmatmul.mubr.f32.gmra.mrb[0].mxu0 %v50
  %v813 = vpop.f32.mrb[0].mxu0
  %v814 = vadd.f32 0.0, %v813
  %v815 = vpop.f32.mrb[0].mxu0
  %816 = vmatprep.mubr.f32.mxu0 %v361
  %817 = vmatmul.mubr.f32.gmra.mrb[0].mxu0 %v52
  %v818 = vpop.f32.mrb[0].mxu0
  %v819 = vadd.f32 0.0, %v818
  %v820 = vpop.f32.mrb[0].mxu0
  %821 = vmatprep.mubr.f32.mxu0 %v364
  %822 = vmatmul.mubr.f32.gmra.mrb[0].mxu0 %v54
  %v823 = vpop.f32.mrb[0].mxu0
  %v824 = vadd.f32 0.0, %v823
  %v825 = vpop.f32.mrb[0].mxu0
  %826 = vmatprep.mubr.f32.mxu0 %v367
  %827 = vmatmul.mubr.f32.gmra.mrb[0].mxu0 %v56
  %v828 = vpop.f32.mrb[0].mxu0
  %v829 = vadd.f32 0.0, %v828
  %v830 = vpop.f32.mrb[0].mxu0
  %831 = vmatprep.mubr.f32.mxu0 %v370
  %832 = vmatmul.mubr.f32.gmra.mrb[0].mxu0 %v58
  %v833 = vpop.f32.mrb[0].mxu0
  %v834 = vadd.f32 0.0, %v833
  %v835 = vpop.f32.mrb[0].mxu0
  %836 = vmatprep.mubr.f32.mxu0 %v373
  %837 = vmatmul.mubr.f32.gmra.mrb[0].mxu0 %v60
  %v838 = vpop.f32.mrb[0].mxu0
  %v839 = vadd.f32 0.0, %v838
  %v840 = vpop.f32.mrb[0].mxu0
  %841 = vmatprep.mubr.f32.mxu0 %v376
  %842 = vmatmul.mubr.f32.gmra.mrb[0].mxu0 %v62
  %v843 = vpop.f32.mrb[0].mxu0
  %v844 = vadd.f32 0.0, %v843
  %v845 = vpop.f32.mrb[0].mxu0
  %846 = vmatprep.mubr.f32.mxu0 %v379
  %847 = vmatmul.mubr.f32.gmra.mrb[0].mxu0 %v64
  %v848 = vpop.f32.mrb[0].mxu0
  %v849 = vadd.f32 0.0, %v848
  %v850 = vpop.f32.mrb[0].mxu0
  %851 = vmatprep.mubr.f32.mxu0 %v382
  %852 = vmatmul.mubr.f32.gmra.mrb[0].mxu0 %v66
  %v853 = vpop.f32.mrb[0].mxu0
  %v854 = vadd.f32 0.0, %v853
  %v855 = vpop.f32.mrb[0].mxu0
  %856 = vmatprep.mubr.f32.mxu0 %v385
  %857 = vmatmul.mubr.f32.gmra.mrb[0].mxu0 %v68
  %v858 = vpop.f32.mrb[0].mxu0
  %v859 = vadd.f32 0.0, %v858
  %v860 = vpop.f32.mrb[0].mxu0
  %861 = vmatprep.mubr.f32.mxu0 %v388
  %862 = vmatmul.mubr.f32.gmra.mrb[0].mxu0 %v70
  %v863 = vpop.f32.mrb[0].mxu0
  %v864 = vadd.f32 0.0, %v863
  %v865 = vpop.f32.mrb[0].mxu0
  %866 = vmatprep.mubr.f32.mxu0 %v391
  %867 = vmatmul.mubr.f32.gmra.mrb[0].mxu0 %v72
  %v868 = vpop.f32.mrb[0].mxu0
  %v869 = vadd.f32 0.0, %v868
  %v870 = vpop.f32.mrb[0].mxu0
  %871 = vmatprep.mubr.f32.mxu0 %v394
  %872 = vmatmul.mubr.f32.gmra.mrb[0].mxu0 %v74
  %v873 = vpop.f32.mrb[0].mxu0
  %v874 = vadd.f32 0.0, %v873
  %v875 = vpop.f32.mrb[0].mxu0
  %876 = vmatprep.mubr.f32.mxu0 %v397
  %877 = vmatmul.mubr.f32.gmra.mrb[0].mxu0 %v76
  %v878 = vpop.f32.mrb[0].mxu0
  %v879 = vadd.f32 0.0, %v878
  %v880 = vpop.f32.mrb[0].mxu0
  %881 = vmatprep.mubr.f32.mxu0 %v400
  %882 = vmatmul.mubr.f32.gmra.mrb[0].mxu0 %v78
  %v883 = vpop.f32.mrb[0].mxu0
  %v884 = vadd.f32 0.0, %v883
  %v885 = vpop.f32.mrb[0].mxu0
  %886 = vmatprep.mubr.f32.mxu0 %v403
  %887 = vmatmul.mubr.f32.gmra.mrb[0].mxu0 %v80
  %v888 = vpop.f32.mrb[0].mxu0
  %v889 = vadd.f32 0.0, %v888
  %v890 = vpop.f32.mrb[0].mxu0
  %891 = vmatprep.mubr.f32.mxu0 %v406
  %892 = vmatmul.mubr.f32.gmra.mrb[0].mxu0 %v82
  %v893 = vpop.f32.mrb[0].mxu0
  %v894 = vadd.f32 0.0, %v893
  %v895 = vpop.f32.mrb[0].mxu0
  %896 = vmatprep.mubr.f32.mxu0 %v409
  %897 = vmatmul.mubr.f32.gmra.mrb[0].mxu0 %v84
  %v898 = vpop.f32.mrb[0].mxu0
  %v899 = vadd.f32 0.0, %v898
  %v900 = vpop.f32.mrb[0].mxu0
  %901 = vmatprep.mubr.f32.mxu0 %v412
  %902 = vmatmul.mubr.f32.gmra.mrb[0].mxu0 %v86
  %v903 = vpop.f32.mrb[0].mxu0
  %v904 = vadd.f32 0.0, %v903
  %v905 = vpop.f32.mrb[0].mxu0
  %906 = vmatprep.mubr.f32.mxu0 %v415
  %907 = vmatmul.mubr.f32.gmra.mrb[0].mxu0 %v88
  %v908 = vpop.f32.mrb[0].mxu0
  %v909 = vadd.f32 0.0, %v908
  %v910 = vpop.f32.mrb[0].mxu0
  %911 = vmatprep.mubr.f32.mxu0 %v418
  %912 = vmatmul.mubr.f32.gmra.mrb[0].mxu0 %v90
  %v913 = vpop.f32.mrb[0].mxu0
  %v914 = vadd.f32 0.0, %v913
  %v915 = vpop.f32.mrb[0].mxu0
  %916 = vmatprep.mubr.f32.mxu0 %v421
  %917 = vmatmul.mubr.f32.gmra.mrb[0].mxu0 %v92
  %v918 = vpop.f32.mrb[0].mxu0
  %v919 = vadd.f32 0.0, %v918
  %v920 = vpop.f32.mrb[0].mxu0
  %921 = vmatprep.mubr.f32.mxu0 %v424
  %922 = vmatmul.mubr.f32.gmra.mrb[0].mxu0 %v94
  %v923 = vpop.f32.mrb[0].mxu0
  %v924 = vadd.f32 0.0, %v923
  %v925 = vpop.f32.mrb[0].mxu0
  %926 = vmatprep.mubr.f32.mxu0 %v427
  %927 = vmatmul.mubr.f32.gmra.mrb[0].mxu0 %v96
  %v928 = vpop.f32.mrb[0].mxu0
  %v929 = vadd.f32 0.0, %v928
  %v930 = vpop.f32.mrb[0].mxu0
  %931 = vmatprep.mubr.f32.mxu0 %v430
  %932 = vmatmul.mubr.f32.gmra.mrb[0].mxu0 %v98
  %v933 = vpop.f32.mrb[0].mxu0
  %v934 = vadd.f32 0.0, %v933
  %v935 = vpop.f32.mrb[0].mxu0
  %936 = vmatprep.mubr.f32.mxu0 %v433
  %937 = vmatmul.mubr.f32.gmra.mrb[0].mxu0 %v100
  %v938 = vpop.f32.mrb[0].mxu0
  %v939 = vadd.f32 0.0, %v938
  %v940 = vpop.f32.mrb[0].mxu0
  %941 = vmatprep.mubr.f32.mxu0 %v436
  %942 = vmatmul.mubr.f32.gmra.mrb[0].mxu0 %v102
  %v943 = vpop.f32.mrb[0].mxu0
  %v944 = vadd.f32 0.0, %v943
  %v945 = vpop.f32.mrb[0].mxu0
  %946 = vmatprep.mubr.f32.mxu0 %v439
  %947 = vmatmul.mubr.f32.gmra.mrb[0].mxu0 %v104
  %v948 = vpop.f32.mrb[0].mxu0
  %v949 = vadd.f32 0.0, %v948
  %v950 = vpop.f32.mrb[0].mxu0
  %951 = vmatprep.mubr.f32.mxu0 %v442
  %952 = vmatmul.mubr.f32.gmra.mrb[0].mxu0 %v106
  %v953 = vpop.f32.mrb[0].mxu0
  %v954 = vadd.f32 0.0, %v953
  %v955 = vpop.f32.mrb[0].mxu0
  %956 = vmatprep.mubr.f32.mxu0 %v445
  %957 = vmatmul.mubr.f32.gmra.mrb[0].mxu0 %v108
  %v958 = vpop.f32.mrb[0].mxu0
  %v959 = vadd.f32 0.0, %v958
  %v960 = vpop.f32.mrb[0].mxu0
  %961 = vmatprep.mubr.f32.mxu0 %v448
  %962 = vmatmul.mubr.f32.gmra.mrb[0].mxu0 %v110
  %v963 = vpop.f32.mrb[0].mxu0
  %v964 = vadd.f32 0.0, %v963
  %v965 = vpop.f32.mrb[0].mxu0
  %966 = vmatprep.mubr.f32.mxu0 %v451
  %967 = vmatmul.mubr.f32.gmra.mrb[0].mxu0 %v112
  %v968 = vpop.f32.mrb[0].mxu0
  %v969 = vadd.f32 0.0, %v968
  %v970 = vpop.f32.mrb[0].mxu0
  %971 = vmatprep.mubr.f32.mxu0 %v454
  %972 = vmatmul.mubr.f32.gmra.mrb[0].mxu0 %v114
  %v973 = vpop.f32.mrb[0].mxu0
  %v974 = vadd.f32 0.0, %v973
  %v975 = vpop.f32.mrb[0].mxu0
  %976 = vmatprep.mubr.f32.mxu0 %v457
  %977 = vmatmul.mubr.f32.gmra.mrb[0].mxu0 %v116
  %v978 = vpop.f32.mrb[0].mxu0
  %v979 = vadd.f32 0.0, %v978
  %v980 = vpop.f32.mrb[0].mxu0
  %981 = vmatprep.mubr.f32.mxu0 %v460
  %982 = vmatmul.mubr.f32.gmra.mrb[0].mxu0 %v118
  %v983 = vpop.f32.mrb[0].mxu0
  %v984 = vadd.f32 0.0, %v983
  %v985 = vpop.f32.mrb[0].mxu0
  %986 = vmatprep.mubr.f32.mxu0 %v463
  %987 = vmatmul.mubr.f32.gmra.mrb[0].mxu0 %v120
  %v988 = vpop.f32.mrb[0].mxu0
  %v989 = vadd.f32 0.0, %v988
  %v990 = vpop.f32.mrb[0].mxu0
  %991 = vmatprep.mubr.f32.mxu0 %v466
  %992 = vmatmul.mubr.f32.gmra.mrb[0].mxu0 %v122
  %v993 = vpop.f32.mrb[0].mxu0
  %v994 = vadd.f32 0.0, %v993
  %v995 = vpop.f32.mrb[0].mxu0
  %996 = vmatprep.mubr.f32.mxu0 %v469
  %997 = vmatmul.mubr.f32.gmra.mrb[0].mxu0 %v124
  %v998 = vpop.f32.mrb[0].mxu0
  %v999 = vadd.f32 0.0, %v998
  %v1000 = vpop.f32.mrb[0].mxu0
  %1001 = vmatprep.mubr.f32.mxu0 %v472
  %1002 = vmatmul.mubr.f32.gmra.mrb[0].mxu0 %v126
  %v1003 = vpop.f32.mrb[0].mxu0
  %v1004 = vadd.f32 0.0, %v1003
  %v1005 = vpop.f32.mrb[0].mxu0
  %1006 = vmatprep.mubr.f32.mxu0 %v475
  %1007 = vmatmul.mubr.f32.gmra.mrb[0].mxu0 %v128
  %v1008 = vpop.f32.mrb[0].mxu0
  %v1009 = vadd.f32 0.0, %v1008
  %v1010 = vpop.f32.mrb[0].mxu0
  %1011 = vmatprep.mubr.f32.mxu0 %v478
  %1012 = vmatmul.mubr.f32.gmra.mrb[0].mxu0 %v130
  %v1013 = vpop.f32.mrb[0].mxu0
  %v1014 = vadd.f32 0.0, %v1013
  %v1015 = vpop.f32.mrb[0].mxu0
  %1016 = vmatprep.mubr.f32.mxu0 %v481
  %1017 = vmatmul.mubr.f32.gmra.mrb[0].mxu0 %v132
  %v1018 = vpop.f32.mrb[0].mxu0
  %v1019 = vadd.f32 0.0, %v1018
  %v1020 = vpop.f32.mrb[0].mxu0
  %1021 = vmatprep.mubr.f32.mxu0 %v484
  %1022 = vmatmul.mubr.f32.gmra.mrb[0].mxu0 %v134
  %v1023 = vpop.f32.mrb[0].mxu0
  %v1024 = vadd.f32 0.0, %v1023
  %v1025 = vpop.f32.mrb[0].mxu0
  %1026 = vmatprep.mubr.f32.mxu0 %v487
  %1027 = vmatmul.mubr.f32.gmra.mrb[0].mxu0 %v136
  %v1028 = vpop.f32.mrb[0].mxu0
  %v1029 = vadd.f32 0.0, %v1028
  %v1030 = vpop.f32.mrb[0].mxu0
  %1031 = vmatprep.mubr.f32.mxu0 %v490
  %1032 = vmatmul.mubr.f32.gmra.mrb[0].mxu0 %v138
  %v1033 = vpop.f32.mrb[0].mxu0
  %v1034 = vadd.f32 0.0, %v1033
  %v1035 = vpop.f32.mrb[0].mxu0
  %1036 = vmatprep.mubr.f32.mxu0 %v493
  %1037 = vmatmul.mubr.f32.gmra.mrb[0].mxu0 %v140
  %v1038 = vpop.f32.mrb[0].mxu0
  %v1039 = vadd.f32 0.0, %v1038
  %v1040 = vpop.f32.mrb[0].mxu0
  %1041 = vmatprep.mubr.f32.mxu0 %v496
  %1042 = vmatmul.mubr.f32.gmra.mrb[0].mxu0 %v142
  %v1043 = vpop.f32.mrb[0].mxu0
  %v1044 = vadd.f32 0.0, %v1043
  %v1045 = vpop.f32.mrb[0].mxu0
  %1046 = vmatprep.mubr.f32.mxu0 %v499
  %1047 = vmatmul.mubr.f32.gmra.mrb[0].mxu0 %v144
  %v1048 = vpop.f32.mrb[0].mxu0
  %v1049 = vadd.f32 0.0, %v1048
  %v1050 = vpop.f32.mrb[0].mxu0
  %1051 = vmatprep.mubr.f32.mxu0 %v502
  %1052 = vmatmul.mubr.f32.gmra.mrb[0].mxu0 %v146
  %v1053 = vpop.f32.mrb[0].mxu0
  %v1054 = vadd.f32 0.0, %v1053
  %v1055 = vpop.f32.mrb[0].mxu0
  %1056 = vmatprep.mubr.f32.mxu0 %v505
  %1057 = vmatmul.mubr.f32.gmra.mrb[0].mxu0 %v148
  %v1058 = vpop.f32.mrb[0].mxu0
  %v1059 = vadd.f32 0.0, %v1058
  %v1060 = vpop.f32.mrb[0].mxu0
  %1061 = vmatprep.mubr.f32.mxu0 %v508
  %1062 = vmatmul.mubr.f32.gmra.mrb[0].mxu0 %v150
  %v1063 = vpop.f32.mrb[0].mxu0
  %v1064 = vadd.f32 0.0, %v1063
  %v1065 = vpop.f32.mrb[0].mxu0
  %1066 = vmatprep.mubr.f32.mxu0 %v511
  %1067 = vmatmul.mubr.f32.gmra.mrb[0].mxu0 %v152
  %v1068 = vpop.f32.mrb[0].mxu0
  %v1069 = vadd.f32 0.0, %v1068
  %v1070 = vpop.f32.mrb[0].mxu0
  %1071 = vmatprep.mubr.f32.mxu0 %v514
  %1072 = vmatmul.mubr.f32.gmra.mrb[0].mxu0 %v154
  %v1073 = vpop.f32.mrb[0].mxu0
  %v1074 = vadd.f32 0.0, %v1073
  %v1075 = vpop.f32.mrb[0].mxu0
  %1076 = vmatprep.mubr.f32.mxu0 %v517
  %1077 = vmatmul.mubr.f32.gmra.mrb[0].mxu0 %v156
  %v1078 = vpop.f32.mrb[0].mxu0
  %v1079 = vadd.f32 0.0, %v1078
  %v1080 = vpop.f32.mrb[0].mxu0
  %1081 = vmatprep.mubr.f32.mxu0 %v520
  %1082 = vmatmul.mubr.f32.gmra.mrb[0].mxu0 %v158
  %v1083 = vpop.f32.mrb[0].mxu0
  %v1084 = vadd.f32 0.0, %v1083
  %v1085 = vpop.f32.mrb[0].mxu0
  %1086 = vmatprep.mubr.f32.mxu0 %v523
  %1087 = vmatmul.mubr.f32.gmra.mrb[0].mxu0 %v160
  %v1088 = vpop.f32.mrb[0].mxu0
  %v1089 = vadd.f32 0.0, %v1088
  %v1090 = vpop.f32.mrb[0].mxu0
  %1091 = vmatprep.mubr.f32.mxu0 %v526
  %1092 = vmatmul.mubr.f32.gmra.mrb[0].mxu0 %v162
  %v1093 = vpop.f32.mrb[0].mxu0
  %v1094 = vadd.f32 0.0, %v1093
  %v1095 = vpop.f32.mrb[0].mxu0
  %1096 = vmatprep.mubr.f32.mxu0 %v529
  %1097 = vmatmul.mubr.f32.gmra.mrb[0].mxu0 %v164
  %v1098 = vpop.f32.mrb[0].mxu0
  %v1099 = vadd.f32 0.0, %v1098
  %v1100 = vpop.f32.mrb[0].mxu0
  %1101 = vmatprep.mubr.f32.mxu0 %v532
  %1102 = vmatmul.mubr.f32.gmra.mrb[0].mxu0 %v166
  %v1103 = vpop.f32.mrb[0].mxu0
  %v1104 = vadd.f32 0.0, %v1103
  %v1105 = vpop.f32.mrb[0].mxu0
  %1106 = vmatprep.mubr.f32.mxu0 %v535
  %1107 = vmatmul.mubr.f32.gmra.mrb[0].mxu0 %v168
  %v1108 = vpop.f32.mrb[0].mxu0
  %v1109 = vadd.f32 0.0, %v1108
  %v1110 = vpop.f32.mrb[0].mxu0
  %1111 = vmatprep.mubr.f32.mxu0 %v538
  %1112 = vmatmul.mubr.f32.gmra.mrb[0].mxu0 %v170
  %v1113 = vpop.f32.mrb[0].mxu0
  %v1114 = vadd.f32 0.0, %v1113
  %v1115 = vpop.f32.mrb[0].mxu0
  %1116 = vmatprep.mubr.f32.mxu0 %v541
  %1117 = vmatmul.mubr.f32.gmra.mrb[0].mxu0 %v172
  %v1118 = vpop.f32.mrb[0].mxu0
  %v1119 = vadd.f32 0.0, %v1118
  %v1120 = vpop.f32.mrb[0].mxu0
  %1121 = vmatprep.mubr.f32.mxu0 %v544
  %1122 = vmatmul.mubr.f32.gmra.mrb[0].mxu0 %v174
  %v1123 = vpop.f32.mrb[0].mxu0
  %v1124 = vadd.f32 0.0, %v1123
  %v1125 = vpop.f32.mrb[0].mxu0
  %1126 = vmatprep.mubr.f32.mxu0 %v547
  %1127 = vmatmul.mubr.f32.gmra.mrb[0].mxu0 %v176
  %v1128 = vpop.f32.mrb[0].mxu0
  %v1129 = vadd.f32 0.0, %v1128
  %v1130 = vpop.f32.mrb[0].mxu0
  %1131 = vmatprep.mubr.f32.mxu0 %v550
  %1132 = vmatmul.mubr.f32.gmra.mrb[0].mxu0 %v178
  %v1133 = vpop.f32.mrb[0].mxu0
  %v1134 = vadd.f32 0.0, %v1133
  %v1135 = vpop.f32.mrb[0].mxu0
  %1136 = vmatprep.mubr.f32.mxu0 %v553
  %1137 = vmatmul.mubr.f32.gmra.mrb[0].mxu0 %v180
  %v1138 = vpop.f32.mrb[0].mxu0
  %v1139 = vadd.f32 0.0, %v1138
  %v1140 = vpop.f32.mrb[0].mxu0
  %1141 = vmatprep.mubr.f32.mxu0 %v556
  %1142 = vmatmul.mubr.f32.gmra.mrb[0].mxu0 %v182
  %v1143 = vpop.f32.mrb[0].mxu0
  %v1144 = vadd.f32 0.0, %v1143
  %v1145 = vpop.f32.mrb[0].mxu0
  %1146 = vmatprep.mubr.f32.mxu0 %v559
  %1147 = vmatmul.mubr.f32.gmra.mrb[0].mxu0 %v184
  %v1148 = vpop.f32.mrb[0].mxu0
  %v1149 = vadd.f32 0.0, %v1148
  %v1150 = vpop.f32.mrb[0].mxu0
  %1151 = vmatprep.mubr.f32.mxu0 %v562
  %1152 = vmatmul.mubr.f32.gmra.mrb[0].mxu0 %v186
  %v1153 = vpop.f32.mrb[0].mxu0
  %v1154 = vadd.f32 0.0, %v1153
  %v1155 = vpop.f32.mrb[0].mxu0
  %1156 = vmatprep.mubr.f32.mxu0 %v565
  %1157 = vmatmul.mubr.f32.gmra.mrb[0].mxu0 %v188
  %v1158 = vpop.f32.mrb[0].mxu0
  %v1159 = vadd.f32 0.0, %v1158
  %v1160 = vpop.f32.mrb[0].mxu0
  %1161 = vmatprep.mubr.f32.mxu0 %v568
  %1162 = vmatmul.mubr.f32.gmra.mrb[0].mxu0 %v190
  %v1163 = vpop.f32.mrb[0].mxu0
  %v1164 = vadd.f32 0.0, %v1163
  %v1165 = vpop.f32.mrb[0].mxu0
  %1166 = vmatprep.mubr.f32.mxu0 %v571
  %1167 = vmatmul.mubr.f32.gmra.mrb[0].mxu0 %v192
  %v1168 = vpop.f32.mrb[0].mxu0
  %v1169 = vadd.f32 0.0, %v1168
  %v1170 = vpop.f32.mrb[0].mxu0
  %1171 = vmatprep.mubr.f32.mxu0 %v574
  %1172 = vmatmul.mubr.f32.gmra.mrb[0].mxu0 %v194
  %v1173 = vpop.f32.mrb[0].mxu0
  %v1174 = vadd.f32 0.0, %v1173
  %v1175 = vpop.f32.mrb[0].mxu0
  %1176 = vmatprep.mubr.f32.mxu0 %v577
  %1177 = vmatmul.mubr.f32.gmra.mrb[0].mxu0 %v196
  %v1178 = vpop.f32.mrb[0].mxu0
  %v1179 = vadd.f32 0.0, %v1178
  %v1180 = vpop.f32.mrb[0].mxu0
  %1181 = vmatprep.mubr.f32.mxu0 %v580
  %1182 = vmatmul.mubr.f32.gmra.mrb[0].mxu0 %v198
  %v1183 = vpop.f32.mrb[0].mxu0
  %v1184 = vadd.f32 0.0, %v1183
  %v1185 = vpop.f32.mrb[0].mxu0
  %1186 = vmatprep.mubr.f32.mxu0 %v583
  %1187 = vmatmul.mubr.f32.gmra.mrb[0].mxu0 %v200
  %v1188 = vpop.f32.mrb[0].mxu0
  %v1189 = vadd.f32 0.0, %v1188
  %v1190 = vpop.f32.mrb[0].mxu0
  %1191 = vmatprep.mubr.f32.mxu0 %v586
  %1192 = vmatmul.mubr.f32.gmra.mrb[0].mxu0 %v202
  %v1193 = vpop.f32.mrb[0].mxu0
  %v1194 = vadd.f32 0.0, %v1193
  %v1195 = vpop.f32.mrb[0].mxu0
  %1196 = vmatprep.mubr.f32.mxu0 %v589
  %1197 = vmatmul.mubr.f32.gmra.mrb[0].mxu0 %v204
  %v1198 = vpop.f32.mrb[0].mxu0
  %v1199 = vadd.f32 0.0, %v1198
  %v1200 = vpop.f32.mrb[0].mxu0
  %1201 = vmatprep.mubr.f32.mxu0 %v592
  %1202 = vmatmul.mubr.f32.gmra.mrb[0].mxu0 %v206
  %v1203 = vpop.f32.mrb[0].mxu0
  %v1204 = vadd.f32 0.0, %v1203
  %v1205 = vpop.f32.mrb[0].mxu0
  %1206 = vmatprep.mubr.f32.mxu0 %v595
  %1207 = vmatmul.mubr.f32.gmra.mrb[0].mxu0 %v208
  %v1208 = vpop.f32.mrb[0].mxu0
  %v1209 = vadd.f32 0.0, %v1208
  %v1210 = vpop.f32.mrb[0].mxu0
  %1211 = vmatprep.mubr.f32.mxu0 %v598
  %1212 = vmatmul.mubr.f32.gmra.mrb[0].mxu0 %v210
  %v1213 = vpop.f32.mrb[0].mxu0
  %v1214 = vadd.f32 0.0, %v1213
  %v1215 = vpop.f32.mrb[0].mxu0
  %1216 = vmatprep.mubr.f32.mxu0 %v601
  %1217 = vmatmul.mubr.f32.gmra.mrb[0].mxu0 %v212
  %v1218 = vpop.f32.mrb[0].mxu0
  %v1219 = vadd.f32 0.0, %v1218
  %v1220 = vpop.f32.mrb[0].mxu0
  %1221 = vmatprep.mubr.f32.mxu0 %v604
  %1222 = vmatmul.mubr.f32.gmra.mrb[0].mxu0 %v214
  %v1223 = vpop.f32.mrb[0].mxu0
  %v1224 = vadd.f32 0.0, %v1223
  %v1225 = vpop.f32.mrb[0].mxu0
  %1226 = vmatprep.mubr.f32.mxu0 %v607
  %1227 = vmatmul.mubr.f32.gmra.mrb[0].mxu0 %v216
  %v1228 = vpop.f32.mrb[0].mxu0
  %v1229 = vadd.f32 0.0, %v1228
  %v1230 = vpop.f32.mrb[0].mxu0
  %1231 = vmatprep.mubr.f32.mxu0 %v610
  %1232 = vmatmul.mubr.f32.gmra.mrb[0].mxu0 %v218
  %v1233 = vpop.f32.mrb[0].mxu0
  %v1234 = vadd.f32 0.0, %v1233
  %v1235 = vpop.f32.mrb[0].mxu0
  %1236 = vmatprep.mubr.f32.mxu0 %v613
  %1237 = vmatmul.mubr.f32.gmra.mrb[0].mxu0 %v220
  %v1238 = vpop.f32.mrb[0].mxu0
  %v1239 = vadd.f32 0.0, %v1238
  %v1240 = vpop.f32.mrb[0].mxu0
  %1241 = vmatprep.mubr.f32.mxu0 %v616
  %1242 = vmatmul.mubr.f32.gmra.mrb[0].mxu0 %v222
  %v1243 = vpop.f32.mrb[0].mxu0
  %v1244 = vadd.f32 0.0, %v1243
  %v1245 = vpop.f32.mrb[0].mxu0
  %1246 = vmatprep.mubr.f32.mxu0 %v619
  %1247 = vmatmul.mubr.f32.gmra.mrb[0].mxu0 %v224
  %v1248 = vpop.f32.mrb[0].mxu0
  %v1249 = vadd.f32 0.0, %v1248
  %v1250 = vpop.f32.mrb[0].mxu0
  %1251 = vmatprep.mubr.f32.mxu0 %v622
  %1252 = vmatmul.mubr.f32.gmra.mrb[0].mxu0 %v226
  %v1253 = vpop.f32.mrb[0].mxu0
  %v1254 = vadd.f32 0.0, %v1253
  %v1255 = vpop.f32.mrb[0].mxu0
  %1256 = vmatprep.mubr.f32.mxu0 %v625
  %1257 = vmatmul.mubr.f32.gmra.mrb[0].mxu0 %v228
  %v1258 = vpop.f32.mrb[0].mxu0
  %v1259 = vadd.f32 0.0, %v1258
  %v1260 = vpop.f32.mrb[0].mxu0
  %1261 = vmatprep.mubr.f32.mxu0 %v628
  %1262 = vmatmul.mubr.f32.gmra.mrb[0].mxu0 %v230
  %v1263 = vpop.f32.mrb[0].mxu0
  %v1264 = vadd.f32 0.0, %v1263
  %v1265 = vpop.f32.mrb[0].mxu0
  %1266 = vmatprep.mubr.f32.mxu0 %v631
  %1267 = vmatmul.mubr.f32.gmra.mrb[0].mxu0 %v232
  %v1268 = vpop.f32.mrb[0].mxu0
  %v1269 = vadd.f32 0.0, %v1268
  %v1270 = vpop.f32.mrb[0].mxu0
  %1271 = vmatprep.mubr.f32.mxu0 %v634
  %1272 = vmatmul.mubr.f32.gmra.mrb[0].mxu0 %v234
  %v1273 = vpop.f32.mrb[0].mxu0
  %v1274 = vadd.f32 0.0, %v1273
  %v1275 = vpop.f32.mrb[0].mxu0
  %1276 = vmatprep.mubr.f32.mxu0 %v637
  %1277 = vmatmul.mubr.f32.gmra.mrb[0].mxu0 %v236
  %v1278 = vpop.f32.mrb[0].mxu0
  %v1279 = vadd.f32 0.0, %v1278
  %v1280 = vpop.f32.mrb[0].mxu0
  %1281 = vmatprep.mubr.f32.mxu0 %v640
  %1282 = vmatmul.mubr.f32.gmra.mrb[0].mxu0 %v238
  %v1283 = vpop.f32.mrb[0].mxu0
  %v1284 = vadd.f32 0.0, %v1283
  %v1285 = vpop.f32.mrb[0].mxu0
  %1286 = vmatprep.mubr.f32.mxu0 %v643
  %1287 = vmatmul.mubr.f32.gmra.mrb[0].mxu0 %v240
  %v1288 = vpop.f32.mrb[0].mxu0
  %v1289 = vadd.f32 0.0, %v1288
  %v1290 = vpop.f32.mrb[0].mxu0
  %1291 = vmatprep.mubr.f32.mxu0 %v646
  %1292 = vmatmul.mubr.f32.gmra.mrb[0].mxu0 %v242
  %v1293 = vpop.f32.mrb[0].mxu0
  %v1294 = vadd.f32 0.0, %v1293
  %v1295 = vpop.f32.mrb[0].mxu0
  %1296 = vmatprep.mubr.f32.mxu0 %v649
  %1297 = vmatmul.mubr.f32.gmra.mrb[0].mxu0 %v244
  %v1298 = vpop.f32.mrb[0].mxu0
  %v1299 = vadd.f32 0.0, %v1298
  %v1300 = vpop.f32.mrb[0].mxu0
  %1301 = vmatprep.mubr.f32.mxu0 %v652
  %1302 = vmatmul.mubr.f32.gmra.mrb[0].mxu0 %v246
  %v1303 = vpop.f32.mrb[0].mxu0
  %v1304 = vadd.f32 0.0, %v1303
  %v1305 = vpop.f32.mrb[0].mxu0
  %1306 = vmatprep.mubr.f32.mxu0 %v655
  %1307 = vmatmul.mubr.f32.gmra.mrb[0].mxu0 %v248
  %v1308 = vpop.f32.mrb[0].mxu0
  %v1309 = vadd.f32 0.0, %v1308
  %v1310 = vpop.f32.mrb[0].mxu0
  %1311 = vmatprep.mubr.f32.mxu0 %v658
  %1312 = vmatmul.mubr.f32.gmra.mrb[0].mxu0 %v250
  %v1313 = vpop.f32.mrb[0].mxu0
  %v1314 = vadd.f32 0.0, %v1313
  %v1315 = vpop.f32.mrb[0].mxu0
  %1316 = vmatprep.mubr.f32.mxu0 %v661
  %1317 = vmatmul.mubr.f32.gmra.mrb[0].mxu0 %v252
  %v1318 = vpop.f32.mrb[0].mxu0
  %v1319 = vadd.f32 0.0, %v1318
  %v1320 = vpop.f32.mrb[0].mxu0
  %1321 = vmatprep.mubr.f32.mxu0 %v664
  %1322 = vmatmul.mubr.f32.gmra.mrb[0].mxu0 %v254
  %v1323 = vpop.f32.mrb[0].mxu0
  %v1324 = vadd.f32 0.0, %v1323
  %v1325 = vpop.f32.mrb[0].mxu0
  %1326 = vmatprep.mubr.f32.mxu0 %v667
  %1327 = vmatmul.mubr.f32.gmra.mrb[0].mxu0 %v256
  %v1328 = vpop.f32.mrb[0].mxu0
  %v1329 = vadd.f32 0.0, %v1328
  %v1330 = vpop.f32.mrb[0].mxu0
  %1331 = vmatprep.mubr.f32.mxu0 %v670
  %1332 = vmatmul.mubr.f32.gmra.mrb[0].mxu0 %v258
  %v1333 = vpop.f32.mrb[0].mxu0
  %v1334 = vadd.f32 0.0, %v1333
  %v1335 = vpop.f32.mrb[0].mxu0
  %1336 = vdwg.mxu0
  %v1337 = vmax.f32 %v739, %v889
  %v1338 = vmax.f32 %v744, %v894
  %v1339 = vmax.f32 %v749, %v899
  %v1340 = vmax.f32 %v754, %v904
  %v1341 = vmax.f32 %v759, %v909
  %v1342 = vmax.f32 %v764, %v914
  %v1343 = vmax.f32 %v769, %v919
  %v1344 = vmax.f32 %v774, %v924
  %v1345 = vmax.f32 %v779, %v929
  %v1346 = vmax.f32 %v784, %v934
  %v1347 = vmax.f32 %v789, %v939
  %v1348 = vmax.f32 %v794, %v944
  %v1349 = vmax.f32 %v799, %v949
  %v1350 = vmax.f32 %v804, %v954
  %v1351 = vmax.f32 %v809, %v959
  %v1352 = vmax.f32 %v814, %v964
  %v1353 = vmax.f32 %v819, %v969
  %v1354 = vmax.f32 %v824, %v974
  %v1355 = vmax.f32 %v829, %v979
  %v1356 = vmax.f32 %v834, %v984
  %v1357 = vmax.f32 %v839, %v989
  %v1358 = vmax.f32 %v844, %v994
  %v1359 = vmax.f32 %v849, %v999
  %v1360 = vmax.f32 %v854, %v1004
  %v1361 = vmax.f32 %v859, %v1009
  %v1362 = vmax.f32 %v864, %v1014
  %v1363 = vmax.f32 %v869, %v1019
  %v1364 = vmax.f32 %v874, %v1024
  %v1365 = vmax.f32 %v879, %v1029
  %v1366 = vmax.f32 %v884, %v1034
  %v1367 = vmax.f32 %v1039, %v1189
  %v1368 = vmax.f32 %v1044, %v1194
  %v1369 = vmax.f32 %v1049, %v1199
  %v1370 = vmax.f32 %v1054, %v1204
  %v1371 = vmax.f32 %v1059, %v1209
  %v1372 = vmax.f32 %v1064, %v1214
  %v1373 = vmax.f32 %v1069, %v1219
  %v1374 = vmax.f32 %v1074, %v1224
  %v1375 = vmax.f32 %v1079, %v1229
  %v1376 = vmax.f32 %v1084, %v1234
  %v1377 = vmax.f32 %v1089, %v1239
  %v1378 = vmax.f32 %v1094, %v1244
  %v1379 = vmax.f32 %v1099, %v1249
  %v1380 = vmax.f32 %v1104, %v1254
  %v1381 = vmax.f32 %v1109, %v1259
  %v1382 = vmax.f32 %v1114, %v1264
  %v1383 = vmax.f32 %v1119, %v1269
  %v1384 = vmax.f32 %v1124, %v1274
  %v1385 = vmax.f32 %v1129, %v1279
  %v1386 = vmax.f32 %v1134, %v1284
  %v1387 = vmax.f32 %v1139, %v1289
  %v1388 = vmax.f32 %v1144, %v1294
  %v1389 = vmax.f32 %v1149, %v1299
  %v1390 = vmax.f32 %v1154, %v1304
  %v1391 = vmax.f32 %v1159, %v1309
  %v1392 = vmax.f32 %v1164, %v1314
  %v1393 = vmax.f32 %v1169, %v1319
  %v1394 = vmax.f32 %v1174, %v1324
  %v1395 = vmax.f32 %v1179, %v1329
  %v1396 = vmax.f32 %v1184, %v1334
  %v1397 = vmax.f32 %v1337, %v1367
  %v1398 = vmax.f32 %v1338, %v1368
  %v1399 = vmax.f32 %v1339, %v1369
  %v1400 = vmax.f32 %v1340, %v1370
  %v1401 = vmax.f32 %v1341, %v1371
  %v1402 = vmax.f32 %v1342, %v1372
  %v1403 = vmax.f32 %v1343, %v1373
  %v1404 = vmax.f32 %v1344, %v1374
  %v1405 = vmax.f32 %v1345, %v1375
  %v1406 = vmax.f32 %v1346, %v1376
  %v1407 = vmax.f32 %v1347, %v1377
  %v1408 = vmax.f32 %v1348, %v1378
  %v1409 = vmax.f32 %v1349, %v1379
  %v1410 = vmax.f32 %v1350, %v1380
  %v1411 = vmax.f32 %v1351, %v1381
  %v1412 = vmax.f32 %v1352, %v1382
  %v1413 = vmax.f32 %v1353, %v1383
  %v1414 = vmax.f32 %v1354, %v1384
  %v1415 = vmax.f32 %v1355, %v1385
  %v1416 = vmax.f32 %v1356, %v1386
  %v1417 = vmax.f32 %v1357, %v1387
  %v1418 = vmax.f32 %v1358, %v1388
  %v1419 = vmax.f32 %v1359, %v1389
  %v1420 = vmax.f32 %v1360, %v1390
  %v1421 = vmax.f32 %v1361, %v1391
  %v1422 = vmax.f32 %v1362, %v1392
  %v1423 = vmax.f32 %v1363, %v1393
  %v1424 = vmax.f32 %v1364, %v1394
  %v1425 = vmax.f32 %v1365, %v1395
  %v1426 = vmax.f32 %v1366, %v1396
  %1428 = vset.pattern.permute.xlu0 0
  %1429 = vperm.xlu0 %1428, %v260
  %v1430 = vpop.permute.xlu0 %1429
  %1433 = vset.pattern.permute.xlu0 0
  %1434 = vperm.xlu0 %1433, %v261
  %v1435 = vpop.permute.xlu0 %1434
  %1438 = vset.pattern.permute.xlu0 0
  %1439 = vperm.xlu0 %1438, %v262
  %v1440 = vpop.permute.xlu0 %1439
  %1443 = vset.pattern.permute.xlu0 0
  %1444 = vperm.xlu0 %1443, %v263
  %v1445 = vpop.permute.xlu0 %1444
  %1448 = vset.pattern.permute.xlu0 0
  %1449 = vperm.xlu0 %1448, %v264
  %v1450 = vpop.permute.xlu0 %1449
  %1453 = vset.pattern.permute.xlu0 0
  %1454 = vperm.xlu0 %1453, %v265
  %v1455 = vpop.permute.xlu0 %1454
  %1458 = vset.pattern.permute.xlu0 0
  %1459 = vperm.xlu0 %1458, %v266
  %v1460 = vpop.permute.xlu0 %1459
  %1463 = vset.pattern.permute.xlu0 0
  %1464 = vperm.xlu0 %1463, %v267
  %v1465 = vpop.permute.xlu0 %1464
  %1468 = vset.pattern.permute.xlu0 0
  %1469 = vperm.xlu0 %1468, %v268
  %v1470 = vpop.permute.xlu0 %1469
  %1473 = vset.pattern.permute.xlu0 0
  %1474 = vperm.xlu0 %1473, %v269
  %v1475 = vpop.permute.xlu0 %1474
  %1478 = vset.pattern.permute.xlu0 0
  %1479 = vperm.xlu0 %1478, %v270
  %v1480 = vpop.permute.xlu0 %1479
  %1483 = vset.pattern.permute.xlu0 0
  %1484 = vperm.xlu0 %1483, %v271
  %v1485 = vpop.permute.xlu0 %1484
  %1488 = vset.pattern.permute.xlu0 0
  %1489 = vperm.xlu0 %1488, %v272
  %v1490 = vpop.permute.xlu0 %1489
  %1493 = vset.pattern.permute.xlu0 0
  %1494 = vperm.xlu0 %1493, %v273
  %v1495 = vpop.permute.xlu0 %1494
  %1498 = vset.pattern.permute.xlu0 0
  %1499 = vperm.xlu0 %1498, %v274
  %v1500 = vpop.permute.xlu0 %1499
  %1503 = vset.pattern.permute.xlu0 0
  %1504 = vperm.xlu0 %1503, %v275
  %v1505 = vpop.permute.xlu0 %1504
  %1508 = vset.pattern.permute.xlu0 0
  %1509 = vperm.xlu0 %1508, %v276
  %v1510 = vpop.permute.xlu0 %1509
  %1513 = vset.pattern.permute.xlu0 0
  %1514 = vperm.xlu0 %1513, %v277
  %v1515 = vpop.permute.xlu0 %1514
  %1518 = vset.pattern.permute.xlu0 0
  %1519 = vperm.xlu0 %1518, %v278
  %v1520 = vpop.permute.xlu0 %1519
  %1523 = vset.pattern.permute.xlu0 0
  %1524 = vperm.xlu0 %1523, %v279
  %v1525 = vpop.permute.xlu0 %1524
  %1528 = vset.pattern.permute.xlu0 0
  %1529 = vperm.xlu0 %1528, %v280
  %v1530 = vpop.permute.xlu0 %1529
  %1533 = vset.pattern.permute.xlu0 0
  %1534 = vperm.xlu0 %1533, %v281
  %v1535 = vpop.permute.xlu0 %1534
  %1538 = vset.pattern.permute.xlu0 0
  %1539 = vperm.xlu0 %1538, %v282
  %v1540 = vpop.permute.xlu0 %1539
  %1543 = vset.pattern.permute.xlu0 0
  %1544 = vperm.xlu0 %1543, %v283
  %v1545 = vpop.permute.xlu0 %1544
  %1548 = vset.pattern.permute.xlu0 0
  %1549 = vperm.xlu0 %1548, %v284
  %v1550 = vpop.permute.xlu0 %1549
  %1553 = vset.pattern.permute.xlu0 0
  %1554 = vperm.xlu0 %1553, %v285
  %v1555 = vpop.permute.xlu0 %1554
  %1558 = vset.pattern.permute.xlu0 0
  %1559 = vperm.xlu0 %1558, %v286
  %v1560 = vpop.permute.xlu0 %1559
  %1563 = vset.pattern.permute.xlu0 0
  %1564 = vperm.xlu0 %1563, %v287
  %v1565 = vpop.permute.xlu0 %1564
  %1568 = vset.pattern.permute.xlu0 0
  %1569 = vperm.xlu0 %1568, %v288
  %v1570 = vpop.permute.xlu0 %1569
  %1573 = vset.pattern.permute.xlu0 0
  %1574 = vperm.xlu0 %1573, %v289
  %v1575 = vpop.permute.xlu0 %1574
  %v1577 = vadd.f32 %v1397, %v1430
  %v1578 = vadd.f32 %v1398, %v1435
  %v1579 = vadd.f32 %v1399, %v1440
  %v1580 = vadd.f32 %v1400, %v1445
  %v1581 = vadd.f32 %v1401, %v1450
  %v1582 = vadd.f32 %v1402, %v1455
  %v1583 = vadd.f32 %v1403, %v1460
  %v1584 = vadd.f32 %v1404, %v1465
  %v1585 = vadd.f32 %v1405, %v1470
  %v1586 = vadd.f32 %v1406, %v1475
  %v1587 = vadd.f32 %v1407, %v1480
  %v1588 = vadd.f32 %v1408, %v1485
  %v1589 = vadd.f32 %v1409, %v1490
  %v1590 = vadd.f32 %v1410, %v1495
  %v1591 = vadd.f32 %v1411, %v1500
  %v1592 = vadd.f32 %v1412, %v1505
  %v1593 = vadd.f32 %v1413, %v1510
  %v1594 = vadd.f32 %v1414, %v1515
  %v1595 = vadd.f32 %v1415, %v1520
  %v1596 = vadd.f32 %v1416, %v1525
  %v1597 = vadd.f32 %v1417, %v1530
  %v1598 = vadd.f32 %v1418, %v1535
  %v1599 = vadd.f32 %v1419, %v1540
  %v1600 = vadd.f32 %v1420, %v1545
  %v1601 = vadd.f32 %v1421, %v1550
  %v1602 = vadd.f32 %v1422, %v1555
  %v1603 = vadd.f32 %v1423, %v1560
  %v1604 = vadd.f32 %v1424, %v1565
  %v1605 = vadd.f32 %v1425, %v1570
  %v1606 = vadd.f32 %v1426, %v1575
  %v1607 = vmax.f32 %v1577, 0.0
  %v1608 = vmax.f32 %v1578, 0.0
  %v1609 = vmax.f32 %v1579, 0.0
  %v1610 = vmax.f32 %v1580, 0.0
  %v1611 = vmax.f32 %v1581, 0.0
  %v1612 = vmax.f32 %v1582, 0.0
  %v1613 = vmax.f32 %v1583, 0.0
  %v1614 = vmax.f32 %v1584, 0.0
  %v1615 = vmax.f32 %v1585, 0.0
  %v1616 = vmax.f32 %v1586, 0.0
  %v1617 = vmax.f32 %v1587, 0.0
  %v1618 = vmax.f32 %v1588, 0.0
  %v1619 = vmax.f32 %v1589, 0.0
  %v1620 = vmax.f32 %v1590, 0.0
  %v1621 = vmax.f32 %v1591, 0.0
  %v1622 = vmax.f32 %v1592, 0.0
  %v1623 = vmax.f32 %v1593, 0.0
  %v1624 = vmax.f32 %v1594, 0.0
  %v1625 = vmax.f32 %v1595, 0.0
  %v1626 = vmax.f32 %v1596, 0.0
  %v1627 = vmax.f32 %v1597, 0.0
  %v1628 = vmax.f32 %v1598, 0.0
  %v1629 = vmax.f32 %v1599, 0.0
  %v1630 = vmax.f32 %v1600, 0.0
  %v1631 = vmax.f32 %v1601, 0.0
  %v1632 = vmax.f32 %v1602, 0.0
  %v1633 = vmax.f32 %v1603, 0.0
  %v1634 = vmax.f32 %v1604, 0.0
  %v1635 = vmax.f32 %v1605, 0.0
  %v1636 = vmax.f32 %v1606, 0.0
  %v1637 = vld [vmem:[%s3] sm:$0xff]
  %v1638 = vld [vmem:[%s3 + $0x8] sm:$0xff]
  %v1639 = vld [vmem:[%s3 + $0x10] sm:$0x3]
  %v1640 = vld [vmem:[%s3 + $0x18] sm:$0x3]
  %v1641 = vld [vmem:[%s0 + $0x38] sm:$0xff]
  %v1642 = vld [vmem:[%s0 + $0x40] sm:$0xff]
  %v1643 = vld [vmem:[%s0 + $0x48] sm:$0xff]
  %v1644 = vld [vmem:[%s0 + $0x50] sm:$0xff]
  %v1645 = vld [vmem:[%s0 + $0x58] sm:$0xff]
  %v1646 = vld [vmem:[%s0 + $0x60] sm:$0xff]
  %v1647 = vld [vmem:[%s0 + $0x68] sm:$0xff]
  %v1648 = vld [vmem:[%s0 + $0x70] sm:$0xff]
  %v1649 = vld [vmem:[%s0 + $0x78] sm:$0xff]
  %v1650 = vld [vmem:[%s0 + $0x80] sm:$0xff]
  %v1651 = vld [vmem:[%s0 + $0x88] sm:$0xff]
  %v1652 = vld [vmem:[%s0 + $0x90] sm:$0xff]
  %v1653 = vld [vmem:[%s0 + $0x98] sm:$0xff]
  %v1654 = vld [vmem:[%s0 + $0xa0] sm:$0xff]
  %v1655 = vld [vmem:[%s0 + $0xa8] sm:$0xff]
  %v1656 = vld [vmem:[%s0 + $0xb0] sm:$0xff]
  %v1657 = vld [vmem:[%s0 + $0xb8] sm:$0xff]
  %v1658 = vld [vmem:[%s0 + $0xc0] sm:$0xff]
  %v1659 = vld [vmem:[%s0 + $0xc8] sm:$0xff]
  %v1660 = vld [vmem:[%s0 + $0xd0] sm:$0xff]
  %v1661 = vld [vmem:[%s0 + $0xd8] sm:$0xff]
  %1662 = vmatprep.subr.mxu0 0.0
  %1663 = vmatpush1.msra.mxu0 %v1641
  %1664 = vmatprep.subr.mxu0 0.0
  %1665 = vmatpush1.msra.mxu0 %v1642
  %1666 = vmatprep.subr.mxu0 0.0
  %1667 = vmatpush1.msra.mxu0 %v1643
  %1668 = vmatprep.subr.mxu0 0.0
  %1669 = vmatpush1.msra.mxu0 %v1644
  %1670 = vmatprep.subr.mxu0 0.0
  %1671 = vmatpush1.msra.mxu0 %v1645
  %1672 = vmatprep.subr.mxu0 0.0
  %1673 = vmatpush1.msra.mxu0 %v1646
  %1674 = vmatprep.subr.mxu0 0.0
  %1675 = vmatpush1.msra.mxu0 %v1647
  %1676 = vmatprep.subr.mxu0 0.0
  %1677 = vmatpush1.msra.mxu0 %v1648
  %1678 = vmatprep.subr.mxu0 0.0
  %1679 = vmatpush1.msra.mxu0 %v1649
  %1680 = vmatprep.subr.mxu0 0.0
  %1681 = vmatpush1.msra.mxu0 %v1650
  %1682 = vmatprep.subr.mxu0 0.0
  %1683 = vmatpush1.msra.mxu0 %v1651
  %1684 = vmatprep.subr.mxu0 0.0
  %1685 = vmatpush1.msra.mxu0 %v1652
  %1686 = vmatprep.subr.mxu0 0.0
  %1687 = vmatpush1.msra.mxu0 %v1653
  %1688 = vmatprep.subr.mxu0 0.0
  %1689 = vmatpush1.msra.mxu0 %v1654
  %1690 = vmatprep.subr.mxu0 0.0
  %1691 = vmatpush1.msra.mxu0 %v1655
  %1692 = vmatprep.subr.mxu0 0.0
  %1693 = vmatpush1.msra.mxu0 %v1656
  %1694 = vmatprep.subr.mxu0 0.0
  %1695 = vmatpush1.msra.mxu0 %v1657
  %1696 = vmatprep.subr.mxu0 0.0
  %1697 = vmatpush1.msra.mxu0 %v1658
  %1698 = vmatprep.subr.mxu0 0.0
  %1699 = vmatpush1.msra.mxu0 %v1659
  %1700 = vmatprep.subr.mxu0 0.0
  %1701 = vmatpush1.msra.mxu0 %v1660
  %1702 = vmatprep.subr.mxu0 0.0
  %1703 = vmatpush1.msra.mxu0 %v1661
  %1704 = vmatprep.subr.mxu0 0.0
  %1705 = vmatpush1.msra.mxu0 0.0
  %1706 = vmatprep.subr.mxu0 0.0
  %1707 = vmatpush1.msra.mxu0 0.0
  %1708 = vmatprep.subr.mxu0 0.0
  %1709 = vmatpush1.msra.mxu0 0.0
  %1710 = vmatprep.subr.mxu0 0.0
  %1711 = vmatpush1.msra.mxu0 0.0
  %1712 = vmatprep.subr.mxu0 0.0
  %1713 = vmatpush1.msra.mxu0 0.0
  %1714 = vmatprep.subr.mxu0 0.0
  %1715 = vmatpush1.msra.mxu0 0.0
  %1716 = vmatprep.subr.mxu0 0.0
  %1717 = vmatpush1.msra.mxu0 0.0
  %1718 = vmatprep.subr.mxu0 0.0
  %1719 = vmatpush1.msra.mxu0 0.0
  %1720 = vmatprep.subr.mxu0 0.0
  %1721 = vmatpush1.msra.mxu0 0.0
  %1722 = vmatprep.subr.mxu0 0.0
  %1723 = vmatpush1.msra.mxu0 0.0
  %1724 = vmatprep.subr.mxu0 0.0
  %1725 = vmatpush1.msra.mxu0 0.0
  %1726 = vmatprep.mubr.f32.mxu0 %v313
  %1727 = vmatmul.mubr.f32.gmra.mrb[0].mxu0 %v20
  %v1728 = vpop.f32.mrb[0].mxu0
  %v1729 = vadd.f32 0.0, %v1728
  %v1730 = vpop.f32.mrb[0].mxu0
  %1731 = vmatprep.mubr.f32.mxu0 %v316
  %1732 = vmatmul.mubr.f32.gmra.mrb[0].mxu0 %v22
  %v1733 = vpop.f32.mrb[0].mxu0
  %v1734 = vadd.f32 0.0, %v1733
  %v1735 = vpop.f32.mrb[0].mxu0
  %1736 = vmatprep.mubr.f32.mxu0 %v319
  %1737 = vmatmul.mubr.f32.gmra.mrb[0].mxu0 %v24
  %v1738 = vpop.f32.mrb[0].mxu0
  %v1739 = vadd.f32 0.0, %v1738
  %v1740 = vpop.f32.mrb[0].mxu0
  %1741 = vmatprep.mubr.f32.mxu0 %v322
  %1742 = vmatmul.mubr.f32.gmra.mrb[0].mxu0 %v26
  %v1743 = vpop.f32.mrb[0].mxu0
  %v1744 = vadd.f32 0.0, %v1743
  %v1745 = vpop.f32.mrb[0].mxu0
  %1746 = vmatprep.mubr.f32.mxu0 %v325
  %1747 = vmatmul.mubr.f32.gmra.mrb[0].mxu0 %v28
  %v1748 = vpop.f32.mrb[0].mxu0
  %v1749 = vadd.f32 0.0, %v1748
  %v1750 = vpop.f32.mrb[0].mxu0
  %1751 = vmatprep.mubr.f32.mxu0 %v328
  %1752 = vmatmul.mubr.f32.gmra.mrb[0].mxu0 %v30
  %v1753 = vpop.f32.mrb[0].mxu0
  %v1754 = vadd.f32 0.0, %v1753
  %v1755 = vpop.f32.mrb[0].mxu0
  %1756 = vmatprep.mubr.f32.mxu0 %v331
  %1757 = vmatmul.mubr.f32.gmra.mrb[0].mxu0 %v32
  %v1758 = vpop.f32.mrb[0].mxu0
  %v1759 = vadd.f32 0.0, %v1758
  %v1760 = vpop.f32.mrb[0].mxu0
  %1761 = vmatprep.mubr.f32.mxu0 %v334
  %1762 = vmatmul.mubr.f32.gmra.mrb[0].mxu0 %v34
  %v1763 = vpop.f32.mrb[0].mxu0
  %v1764 = vadd.f32 0.0, %v1763
  %v1765 = vpop.f32.mrb[0].mxu0
  %1766 = vmatprep.mubr.f32.mxu0 %v337
  %1767 = vmatmul.mubr.f32.gmra.mrb[0].mxu0 %v36
  %v1768 = vpop.f32.mrb[0].mxu0
  %v1769 = vadd.f32 0.0, %v1768
  %v1770 = vpop.f32.mrb[0].mxu0
  %1771 = vmatprep.mubr.f32.mxu0 %v340
  %1772 = vmatmul.mubr.f32.gmra.mrb[0].mxu0 %v38
  %v1773 = vpop.f32.mrb[0].mxu0
  %v1774 = vadd.f32 0.0, %v1773
  %v1775 = vpop.f32.mrb[0].mxu0
  %1776 = vmatprep.mubr.f32.mxu0 %v343
  %1777 = vmatmul.mubr.f32.gmra.mrb[0].mxu0 %v40
  %v1778 = vpop.f32.mrb[0].mxu0
  %v1779 = vadd.f32 0.0, %v1778
  %v1780 = vpop.f32.mrb[0].mxu0
  %1781 = vmatprep.mubr.f32.mxu0 %v346
  %1782 = vmatmul.mubr.f32.gmra.mrb[0].mxu0 %v42
  %v1783 = vpop.f32.mrb[0].mxu0
  %v1784 = vadd.f32 0.0, %v1783
  %v1785 = vpop.f32.mrb[0].mxu0
  %1786 = vmatprep.mubr.f32.mxu0 %v349
  %1787 = vmatmul.mubr.f32.gmra.mrb[0].mxu0 %v44
  %v1788 = vpop.f32.mrb[0].mxu0
  %v1789 = vadd.f32 0.0, %v1788
  %v1790 = vpop.f32.mrb[0].mxu0
  %1791 = vmatprep.mubr.f32.mxu0 %v352
  %1792 = vmatmul.mubr.f32.gmra.mrb[0].mxu0 %v46
  %v1793 = vpop.f32.mrb[0].mxu0
  %v1794 = vadd.f32 0.0, %v1793
  %v1795 = vpop.f32.mrb[0].mxu0
  %1796 = vmatprep.mubr.f32.mxu0 %v355
  %1797 = vmatmul.mubr.f32.gmra.mrb[0].mxu0 %v48
  %v1798 = vpop.f32.mrb[0].mxu0
  %v1799 = vadd.f32 0.0, %v1798
  %v1800 = vpop.f32.mrb[0].mxu0
  %1801 = vmatprep.mubr.f32.mxu0 %v358
  %1802 = vmatmul.mubr.f32.gmra.mrb[0].mxu0 %v50
  %v1803 = vpop.f32.mrb[0].mxu0
  %v1804 = vadd.f32 0.0, %v1803
  %v1805 = vpop.f32.mrb[0].mxu0
  %1806 = vmatprep.mubr.f32.mxu0 %v361
  %1807 = vmatmul.mubr.f32.gmra.mrb[0].mxu0 %v52
  %v1808 = vpop.f32.mrb[0].mxu0
  %v1809 = vadd.f32 0.0, %v1808
  %v1810 = vpop.f32.mrb[0].mxu0
  %1811 = vmatprep.mubr.f32.mxu0 %v364
  %1812 = vmatmul.mubr.f32.gmra.mrb[0].mxu0 %v54
  %v1813 = vpop.f32.mrb[0].mxu0
  %v1814 = vadd.f32 0.0, %v1813
  %v1815 = vpop.f32.mrb[0].mxu0
  %1816 = vmatprep.mubr.f32.mxu0 %v367
  %1817 = vmatmul.mubr.f32.gmra.mrb[0].mxu0 %v56
  %v1818 = vpop.f32.mrb[0].mxu0
  %v1819 = vadd.f32 0.0, %v1818
  %v1820 = vpop.f32.mrb[0].mxu0
  %1821 = vmatprep.mubr.f32.mxu0 %v370
  %1822 = vmatmul.mubr.f32.gmra.mrb[0].mxu0 %v58
  %v1823 = vpop.f32.mrb[0].mxu0
  %v1824 = vadd.f32 0.0, %v1823
  %v1825 = vpop.f32.mrb[0].mxu0
  %1826 = vmatprep.mubr.f32.mxu0 %v373
  %1827 = vmatmul.mubr.f32.gmra.mrb[0].mxu0 %v60
  %v1828 = vpop.f32.mrb[0].mxu0
  %v1829 = vadd.f32 0.0, %v1828
  %v1830 = vpop.f32.mrb[0].mxu0
  %1831 = vmatprep.mubr.f32.mxu0 %v376
  %1832 = vmatmul.mubr.f32.gmra.mrb[0].mxu0 %v62
  %v1833 = vpop.f32.mrb[0].mxu0
  %v1834 = vadd.f32 0.0, %v1833
  %v1835 = vpop.f32.mrb[0].mxu0
  %1836 = vmatprep.mubr.f32.mxu0 %v379
  %1837 = vmatmul.mubr.f32.gmra.mrb[0].mxu0 %v64
  %v1838 = vpop.f32.mrb[0].mxu0
  %v1839 = vadd.f32 0.0, %v1838
  %v1840 = vpop.f32.mrb[0].mxu0
  %1841 = vmatprep.mubr.f32.mxu0 %v382
  %1842 = vmatmul.mubr.f32.gmra.mrb[0].mxu0 %v66
  %v1843 = vpop.f32.mrb[0].mxu0
  %v1844 = vadd.f32 0.0, %v1843
  %v1845 = vpop.f32.mrb[0].mxu0
  %1846 = vmatprep.mubr.f32.mxu0 %v385
  %1847 = vmatmul.mubr.f32.gmra.mrb[0].mxu0 %v68
  %v1848 = vpop.f32.mrb[0].mxu0
  %v1849 = vadd.f32 0.0, %v1848
  %v1850 = vpop.f32.mrb[0].mxu0
  %1851 = vmatprep.mubr.f32.mxu0 %v388
  %1852 = vmatmul.mubr.f32.gmra.mrb[0].mxu0 %v70
  %v1853 = vpop.f32.mrb[0].mxu0
  %v1854 = vadd.f32 0.0, %v1853
  %v1855 = vpop.f32.mrb[0].mxu0
  %1856 = vmatprep.mubr.f32.mxu0 %v391
  %1857 = vmatmul.mubr.f32.gmra.mrb[0].mxu0 %v72
  %v1858 = vpop.f32.mrb[0].mxu0
  %v1859 = vadd.f32 0.0, %v1858
  %v1860 = vpop.f32.mrb[0].mxu0
  %1861 = vmatprep.mubr.f32.mxu0 %v394
  %1862 = vmatmul.mubr.f32.gmra.mrb[0].mxu0 %v74
  %v1863 = vpop.f32.mrb[0].mxu0
  %v1864 = vadd.f32 0.0, %v1863
  %v1865 = vpop.f32.mrb[0].mxu0
  %1866 = vmatprep.mubr.f32.mxu0 %v397
  %1867 = vmatmul.mubr.f32.gmra.mrb[0].mxu0 %v76
  %v1868 = vpop.f32.mrb[0].mxu0
  %v1869 = vadd.f32 0.0, %v1868
  %v1870 = vpop.f32.mrb[0].mxu0
  %1871 = vmatprep.mubr.f32.mxu0 %v400
  %1872 = vmatmul.mubr.f32.gmra.mrb[0].mxu0 %v78
  %v1873 = vpop.f32.mrb[0].mxu0
  %v1874 = vadd.f32 0.0, %v1873
  %v1875 = vpop.f32.mrb[0].mxu0
  %1876 = vmatprep.mubr.f32.mxu0 %v403
  %1877 = vmatmul.mubr.f32.gmra.mrb[0].mxu0 %v80
  %v1878 = vpop.f32.mrb[0].mxu0
  %v1879 = vadd.f32 0.0, %v1878
  %v1880 = vpop.f32.mrb[0].mxu0
  %1881 = vmatprep.mubr.f32.mxu0 %v406
  %1882 = vmatmul.mubr.f32.gmra.mrb[0].mxu0 %v82
  %v1883 = vpop.f32.mrb[0].mxu0
  %v1884 = vadd.f32 0.0, %v1883
  %v1885 = vpop.f32.mrb[0].mxu0
  %1886 = vmatprep.mubr.f32.mxu0 %v409
  %1887 = vmatmul.mubr.f32.gmra.mrb[0].mxu0 %v84
  %v1888 = vpop.f32.mrb[0].mxu0
  %v1889 = vadd.f32 0.0, %v1888
  %v1890 = vpop.f32.mrb[0].mxu0
  %1891 = vmatprep.mubr.f32.mxu0 %v412
  %1892 = vmatmul.mubr.f32.gmra.mrb[0].mxu0 %v86
  %v1893 = vpop.f32.mrb[0].mxu0
  %v1894 = vadd.f32 0.0, %v1893
  %v1895 = vpop.f32.mrb[0].mxu0
  %1896 = vmatprep.mubr.f32.mxu0 %v415
  %1897 = vmatmul.mubr.f32.gmra.mrb[0].mxu0 %v88
  %v1898 = vpop.f32.mrb[0].mxu0
  %v1899 = vadd.f32 0.0, %v1898
  %v1900 = vpop.f32.mrb[0].mxu0
  %1901 = vmatprep.mubr.f32.mxu0 %v418
  %1902 = vmatmul.mubr.f32.gmra.mrb[0].mxu0 %v90
  %v1903 = vpop.f32.mrb[0].mxu0
  %v1904 = vadd.f32 0.0, %v1903
  %v1905 = vpop.f32.mrb[0].mxu0
  %1906 = vmatprep.mubr.f32.mxu0 %v421
  %1907 = vmatmul.mubr.f32.gmra.mrb[0].mxu0 %v92
  %v1908 = vpop.f32.mrb[0].mxu0
  %v1909 = vadd.f32 0.0, %v1908
  %v1910 = vpop.f32.mrb[0].mxu0
  %1911 = vmatprep.mubr.f32.mxu0 %v424
  %1912 = vmatmul.mubr.f32.gmra.mrb[0].mxu0 %v94
  %v1913 = vpop.f32.mrb[0].mxu0
  %v1914 = vadd.f32 0.0, %v1913
  %v1915 = vpop.f32.mrb[0].mxu0
  %1916 = vmatprep.mubr.f32.mxu0 %v427
  %1917 = vmatmul.mubr.f32.gmra.mrb[0].mxu0 %v96
  %v1918 = vpop.f32.mrb[0].mxu0
  %v1919 = vadd.f32 0.0, %v1918
  %v1920 = vpop.f32.mrb[0].mxu0
  %1921 = vmatprep.mubr.f32.mxu0 %v430
  %1922 = vmatmul.mubr.f32.gmra.mrb[0].mxu0 %v98
  %v1923 = vpop.f32.mrb[0].mxu0
  %v1924 = vadd.f32 0.0, %v1923
  %v1925 = vpop.f32.mrb[0].mxu0
  %1926 = vmatprep.mubr.f32.mxu0 %v433
  %1927 = vmatmul.mubr.f32.gmra.mrb[0].mxu0 %v100
  %v1928 = vpop.f32.mrb[0].mxu0
  %v1929 = vadd.f32 0.0, %v1928
  %v1930 = vpop.f32.mrb[0].mxu0
  %1931 = vmatprep.mubr.f32.mxu0 %v436
  %1932 = vmatmul.mubr.f32.gmra.mrb[0].mxu0 %v102
  %v1933 = vpop.f32.mrb[0].mxu0
  %v1934 = vadd.f32 0.0, %v1933
  %v1935 = vpop.f32.mrb[0].mxu0
  %1936 = vmatprep.mubr.f32.mxu0 %v439
  %1937 = vmatmul.mubr.f32.gmra.mrb[0].mxu0 %v104
  %v1938 = vpop.f32.mrb[0].mxu0
  %v1939 = vadd.f32 0.0, %v1938
  %v1940 = vpop.f32.mrb[0].mxu0
  %1941 = vmatprep.mubr.f32.mxu0 %v442
  %1942 = vmatmul.mubr.f32.gmra.mrb[0].mxu0 %v106
  %v1943 = vpop.f32.mrb[0].mxu0
  %v1944 = vadd.f32 0.0, %v1943
  %v1945 = vpop.f32.mrb[0].mxu0
  %1946 = vmatprep.mubr.f32.mxu0 %v445
  %1947 = vmatmul.mubr.f32.gmra.mrb[0].mxu0 %v108
  %v1948 = vpop.f32.mrb[0].mxu0
  %v1949 = vadd.f32 0.0, %v1948
  %v1950 = vpop.f32.mrb[0].mxu0
  %1951 = vmatprep.mubr.f32.mxu0 %v448
  %1952 = vmatmul.mubr.f32.gmra.mrb[0].mxu0 %v110
  %v1953 = vpop.f32.mrb[0].mxu0
  %v1954 = vadd.f32 0.0, %v1953
  %v1955 = vpop.f32.mrb[0].mxu0
  %1956 = vmatprep.mubr.f32.mxu0 %v451
  %1957 = vmatmul.mubr.f32.gmra.mrb[0].mxu0 %v112
  %v1958 = vpop.f32.mrb[0].mxu0
  %v1959 = vadd.f32 0.0, %v1958
  %v1960 = vpop.f32.mrb[0].mxu0
  %1961 = vmatprep.mubr.f32.mxu0 %v454
  %1962 = vmatmul.mubr.f32.gmra.mrb[0].mxu0 %v114
  %v1963 = vpop.f32.mrb[0].mxu0
  %v1964 = vadd.f32 0.0, %v1963
  %v1965 = vpop.f32.mrb[0].mxu0
  %1966 = vmatprep.mubr.f32.mxu0 %v457
  %1967 = vmatmul.mubr.f32.gmra.mrb[0].mxu0 %v116
  %v1968 = vpop.f32.mrb[0].mxu0
  %v1969 = vadd.f32 0.0, %v1968
  %v1970 = vpop.f32.mrb[0].mxu0
  %1971 = vmatprep.mubr.f32.mxu0 %v460
  %1972 = vmatmul.mubr.f32.gmra.mrb[0].mxu0 %v118
  %v1973 = vpop.f32.mrb[0].mxu0
  %v1974 = vadd.f32 0.0, %v1973
  %v1975 = vpop.f32.mrb[0].mxu0
  %1976 = vmatprep.mubr.f32.mxu0 %v463
  %1977 = vmatmul.mubr.f32.gmra.mrb[0].mxu0 %v120
  %v1978 = vpop.f32.mrb[0].mxu0
  %v1979 = vadd.f32 0.0, %v1978
  %v1980 = vpop.f32.mrb[0].mxu0
  %1981 = vmatprep.mubr.f32.mxu0 %v466
  %1982 = vmatmul.mubr.f32.gmra.mrb[0].mxu0 %v122
  %v1983 = vpop.f32.mrb[0].mxu0
  %v1984 = vadd.f32 0.0, %v1983
  %v1985 = vpop.f32.mrb[0].mxu0
  %1986 = vmatprep.mubr.f32.mxu0 %v469
  %1987 = vmatmul.mubr.f32.gmra.mrb[0].mxu0 %v124
  %v1988 = vpop.f32.mrb[0].mxu0
  %v1989 = vadd.f32 0.0, %v1988
  %v1990 = vpop.f32.mrb[0].mxu0
  %1991 = vmatprep.mubr.f32.mxu0 %v472
  %1992 = vmatmul.mubr.f32.gmra.mrb[0].mxu0 %v126
  %v1993 = vpop.f32.mrb[0].mxu0
  %v1994 = vadd.f32 0.0, %v1993
  %v1995 = vpop.f32.mrb[0].mxu0
  %1996 = vmatprep.mubr.f32.mxu0 %v475
  %1997 = vmatmul.mubr.f32.gmra.mrb[0].mxu0 %v128
  %v1998 = vpop.f32.mrb[0].mxu0
  %v1999 = vadd.f32 0.0, %v1998
  %v2000 = vpop.f32.mrb[0].mxu0
  %2001 = vmatprep.mubr.f32.mxu0 %v478
  %2002 = vmatmul.mubr.f32.gmra.mrb[0].mxu0 %v130
  %v2003 = vpop.f32.mrb[0].mxu0
  %v2004 = vadd.f32 0.0, %v2003
  %v2005 = vpop.f32.mrb[0].mxu0
  %2006 = vmatprep.mubr.f32.mxu0 %v481
  %2007 = vmatmul.mubr.f32.gmra.mrb[0].mxu0 %v132
  %v2008 = vpop.f32.mrb[0].mxu0
  %v2009 = vadd.f32 0.0, %v2008
  %v2010 = vpop.f32.mrb[0].mxu0
  %2011 = vmatprep.mubr.f32.mxu0 %v484
  %2012 = vmatmul.mubr.f32.gmra.mrb[0].mxu0 %v134
  %v2013 = vpop.f32.mrb[0].mxu0
  %v2014 = vadd.f32 0.0, %v2013
  %v2015 = vpop.f32.mrb[0].mxu0
  %2016 = vmatprep.mubr.f32.mxu0 %v487
  %2017 = vmatmul.mubr.f32.gmra.mrb[0].mxu0 %v136
  %v2018 = vpop.f32.mrb[0].mxu0
  %v2019 = vadd.f32 0.0, %v2018
  %v2020 = vpop.f32.mrb[0].mxu0
  %2021 = vmatprep.mubr.f32.mxu0 %v490
  %2022 = vmatmul.mubr.f32.gmra.mrb[0].mxu0 %v138
  %v2023 = vpop.f32.mrb[0].mxu0
  %v2024 = vadd.f32 0.0, %v2023
  %v2025 = vpop.f32.mrb[0].mxu0
  %2026 = vmatprep.mubr.f32.mxu0 %v493
  %2027 = vmatmul.mubr.f32.gmra.mrb[0].mxu0 %v140
  %v2028 = vpop.f32.mrb[0].mxu0
  %v2029 = vadd.f32 0.0, %v2028
  %v2030 = vpop.f32.mrb[0].mxu0
  %2031 = vmatprep.mubr.f32.mxu0 %v496
  %2032 = vmatmul.mubr.f32.gmra.mrb[0].mxu0 %v142
  %v2033 = vpop.f32.mrb[0].mxu0
  %v2034 = vadd.f32 0.0, %v2033
  %v2035 = vpop.f32.mrb[0].mxu0
  %2036 = vmatprep.mubr.f32.mxu0 %v499
  %2037 = vmatmul.mubr.f32.gmra.mrb[0].mxu0 %v144
  %v2038 = vpop.f32.mrb[0].mxu0
  %v2039 = vadd.f32 0.0, %v2038
  %v2040 = vpop.f32.mrb[0].mxu0
  %2041 = vmatprep.mubr.f32.mxu0 %v502
  %2042 = vmatmul.mubr.f32.gmra.mrb[0].mxu0 %v146
  %v2043 = vpop.f32.mrb[0].mxu0
  %v2044 = vadd.f32 0.0, %v2043
  %v2045 = vpop.f32.mrb[0].mxu0
  %2046 = vmatprep.mubr.f32.mxu0 %v505
  %2047 = vmatmul.mubr.f32.gmra.mrb[0].mxu0 %v148
  %v2048 = vpop.f32.mrb[0].mxu0
  %v2049 = vadd.f32 0.0, %v2048
  %v2050 = vpop.f32.mrb[0].mxu0
  %2051 = vmatprep.mubr.f32.mxu0 %v508
  %2052 = vmatmul.mubr.f32.gmra.mrb[0].mxu0 %v150
  %v2053 = vpop.f32.mrb[0].mxu0
  %v2054 = vadd.f32 0.0, %v2053
  %v2055 = vpop.f32.mrb[0].mxu0
  %2056 = vmatprep.mubr.f32.mxu0 %v511
  %2057 = vmatmul.mubr.f32.gmra.mrb[0].mxu0 %v152
  %v2058 = vpop.f32.mrb[0].mxu0
  %v2059 = vadd.f32 0.0, %v2058
  %v2060 = vpop.f32.mrb[0].mxu0
  %2061 = vmatprep.mubr.f32.mxu0 %v514
  %2062 = vmatmul.mubr.f32.gmra.mrb[0].mxu0 %v154
  %v2063 = vpop.f32.mrb[0].mxu0
  %v2064 = vadd.f32 0.0, %v2063
  %v2065 = vpop.f32.mrb[0].mxu0
  %2066 = vmatprep.mubr.f32.mxu0 %v517
  %2067 = vmatmul.mubr.f32.gmra.mrb[0].mxu0 %v156
  %v2068 = vpop.f32.mrb[0].mxu0
  %v2069 = vadd.f32 0.0, %v2068
  %v2070 = vpop.f32.mrb[0].mxu0
  %2071 = vmatprep.mubr.f32.mxu0 %v520
  %2072 = vmatmul.mubr.f32.gmra.mrb[0].mxu0 %v158
  %v2073 = vpop.f32.mrb[0].mxu0
  %v2074 = vadd.f32 0.0, %v2073
  %v2075 = vpop.f32.mrb[0].mxu0
  %2076 = vmatprep.mubr.f32.mxu0 %v523
  %2077 = vmatmul.mubr.f32.gmra.mrb[0].mxu0 %v160
  %v2078 = vpop.f32.mrb[0].mxu0
  %v2079 = vadd.f32 0.0, %v2078
  %v2080 = vpop.f32.mrb[0].mxu0
  %2081 = vmatprep.mubr.f32.mxu0 %v526
  %2082 = vmatmul.mubr.f32.gmra.mrb[0].mxu0 %v162
  %v2083 = vpop.f32.mrb[0].mxu0
  %v2084 = vadd.f32 0.0, %v2083
  %v2085 = vpop.f32.mrb[0].mxu0
  %2086 = vmatprep.mubr.f32.mxu0 %v529
  %2087 = vmatmul.mubr.f32.gmra.mrb[0].mxu0 %v164
  %v2088 = vpop.f32.mrb[0].mxu0
  %v2089 = vadd.f32 0.0, %v2088
  %v2090 = vpop.f32.mrb[0].mxu0
  %2091 = vmatprep.mubr.f32.mxu0 %v532
  %2092 = vmatmul.mubr.f32.gmra.mrb[0].mxu0 %v166
  %v2093 = vpop.f32.mrb[0].mxu0
  %v2094 = vadd.f32 0.0, %v2093
  %v2095 = vpop.f32.mrb[0].mxu0
  %2096 = vmatprep.mubr.f32.mxu0 %v535
  %2097 = vmatmul.mubr.f32.gmra.mrb[0].mxu0 %v168
  %v2098 = vpop.f32.mrb[0].mxu0
  %v2099 = vadd.f32 0.0, %v2098
  %v2100 = vpop.f32.mrb[0].mxu0
  %2101 = vmatprep.mubr.f32.mxu0 %v538
  %2102 = vmatmul.mubr.f32.gmra.mrb[0].mxu0 %v170
  %v2103 = vpop.f32.mrb[0].mxu0
  %v2104 = vadd.f32 0.0, %v2103
  %v2105 = vpop.f32.mrb[0].mxu0
  %2106 = vmatprep.mubr.f32.mxu0 %v541
  %2107 = vmatmul.mubr.f32.gmra.mrb[0].mxu0 %v172
  %v2108 = vpop.f32.mrb[0].mxu0
  %v2109 = vadd.f32 0.0, %v2108
  %v2110 = vpop.f32.mrb[0].mxu0
  %2111 = vmatprep.mubr.f32.mxu0 %v544
  %2112 = vmatmul.mubr.f32.gmra.mrb[0].mxu0 %v174
  %v2113 = vpop.f32.mrb[0].mxu0
  %v2114 = vadd.f32 0.0, %v2113
  %v2115 = vpop.f32.mrb[0].mxu0
  %2116 = vmatprep.mubr.f32.mxu0 %v547
  %2117 = vmatmul.mubr.f32.gmra.mrb[0].mxu0 %v176
  %v2118 = vpop.f32.mrb[0].mxu0
  %v2119 = vadd.f32 0.0, %v2118
  %v2120 = vpop.f32.mrb[0].mxu0
  %2121 = vmatprep.mubr.f32.mxu0 %v550
  %2122 = vmatmul.mubr.f32.gmra.mrb[0].mxu0 %v178
  %v2123 = vpop.f32.mrb[0].mxu0
  %v2124 = vadd.f32 0.0, %v2123
  %v2125 = vpop.f32.mrb[0].mxu0
  %2126 = vmatprep.mubr.f32.mxu0 %v553
  %2127 = vmatmul.mubr.f32.gmra.mrb[0].mxu0 %v180
  %v2128 = vpop.f32.mrb[0].mxu0
  %v2129 = vadd.f32 0.0, %v2128
  %v2130 = vpop.f32.mrb[0].mxu0
  %2131 = vmatprep.mubr.f32.mxu0 %v556
  %2132 = vmatmul.mubr.f32.gmra.mrb[0].mxu0 %v182
  %v2133 = vpop.f32.mrb[0].mxu0
  %v2134 = vadd.f32 0.0, %v2133
  %v2135 = vpop.f32.mrb[0].mxu0
  %2136 = vmatprep.mubr.f32.mxu0 %v559
  %2137 = vmatmul.mubr.f32.gmra.mrb[0].mxu0 %v184
  %v2138 = vpop.f32.mrb[0].mxu0
  %v2139 = vadd.f32 0.0, %v2138
  %v2140 = vpop.f32.mrb[0].mxu0
  %2141 = vmatprep.mubr.f32.mxu0 %v562
  %2142 = vmatmul.mubr.f32.gmra.mrb[0].mxu0 %v186
  %v2143 = vpop.f32.mrb[0].mxu0
  %v2144 = vadd.f32 0.0, %v2143
  %v2145 = vpop.f32.mrb[0].mxu0
  %2146 = vmatprep.mubr.f32.mxu0 %v565
  %2147 = vmatmul.mubr.f32.gmra.mrb[0].mxu0 %v188
  %v2148 = vpop.f32.mrb[0].mxu0
  %v2149 = vadd.f32 0.0, %v2148
  %v2150 = vpop.f32.mrb[0].mxu0
  %2151 = vmatprep.mubr.f32.mxu0 %v568
  %2152 = vmatmul.mubr.f32.gmra.mrb[0].mxu0 %v190
  %v2153 = vpop.f32.mrb[0].mxu0
  %v2154 = vadd.f32 0.0, %v2153
  %v2155 = vpop.f32.mrb[0].mxu0
  %2156 = vmatprep.mubr.f32.mxu0 %v571
  %2157 = vmatmul.mubr.f32.gmra.mrb[0].mxu0 %v192
  %v2158 = vpop.f32.mrb[0].mxu0
  %v2159 = vadd.f32 0.0, %v2158
  %v2160 = vpop.f32.mrb[0].mxu0
  %2161 = vmatprep.mubr.f32.mxu0 %v574
  %2162 = vmatmul.mubr.f32.gmra.mrb[0].mxu0 %v194
  %v2163 = vpop.f32.mrb[0].mxu0
  %v2164 = vadd.f32 0.0, %v2163
  %v2165 = vpop.f32.mrb[0].mxu0
  %2166 = vmatprep.mubr.f32.mxu0 %v577
  %2167 = vmatmul.mubr.f32.gmra.mrb[0].mxu0 %v196
  %v2168 = vpop.f32.mrb[0].mxu0
  %v2169 = vadd.f32 0.0, %v2168
  %v2170 = vpop.f32.mrb[0].mxu0
  %2171 = vmatprep.mubr.f32.mxu0 %v580
  %2172 = vmatmul.mubr.f32.gmra.mrb[0].mxu0 %v198
  %v2173 = vpop.f32.mrb[0].mxu0
  %v2174 = vadd.f32 0.0, %v2173
  %v2175 = vpop.f32.mrb[0].mxu0
  %2176 = vmatprep.mubr.f32.mxu0 %v583
  %2177 = vmatmul.mubr.f32.gmra.mrb[0].mxu0 %v200
  %v2178 = vpop.f32.mrb[0].mxu0
  %v2179 = vadd.f32 0.0, %v2178
  %v2180 = vpop.f32.mrb[0].mxu0
  %2181 = vmatprep.mubr.f32.mxu0 %v586
  %2182 = vmatmul.mubr.f32.gmra.mrb[0].mxu0 %v202
  %v2183 = vpop.f32.mrb[0].mxu0
  %v2184 = vadd.f32 0.0, %v2183
  %v2185 = vpop.f32.mrb[0].mxu0
  %2186 = vmatprep.mubr.f32.mxu0 %v589
  %2187 = vmatmul.mubr.f32.gmra.mrb[0].mxu0 %v204
  %v2188 = vpop.f32.mrb[0].mxu0
  %v2189 = vadd.f32 0.0, %v2188
  %v2190 = vpop.f32.mrb[0].mxu0
  %2191 = vmatprep.mubr.f32.mxu0 %v592
  %2192 = vmatmul.mubr.f32.gmra.mrb[0].mxu0 %v206
  %v2193 = vpop.f32.mrb[0].mxu0
  %v2194 = vadd.f32 0.0, %v2193
  %v2195 = vpop.f32.mrb[0].mxu0
  %2196 = vmatprep.mubr.f32.mxu0 %v595
  %2197 = vmatmul.mubr.f32.gmra.mrb[0].mxu0 %v208
  %v2198 = vpop.f32.mrb[0].mxu0
  %v2199 = vadd.f32 0.0, %v2198
  %v2200 = vpop.f32.mrb[0].mxu0
  %2201 = vmatprep.mubr.f32.mxu0 %v598
  %2202 = vmatmul.mubr.f32.gmra.mrb[0].mxu0 %v210
  %v2203 = vpop.f32.mrb[0].mxu0
  %v2204 = vadd.f32 0.0, %v2203
  %v2205 = vpop.f32.mrb[0].mxu0
  %2206 = vmatprep.mubr.f32.mxu0 %v601
  %2207 = vmatmul.mubr.f32.gmra.mrb[0].mxu0 %v212
  %v2208 = vpop.f32.mrb[0].mxu0
  %v2209 = vadd.f32 0.0, %v2208
  %v2210 = vpop.f32.mrb[0].mxu0
  %2211 = vmatprep.mubr.f32.mxu0 %v604
  %2212 = vmatmul.mubr.f32.gmra.mrb[0].mxu0 %v214
  %v2213 = vpop.f32.mrb[0].mxu0
  %v2214 = vadd.f32 0.0, %v2213
  %v2215 = vpop.f32.mrb[0].mxu0
  %2216 = vmatprep.mubr.f32.mxu0 %v607
  %2217 = vmatmul.mubr.f32.gmra.mrb[0].mxu0 %v216
  %v2218 = vpop.f32.mrb[0].mxu0
  %v2219 = vadd.f32 0.0, %v2218
  %v2220 = vpop.f32.mrb[0].mxu0
  %2221 = vmatprep.mubr.f32.mxu0 %v610
  %2222 = vmatmul.mubr.f32.gmra.mrb[0].mxu0 %v218
  %v2223 = vpop.f32.mrb[0].mxu0
  %v2224 = vadd.f32 0.0, %v2223
  %v2225 = vpop.f32.mrb[0].mxu0
  %2226 = vmatprep.mubr.f32.mxu0 %v613
  %2227 = vmatmul.mubr.f32.gmra.mrb[0].mxu0 %v220
  %v2228 = vpop.f32.mrb[0].mxu0
  %v2229 = vadd.f32 0.0, %v2228
  %v2230 = vpop.f32.mrb[0].mxu0
  %2231 = vmatprep.mubr.f32.mxu0 %v616
  %2232 = vmatmul.mubr.f32.gmra.mrb[0].mxu0 %v222
  %v2233 = vpop.f32.mrb[0].mxu0
  %v2234 = vadd.f32 0.0, %v2233
  %v2235 = vpop.f32.mrb[0].mxu0
  %2236 = vmatprep.mubr.f32.mxu0 %v619
  %2237 = vmatmul.mubr.f32.gmra.mrb[0].mxu0 %v224
  %v2238 = vpop.f32.mrb[0].mxu0
  %v2239 = vadd.f32 0.0, %v2238
  %v2240 = vpop.f32.mrb[0].mxu0
  %2241 = vmatprep.mubr.f32.mxu0 %v622
  %2242 = vmatmul.mubr.f32.gmra.mrb[0].mxu0 %v226
  %v2243 = vpop.f32.mrb[0].mxu0
  %v2244 = vadd.f32 0.0, %v2243
  %v2245 = vpop.f32.mrb[0].mxu0
  %2246 = vmatprep.mubr.f32.mxu0 %v625
  %2247 = vmatmul.mubr.f32.gmra.mrb[0].mxu0 %v228
  %v2248 = vpop.f32.mrb[0].mxu0
  %v2249 = vadd.f32 0.0, %v2248
  %v2250 = vpop.f32.mrb[0].mxu0
  %2251 = vmatprep.mubr.f32.mxu0 %v628
  %2252 = vmatmul.mubr.f32.gmra.mrb[0].mxu0 %v230
  %v2253 = vpop.f32.mrb[0].mxu0
  %v2254 = vadd.f32 0.0, %v2253
  %v2255 = vpop.f32.mrb[0].mxu0
  %2256 = vmatprep.mubr.f32.mxu0 %v631
  %2257 = vmatmul.mubr.f32.gmra.mrb[0].mxu0 %v232
  %v2258 = vpop.f32.mrb[0].mxu0
  %v2259 = vadd.f32 0.0, %v2258
  %v2260 = vpop.f32.mrb[0].mxu0
  %2261 = vmatprep.mubr.f32.mxu0 %v634
  %2262 = vmatmul.mubr.f32.gmra.mrb[0].mxu0 %v234
  %v2263 = vpop.f32.mrb[0].mxu0
  %v2264 = vadd.f32 0.0, %v2263
  %v2265 = vpop.f32.mrb[0].mxu0
  %2266 = vmatprep.mubr.f32.mxu0 %v637
  %2267 = vmatmul.mubr.f32.gmra.mrb[0].mxu0 %v236
  %v2268 = vpop.f32.mrb[0].mxu0
  %v2269 = vadd.f32 0.0, %v2268
  %v2270 = vpop.f32.mrb[0].mxu0
  %2271 = vmatprep.mubr.f32.mxu0 %v640
  %2272 = vmatmul.mubr.f32.gmra.mrb[0].mxu0 %v238
  %v2273 = vpop.f32.mrb[0].mxu0
  %v2274 = vadd.f32 0.0, %v2273
  %v2275 = vpop.f32.mrb[0].mxu0
  %2276 = vmatprep.mubr.f32.mxu0 %v643
  %2277 = vmatmul.mubr.f32.gmra.mrb[0].mxu0 %v240
  %v2278 = vpop.f32.mrb[0].mxu0
  %v2279 = vadd.f32 0.0, %v2278
  %v2280 = vpop.f32.mrb[0].mxu0
  %2281 = vmatprep.mubr.f32.mxu0 %v646
  %2282 = vmatmul.mubr.f32.gmra.mrb[0].mxu0 %v242
  %v2283 = vpop.f32.mrb[0].mxu0
  %v2284 = vadd.f32 0.0, %v2283
  %v2285 = vpop.f32.mrb[0].mxu0
  %2286 = vmatprep.mubr.f32.mxu0 %v649
  %2287 = vmatmul.mubr.f32.gmra.mrb[0].mxu0 %v244
  %v2288 = vpop.f32.mrb[0].mxu0
  %v2289 = vadd.f32 0.0, %v2288
  %v2290 = vpop.f32.mrb[0].mxu0
  %2291 = vmatprep.mubr.f32.mxu0 %v652
  %2292 = vmatmul.mubr.f32.gmra.mrb[0].mxu0 %v246
  %v2293 = vpop.f32.mrb[0].mxu0
  %v2294 = vadd.f32 0.0, %v2293
  %v2295 = vpop.f32.mrb[0].mxu0
  %2296 = vmatprep.mubr.f32.mxu0 %v655
  %2297 = vmatmul.mubr.f32.gmra.mrb[0].mxu0 %v248
  %v2298 = vpop.f32.mrb[0].mxu0
  %v2299 = vadd.f32 0.0, %v2298
  %v2300 = vpop.f32.mrb[0].mxu0
  %2301 = vmatprep.mubr.f32.mxu0 %v658
  %2302 = vmatmul.mubr.f32.gmra.mrb[0].mxu0 %v250
  %v2303 = vpop.f32.mrb[0].mxu0
  %v2304 = vadd.f32 0.0, %v2303
  %v2305 = vpop.f32.mrb[0].mxu0
  %2306 = vmatprep.mubr.f32.mxu0 %v661
  %2307 = vmatmul.mubr.f32.gmra.mrb[0].mxu0 %v252
  %v2308 = vpop.f32.mrb[0].mxu0
  %v2309 = vadd.f32 0.0, %v2308
  %v2310 = vpop.f32.mrb[0].mxu0
  %2311 = vmatprep.mubr.f32.mxu0 %v664
  %2312 = vmatmul.mubr.f32.gmra.mrb[0].mxu0 %v254
  %v2313 = vpop.f32.mrb[0].mxu0
  %v2314 = vadd.f32 0.0, %v2313
  %v2315 = vpop.f32.mrb[0].mxu0
  %2316 = vmatprep.mubr.f32.mxu0 %v667
  %2317 = vmatmul.mubr.f32.gmra.mrb[0].mxu0 %v256
  %v2318 = vpop.f32.mrb[0].mxu0
  %v2319 = vadd.f32 0.0, %v2318
  %v2320 = vpop.f32.mrb[0].mxu0
  %2321 = vmatprep.mubr.f32.mxu0 %v670
  %2322 = vmatmul.mubr.f32.gmra.mrb[0].mxu0 %v258
  %v2323 = vpop.f32.mrb[0].mxu0
  %v2324 = vadd.f32 0.0, %v2323
  %v2325 = vpop.f32.mrb[0].mxu0
  %2326 = vdwg.mxu0
  %v2327 = vmax.f32 %v1729, %v1879
  %v2328 = vmax.f32 %v1734, %v1884
  %v2329 = vmax.f32 %v1739, %v1889
  %v2330 = vmax.f32 %v1744, %v1894
  %v2331 = vmax.f32 %v1749, %v1899
  %v2332 = vmax.f32 %v1754, %v1904
  %v2333 = vmax.f32 %v1759, %v1909
  %v2334 = vmax.f32 %v1764, %v1914
  %v2335 = vmax.f32 %v1769, %v1919
  %v2336 = vmax.f32 %v1774, %v1924
  %v2337 = vmax.f32 %v1779, %v1929
  %v2338 = vmax.f32 %v1784, %v1934
  %v2339 = vmax.f32 %v1789, %v1939
  %v2340 = vmax.f32 %v1794, %v1944
  %v2341 = vmax.f32 %v1799, %v1949
  %v2342 = vmax.f32 %v1804, %v1954
  %v2343 = vmax.f32 %v1809, %v1959
  %v2344 = vmax.f32 %v1814, %v1964
  %v2345 = vmax.f32 %v1819, %v1969
  %v2346 = vmax.f32 %v1824, %v1974
  %v2347 = vmax.f32 %v1829, %v1979
  %v2348 = vmax.f32 %v1834, %v1984
  %v2349 = vmax.f32 %v1839, %v1989
  %v2350 = vmax.f32 %v1844, %v1994
  %v2351 = vmax.f32 %v1849, %v1999
  %v2352 = vmax.f32 %v1854, %v2004
  %v2353 = vmax.f32 %v1859, %v2009
  %v2354 = vmax.f32 %v1864, %v2014
  %v2355 = vmax.f32 %v1869, %v2019
  %v2356 = vmax.f32 %v1874, %v2024
  %v2357 = vmax.f32 %v2029, %v2179
  %v2358 = vmax.f32 %v2034, %v2184
  %v2359 = vmax.f32 %v2039, %v2189
  %v2360 = vmax.f32 %v2044, %v2194
  %v2361 = vmax.f32 %v2049, %v2199
  %v2362 = vmax.f32 %v2054, %v2204
  %v2363 = vmax.f32 %v2059, %v2209
  %v2364 = vmax.f32 %v2064, %v2214
  %v2365 = vmax.f32 %v2069, %v2219
  %v2366 = vmax.f32 %v2074, %v2224
  %v2367 = vmax.f32 %v2079, %v2229
  %v2368 = vmax.f32 %v2084, %v2234
  %v2369 = vmax.f32 %v2089, %v2239
  %v2370 = vmax.f32 %v2094, %v2244
  %v2371 = vmax.f32 %v2099, %v2249
  %v2372 = vmax.f32 %v2104, %v2254
  %v2373 = vmax.f32 %v2109, %v2259
  %v2374 = vmax.f32 %v2114, %v2264
  %v2375 = vmax.f32 %v2119, %v2269
  %v2376 = vmax.f32 %v2124, %v2274
  %v2377 = vmax.f32 %v2129, %v2279
  %v2378 = vmax.f32 %v2134, %v2284
  %v2379 = vmax.f32 %v2139, %v2289
  %v2380 = vmax.f32 %v2144, %v2294
  %v2381 = vmax.f32 %v2149, %v2299
  %v2382 = vmax.f32 %v2154, %v2304
  %v2383 = vmax.f32 %v2159, %v2309
  %v2384 = vmax.f32 %v2164, %v2314
  %v2385 = vmax.f32 %v2169, %v2319
  %v2386 = vmax.f32 %v2174, %v2324
  %v2387 = vmax.f32 %v2327, %v2357
  %v2388 = vmax.f32 %v2328, %v2358
  %v2389 = vmax.f32 %v2329, %v2359
  %v2390 = vmax.f32 %v2330, %v2360
  %v2391 = vmax.f32 %v2331, %v2361
  %v2392 = vmax.f32 %v2332, %v2362
  %v2393 = vmax.f32 %v2333, %v2363
  %v2394 = vmax.f32 %v2334, %v2364
  %v2395 = vmax.f32 %v2335, %v2365
  %v2396 = vmax.f32 %v2336, %v2366
  %v2397 = vmax.f32 %v2337, %v2367
  %v2398 = vmax.f32 %v2338, %v2368
  %v2399 = vmax.f32 %v2339, %v2369
  %v2400 = vmax.f32 %v2340, %v2370
  %v2401 = vmax.f32 %v2341, %v2371
  %v2402 = vmax.f32 %v2342, %v2372
  %v2403 = vmax.f32 %v2343, %v2373
  %v2404 = vmax.f32 %v2344, %v2374
  %v2405 = vmax.f32 %v2345, %v2375
  %v2406 = vmax.f32 %v2346, %v2376
  %v2407 = vmax.f32 %v2347, %v2377
  %v2408 = vmax.f32 %v2348, %v2378
  %v2409 = vmax.f32 %v2349, %v2379
  %v2410 = vmax.f32 %v2350, %v2380
  %v2411 = vmax.f32 %v2351, %v2381
  %v2412 = vmax.f32 %v2352, %v2382
  %v2413 = vmax.f32 %v2353, %v2383
  %v2414 = vmax.f32 %v2354, %v2384
  %v2415 = vmax.f32 %v2355, %v2385
  %v2416 = vmax.f32 %v2356, %v2386
  %v2417 = vadd.f32 %v2387, %v1430
  %v2418 = vadd.f32 %v2388, %v1435
  %v2419 = vadd.f32 %v2389, %v1440
  %v2420 = vadd.f32 %v2390, %v1445
  %v2421 = vadd.f32 %v2391, %v1450
  %v2422 = vadd.f32 %v2392, %v1455
  %v2423 = vadd.f32 %v2393, %v1460
  %v2424 = vadd.f32 %v2394, %v1465
  %v2425 = vadd.f32 %v2395, %v1470
  %v2426 = vadd.f32 %v2396, %v1475
  %v2427 = vadd.f32 %v2397, %v1480
  %v2428 = vadd.f32 %v2398, %v1485
  %v2429 = vadd.f32 %v2399, %v1490
  %v2430 = vadd.f32 %v2400, %v1495
  %v2431 = vadd.f32 %v2401, %v1500
  %v2432 = vadd.f32 %v2402, %v1505
  %v2433 = vadd.f32 %v2403, %v1510
  %v2434 = vadd.f32 %v2404, %v1515
  %v2435 = vadd.f32 %v2405, %v1520
  %v2436 = vadd.f32 %v2406, %v1525
  %v2437 = vadd.f32 %v2407, %v1530
  %v2438 = vadd.f32 %v2408, %v1535
  %v2439 = vadd.f32 %v2409, %v1540
  %v2440 = vadd.f32 %v2410, %v1545
  %v2441 = vadd.f32 %v2411, %v1550
  %v2442 = vadd.f32 %v2412, %v1555
  %v2443 = vadd.f32 %v2413, %v1560
  %v2444 = vadd.f32 %v2414, %v1565
  %v2445 = vadd.f32 %v2415, %v1570
  %v2446 = vadd.f32 %v2416, %v1575
  %v2447 = vmax.f32 %v2417, 0.0
  %v2448 = vmax.f32 %v2418, 0.0
  %v2449 = vmax.f32 %v2419, 0.0
  %v2450 = vmax.f32 %v2420, 0.0
  %v2451 = vmax.f32 %v2421, 0.0
  %v2452 = vmax.f32 %v2422, 0.0
  %v2453 = vmax.f32 %v2423, 0.0
  %v2454 = vmax.f32 %v2424, 0.0
  %v2455 = vmax.f32 %v2425, 0.0
  %v2456 = vmax.f32 %v2426, 0.0
  %v2457 = vmax.f32 %v2427, 0.0
  %v2458 = vmax.f32 %v2428, 0.0
  %v2459 = vmax.f32 %v2429, 0.0
  %v2460 = vmax.f32 %v2430, 0.0
  %v2461 = vmax.f32 %v2431, 0.0
  %v2462 = vmax.f32 %v2432, 0.0
  %v2463 = vmax.f32 %v2433, 0.0
  %v2464 = vmax.f32 %v2434, 0.0
  %v2465 = vmax.f32 %v2435, 0.0
  %v2466 = vmax.f32 %v2436, 0.0
  %v2467 = vmax.f32 %v2437, 0.0
  %v2468 = vmax.f32 %v2438, 0.0
  %v2469 = vmax.f32 %v2439, 0.0
  %v2470 = vmax.f32 %v2440, 0.0
  %v2471 = vmax.f32 %v2441, 0.0
  %v2472 = vmax.f32 %v2442, 0.0
  %v2473 = vmax.f32 %v2443, 0.0
  %v2474 = vmax.f32 %v2444, 0.0
  %v2475 = vmax.f32 %v2445, 0.0
  %v2476 = vmax.f32 %v2446, 0.0
  %s2477 = scalar_lea.vmem %s3, 32
  %v2478 = vld [vmem:[%s2477] sm:$0xff]
  %v2479 = vld [vmem:[%s2477 + $0x8] sm:$0xff]
  %v2480 = vld [vmem:[%s2477 + $0x10] sm:$0x3]
  %v2481 = vld [vmem:[%s2477 + $0x18] sm:$0x3]
  %vm2482 = vcmask 916480
  %v2484 = vsel %vm2482, %v2479, 0
  %v2487 = vsel %vm2482, %v2481, 0
  %2489 = vmatprep.subr.mxu0 0.0
  %2490 = vmatpush1.msra.mxu0 %v2447
  %2491 = vmatprep.subr.mxu0 0.0
  %2492 = vmatpush1.msra.mxu0 %v2448
  %2493 = vmatprep.subr.mxu0 0.0
  %2494 = vmatpush1.msra.mxu0 %v2449
  %2495 = vmatprep.subr.mxu0 0.0
  %2496 = vmatpush1.msra.mxu0 %v2450
  %2497 = vmatprep.subr.mxu0 0.0
  %2498 = vmatpush1.msra.mxu0 %v2451
  %2499 = vmatprep.subr.mxu0 0.0
  %2500 = vmatpush1.msra.mxu0 %v2452
  %2501 = vmatprep.subr.mxu0 0.0
  %2502 = vmatpush1.msra.mxu0 %v2453
  %2503 = vmatprep.subr.mxu0 0.0
  %2504 = vmatpush1.msra.mxu0 %v2454
  %2505 = vmatprep.subr.mxu0 0.0
  %2506 = vmatpush1.msra.mxu0 %v2455
  %2507 = vmatprep.subr.mxu0 0.0
  %2508 = vmatpush1.msra.mxu0 %v2456
  %2509 = vmatprep.subr.mxu0 0.0
  %2510 = vmatpush1.msra.mxu0 %v2457
  %2511 = vmatprep.subr.mxu0 0.0
  %2512 = vmatpush1.msra.mxu0 %v2458
  %2513 = vmatprep.subr.mxu0 0.0
  %2514 = vmatpush1.msra.mxu0 %v2459
  %2515 = vmatprep.subr.mxu0 0.0
  %2516 = vmatpush1.msra.mxu0 %v2460
  %2517 = vmatprep.subr.mxu0 0.0
  %2518 = vmatpush1.msra.mxu0 %v2461
  %2519 = vmatprep.subr.mxu0 0.0
  %2520 = vmatpush1.msra.mxu0 %v2462
  %2521 = vmatprep.subr.mxu0 0.0
  %2522 = vmatpush1.msra.mxu0 %v2463
  %2523 = vmatprep.subr.mxu0 0.0
  %2524 = vmatpush1.msra.mxu0 %v2464
  %2525 = vmatprep.subr.mxu0 0.0
  %2526 = vmatpush1.msra.mxu0 %v2465
  %2527 = vmatprep.subr.mxu0 0.0
  %2528 = vmatpush1.msra.mxu0 %v2466
  %2529 = vmatprep.subr.mxu0 0.0
  %2530 = vmatpush1.msra.mxu0 %v2467
  %2531 = vmatprep.subr.mxu0 0.0
  %2532 = vmatpush1.msra.mxu0 %v2468
  %2533 = vmatprep.subr.mxu0 0.0
  %2534 = vmatpush1.msra.mxu0 %v2469
  %2535 = vmatprep.subr.mxu0 0.0
  %2536 = vmatpush1.msra.mxu0 %v2470
  %2537 = vmatprep.subr.mxu0 0.0
  %2538 = vmatpush1.msra.mxu0 %v2471
  %2539 = vmatprep.subr.mxu0 0.0
  %2540 = vmatpush1.msra.mxu0 %v2472
  %2541 = vmatprep.subr.mxu0 0.0
  %2542 = vmatpush1.msra.mxu0 %v2473
  %2543 = vmatprep.subr.mxu0 0.0
  %2544 = vmatpush1.msra.mxu0 %v2474
  %2545 = vmatprep.subr.mxu0 0.0
  %2546 = vmatpush1.msra.mxu0 %v2475
  %2547 = vmatprep.subr.mxu0 0.0
  %2548 = vmatpush1.msra.mxu0 %v2476
  %2549 = vmatprep.subr.mxu0 0.0
  %2550 = vmatpush1.msra.mxu0 0.0
  %2551 = vmatprep.subr.mxu0 0.0
  %2552 = vmatpush1.msra.mxu0 0.0
  %2553 = vmatprep.mubr.f32.mxu0 %v2484
  %2554 = vmatmul.mubr.f32.gmra.mrb[0].mxu0 %v2478
  %v2555 = vpop.f32.mrb[0].mxu0
  %v2556 = vadd.f32 0.0, %v2555
  %v2557 = vpop.f32.mrb[0].mxu0
  %2558 = vmatprep.mubr.f32.mxu0 %v2487
  %2559 = vmatmul.mubr.f32.gmra.mrb[0].mxu0 %v2480
  %v2560 = vpop.f32.mrb[0].mxu0
  %v2561 = vadd.f32 0.0, %v2560
  %v2562 = vpop.f32.mrb[0].mxu0
  %2563 = vdwg.mxu0
  %v2565 = vsel %vm2482, %v1638, 0
  %v2568 = vsel %vm2482, %v1640, 0
  %2570 = vmatprep.subr.mxu0 0.0
  %2571 = vmatpush1.msra.mxu0 %v1607
  %2572 = vmatprep.subr.mxu0 0.0
  %2573 = vmatpush1.msra.mxu0 %v1608
  %2574 = vmatprep.subr.mxu0 0.0
  %2575 = vmatpush1.msra.mxu0 %v1609
  %2576 = vmatprep.subr.mxu0 0.0
  %2577 = vmatpush1.msra.mxu0 %v1610
  %2578 = vmatprep.subr.mxu0 0.0
  %2579 = vmatpush1.msra.mxu0 %v1611
  %2580 = vmatprep.subr.mxu0 0.0
  %2581 = vmatpush1.msra.mxu0 %v1612
  %2582 = vmatprep.subr.mxu0 0.0
  %2583 = vmatpush1.msra.mxu0 %v1613
  %2584 = vmatprep.subr.mxu0 0.0
  %2585 = vmatpush1.msra.mxu0 %v1614
  %2586 = vmatprep.subr.mxu0 0.0
  %2587 = vmatpush1.msra.mxu0 %v1615
  %2588 = vmatprep.subr.mxu0 0.0
  %2589 = vmatpush1.msra.mxu0 %v1616
  %2590 = vmatprep.subr.mxu0 0.0
  %2591 = vmatpush1.msra.mxu0 %v1617
  %2592 = vmatprep.subr.mxu0 0.0
  %2593 = vmatpush1.msra.mxu0 %v1618
  %2594 = vmatprep.subr.mxu0 0.0
  %2595 = vmatpush1.msra.mxu0 %v1619
  %2596 = vmatprep.subr.mxu0 0.0
  %2597 = vmatpush1.msra.mxu0 %v1620
  %2598 = vmatprep.subr.mxu0 0.0
  %2599 = vmatpush1.msra.mxu0 %v1621
  %2600 = vmatprep.subr.mxu0 0.0
  %2601 = vmatpush1.msra.mxu0 %v1622
  %2602 = vmatprep.subr.mxu0 0.0
  %2603 = vmatpush1.msra.mxu0 %v1623
  %2604 = vmatprep.subr.mxu0 0.0
  %2605 = vmatpush1.msra.mxu0 %v1624
  %2606 = vmatprep.subr.mxu0 0.0
  %2607 = vmatpush1.msra.mxu0 %v1625
  %2608 = vmatprep.subr.mxu0 0.0
  %2609 = vmatpush1.msra.mxu0 %v1626
  %2610 = vmatprep.subr.mxu0 0.0
  %2611 = vmatpush1.msra.mxu0 %v1627
  %2612 = vmatprep.subr.mxu0 0.0
  %2613 = vmatpush1.msra.mxu0 %v1628
  %2614 = vmatprep.subr.mxu0 0.0
  %2615 = vmatpush1.msra.mxu0 %v1629
  %2616 = vmatprep.subr.mxu0 0.0
  %2617 = vmatpush1.msra.mxu0 %v1630
  %2618 = vmatprep.subr.mxu0 0.0
  %2619 = vmatpush1.msra.mxu0 %v1631
  %2620 = vmatprep.subr.mxu0 0.0
  %2621 = vmatpush1.msra.mxu0 %v1632
  %2622 = vmatprep.subr.mxu0 0.0
  %2623 = vmatpush1.msra.mxu0 %v1633
  %2624 = vmatprep.subr.mxu0 0.0
  %2625 = vmatpush1.msra.mxu0 %v1634
  %2626 = vmatprep.subr.mxu0 0.0
  %2627 = vmatpush1.msra.mxu0 %v1635
  %2628 = vmatprep.subr.mxu0 0.0
  %2629 = vmatpush1.msra.mxu0 %v1636
  %2630 = vmatprep.subr.mxu0 0.0
  %2631 = vmatpush1.msra.mxu0 0.0
  %2632 = vmatprep.subr.mxu0 0.0
  %2633 = vmatpush1.msra.mxu0 0.0
  %2634 = vmatprep.mubr.f32.mxu0 %v2565
  %2635 = vmatmul.mubr.f32.gmra.mrb[0].mxu0 %v1637
  %v2636 = vpop.f32.mrb[0].mxu0
  %v2637 = vadd.f32 %v2556, %v2636
  %v2638 = vpop.f32.mrb[0].mxu0
  %2639 = vmatprep.mubr.f32.mxu0 %v2568
  %2640 = vmatmul.mubr.f32.gmra.mrb[0].mxu0 %v1639
  %v2641 = vpop.f32.mrb[0].mxu0
  %v2642 = vadd.f32 %v2561, %v2641
  %v2643 = vpop.f32.mrb[0].mxu0
  %2644 = vdwg.mxu0
  %v2645 = vld [vmem:[%s0 + $0x70] sm:$0xff]
  %v2646 = vld [vmem:[%s0 + $0x78] sm:$0xff]
  %v2647 = vld [vmem:[%s0 + $0x80] sm:$0xff]
  %v2648 = vld [vmem:[%s0 + $0x88] sm:$0xff]
  %v2649 = vld [vmem:[%s0 + $0x90] sm:$0xff]
  %v2650 = vld [vmem:[%s0 + $0x98] sm:$0xff]
  %v2651 = vld [vmem:[%s0 + $0xa0] sm:$0xff]
  %v2652 = vld [vmem:[%s0 + $0xa8] sm:$0xff]
  %v2653 = vld [vmem:[%s0 + $0xb0] sm:$0xff]
  %v2654 = vld [vmem:[%s0 + $0xb8] sm:$0xff]
  %v2655 = vld [vmem:[%s0 + $0xc0] sm:$0xff]
  %v2656 = vld [vmem:[%s0 + $0xc8] sm:$0xff]
  %v2657 = vld [vmem:[%s0 + $0xd0] sm:$0xff]
  %v2658 = vld [vmem:[%s0 + $0xd8] sm:$0xff]
  %v2659 = vld [vmem:[%s0 + $0xe0] sm:$0xff]
  %v2660 = vld [vmem:[%s0 + $0xe8] sm:$0xff]
  %v2661 = vld [vmem:[%s0 + $0xf0] sm:$0xff]
  %v2662 = vld [vmem:[%s0 + $0xf8] sm:$0xff]
  %v2663 = vld [vmem:[%s0 + $0x100] sm:$0xff]
  %v2664 = vld [vmem:[%s0 + $0x108] sm:$0xff]
  %v2665 = vld [vmem:[%s0 + $0x110] sm:$0xff]
  %2666 = vmatprep.subr.mxu0 0.0
  %2667 = vmatpush1.msra.mxu0 %v2645
  %2668 = vmatprep.subr.mxu0 0.0
  %2669 = vmatpush1.msra.mxu0 %v2646
  %2670 = vmatprep.subr.mxu0 0.0
  %2671 = vmatpush1.msra.mxu0 %v2647
  %2672 = vmatprep.subr.mxu0 0.0
  %2673 = vmatpush1.msra.mxu0 %v2648
  %2674 = vmatprep.subr.mxu0 0.0
  %2675 = vmatpush1.msra.mxu0 %v2649
  %2676 = vmatprep.subr.mxu0 0.0
  %2677 = vmatpush1.msra.mxu0 %v2650
  %2678 = vmatprep.subr.mxu0 0.0
  %2679 = vmatpush1.msra.mxu0 %v2651
  %2680 = vmatprep.subr.mxu0 0.0
  %2681 = vmatpush1.msra.mxu0 %v2652
  %2682 = vmatprep.subr.mxu0 0.0
  %2683 = vmatpush1.msra.mxu0 %v2653
  %2684 = vmatprep.subr.mxu0 0.0
  %2685 = vmatpush1.msra.mxu0 %v2654
  %2686 = vmatprep.subr.mxu0 0.0
  %2687 = vmatpush1.msra.mxu0 %v2655
  %2688 = vmatprep.subr.mxu0 0.0
  %2689 = vmatpush1.msra.mxu0 %v2656
  %2690 = vmatprep.subr.mxu0 0.0
  %2691 = vmatpush1.msra.mxu0 %v2657
  %2692 = vmatprep.subr.mxu0 0.0
  %2693 = vmatpush1.msra.mxu0 %v2658
  %2694 = vmatprep.subr.mxu0 0.0
  %2695 = vmatpush1.msra.mxu0 %v2659
  %2696 = vmatprep.subr.mxu0 0.0
  %2697 = vmatpush1.msra.mxu0 %v2660
  %2698 = vmatprep.subr.mxu0 0.0
  %2699 = vmatpush1.msra.mxu0 %v2661
  %2700 = vmatprep.subr.mxu0 0.0
  %2701 = vmatpush1.msra.mxu0 %v2662
  %2702 = vmatprep.subr.mxu0 0.0
  %2703 = vmatpush1.msra.mxu0 %v2663
  %2704 = vmatprep.subr.mxu0 0.0
  %2705 = vmatpush1.msra.mxu0 %v2664
  %2706 = vmatprep.subr.mxu0 0.0
  %2707 = vmatpush1.msra.mxu0 %v2665
  %2708 = vmatprep.subr.mxu0 0.0
  %2709 = vmatpush1.msra.mxu0 0.0
  %2710 = vmatprep.subr.mxu0 0.0
  %2711 = vmatpush1.msra.mxu0 0.0
  %2712 = vmatprep.subr.mxu0 0.0
  %2713 = vmatpush1.msra.mxu0 0.0
  %2714 = vmatprep.subr.mxu0 0.0
  %2715 = vmatpush1.msra.mxu0 0.0
  %2716 = vmatprep.subr.mxu0 0.0
  %2717 = vmatpush1.msra.mxu0 0.0
  %2718 = vmatprep.subr.mxu0 0.0
  %2719 = vmatpush1.msra.mxu0 0.0
  %2720 = vmatprep.subr.mxu0 0.0
  %2721 = vmatpush1.msra.mxu0 0.0
  %2722 = vmatprep.subr.mxu0 0.0
  %2723 = vmatpush1.msra.mxu0 0.0
  %2724 = vmatprep.subr.mxu0 0.0
  %2725 = vmatpush1.msra.mxu0 0.0
  %2726 = vmatprep.subr.mxu0 0.0
  %2727 = vmatpush1.msra.mxu0 0.0
  %2728 = vmatprep.subr.mxu0 0.0
  %2729 = vmatpush1.msra.mxu0 0.0
  %2730 = vmatprep.mubr.f32.mxu0 %v313
  %2731 = vmatmul.mubr.f32.gmra.mrb[0].mxu0 %v20
  %v2732 = vpop.f32.mrb[0].mxu0
  %v2733 = vadd.f32 0.0, %v2732
  %v2734 = vpop.f32.mrb[0].mxu0
  %2735 = vmatprep.mubr.f32.mxu0 %v316
  %2736 = vmatmul.mubr.f32.gmra.mrb[0].mxu0 %v22
  %v2737 = vpop.f32.mrb[0].mxu0
  %v2738 = vadd.f32 0.0, %v2737
  %v2739 = vpop.f32.mrb[0].mxu0
  %2740 = vmatprep.mubr.f32.mxu0 %v319
  %2741 = vmatmul.mubr.f32.gmra.mrb[0].mxu0 %v24
  %v2742 = vpop.f32.mrb[0].mxu0
  %v2743 = vadd.f32 0.0, %v2742
  %v2744 = vpop.f32.mrb[0].mxu0
  %2745 = vmatprep.mubr.f32.mxu0 %v322
  %2746 = vmatmul.mubr.f32.gmra.mrb[0].mxu0 %v26
  %v2747 = vpop.f32.mrb[0].mxu0
  %v2748 = vadd.f32 0.0, %v2747
  %v2749 = vpop.f32.mrb[0].mxu0
  %2750 = vmatprep.mubr.f32.mxu0 %v325
  %2751 = vmatmul.mubr.f32.gmra.mrb[0].mxu0 %v28
  %v2752 = vpop.f32.mrb[0].mxu0
  %v2753 = vadd.f32 0.0, %v2752
  %v2754 = vpop.f32.mrb[0].mxu0
  %2755 = vmatprep.mubr.f32.mxu0 %v328
  %2756 = vmatmul.mubr.f32.gmra.mrb[0].mxu0 %v30
  %v2757 = vpop.f32.mrb[0].mxu0
  %v2758 = vadd.f32 0.0, %v2757
  %v2759 = vpop.f32.mrb[0].mxu0
  %2760 = vmatprep.mubr.f32.mxu0 %v331
  %2761 = vmatmul.mubr.f32.gmra.mrb[0].mxu0 %v32
  %v2762 = vpop.f32.mrb[0].mxu0
  %v2763 = vadd.f32 0.0, %v2762
  %v2764 = vpop.f32.mrb[0].mxu0
  %2765 = vmatprep.mubr.f32.mxu0 %v334
  %2766 = vmatmul.mubr.f32.gmra.mrb[0].mxu0 %v34
  %v2767 = vpop.f32.mrb[0].mxu0
  %v2768 = vadd.f32 0.0, %v2767
  %v2769 = vpop.f32.mrb[0].mxu0
  %2770 = vmatprep.mubr.f32.mxu0 %v337
  %2771 = vmatmul.mubr.f32.gmra.mrb[0].mxu0 %v36
  %v2772 = vpop.f32.mrb[0].mxu0
  %v2773 = vadd.f32 0.0, %v2772
  %v2774 = vpop.f32.mrb[0].mxu0
  %2775 = vmatprep.mubr.f32.mxu0 %v340
  %2776 = vmatmul.mubr.f32.gmra.mrb[0].mxu0 %v38
  %v2777 = vpop.f32.mrb[0].mxu0
  %v2778 = vadd.f32 0.0, %v2777
  %v2779 = vpop.f32.mrb[0].mxu0
  %2780 = vmatprep.mubr.f32.mxu0 %v343
  %2781 = vmatmul.mubr.f32.gmra.mrb[0].mxu0 %v40
  %v2782 = vpop.f32.mrb[0].mxu0
  %v2783 = vadd.f32 0.0, %v2782
  %v2784 = vpop.f32.mrb[0].mxu0
  %2785 = vmatprep.mubr.f32.mxu0 %v346
  %2786 = vmatmul.mubr.f32.gmra.mrb[0].mxu0 %v42
  %v2787 = vpop.f32.mrb[0].mxu0
  %v2788 = vadd.f32 0.0, %v2787
  %v2789 = vpop.f32.mrb[0].mxu0
  %2790 = vmatprep.mubr.f32.mxu0 %v349
  %2791 = vmatmul.mubr.f32.gmra.mrb[0].mxu0 %v44
  %v2792 = vpop.f32.mrb[0].mxu0
  %v2793 = vadd.f32 0.0, %v2792
  %v2794 = vpop.f32.mrb[0].mxu0
  %2795 = vmatprep.mubr.f32.mxu0 %v352
  %2796 = vmatmul.mubr.f32.gmra.mrb[0].mxu0 %v46
  %v2797 = vpop.f32.mrb[0].mxu0
  %v2798 = vadd.f32 0.0, %v2797
  %v2799 = vpop.f32.mrb[0].mxu0
  %2800 = vmatprep.mubr.f32.mxu0 %v355
  %2801 = vmatmul.mubr.f32.gmra.mrb[0].mxu0 %v48
  %v2802 = vpop.f32.mrb[0].mxu0
  %v2803 = vadd.f32 0.0, %v2802
  %v2804 = vpop.f32.mrb[0].mxu0
  %2805 = vmatprep.mubr.f32.mxu0 %v358
  %2806 = vmatmul.mubr.f32.gmra.mrb[0].mxu0 %v50
  %v2807 = vpop.f32.mrb[0].mxu0
  %v2808 = vadd.f32 0.0, %v2807
  %v2809 = vpop.f32.mrb[0].mxu0
  %2810 = vmatprep.mubr.f32.mxu0 %v361
  %2811 = vmatmul.mubr.f32.gmra.mrb[0].mxu0 %v52
  %v2812 = vpop.f32.mrb[0].mxu0
  %v2813 = vadd.f32 0.0, %v2812
  %v2814 = vpop.f32.mrb[0].mxu0
  %2815 = vmatprep.mubr.f32.mxu0 %v364
  %2816 = vmatmul.mubr.f32.gmra.mrb[0].mxu0 %v54
  %v2817 = vpop.f32.mrb[0].mxu0
  %v2818 = vadd.f32 0.0, %v2817
  %v2819 = vpop.f32.mrb[0].mxu0
  %2820 = vmatprep.mubr.f32.mxu0 %v367
  %2821 = vmatmul.mubr.f32.gmra.mrb[0].mxu0 %v56
  %v2822 = vpop.f32.mrb[0].mxu0
  %v2823 = vadd.f32 0.0, %v2822
  %v2824 = vpop.f32.mrb[0].mxu0
  %2825 = vmatprep.mubr.f32.mxu0 %v370
  %2826 = vmatmul.mubr.f32.gmra.mrb[0].mxu0 %v58
  %v2827 = vpop.f32.mrb[0].mxu0
  %v2828 = vadd.f32 0.0, %v2827
  %v2829 = vpop.f32.mrb[0].mxu0
  %2830 = vmatprep.mubr.f32.mxu0 %v373
  %2831 = vmatmul.mubr.f32.gmra.mrb[0].mxu0 %v60
  %v2832 = vpop.f32.mrb[0].mxu0
  %v2833 = vadd.f32 0.0, %v2832
  %v2834 = vpop.f32.mrb[0].mxu0
  %2835 = vmatprep.mubr.f32.mxu0 %v376
  %2836 = vmatmul.mubr.f32.gmra.mrb[0].mxu0 %v62
  %v2837 = vpop.f32.mrb[0].mxu0
  %v2838 = vadd.f32 0.0, %v2837
  %v2839 = vpop.f32.mrb[0].mxu0
  %2840 = vmatprep.mubr.f32.mxu0 %v379
  %2841 = vmatmul.mubr.f32.gmra.mrb[0].mxu0 %v64
  %v2842 = vpop.f32.mrb[0].mxu0
  %v2843 = vadd.f32 0.0, %v2842
  %v2844 = vpop.f32.mrb[0].mxu0
  %2845 = vmatprep.mubr.f32.mxu0 %v382
  %2846 = vmatmul.mubr.f32.gmra.mrb[0].mxu0 %v66
  %v2847 = vpop.f32.mrb[0].mxu0
  %v2848 = vadd.f32 0.0, %v2847
  %v2849 = vpop.f32.mrb[0].mxu0
  %2850 = vmatprep.mubr.f32.mxu0 %v385
  %2851 = vmatmul.mubr.f32.gmra.mrb[0].mxu0 %v68
  %v2852 = vpop.f32.mrb[0].mxu0
  %v2853 = vadd.f32 0.0, %v2852
  %v2854 = vpop.f32.mrb[0].mxu0
  %2855 = vmatprep.mubr.f32.mxu0 %v388
  %2856 = vmatmul.mubr.f32.gmra.mrb[0].mxu0 %v70
  %v2857 = vpop.f32.mrb[0].mxu0
  %v2858 = vadd.f32 0.0, %v2857
  %v2859 = vpop.f32.mrb[0].mxu0
  %2860 = vmatprep.mubr.f32.mxu0 %v391
  %2861 = vmatmul.mubr.f32.gmra.mrb[0].mxu0 %v72
  %v2862 = vpop.f32.mrb[0].mxu0
  %v2863 = vadd.f32 0.0, %v2862
  %v2864 = vpop.f32.mrb[0].mxu0
  %2865 = vmatprep.mubr.f32.mxu0 %v394
  %2866 = vmatmul.mubr.f32.gmra.mrb[0].mxu0 %v74
  %v2867 = vpop.f32.mrb[0].mxu0
  %v2868 = vadd.f32 0.0, %v2867
  %v2869 = vpop.f32.mrb[0].mxu0
  %2870 = vmatprep.mubr.f32.mxu0 %v397
  %2871 = vmatmul.mubr.f32.gmra.mrb[0].mxu0 %v76
  %v2872 = vpop.f32.mrb[0].mxu0
  %v2873 = vadd.f32 0.0, %v2872
  %v2874 = vpop.f32.mrb[0].mxu0
  %2875 = vmatprep.mubr.f32.mxu0 %v400
  %2876 = vmatmul.mubr.f32.gmra.mrb[0].mxu0 %v78
  %v2877 = vpop.f32.mrb[0].mxu0
  %v2878 = vadd.f32 0.0, %v2877
  %v2879 = vpop.f32.mrb[0].mxu0
  %2880 = vmatprep.mubr.f32.mxu0 %v403
  %2881 = vmatmul.mubr.f32.gmra.mrb[0].mxu0 %v80
  %v2882 = vpop.f32.mrb[0].mxu0
  %v2883 = vadd.f32 0.0, %v2882
  %v2884 = vpop.f32.mrb[0].mxu0
  %2885 = vmatprep.mubr.f32.mxu0 %v406
  %2886 = vmatmul.mubr.f32.gmra.mrb[0].mxu0 %v82
  %v2887 = vpop.f32.mrb[0].mxu0
  %v2888 = vadd.f32 0.0, %v2887
  %v2889 = vpop.f32.mrb[0].mxu0
  %2890 = vmatprep.mubr.f32.mxu0 %v409
  %2891 = vmatmul.mubr.f32.gmra.mrb[0].mxu0 %v84
  %v2892 = vpop.f32.mrb[0].mxu0
  %v2893 = vadd.f32 0.0, %v2892
  %v2894 = vpop.f32.mrb[0].mxu0
  %2895 = vmatprep.mubr.f32.mxu0 %v412
  %2896 = vmatmul.mubr.f32.gmra.mrb[0].mxu0 %v86
  %v2897 = vpop.f32.mrb[0].mxu0
  %v2898 = vadd.f32 0.0, %v2897
  %v2899 = vpop.f32.mrb[0].mxu0
  %2900 = vmatprep.mubr.f32.mxu0 %v415
  %2901 = vmatmul.mubr.f32.gmra.mrb[0].mxu0 %v88
  %v2902 = vpop.f32.mrb[0].mxu0
  %v2903 = vadd.f32 0.0, %v2902
  %v2904 = vpop.f32.mrb[0].mxu0
  %2905 = vmatprep.mubr.f32.mxu0 %v418
  %2906 = vmatmul.mubr.f32.gmra.mrb[0].mxu0 %v90
  %v2907 = vpop.f32.mrb[0].mxu0
  %v2908 = vadd.f32 0.0, %v2907
  %v2909 = vpop.f32.mrb[0].mxu0
  %2910 = vmatprep.mubr.f32.mxu0 %v421
  %2911 = vmatmul.mubr.f32.gmra.mrb[0].mxu0 %v92
  %v2912 = vpop.f32.mrb[0].mxu0
  %v2913 = vadd.f32 0.0, %v2912
  %v2914 = vpop.f32.mrb[0].mxu0
  %2915 = vmatprep.mubr.f32.mxu0 %v424
  %2916 = vmatmul.mubr.f32.gmra.mrb[0].mxu0 %v94
  %v2917 = vpop.f32.mrb[0].mxu0
  %v2918 = vadd.f32 0.0, %v2917
  %v2919 = vpop.f32.mrb[0].mxu0
  %2920 = vmatprep.mubr.f32.mxu0 %v427
  %2921 = vmatmul.mubr.f32.gmra.mrb[0].mxu0 %v96
  %v2922 = vpop.f32.mrb[0].mxu0
  %v2923 = vadd.f32 0.0, %v2922
  %v2924 = vpop.f32.mrb[0].mxu0
  %2925 = vmatprep.mubr.f32.mxu0 %v430
  %2926 = vmatmul.mubr.f32.gmra.mrb[0].mxu0 %v98
  %v2927 = vpop.f32.mrb[0].mxu0
  %v2928 = vadd.f32 0.0, %v2927
  %v2929 = vpop.f32.mrb[0].mxu0
  %2930 = vmatprep.mubr.f32.mxu0 %v433
  %2931 = vmatmul.mubr.f32.gmra.mrb[0].mxu0 %v100
  %v2932 = vpop.f32.mrb[0].mxu0
  %v2933 = vadd.f32 0.0, %v2932
  %v2934 = vpop.f32.mrb[0].mxu0
  %2935 = vmatprep.mubr.f32.mxu0 %v436
  %2936 = vmatmul.mubr.f32.gmra.mrb[0].mxu0 %v102
  %v2937 = vpop.f32.mrb[0].mxu0
  %v2938 = vadd.f32 0.0, %v2937
  %v2939 = vpop.f32.mrb[0].mxu0
  %2940 = vmatprep.mubr.f32.mxu0 %v439
  %2941 = vmatmul.mubr.f32.gmra.mrb[0].mxu0 %v104
  %v2942 = vpop.f32.mrb[0].mxu0
  %v2943 = vadd.f32 0.0, %v2942
  %v2944 = vpop.f32.mrb[0].mxu0
  %2945 = vmatprep.mubr.f32.mxu0 %v442
  %2946 = vmatmul.mubr.f32.gmra.mrb[0].mxu0 %v106
  %v2947 = vpop.f32.mrb[0].mxu0
  %v2948 = vadd.f32 0.0, %v2947
  %v2949 = vpop.f32.mrb[0].mxu0
  %2950 = vmatprep.mubr.f32.mxu0 %v445
  %2951 = vmatmul.mubr.f32.gmra.mrb[0].mxu0 %v108
  %v2952 = vpop.f32.mrb[0].mxu0
  %v2953 = vadd.f32 0.0, %v2952
  %v2954 = vpop.f32.mrb[0].mxu0
  %2955 = vmatprep.mubr.f32.mxu0 %v448
  %2956 = vmatmul.mubr.f32.gmra.mrb[0].mxu0 %v110
  %v2957 = vpop.f32.mrb[0].mxu0
  %v2958 = vadd.f32 0.0, %v2957
  %v2959 = vpop.f32.mrb[0].mxu0
  %2960 = vmatprep.mubr.f32.mxu0 %v451
  %2961 = vmatmul.mubr.f32.gmra.mrb[0].mxu0 %v112
  %v2962 = vpop.f32.mrb[0].mxu0
  %v2963 = vadd.f32 0.0, %v2962
  %v2964 = vpop.f32.mrb[0].mxu0
  %2965 = vmatprep.mubr.f32.mxu0 %v454
  %2966 = vmatmul.mubr.f32.gmra.mrb[0].mxu0 %v114
  %v2967 = vpop.f32.mrb[0].mxu0
  %v2968 = vadd.f32 0.0, %v2967
  %v2969 = vpop.f32.mrb[0].mxu0
  %2970 = vmatprep.mubr.f32.mxu0 %v457
  %2971 = vmatmul.mubr.f32.gmra.mrb[0].mxu0 %v116
  %v2972 = vpop.f32.mrb[0].mxu0
  %v2973 = vadd.f32 0.0, %v2972
  %v2974 = vpop.f32.mrb[0].mxu0
  %2975 = vmatprep.mubr.f32.mxu0 %v460
  %2976 = vmatmul.mubr.f32.gmra.mrb[0].mxu0 %v118
  %v2977 = vpop.f32.mrb[0].mxu0
  %v2978 = vadd.f32 0.0, %v2977
  %v2979 = vpop.f32.mrb[0].mxu0
  %2980 = vmatprep.mubr.f32.mxu0 %v463
  %2981 = vmatmul.mubr.f32.gmra.mrb[0].mxu0 %v120
  %v2982 = vpop.f32.mrb[0].mxu0
  %v2983 = vadd.f32 0.0, %v2982
  %v2984 = vpop.f32.mrb[0].mxu0
  %2985 = vmatprep.mubr.f32.mxu0 %v466
  %2986 = vmatmul.mubr.f32.gmra.mrb[0].mxu0 %v122
  %v2987 = vpop.f32.mrb[0].mxu0
  %v2988 = vadd.f32 0.0, %v2987
  %v2989 = vpop.f32.mrb[0].mxu0
  %2990 = vmatprep.mubr.f32.mxu0 %v469
  %2991 = vmatmul.mubr.f32.gmra.mrb[0].mxu0 %v124
  %v2992 = vpop.f32.mrb[0].mxu0
  %v2993 = vadd.f32 0.0, %v2992
  %v2994 = vpop.f32.mrb[0].mxu0
  %2995 = vmatprep.mubr.f32.mxu0 %v472
  %2996 = vmatmul.mubr.f32.gmra.mrb[0].mxu0 %v126
  %v2997 = vpop.f32.mrb[0].mxu0
  %v2998 = vadd.f32 0.0, %v2997
  %v2999 = vpop.f32.mrb[0].mxu0
  %3000 = vmatprep.mubr.f32.mxu0 %v475
  %3001 = vmatmul.mubr.f32.gmra.mrb[0].mxu0 %v128
  %v3002 = vpop.f32.mrb[0].mxu0
  %v3003 = vadd.f32 0.0, %v3002
  %v3004 = vpop.f32.mrb[0].mxu0
  %3005 = vmatprep.mubr.f32.mxu0 %v478
  %3006 = vmatmul.mubr.f32.gmra.mrb[0].mxu0 %v130
  %v3007 = vpop.f32.mrb[0].mxu0
  %v3008 = vadd.f32 0.0, %v3007
  %v3009 = vpop.f32.mrb[0].mxu0
  %3010 = vmatprep.mubr.f32.mxu0 %v481
  %3011 = vmatmul.mubr.f32.gmra.mrb[0].mxu0 %v132
  %v3012 = vpop.f32.mrb[0].mxu0
  %v3013 = vadd.f32 0.0, %v3012
  %v3014 = vpop.f32.mrb[0].mxu0
  %3015 = vmatprep.mubr.f32.mxu0 %v484
  %3016 = vmatmul.mubr.f32.gmra.mrb[0].mxu0 %v134
  %v3017 = vpop.f32.mrb[0].mxu0
  %v3018 = vadd.f32 0.0, %v3017
  %v3019 = vpop.f32.mrb[0].mxu0
  %3020 = vmatprep.mubr.f32.mxu0 %v487
  %3021 = vmatmul.mubr.f32.gmra.mrb[0].mxu0 %v136
  %v3022 = vpop.f32.mrb[0].mxu0
  %v3023 = vadd.f32 0.0, %v3022
  %v3024 = vpop.f32.mrb[0].mxu0
  %3025 = vmatprep.mubr.f32.mxu0 %v490
  %3026 = vmatmul.mubr.f32.gmra.mrb[0].mxu0 %v138
  %v3027 = vpop.f32.mrb[0].mxu0
  %v3028 = vadd.f32 0.0, %v3027
  %v3029 = vpop.f32.mrb[0].mxu0
  %3030 = vmatprep.mubr.f32.mxu0 %v493
  %3031 = vmatmul.mubr.f32.gmra.mrb[0].mxu0 %v140
  %v3032 = vpop.f32.mrb[0].mxu0
  %v3033 = vadd.f32 0.0, %v3032
  %v3034 = vpop.f32.mrb[0].mxu0
  %3035 = vmatprep.mubr.f32.mxu0 %v496
  %3036 = vmatmul.mubr.f32.gmra.mrb[0].mxu0 %v142
  %v3037 = vpop.f32.mrb[0].mxu0
  %v3038 = vadd.f32 0.0, %v3037
  %v3039 = vpop.f32.mrb[0].mxu0
  %3040 = vmatprep.mubr.f32.mxu0 %v499
  %3041 = vmatmul.mubr.f32.gmra.mrb[0].mxu0 %v144
  %v3042 = vpop.f32.mrb[0].mxu0
  %v3043 = vadd.f32 0.0, %v3042
  %v3044 = vpop.f32.mrb[0].mxu0
  %3045 = vmatprep.mubr.f32.mxu0 %v502
  %3046 = vmatmul.mubr.f32.gmra.mrb[0].mxu0 %v146
  %v3047 = vpop.f32.mrb[0].mxu0
  %v3048 = vadd.f32 0.0, %v3047
  %v3049 = vpop.f32.mrb[0].mxu0
  %3050 = vmatprep.mubr.f32.mxu0 %v505
  %3051 = vmatmul.mubr.f32.gmra.mrb[0].mxu0 %v148
  %v3052 = vpop.f32.mrb[0].mxu0
  %v3053 = vadd.f32 0.0, %v3052
  %v3054 = vpop.f32.mrb[0].mxu0
  %3055 = vmatprep.mubr.f32.mxu0 %v508
  %3056 = vmatmul.mubr.f32.gmra.mrb[0].mxu0 %v150
  %v3057 = vpop.f32.mrb[0].mxu0
  %v3058 = vadd.f32 0.0, %v3057
  %v3059 = vpop.f32.mrb[0].mxu0
  %3060 = vmatprep.mubr.f32.mxu0 %v511
  %3061 = vmatmul.mubr.f32.gmra.mrb[0].mxu0 %v152
  %v3062 = vpop.f32.mrb[0].mxu0
  %v3063 = vadd.f32 0.0, %v3062
  %v3064 = vpop.f32.mrb[0].mxu0
  %3065 = vmatprep.mubr.f32.mxu0 %v514
  %3066 = vmatmul.mubr.f32.gmra.mrb[0].mxu0 %v154
  %v3067 = vpop.f32.mrb[0].mxu0
  %v3068 = vadd.f32 0.0, %v3067
  %v3069 = vpop.f32.mrb[0].mxu0
  %3070 = vmatprep.mubr.f32.mxu0 %v517
  %3071 = vmatmul.mubr.f32.gmra.mrb[0].mxu0 %v156
  %v3072 = vpop.f32.mrb[0].mxu0
  %v3073 = vadd.f32 0.0, %v3072
  %v3074 = vpop.f32.mrb[0].mxu0
  %3075 = vmatprep.mubr.f32.mxu0 %v520
  %3076 = vmatmul.mubr.f32.gmra.mrb[0].mxu0 %v158
  %v3077 = vpop.f32.mrb[0].mxu0
  %v3078 = vadd.f32 0.0, %v3077
  %v3079 = vpop.f32.mrb[0].mxu0
  %3080 = vmatprep.mubr.f32.mxu0 %v523
  %3081 = vmatmul.mubr.f32.gmra.mrb[0].mxu0 %v160
  %v3082 = vpop.f32.mrb[0].mxu0
  %v3083 = vadd.f32 0.0, %v3082
  %v3084 = vpop.f32.mrb[0].mxu0
  %3085 = vmatprep.mubr.f32.mxu0 %v526
  %3086 = vmatmul.mubr.f32.gmra.mrb[0].mxu0 %v162
  %v3087 = vpop.f32.mrb[0].mxu0
  %v3088 = vadd.f32 0.0, %v3087
  %v3089 = vpop.f32.mrb[0].mxu0
  %3090 = vmatprep.mubr.f32.mxu0 %v529
  %3091 = vmatmul.mubr.f32.gmra.mrb[0].mxu0 %v164
  %v3092 = vpop.f32.mrb[0].mxu0
  %v3093 = vadd.f32 0.0, %v3092
  %v3094 = vpop.f32.mrb[0].mxu0
  %3095 = vmatprep.mubr.f32.mxu0 %v532
  %3096 = vmatmul.mubr.f32.gmra.mrb[0].mxu0 %v166
  %v3097 = vpop.f32.mrb[0].mxu0
  %v3098 = vadd.f32 0.0, %v3097
  %v3099 = vpop.f32.mrb[0].mxu0
  %3100 = vmatprep.mubr.f32.mxu0 %v535
  %3101 = vmatmul.mubr.f32.gmra.mrb[0].mxu0 %v168
  %v3102 = vpop.f32.mrb[0].mxu0
  %v3103 = vadd.f32 0.0, %v3102
  %v3104 = vpop.f32.mrb[0].mxu0
  %3105 = vmatprep.mubr.f32.mxu0 %v538
  %3106 = vmatmul.mubr.f32.gmra.mrb[0].mxu0 %v170
  %v3107 = vpop.f32.mrb[0].mxu0
  %v3108 = vadd.f32 0.0, %v3107
  %v3109 = vpop.f32.mrb[0].mxu0
  %3110 = vmatprep.mubr.f32.mxu0 %v541
  %3111 = vmatmul.mubr.f32.gmra.mrb[0].mxu0 %v172
  %v3112 = vpop.f32.mrb[0].mxu0
  %v3113 = vadd.f32 0.0, %v3112
  %v3114 = vpop.f32.mrb[0].mxu0
  %3115 = vmatprep.mubr.f32.mxu0 %v544
  %3116 = vmatmul.mubr.f32.gmra.mrb[0].mxu0 %v174
  %v3117 = vpop.f32.mrb[0].mxu0
  %v3118 = vadd.f32 0.0, %v3117
  %v3119 = vpop.f32.mrb[0].mxu0
  %3120 = vmatprep.mubr.f32.mxu0 %v547
  %3121 = vmatmul.mubr.f32.gmra.mrb[0].mxu0 %v176
  %v3122 = vpop.f32.mrb[0].mxu0
  %v3123 = vadd.f32 0.0, %v3122
  %v3124 = vpop.f32.mrb[0].mxu0
  %3125 = vmatprep.mubr.f32.mxu0 %v550
  %3126 = vmatmul.mubr.f32.gmra.mrb[0].mxu0 %v178
  %v3127 = vpop.f32.mrb[0].mxu0
  %v3128 = vadd.f32 0.0, %v3127
  %v3129 = vpop.f32.mrb[0].mxu0
  %3130 = vmatprep.mubr.f32.mxu0 %v553
  %3131 = vmatmul.mubr.f32.gmra.mrb[0].mxu0 %v180
  %v3132 = vpop.f32.mrb[0].mxu0
  %v3133 = vadd.f32 0.0, %v3132
  %v3134 = vpop.f32.mrb[0].mxu0
  %3135 = vmatprep.mubr.f32.mxu0 %v556
  %3136 = vmatmul.mubr.f32.gmra.mrb[0].mxu0 %v182
  %v3137 = vpop.f32.mrb[0].mxu0
  %v3138 = vadd.f32 0.0, %v3137
  %v3139 = vpop.f32.mrb[0].mxu0
  %3140 = vmatprep.mubr.f32.mxu0 %v559
  %3141 = vmatmul.mubr.f32.gmra.mrb[0].mxu0 %v184
  %v3142 = vpop.f32.mrb[0].mxu0
  %v3143 = vadd.f32 0.0, %v3142
  %v3144 = vpop.f32.mrb[0].mxu0
  %3145 = vmatprep.mubr.f32.mxu0 %v562
  %3146 = vmatmul.mubr.f32.gmra.mrb[0].mxu0 %v186
  %v3147 = vpop.f32.mrb[0].mxu0
  %v3148 = vadd.f32 0.0, %v3147
  %v3149 = vpop.f32.mrb[0].mxu0
  %3150 = vmatprep.mubr.f32.mxu0 %v565
  %3151 = vmatmul.mubr.f32.gmra.mrb[0].mxu0 %v188
  %v3152 = vpop.f32.mrb[0].mxu0
  %v3153 = vadd.f32 0.0, %v3152
  %v3154 = vpop.f32.mrb[0].mxu0
  %3155 = vmatprep.mubr.f32.mxu0 %v568
  %3156 = vmatmul.mubr.f32.gmra.mrb[0].mxu0 %v190
  %v3157 = vpop.f32.mrb[0].mxu0
  %v3158 = vadd.f32 0.0, %v3157
  %v3159 = vpop.f32.mrb[0].mxu0
  %3160 = vmatprep.mubr.f32.mxu0 %v571
  %3161 = vmatmul.mubr.f32.gmra.mrb[0].mxu0 %v192
  %v3162 = vpop.f32.mrb[0].mxu0
  %v3163 = vadd.f32 0.0, %v3162
  %v3164 = vpop.f32.mrb[0].mxu0
  %3165 = vmatprep.mubr.f32.mxu0 %v574
  %3166 = vmatmul.mubr.f32.gmra.mrb[0].mxu0 %v194
  %v3167 = vpop.f32.mrb[0].mxu0
  %v3168 = vadd.f32 0.0, %v3167
  %v3169 = vpop.f32.mrb[0].mxu0
  %3170 = vmatprep.mubr.f32.mxu0 %v577
  %3171 = vmatmul.mubr.f32.gmra.mrb[0].mxu0 %v196
  %v3172 = vpop.f32.mrb[0].mxu0
  %v3173 = vadd.f32 0.0, %v3172
  %v3174 = vpop.f32.mrb[0].mxu0
  %3175 = vmatprep.mubr.f32.mxu0 %v580
  %3176 = vmatmul.mubr.f32.gmra.mrb[0].mxu0 %v198
  %v3177 = vpop.f32.mrb[0].mxu0
  %v3178 = vadd.f32 0.0, %v3177
  %v3179 = vpop.f32.mrb[0].mxu0
  %3180 = vmatprep.mubr.f32.mxu0 %v583
  %3181 = vmatmul.mubr.f32.gmra.mrb[0].mxu0 %v200
  %v3182 = vpop.f32.mrb[0].mxu0
  %v3183 = vadd.f32 0.0, %v3182
  %v3184 = vpop.f32.mrb[0].mxu0
  %3185 = vmatprep.mubr.f32.mxu0 %v586
  %3186 = vmatmul.mubr.f32.gmra.mrb[0].mxu0 %v202
  %v3187 = vpop.f32.mrb[0].mxu0
  %v3188 = vadd.f32 0.0, %v3187
  %v3189 = vpop.f32.mrb[0].mxu0
  %3190 = vmatprep.mubr.f32.mxu0 %v589
  %3191 = vmatmul.mubr.f32.gmra.mrb[0].mxu0 %v204
  %v3192 = vpop.f32.mrb[0].mxu0
  %v3193 = vadd.f32 0.0, %v3192
  %v3194 = vpop.f32.mrb[0].mxu0
  %3195 = vmatprep.mubr.f32.mxu0 %v592
  %3196 = vmatmul.mubr.f32.gmra.mrb[0].mxu0 %v206
  %v3197 = vpop.f32.mrb[0].mxu0
  %v3198 = vadd.f32 0.0, %v3197
  %v3199 = vpop.f32.mrb[0].mxu0
  %3200 = vmatprep.mubr.f32.mxu0 %v595
  %3201 = vmatmul.mubr.f32.gmra.mrb[0].mxu0 %v208
  %v3202 = vpop.f32.mrb[0].mxu0
  %v3203 = vadd.f32 0.0, %v3202
  %v3204 = vpop.f32.mrb[0].mxu0
  %3205 = vmatprep.mubr.f32.mxu0 %v598
  %3206 = vmatmul.mubr.f32.gmra.mrb[0].mxu0 %v210
  %v3207 = vpop.f32.mrb[0].mxu0
  %v3208 = vadd.f32 0.0, %v3207
  %v3209 = vpop.f32.mrb[0].mxu0
  %3210 = vmatprep.mubr.f32.mxu0 %v601
  %3211 = vmatmul.mubr.f32.gmra.mrb[0].mxu0 %v212
  %v3212 = vpop.f32.mrb[0].mxu0
  %v3213 = vadd.f32 0.0, %v3212
  %v3214 = vpop.f32.mrb[0].mxu0
  %3215 = vmatprep.mubr.f32.mxu0 %v604
  %3216 = vmatmul.mubr.f32.gmra.mrb[0].mxu0 %v214
  %v3217 = vpop.f32.mrb[0].mxu0
  %v3218 = vadd.f32 0.0, %v3217
  %v3219 = vpop.f32.mrb[0].mxu0
  %3220 = vmatprep.mubr.f32.mxu0 %v607
  %3221 = vmatmul.mubr.f32.gmra.mrb[0].mxu0 %v216
  %v3222 = vpop.f32.mrb[0].mxu0
  %v3223 = vadd.f32 0.0, %v3222
  %v3224 = vpop.f32.mrb[0].mxu0
  %3225 = vmatprep.mubr.f32.mxu0 %v610
  %3226 = vmatmul.mubr.f32.gmra.mrb[0].mxu0 %v218
  %v3227 = vpop.f32.mrb[0].mxu0
  %v3228 = vadd.f32 0.0, %v3227
  %v3229 = vpop.f32.mrb[0].mxu0
  %3230 = vmatprep.mubr.f32.mxu0 %v613
  %3231 = vmatmul.mubr.f32.gmra.mrb[0].mxu0 %v220
  %v3232 = vpop.f32.mrb[0].mxu0
  %v3233 = vadd.f32 0.0, %v3232
  %v3234 = vpop.f32.mrb[0].mxu0
  %3235 = vmatprep.mubr.f32.mxu0 %v616
  %3236 = vmatmul.mubr.f32.gmra.mrb[0].mxu0 %v222
  %v3237 = vpop.f32.mrb[0].mxu0
  %v3238 = vadd.f32 0.0, %v3237
  %v3239 = vpop.f32.mrb[0].mxu0
  %3240 = vmatprep.mubr.f32.mxu0 %v619
  %3241 = vmatmul.mubr.f32.gmra.mrb[0].mxu0 %v224
  %v3242 = vpop.f32.mrb[0].mxu0
  %v3243 = vadd.f32 0.0, %v3242
  %v3244 = vpop.f32.mrb[0].mxu0
  %3245 = vmatprep.mubr.f32.mxu0 %v622
  %3246 = vmatmul.mubr.f32.gmra.mrb[0].mxu0 %v226
  %v3247 = vpop.f32.mrb[0].mxu0
  %v3248 = vadd.f32 0.0, %v3247
  %v3249 = vpop.f32.mrb[0].mxu0
  %3250 = vmatprep.mubr.f32.mxu0 %v625
  %3251 = vmatmul.mubr.f32.gmra.mrb[0].mxu0 %v228
  %v3252 = vpop.f32.mrb[0].mxu0
  %v3253 = vadd.f32 0.0, %v3252
  %v3254 = vpop.f32.mrb[0].mxu0
  %3255 = vmatprep.mubr.f32.mxu0 %v628
  %3256 = vmatmul.mubr.f32.gmra.mrb[0].mxu0 %v230
  %v3257 = vpop.f32.mrb[0].mxu0
  %v3258 = vadd.f32 0.0, %v3257
  %v3259 = vpop.f32.mrb[0].mxu0
  %3260 = vmatprep.mubr.f32.mxu0 %v631
  %3261 = vmatmul.mubr.f32.gmra.mrb[0].mxu0 %v232
  %v3262 = vpop.f32.mrb[0].mxu0
  %v3263 = vadd.f32 0.0, %v3262
  %v3264 = vpop.f32.mrb[0].mxu0
  %3265 = vmatprep.mubr.f32.mxu0 %v634
  %3266 = vmatmul.mubr.f32.gmra.mrb[0].mxu0 %v234
  %v3267 = vpop.f32.mrb[0].mxu0
  %v3268 = vadd.f32 0.0, %v3267
  %v3269 = vpop.f32.mrb[0].mxu0
  %3270 = vmatprep.mubr.f32.mxu0 %v637
  %3271 = vmatmul.mubr.f32.gmra.mrb[0].mxu0 %v236
  %v3272 = vpop.f32.mrb[0].mxu0
  %v3273 = vadd.f32 0.0, %v3272
  %v3274 = vpop.f32.mrb[0].mxu0
  %3275 = vmatprep.mubr.f32.mxu0 %v640
  %3276 = vmatmul.mubr.f32.gmra.mrb[0].mxu0 %v238
  %v3277 = vpop.f32.mrb[0].mxu0
  %v3278 = vadd.f32 0.0, %v3277
  %v3279 = vpop.f32.mrb[0].mxu0
  %3280 = vmatprep.mubr.f32.mxu0 %v643
  %3281 = vmatmul.mubr.f32.gmra.mrb[0].mxu0 %v240
  %v3282 = vpop.f32.mrb[0].mxu0
  %v3283 = vadd.f32 0.0, %v3282
  %v3284 = vpop.f32.mrb[0].mxu0
  %3285 = vmatprep.mubr.f32.mxu0 %v646
  %3286 = vmatmul.mubr.f32.gmra.mrb[0].mxu0 %v242
  %v3287 = vpop.f32.mrb[0].mxu0
  %v3288 = vadd.f32 0.0, %v3287
  %v3289 = vpop.f32.mrb[0].mxu0
  %3290 = vmatprep.mubr.f32.mxu0 %v649
  %3291 = vmatmul.mubr.f32.gmra.mrb[0].mxu0 %v244
  %v3292 = vpop.f32.mrb[0].mxu0
  %v3293 = vadd.f32 0.0, %v3292
  %v3294 = vpop.f32.mrb[0].mxu0
  %3295 = vmatprep.mubr.f32.mxu0 %v652
  %3296 = vmatmul.mubr.f32.gmra.mrb[0].mxu0 %v246
  %v3297 = vpop.f32.mrb[0].mxu0
  %v3298 = vadd.f32 0.0, %v3297
  %v3299 = vpop.f32.mrb[0].mxu0
  %3300 = vmatprep.mubr.f32.mxu0 %v655
  %3301 = vmatmul.mubr.f32.gmra.mrb[0].mxu0 %v248
  %v3302 = vpop.f32.mrb[0].mxu0
  %v3303 = vadd.f32 0.0, %v3302
  %v3304 = vpop.f32.mrb[0].mxu0
  %3305 = vmatprep.mubr.f32.mxu0 %v658
  %3306 = vmatmul.mubr.f32.gmra.mrb[0].mxu0 %v250
  %v3307 = vpop.f32.mrb[0].mxu0
  %v3308 = vadd.f32 0.0, %v3307
  %v3309 = vpop.f32.mrb[0].mxu0
  %3310 = vmatprep.mubr.f32.mxu0 %v661
  %3311 = vmatmul.mubr.f32.gmra.mrb[0].mxu0 %v252
  %v3312 = vpop.f32.mrb[0].mxu0
  %v3313 = vadd.f32 0.0, %v3312
  %v3314 = vpop.f32.mrb[0].mxu0
  %3315 = vmatprep.mubr.f32.mxu0 %v664
  %3316 = vmatmul.mubr.f32.gmra.mrb[0].mxu0 %v254
  %v3317 = vpop.f32.mrb[0].mxu0
  %v3318 = vadd.f32 0.0, %v3317
  %v3319 = vpop.f32.mrb[0].mxu0
  %3320 = vmatprep.mubr.f32.mxu0 %v667
  %3321 = vmatmul.mubr.f32.gmra.mrb[0].mxu0 %v256
  %v3322 = vpop.f32.mrb[0].mxu0
  %v3323 = vadd.f32 0.0, %v3322
  %v3324 = vpop.f32.mrb[0].mxu0
  %3325 = vmatprep.mubr.f32.mxu0 %v670
  %3326 = vmatmul.mubr.f32.gmra.mrb[0].mxu0 %v258
  %v3327 = vpop.f32.mrb[0].mxu0
  %v3328 = vadd.f32 0.0, %v3327
  %v3329 = vpop.f32.mrb[0].mxu0
  %3330 = vdwg.mxu0
  %v3331 = vmax.f32 %v2733, %v2883
  %v3332 = vmax.f32 %v2738, %v2888
  %v3333 = vmax.f32 %v2743, %v2893
  %v3334 = vmax.f32 %v2748, %v2898
  %v3335 = vmax.f32 %v2753, %v2903
  %v3336 = vmax.f32 %v2758, %v2908
  %v3337 = vmax.f32 %v2763, %v2913
  %v3338 = vmax.f32 %v2768, %v2918
  %v3339 = vmax.f32 %v2773, %v2923
  %v3340 = vmax.f32 %v2778, %v2928
  %v3341 = vmax.f32 %v2783, %v2933
  %v3342 = vmax.f32 %v2788, %v2938
  %v3343 = vmax.f32 %v2793, %v2943
  %v3344 = vmax.f32 %v2798, %v2948
  %v3345 = vmax.f32 %v2803, %v2953
  %v3346 = vmax.f32 %v2808, %v2958
  %v3347 = vmax.f32 %v2813, %v2963
  %v3348 = vmax.f32 %v2818, %v2968
  %v3349 = vmax.f32 %v2823, %v2973
  %v3350 = vmax.f32 %v2828, %v2978
  %v3351 = vmax.f32 %v2833, %v2983
  %v3352 = vmax.f32 %v2838, %v2988
  %v3353 = vmax.f32 %v2843, %v2993
  %v3354 = vmax.f32 %v2848, %v2998
  %v3355 = vmax.f32 %v2853, %v3003
  %v3356 = vmax.f32 %v2858, %v3008
  %v3357 = vmax.f32 %v2863, %v3013
  %v3358 = vmax.f32 %v2868, %v3018
  %v3359 = vmax.f32 %v2873, %v3023
  %v3360 = vmax.f32 %v2878, %v3028
  %v3361 = vmax.f32 %v3033, %v3183
  %v3362 = vmax.f32 %v3038, %v3188
  %v3363 = vmax.f32 %v3043, %v3193
  %v3364 = vmax.f32 %v3048, %v3198
  %v3365 = vmax.f32 %v3053, %v3203
  %v3366 = vmax.f32 %v3058, %v3208
  %v3367 = vmax.f32 %v3063, %v3213
  %v3368 = vmax.f32 %v3068, %v3218
  %v3369 = vmax.f32 %v3073, %v3223
  %v3370 = vmax.f32 %v3078, %v3228
  %v3371 = vmax.f32 %v3083, %v3233
  %v3372 = vmax.f32 %v3088, %v3238
  %v3373 = vmax.f32 %v3093, %v3243
  %v3374 = vmax.f32 %v3098, %v3248
  %v3375 = vmax.f32 %v3103, %v3253
  %v3376 = vmax.f32 %v3108, %v3258
  %v3377 = vmax.f32 %v3113, %v3263
  %v3378 = vmax.f32 %v3118, %v3268
  %v3379 = vmax.f32 %v3123, %v3273
  %v3380 = vmax.f32 %v3128, %v3278
  %v3381 = vmax.f32 %v3133, %v3283
  %v3382 = vmax.f32 %v3138, %v3288
  %v3383 = vmax.f32 %v3143, %v3293
  %v3384 = vmax.f32 %v3148, %v3298
  %v3385 = vmax.f32 %v3153, %v3303
  %v3386 = vmax.f32 %v3158, %v3308
  %v3387 = vmax.f32 %v3163, %v3313
  %v3388 = vmax.f32 %v3168, %v3318
  %v3389 = vmax.f32 %v3173, %v3323
  %v3390 = vmax.f32 %v3178, %v3328
  %v3391 = vmax.f32 %v3331, %v3361
  %v3392 = vmax.f32 %v3332, %v3362
  %v3393 = vmax.f32 %v3333, %v3363
  %v3394 = vmax.f32 %v3334, %v3364
  %v3395 = vmax.f32 %v3335, %v3365
  %v3396 = vmax.f32 %v3336, %v3366
  %v3397 = vmax.f32 %v3337, %v3367
  %v3398 = vmax.f32 %v3338, %v3368
  %v3399 = vmax.f32 %v3339, %v3369
  %v3400 = vmax.f32 %v3340, %v3370
  %v3401 = vmax.f32 %v3341, %v3371
  %v3402 = vmax.f32 %v3342, %v3372
  %v3403 = vmax.f32 %v3343, %v3373
  %v3404 = vmax.f32 %v3344, %v3374
  %v3405 = vmax.f32 %v3345, %v3375
  %v3406 = vmax.f32 %v3346, %v3376
  %v3407 = vmax.f32 %v3347, %v3377
  %v3408 = vmax.f32 %v3348, %v3378
  %v3409 = vmax.f32 %v3349, %v3379
  %v3410 = vmax.f32 %v3350, %v3380
  %v3411 = vmax.f32 %v3351, %v3381
  %v3412 = vmax.f32 %v3352, %v3382
  %v3413 = vmax.f32 %v3353, %v3383
  %v3414 = vmax.f32 %v3354, %v3384
  %v3415 = vmax.f32 %v3355, %v3385
  %v3416 = vmax.f32 %v3356, %v3386
  %v3417 = vmax.f32 %v3357, %v3387
  %v3418 = vmax.f32 %v3358, %v3388
  %v3419 = vmax.f32 %v3359, %v3389
  %v3420 = vmax.f32 %v3360, %v3390
  %v3421 = vadd.f32 %v3391, %v1430
  %v3422 = vadd.f32 %v3392, %v1435
  %v3423 = vadd.f32 %v3393, %v1440
  %v3424 = vadd.f32 %v3394, %v1445
  %v3425 = vadd.f32 %v3395, %v1450
  %v3426 = vadd.f32 %v3396, %v1455
  %v3427 = vadd.f32 %v3397, %v1460
  %v3428 = vadd.f32 %v3398, %v1465
  %v3429 = vadd.f32 %v3399, %v1470
  %v3430 = vadd.f32 %v3400, %v1475
  %v3431 = vadd.f32 %v3401, %v1480
  %v3432 = vadd.f32 %v3402, %v1485
  %v3433 = vadd.f32 %v3403, %v1490
  %v3434 = vadd.f32 %v3404, %v1495
  %v3435 = vadd.f32 %v3405, %v1500
  %v3436 = vadd.f32 %v3406, %v1505
  %v3437 = vadd.f32 %v3407, %v1510
  %v3438 = vadd.f32 %v3408, %v1515
  %v3439 = vadd.f32 %v3409, %v1520
  %v3440 = vadd.f32 %v3410, %v1525
  %v3441 = vadd.f32 %v3411, %v1530
  %v3442 = vadd.f32 %v3412, %v1535
  %v3443 = vadd.f32 %v3413, %v1540
  %v3444 = vadd.f32 %v3414, %v1545
  %v3445 = vadd.f32 %v3415, %v1550
  %v3446 = vadd.f32 %v3416, %v1555
  %v3447 = vadd.f32 %v3417, %v1560
  %v3448 = vadd.f32 %v3418, %v1565
  %v3449 = vadd.f32 %v3419, %v1570
  %v3450 = vadd.f32 %v3420, %v1575
  %v3451 = vmax.f32 %v3421, 0.0
  %v3452 = vmax.f32 %v3422, 0.0
  %v3453 = vmax.f32 %v3423, 0.0
  %v3454 = vmax.f32 %v3424, 0.0
  %v3455 = vmax.f32 %v3425, 0.0
  %v3456 = vmax.f32 %v3426, 0.0
  %v3457 = vmax.f32 %v3427, 0.0
  %v3458 = vmax.f32 %v3428, 0.0
  %v3459 = vmax.f32 %v3429, 0.0
  %v3460 = vmax.f32 %v3430, 0.0
  %v3461 = vmax.f32 %v3431, 0.0
  %v3462 = vmax.f32 %v3432, 0.0
  %v3463 = vmax.f32 %v3433, 0.0
  %v3464 = vmax.f32 %v3434, 0.0
  %v3465 = vmax.f32 %v3435, 0.0
  %v3466 = vmax.f32 %v3436, 0.0
  %v3467 = vmax.f32 %v3437, 0.0
  %v3468 = vmax.f32 %v3438, 0.0
  %v3469 = vmax.f32 %v3439, 0.0
  %v3470 = vmax.f32 %v3440, 0.0
  %v3471 = vmax.f32 %v3441, 0.0
  %v3472 = vmax.f32 %v3442, 0.0
  %v3473 = vmax.f32 %v3443, 0.0
  %v3474 = vmax.f32 %v3444, 0.0
  %v3475 = vmax.f32 %v3445, 0.0
  %v3476 = vmax.f32 %v3446, 0.0
  %v3477 = vmax.f32 %v3447, 0.0
  %v3478 = vmax.f32 %v3448, 0.0
  %v3479 = vmax.f32 %v3449, 0.0
  %v3480 = vmax.f32 %v3450, 0.0
  %s3481 = scalar_lea.vmem %s3, 64
  %v3482 = vld [vmem:[%s3481] sm:$0xff]
  %v3483 = vld [vmem:[%s3481 + $0x8] sm:$0xff]
  %v3484 = vld [vmem:[%s3481 + $0x10] sm:$0x3]
  %v3485 = vld [vmem:[%s3481 + $0x18] sm:$0x3]
  %v3487 = vsel %vm2482, %v3483, 0
  %v3490 = vsel %vm2482, %v3485, 0
  %3492 = vmatprep.subr.mxu0 0.0
  %3493 = vmatpush1.msra.mxu0 %v3451
  %3494 = vmatprep.subr.mxu0 0.0
  %3495 = vmatpush1.msra.mxu0 %v3452
  %3496 = vmatprep.subr.mxu0 0.0
  %3497 = vmatpush1.msra.mxu0 %v3453
  %3498 = vmatprep.subr.mxu0 0.0
  %3499 = vmatpush1.msra.mxu0 %v3454
  %3500 = vmatprep.subr.mxu0 0.0
  %3501 = vmatpush1.msra.mxu0 %v3455
  %3502 = vmatprep.subr.mxu0 0.0
  %3503 = vmatpush1.msra.mxu0 %v3456
  %3504 = vmatprep.subr.mxu0 0.0
  %3505 = vmatpush1.msra.mxu0 %v3457
  %3506 = vmatprep.subr.mxu0 0.0
  %3507 = vmatpush1.msra.mxu0 %v3458
  %3508 = vmatprep.subr.mxu0 0.0
  %3509 = vmatpush1.msra.mxu0 %v3459
  %3510 = vmatprep.subr.mxu0 0.0
  %3511 = vmatpush1.msra.mxu0 %v3460
  %3512 = vmatprep.subr.mxu0 0.0
  %3513 = vmatpush1.msra.mxu0 %v3461
  %3514 = vmatprep.subr.mxu0 0.0
  %3515 = vmatpush1.msra.mxu0 %v3462
  %3516 = vmatprep.subr.mxu0 0.0
  %3517 = vmatpush1.msra.mxu0 %v3463
  %3518 = vmatprep.subr.mxu0 0.0
  %3519 = vmatpush1.msra.mxu0 %v3464
  %3520 = vmatprep.subr.mxu0 0.0
  %3521 = vmatpush1.msra.mxu0 %v3465
  %3522 = vmatprep.subr.mxu0 0.0
  %3523 = vmatpush1.msra.mxu0 %v3466
  %3524 = vmatprep.subr.mxu0 0.0
  %3525 = vmatpush1.msra.mxu0 %v3467
  %3526 = vmatprep.subr.mxu0 0.0
  %3527 = vmatpush1.msra.mxu0 %v3468
  %3528 = vmatprep.subr.mxu0 0.0
  %3529 = vmatpush1.msra.mxu0 %v3469
  %3530 = vmatprep.subr.mxu0 0.0
  %3531 = vmatpush1.msra.mxu0 %v3470
  %3532 = vmatprep.subr.mxu0 0.0
  %3533 = vmatpush1.msra.mxu0 %v3471
  %3534 = vmatprep.subr.mxu0 0.0
  %3535 = vmatpush1.msra.mxu0 %v3472
  %3536 = vmatprep.subr.mxu0 0.0
  %3537 = vmatpush1.msra.mxu0 %v3473
  %3538 = vmatprep.subr.mxu0 0.0
  %3539 = vmatpush1.msra.mxu0 %v3474
  %3540 = vmatprep.subr.mxu0 0.0
  %3541 = vmatpush1.msra.mxu0 %v3475
  %3542 = vmatprep.subr.mxu0 0.0
  %3543 = vmatpush1.msra.mxu0 %v3476
  %3544 = vmatprep.subr.mxu0 0.0
  %3545 = vmatpush1.msra.mxu0 %v3477
  %3546 = vmatprep.subr.mxu0 0.0
  %3547 = vmatpush1.msra.mxu0 %v3478
  %3548 = vmatprep.subr.mxu0 0.0
  %3549 = vmatpush1.msra.mxu0 %v3479
  %3550 = vmatprep.subr.mxu0 0.0
  %3551 = vmatpush1.msra.mxu0 %v3480
  %3552 = vmatprep.subr.mxu0 0.0
  %3553 = vmatpush1.msra.mxu0 0.0
  %3554 = vmatprep.subr.mxu0 0.0
  %3555 = vmatpush1.msra.mxu0 0.0
  %3556 = vmatprep.mubr.f32.mxu0 %v3487
  %3557 = vmatmul.mubr.f32.gmra.mrb[0].mxu0 %v3482
  %v3558 = vpop.f32.mrb[0].mxu0
  %v3559 = vadd.f32 0.0, %v3558
  %v3560 = vpop.f32.mrb[0].mxu0
  %3561 = vmatprep.mubr.f32.mxu0 %v3490
  %3562 = vmatmul.mubr.f32.gmra.mrb[0].mxu0 %v3484
  %v3563 = vpop.f32.mrb[0].mxu0
  %v3564 = vadd.f32 0.0, %v3563
  %v3565 = vpop.f32.mrb[0].mxu0
  %3566 = vdwg.mxu0
  %v3567 = vadd.f32 %v2637, %v3559
  %v3568 = vadd.f32 %v2642, %v3564
  %v3569 = vld [vmem:[%s0 + $0xa8] sm:$0xff]
  %v3570 = vld [vmem:[%s0 + $0xb0] sm:$0xff]
  %v3571 = vld [vmem:[%s0 + $0xb8] sm:$0xff]
  %v3572 = vld [vmem:[%s0 + $0xc0] sm:$0xff]
  %v3573 = vld [vmem:[%s0 + $0xc8] sm:$0xff]
  %v3574 = vld [vmem:[%s0 + $0xd0] sm:$0xff]
  %v3575 = vld [vmem:[%s0 + $0xd8] sm:$0xff]
  %v3576 = vld [vmem:[%s0 + $0xe0] sm:$0xff]
  %v3577 = vld [vmem:[%s0 + $0xe8] sm:$0xff]
  %v3578 = vld [vmem:[%s0 + $0xf0] sm:$0xff]
  %v3579 = vld [vmem:[%s0 + $0xf8] sm:$0xff]
  %v3580 = vld [vmem:[%s0 + $0x100] sm:$0xff]
  %v3581 = vld [vmem:[%s0 + $0x108] sm:$0xff]
  %v3582 = vld [vmem:[%s0 + $0x110] sm:$0xff]
  %v3583 = vld [vmem:[%s0 + $0x118] sm:$0xff]
  %v3584 = vld [vmem:[%s0 + $0x120] sm:$0xff]
  %v3585 = vld [vmem:[%s0 + $0x128] sm:$0xff]
  %v3586 = vld [vmem:[%s0 + $0x130] sm:$0xff]
  %v3587 = vld [vmem:[%s0 + $0x138] sm:$0xff]
  %v3588 = vld [vmem:[%s0 + $0x140] sm:$0xff]
  %v3589 = vld [vmem:[%s0 + $0x148] sm:$0xff]
  %3590 = vmatprep.subr.mxu0 0.0
  %3591 = vmatpush1.msra.mxu0 %v3569
  %3592 = vmatprep.subr.mxu0 0.0
  %3593 = vmatpush1.msra.mxu0 %v3570
  %3594 = vmatprep.subr.mxu0 0.0
  %3595 = vmatpush1.msra.mxu0 %v3571
  %3596 = vmatprep.subr.mxu0 0.0
  %3597 = vmatpush1.msra.mxu0 %v3572
  %3598 = vmatprep.subr.mxu0 0.0
  %3599 = vmatpush1.msra.mxu0 %v3573
  %3600 = vmatprep.subr.mxu0 0.0
  %3601 = vmatpush1.msra.mxu0 %v3574
  %3602 = vmatprep.subr.mxu0 0.0
  %3603 = vmatpush1.msra.mxu0 %v3575
  %3604 = vmatprep.subr.mxu0 0.0
  %3605 = vmatpush1.msra.mxu0 %v3576
  %3606 = vmatprep.subr.mxu0 0.0
  %3607 = vmatpush1.msra.mxu0 %v3577
  %3608 = vmatprep.subr.mxu0 0.0
  %3609 = vmatpush1.msra.mxu0 %v3578
  %3610 = vmatprep.subr.mxu0 0.0
  %3611 = vmatpush1.msra.mxu0 %v3579
  %3612 = vmatprep.subr.mxu0 0.0
  %3613 = vmatpush1.msra.mxu0 %v3580
  %3614 = vmatprep.subr.mxu0 0.0
  %3615 = vmatpush1.msra.mxu0 %v3581
  %3616 = vmatprep.subr.mxu0 0.0
  %3617 = vmatpush1.msra.mxu0 %v3582
  %3618 = vmatprep.subr.mxu0 0.0
  %3619 = vmatpush1.msra.mxu0 %v3583
  %3620 = vmatprep.subr.mxu0 0.0
  %3621 = vmatpush1.msra.mxu0 %v3584
  %3622 = vmatprep.subr.mxu0 0.0
  %3623 = vmatpush1.msra.mxu0 %v3585
  %3624 = vmatprep.subr.mxu0 0.0
  %3625 = vmatpush1.msra.mxu0 %v3586
  %3626 = vmatprep.subr.mxu0 0.0
  %3627 = vmatpush1.msra.mxu0 %v3587
  %3628 = vmatprep.subr.mxu0 0.0
  %3629 = vmatpush1.msra.mxu0 %v3588
  %3630 = vmatprep.subr.mxu0 0.0
  %3631 = vmatpush1.msra.mxu0 %v3589
  %3632 = vmatprep.subr.mxu0 0.0
  %3633 = vmatpush1.msra.mxu0 0.0
  %3634 = vmatprep.subr.mxu0 0.0
  %3635 = vmatpush1.msra.mxu0 0.0
  %3636 = vmatprep.subr.mxu0 0.0
  %3637 = vmatpush1.msra.mxu0 0.0
  %3638 = vmatprep.subr.mxu0 0.0
  %3639 = vmatpush1.msra.mxu0 0.0
  %3640 = vmatprep.subr.mxu0 0.0
  %3641 = vmatpush1.msra.mxu0 0.0
  %3642 = vmatprep.subr.mxu0 0.0
  %3643 = vmatpush1.msra.mxu0 0.0
  %3644 = vmatprep.subr.mxu0 0.0
  %3645 = vmatpush1.msra.mxu0 0.0
  %3646 = vmatprep.subr.mxu0 0.0
  %3647 = vmatpush1.msra.mxu0 0.0
  %3648 = vmatprep.subr.mxu0 0.0
  %3649 = vmatpush1.msra.mxu0 0.0
  %3650 = vmatprep.subr.mxu0 0.0
  %3651 = vmatpush1.msra.mxu0 0.0
  %3652 = vmatprep.subr.mxu0 0.0
  %3653 = vmatpush1.msra.mxu0 0.0
  %3654 = vmatprep.mubr.f32.mxu0 %v313
  %3655 = vmatmul.mubr.f32.gmra.mrb[0].mxu0 %v20
  %v3656 = vpop.f32.mrb[0].mxu0
  %v3657 = vadd.f32 0.0, %v3656
  %v3658 = vpop.f32.mrb[0].mxu0
  %3659 = vmatprep.mubr.f32.mxu0 %v316
  %3660 = vmatmul.mubr.f32.gmra.mrb[0].mxu0 %v22
  %v3661 = vpop.f32.mrb[0].mxu0
  %v3662 = vadd.f32 0.0, %v3661
  %v3663 = vpop.f32.mrb[0].mxu0
  %3664 = vmatprep.mubr.f32.mxu0 %v319
  %3665 = vmatmul.mubr.f32.gmra.mrb[0].mxu0 %v24
  %v3666 = vpop.f32.mrb[0].mxu0
  %v3667 = vadd.f32 0.0, %v3666
  %v3668 = vpop.f32.mrb[0].mxu0
  %3669 = vmatprep.mubr.f32.mxu0 %v322
  %3670 = vmatmul.mubr.f32.gmra.mrb[0].mxu0 %v26
  %v3671 = vpop.f32.mrb[0].mxu0
  %v3672 = vadd.f32 0.0, %v3671
  %v3673 = vpop.f32.mrb[0].mxu0
  %3674 = vmatprep.mubr.f32.mxu0 %v325
  %3675 = vmatmul.mubr.f32.gmra.mrb[0].mxu0 %v28
  %v3676 = vpop.f32.mrb[0].mxu0
  %v3677 = vadd.f32 0.0, %v3676
  %v3678 = vpop.f32.mrb[0].mxu0
  %3679 = vmatprep.mubr.f32.mxu0 %v328
  %3680 = vmatmul.mubr.f32.gmra.mrb[0].mxu0 %v30
  %v3681 = vpop.f32.mrb[0].mxu0
  %v3682 = vadd.f32 0.0, %v3681
  %v3683 = vpop.f32.mrb[0].mxu0
  %3684 = vmatprep.mubr.f32.mxu0 %v331
  %3685 = vmatmul.mubr.f32.gmra.mrb[0].mxu0 %v32
  %v3686 = vpop.f32.mrb[0].mxu0
  %v3687 = vadd.f32 0.0, %v3686
  %v3688 = vpop.f32.mrb[0].mxu0
  %3689 = vmatprep.mubr.f32.mxu0 %v334
  %3690 = vmatmul.mubr.f32.gmra.mrb[0].mxu0 %v34
  %v3691 = vpop.f32.mrb[0].mxu0
  %v3692 = vadd.f32 0.0, %v3691
  %v3693 = vpop.f32.mrb[0].mxu0
  %3694 = vmatprep.mubr.f32.mxu0 %v337
  %3695 = vmatmul.mubr.f32.gmra.mrb[0].mxu0 %v36
  %v3696 = vpop.f32.mrb[0].mxu0
  %v3697 = vadd.f32 0.0, %v3696
  %v3698 = vpop.f32.mrb[0].mxu0
  %3699 = vmatprep.mubr.f32.mxu0 %v340
  %3700 = vmatmul.mubr.f32.gmra.mrb[0].mxu0 %v38
  %v3701 = vpop.f32.mrb[0].mxu0
  %v3702 = vadd.f32 0.0, %v3701
  %v3703 = vpop.f32.mrb[0].mxu0
  %3704 = vmatprep.mubr.f32.mxu0 %v343
  %3705 = vmatmul.mubr.f32.gmra.mrb[0].mxu0 %v40
  %v3706 = vpop.f32.mrb[0].mxu0
  %v3707 = vadd.f32 0.0, %v3706
  %v3708 = vpop.f32.mrb[0].mxu0
  %3709 = vmatprep.mubr.f32.mxu0 %v346
  %3710 = vmatmul.mubr.f32.gmra.mrb[0].mxu0 %v42
  %v3711 = vpop.f32.mrb[0].mxu0
  %v3712 = vadd.f32 0.0, %v3711
  %v3713 = vpop.f32.mrb[0].mxu0
  %3714 = vmatprep.mubr.f32.mxu0 %v349
  %3715 = vmatmul.mubr.f32.gmra.mrb[0].mxu0 %v44
  %v3716 = vpop.f32.mrb[0].mxu0
  %v3717 = vadd.f32 0.0, %v3716
  %v3718 = vpop.f32.mrb[0].mxu0
  %3719 = vmatprep.mubr.f32.mxu0 %v352
  %3720 = vmatmul.mubr.f32.gmra.mrb[0].mxu0 %v46
  %v3721 = vpop.f32.mrb[0].mxu0
  %v3722 = vadd.f32 0.0, %v3721
  %v3723 = vpop.f32.mrb[0].mxu0
  %3724 = vmatprep.mubr.f32.mxu0 %v355
  %3725 = vmatmul.mubr.f32.gmra.mrb[0].mxu0 %v48
  %v3726 = vpop.f32.mrb[0].mxu0
  %v3727 = vadd.f32 0.0, %v3726
  %v3728 = vpop.f32.mrb[0].mxu0
  %3729 = vmatprep.mubr.f32.mxu0 %v358
  %3730 = vmatmul.mubr.f32.gmra.mrb[0].mxu0 %v50
  %v3731 = vpop.f32.mrb[0].mxu0
  %v3732 = vadd.f32 0.0, %v3731
  %v3733 = vpop.f32.mrb[0].mxu0
  %3734 = vmatprep.mubr.f32.mxu0 %v361
  %3735 = vmatmul.mubr.f32.gmra.mrb[0].mxu0 %v52
  %v3736 = vpop.f32.mrb[0].mxu0
  %v3737 = vadd.f32 0.0, %v3736
  %v3738 = vpop.f32.mrb[0].mxu0
  %3739 = vmatprep.mubr.f32.mxu0 %v364
  %3740 = vmatmul.mubr.f32.gmra.mrb[0].mxu0 %v54
  %v3741 = vpop.f32.mrb[0].mxu0
  %v3742 = vadd.f32 0.0, %v3741
  %v3743 = vpop.f32.mrb[0].mxu0
  %3744 = vmatprep.mubr.f32.mxu0 %v367
  %3745 = vmatmul.mubr.f32.gmra.mrb[0].mxu0 %v56
  %v3746 = vpop.f32.mrb[0].mxu0
  %v3747 = vadd.f32 0.0, %v3746
  %v3748 = vpop.f32.mrb[0].mxu0
  %3749 = vmatprep.mubr.f32.mxu0 %v370
  %3750 = vmatmul.mubr.f32.gmra.mrb[0].mxu0 %v58
  %v3751 = vpop.f32.mrb[0].mxu0
  %v3752 = vadd.f32 0.0, %v3751
  %v3753 = vpop.f32.mrb[0].mxu0
  %3754 = vmatprep.mubr.f32.mxu0 %v373
  %3755 = vmatmul.mubr.f32.gmra.mrb[0].mxu0 %v60
  %v3756 = vpop.f32.mrb[0].mxu0
  %v3757 = vadd.f32 0.0, %v3756
  %v3758 = vpop.f32.mrb[0].mxu0
  %3759 = vmatprep.mubr.f32.mxu0 %v376
  %3760 = vmatmul.mubr.f32.gmra.mrb[0].mxu0 %v62
  %v3761 = vpop.f32.mrb[0].mxu0
  %v3762 = vadd.f32 0.0, %v3761
  %v3763 = vpop.f32.mrb[0].mxu0
  %3764 = vmatprep.mubr.f32.mxu0 %v379
  %3765 = vmatmul.mubr.f32.gmra.mrb[0].mxu0 %v64
  %v3766 = vpop.f32.mrb[0].mxu0
  %v3767 = vadd.f32 0.0, %v3766
  %v3768 = vpop.f32.mrb[0].mxu0
  %3769 = vmatprep.mubr.f32.mxu0 %v382
  %3770 = vmatmul.mubr.f32.gmra.mrb[0].mxu0 %v66
  %v3771 = vpop.f32.mrb[0].mxu0
  %v3772 = vadd.f32 0.0, %v3771
  %v3773 = vpop.f32.mrb[0].mxu0
  %3774 = vmatprep.mubr.f32.mxu0 %v385
  %3775 = vmatmul.mubr.f32.gmra.mrb[0].mxu0 %v68
  %v3776 = vpop.f32.mrb[0].mxu0
  %v3777 = vadd.f32 0.0, %v3776
  %v3778 = vpop.f32.mrb[0].mxu0
  %3779 = vmatprep.mubr.f32.mxu0 %v388
  %3780 = vmatmul.mubr.f32.gmra.mrb[0].mxu0 %v70
  %v3781 = vpop.f32.mrb[0].mxu0
  %v3782 = vadd.f32 0.0, %v3781
  %v3783 = vpop.f32.mrb[0].mxu0
  %3784 = vmatprep.mubr.f32.mxu0 %v391
  %3785 = vmatmul.mubr.f32.gmra.mrb[0].mxu0 %v72
  %v3786 = vpop.f32.mrb[0].mxu0
  %v3787 = vadd.f32 0.0, %v3786
  %v3788 = vpop.f32.mrb[0].mxu0
  %3789 = vmatprep.mubr.f32.mxu0 %v394
  %3790 = vmatmul.mubr.f32.gmra.mrb[0].mxu0 %v74
  %v3791 = vpop.f32.mrb[0].mxu0
  %v3792 = vadd.f32 0.0, %v3791
  %v3793 = vpop.f32.mrb[0].mxu0
  %3794 = vmatprep.mubr.f32.mxu0 %v397
  %3795 = vmatmul.mubr.f32.gmra.mrb[0].mxu0 %v76
  %v3796 = vpop.f32.mrb[0].mxu0
  %v3797 = vadd.f32 0.0, %v3796
  %v3798 = vpop.f32.mrb[0].mxu0
  %3799 = vmatprep.mubr.f32.mxu0 %v400
  %3800 = vmatmul.mubr.f32.gmra.mrb[0].mxu0 %v78
  %v3801 = vpop.f32.mrb[0].mxu0
  %v3802 = vadd.f32 0.0, %v3801
  %v3803 = vpop.f32.mrb[0].mxu0
  %3804 = vmatprep.mubr.f32.mxu0 %v403
  %3805 = vmatmul.mubr.f32.gmra.mrb[0].mxu0 %v80
  %v3806 = vpop.f32.mrb[0].mxu0
  %v3807 = vadd.f32 0.0, %v3806
  %v3808 = vpop.f32.mrb[0].mxu0
  %3809 = vmatprep.mubr.f32.mxu0 %v406
  %3810 = vmatmul.mubr.f32.gmra.mrb[0].mxu0 %v82
  %v3811 = vpop.f32.mrb[0].mxu0
  %v3812 = vadd.f32 0.0, %v3811
  %v3813 = vpop.f32.mrb[0].mxu0
  %3814 = vmatprep.mubr.f32.mxu0 %v409
  %3815 = vmatmul.mubr.f32.gmra.mrb[0].mxu0 %v84
  %v3816 = vpop.f32.mrb[0].mxu0
  %v3817 = vadd.f32 0.0, %v3816
  %v3818 = vpop.f32.mrb[0].mxu0
  %3819 = vmatprep.mubr.f32.mxu0 %v412
  %3820 = vmatmul.mubr.f32.gmra.mrb[0].mxu0 %v86
  %v3821 = vpop.f32.mrb[0].mxu0
  %v3822 = vadd.f32 0.0, %v3821
  %v3823 = vpop.f32.mrb[0].mxu0
  %3824 = vmatprep.mubr.f32.mxu0 %v415
  %3825 = vmatmul.mubr.f32.gmra.mrb[0].mxu0 %v88
  %v3826 = vpop.f32.mrb[0].mxu0
  %v3827 = vadd.f32 0.0, %v3826
  %v3828 = vpop.f32.mrb[0].mxu0
  %3829 = vmatprep.mubr.f32.mxu0 %v418
  %3830 = vmatmul.mubr.f32.gmra.mrb[0].mxu0 %v90
  %v3831 = vpop.f32.mrb[0].mxu0
  %v3832 = vadd.f32 0.0, %v3831
  %v3833 = vpop.f32.mrb[0].mxu0
  %3834 = vmatprep.mubr.f32.mxu0 %v421
  %3835 = vmatmul.mubr.f32.gmra.mrb[0].mxu0 %v92
  %v3836 = vpop.f32.mrb[0].mxu0
  %v3837 = vadd.f32 0.0, %v3836
  %v3838 = vpop.f32.mrb[0].mxu0
  %3839 = vmatprep.mubr.f32.mxu0 %v424
  %3840 = vmatmul.mubr.f32.gmra.mrb[0].mxu0 %v94
  %v3841 = vpop.f32.mrb[0].mxu0
  %v3842 = vadd.f32 0.0, %v3841
  %v3843 = vpop.f32.mrb[0].mxu0
  %3844 = vmatprep.mubr.f32.mxu0 %v427
  %3845 = vmatmul.mubr.f32.gmra.mrb[0].mxu0 %v96
  %v3846 = vpop.f32.mrb[0].mxu0
  %v3847 = vadd.f32 0.0, %v3846
  %v3848 = vpop.f32.mrb[0].mxu0
  %3849 = vmatprep.mubr.f32.mxu0 %v430
  %3850 = vmatmul.mubr.f32.gmra.mrb[0].mxu0 %v98
  %v3851 = vpop.f32.mrb[0].mxu0
  %v3852 = vadd.f32 0.0, %v3851
  %v3853 = vpop.f32.mrb[0].mxu0
  %3854 = vmatprep.mubr.f32.mxu0 %v433
  %3855 = vmatmul.mubr.f32.gmra.mrb[0].mxu0 %v100
  %v3856 = vpop.f32.mrb[0].mxu0
  %v3857 = vadd.f32 0.0, %v3856
  %v3858 = vpop.f32.mrb[0].mxu0
  %3859 = vmatprep.mubr.f32.mxu0 %v436
  %3860 = vmatmul.mubr.f32.gmra.mrb[0].mxu0 %v102
  %v3861 = vpop.f32.mrb[0].mxu0
  %v3862 = vadd.f32 0.0, %v3861
  %v3863 = vpop.f32.mrb[0].mxu0
  %3864 = vmatprep.mubr.f32.mxu0 %v439
  %3865 = vmatmul.mubr.f32.gmra.mrb[0].mxu0 %v104
  %v3866 = vpop.f32.mrb[0].mxu0
  %v3867 = vadd.f32 0.0, %v3866
  %v3868 = vpop.f32.mrb[0].mxu0
  %3869 = vmatprep.mubr.f32.mxu0 %v442
  %3870 = vmatmul.mubr.f32.gmra.mrb[0].mxu0 %v106
  %v3871 = vpop.f32.mrb[0].mxu0
  %v3872 = vadd.f32 0.0, %v3871
  %v3873 = vpop.f32.mrb[0].mxu0
  %3874 = vmatprep.mubr.f32.mxu0 %v445
  %3875 = vmatmul.mubr.f32.gmra.mrb[0].mxu0 %v108
  %v3876 = vpop.f32.mrb[0].mxu0
  %v3877 = vadd.f32 0.0, %v3876
  %v3878 = vpop.f32.mrb[0].mxu0
  %3879 = vmatprep.mubr.f32.mxu0 %v448
  %3880 = vmatmul.mubr.f32.gmra.mrb[0].mxu0 %v110
  %v3881 = vpop.f32.mrb[0].mxu0
  %v3882 = vadd.f32 0.0, %v3881
  %v3883 = vpop.f32.mrb[0].mxu0
  %3884 = vmatprep.mubr.f32.mxu0 %v451
  %3885 = vmatmul.mubr.f32.gmra.mrb[0].mxu0 %v112
  %v3886 = vpop.f32.mrb[0].mxu0
  %v3887 = vadd.f32 0.0, %v3886
  %v3888 = vpop.f32.mrb[0].mxu0
  %3889 = vmatprep.mubr.f32.mxu0 %v454
  %3890 = vmatmul.mubr.f32.gmra.mrb[0].mxu0 %v114
  %v3891 = vpop.f32.mrb[0].mxu0
  %v3892 = vadd.f32 0.0, %v3891
  %v3893 = vpop.f32.mrb[0].mxu0
  %3894 = vmatprep.mubr.f32.mxu0 %v457
  %3895 = vmatmul.mubr.f32.gmra.mrb[0].mxu0 %v116
  %v3896 = vpop.f32.mrb[0].mxu0
  %v3897 = vadd.f32 0.0, %v3896
  %v3898 = vpop.f32.mrb[0].mxu0
  %3899 = vmatprep.mubr.f32.mxu0 %v460
  %3900 = vmatmul.mubr.f32.gmra.mrb[0].mxu0 %v118
  %v3901 = vpop.f32.mrb[0].mxu0
  %v3902 = vadd.f32 0.0, %v3901
  %v3903 = vpop.f32.mrb[0].mxu0
  %3904 = vmatprep.mubr.f32.mxu0 %v463
  %3905 = vmatmul.mubr.f32.gmra.mrb[0].mxu0 %v120
  %v3906 = vpop.f32.mrb[0].mxu0
  %v3907 = vadd.f32 0.0, %v3906
  %v3908 = vpop.f32.mrb[0].mxu0
  %3909 = vmatprep.mubr.f32.mxu0 %v466
  %3910 = vmatmul.mubr.f32.gmra.mrb[0].mxu0 %v122
  %v3911 = vpop.f32.mrb[0].mxu0
  %v3912 = vadd.f32 0.0, %v3911
  %v3913 = vpop.f32.mrb[0].mxu0
  %3914 = vmatprep.mubr.f32.mxu0 %v469
  %3915 = vmatmul.mubr.f32.gmra.mrb[0].mxu0 %v124
  %v3916 = vpop.f32.mrb[0].mxu0
  %v3917 = vadd.f32 0.0, %v3916
  %v3918 = vpop.f32.mrb[0].mxu0
  %3919 = vmatprep.mubr.f32.mxu0 %v472
  %3920 = vmatmul.mubr.f32.gmra.mrb[0].mxu0 %v126
  %v3921 = vpop.f32.mrb[0].mxu0
  %v3922 = vadd.f32 0.0, %v3921
  %v3923 = vpop.f32.mrb[0].mxu0
  %3924 = vmatprep.mubr.f32.mxu0 %v475
  %3925 = vmatmul.mubr.f32.gmra.mrb[0].mxu0 %v128
  %v3926 = vpop.f32.mrb[0].mxu0
  %v3927 = vadd.f32 0.0, %v3926
  %v3928 = vpop.f32.mrb[0].mxu0
  %3929 = vmatprep.mubr.f32.mxu0 %v478
  %3930 = vmatmul.mubr.f32.gmra.mrb[0].mxu0 %v130
  %v3931 = vpop.f32.mrb[0].mxu0
  %v3932 = vadd.f32 0.0, %v3931
  %v3933 = vpop.f32.mrb[0].mxu0
  %3934 = vmatprep.mubr.f32.mxu0 %v481
  %3935 = vmatmul.mubr.f32.gmra.mrb[0].mxu0 %v132
  %v3936 = vpop.f32.mrb[0].mxu0
  %v3937 = vadd.f32 0.0, %v3936
  %v3938 = vpop.f32.mrb[0].mxu0
  %3939 = vmatprep.mubr.f32.mxu0 %v484
  %3940 = vmatmul.mubr.f32.gmra.mrb[0].mxu0 %v134
  %v3941 = vpop.f32.mrb[0].mxu0
  %v3942 = vadd.f32 0.0, %v3941
  %v3943 = vpop.f32.mrb[0].mxu0
  %3944 = vmatprep.mubr.f32.mxu0 %v487
  %3945 = vmatmul.mubr.f32.gmra.mrb[0].mxu0 %v136
  %v3946 = vpop.f32.mrb[0].mxu0
  %v3947 = vadd.f32 0.0, %v3946
  %v3948 = vpop.f32.mrb[0].mxu0
  %3949 = vmatprep.mubr.f32.mxu0 %v490
  %3950 = vmatmul.mubr.f32.gmra.mrb[0].mxu0 %v138
  %v3951 = vpop.f32.mrb[0].mxu0
  %v3952 = vadd.f32 0.0, %v3951
  %v3953 = vpop.f32.mrb[0].mxu0
  %3954 = vmatprep.mubr.f32.mxu0 %v493
  %3955 = vmatmul.mubr.f32.gmra.mrb[0].mxu0 %v140
  %v3956 = vpop.f32.mrb[0].mxu0
  %v3957 = vadd.f32 0.0, %v3956
  %v3958 = vpop.f32.mrb[0].mxu0
  %3959 = vmatprep.mubr.f32.mxu0 %v496
  %3960 = vmatmul.mubr.f32.gmra.mrb[0].mxu0 %v142
  %v3961 = vpop.f32.mrb[0].mxu0
  %v3962 = vadd.f32 0.0, %v3961
  %v3963 = vpop.f32.mrb[0].mxu0
  %3964 = vmatprep.mubr.f32.mxu0 %v499
  %3965 = vmatmul.mubr.f32.gmra.mrb[0].mxu0 %v144
  %v3966 = vpop.f32.mrb[0].mxu0
  %v3967 = vadd.f32 0.0, %v3966
  %v3968 = vpop.f32.mrb[0].mxu0
  %3969 = vmatprep.mubr.f32.mxu0 %v502
  %3970 = vmatmul.mubr.f32.gmra.mrb[0].mxu0 %v146
  %v3971 = vpop.f32.mrb[0].mxu0
  %v3972 = vadd.f32 0.0, %v3971
  %v3973 = vpop.f32.mrb[0].mxu0
  %3974 = vmatprep.mubr.f32.mxu0 %v505
  %3975 = vmatmul.mubr.f32.gmra.mrb[0].mxu0 %v148
  %v3976 = vpop.f32.mrb[0].mxu0
  %v3977 = vadd.f32 0.0, %v3976
  %v3978 = vpop.f32.mrb[0].mxu0
  %3979 = vmatprep.mubr.f32.mxu0 %v508
  %3980 = vmatmul.mubr.f32.gmra.mrb[0].mxu0 %v150
  %v3981 = vpop.f32.mrb[0].mxu0
  %v3982 = vadd.f32 0.0, %v3981
  %v3983 = vpop.f32.mrb[0].mxu0
  %3984 = vmatprep.mubr.f32.mxu0 %v511
  %3985 = vmatmul.mubr.f32.gmra.mrb[0].mxu0 %v152
  %v3986 = vpop.f32.mrb[0].mxu0
  %v3987 = vadd.f32 0.0, %v3986
  %v3988 = vpop.f32.mrb[0].mxu0
  %3989 = vmatprep.mubr.f32.mxu0 %v514
  %3990 = vmatmul.mubr.f32.gmra.mrb[0].mxu0 %v154
  %v3991 = vpop.f32.mrb[0].mxu0
  %v3992 = vadd.f32 0.0, %v3991
  %v3993 = vpop.f32.mrb[0].mxu0
  %3994 = vmatprep.mubr.f32.mxu0 %v517
  %3995 = vmatmul.mubr.f32.gmra.mrb[0].mxu0 %v156
  %v3996 = vpop.f32.mrb[0].mxu0
  %v3997 = vadd.f32 0.0, %v3996
  %v3998 = vpop.f32.mrb[0].mxu0
  %3999 = vmatprep.mubr.f32.mxu0 %v520
  %4000 = vmatmul.mubr.f32.gmra.mrb[0].mxu0 %v158
  %v4001 = vpop.f32.mrb[0].mxu0
  %v4002 = vadd.f32 0.0, %v4001
  %v4003 = vpop.f32.mrb[0].mxu0
  %4004 = vmatprep.mubr.f32.mxu0 %v523
  %4005 = vmatmul.mubr.f32.gmra.mrb[0].mxu0 %v160
  %v4006 = vpop.f32.mrb[0].mxu0
  %v4007 = vadd.f32 0.0, %v4006
  %v4008 = vpop.f32.mrb[0].mxu0
  %4009 = vmatprep.mubr.f32.mxu0 %v526
  %4010 = vmatmul.mubr.f32.gmra.mrb[0].mxu0 %v162
  %v4011 = vpop.f32.mrb[0].mxu0
  %v4012 = vadd.f32 0.0, %v4011
  %v4013 = vpop.f32.mrb[0].mxu0
  %4014 = vmatprep.mubr.f32.mxu0 %v529
  %4015 = vmatmul.mubr.f32.gmra.mrb[0].mxu0 %v164
  %v4016 = vpop.f32.mrb[0].mxu0
  %v4017 = vadd.f32 0.0, %v4016
  %v4018 = vpop.f32.mrb[0].mxu0
  %4019 = vmatprep.mubr.f32.mxu0 %v532
  %4020 = vmatmul.mubr.f32.gmra.mrb[0].mxu0 %v166
  %v4021 = vpop.f32.mrb[0].mxu0
  %v4022 = vadd.f32 0.0, %v4021
  %v4023 = vpop.f32.mrb[0].mxu0
  %4024 = vmatprep.mubr.f32.mxu0 %v535
  %4025 = vmatmul.mubr.f32.gmra.mrb[0].mxu0 %v168
  %v4026 = vpop.f32.mrb[0].mxu0
  %v4027 = vadd.f32 0.0, %v4026
  %v4028 = vpop.f32.mrb[0].mxu0
  %4029 = vmatprep.mubr.f32.mxu0 %v538
  %4030 = vmatmul.mubr.f32.gmra.mrb[0].mxu0 %v170
  %v4031 = vpop.f32.mrb[0].mxu0
  %v4032 = vadd.f32 0.0, %v4031
  %v4033 = vpop.f32.mrb[0].mxu0
  %4034 = vmatprep.mubr.f32.mxu0 %v541
  %4035 = vmatmul.mubr.f32.gmra.mrb[0].mxu0 %v172
  %v4036 = vpop.f32.mrb[0].mxu0
  %v4037 = vadd.f32 0.0, %v4036
  %v4038 = vpop.f32.mrb[0].mxu0
  %4039 = vmatprep.mubr.f32.mxu0 %v544
  %4040 = vmatmul.mubr.f32.gmra.mrb[0].mxu0 %v174
  %v4041 = vpop.f32.mrb[0].mxu0
  %v4042 = vadd.f32 0.0, %v4041
  %v4043 = vpop.f32.mrb[0].mxu0
  %4044 = vmatprep.mubr.f32.mxu0 %v547
  %4045 = vmatmul.mubr.f32.gmra.mrb[0].mxu0 %v176
  %v4046 = vpop.f32.mrb[0].mxu0
  %v4047 = vadd.f32 0.0, %v4046
  %v4048 = vpop.f32.mrb[0].mxu0
  %4049 = vmatprep.mubr.f32.mxu0 %v550
  %4050 = vmatmul.mubr.f32.gmra.mrb[0].mxu0 %v178
  %v4051 = vpop.f32.mrb[0].mxu0
  %v4052 = vadd.f32 0.0, %v4051
  %v4053 = vpop.f32.mrb[0].mxu0
  %4054 = vmatprep.mubr.f32.mxu0 %v553
  %4055 = vmatmul.mubr.f32.gmra.mrb[0].mxu0 %v180
  %v4056 = vpop.f32.mrb[0].mxu0
  %v4057 = vadd.f32 0.0, %v4056
  %v4058 = vpop.f32.mrb[0].mxu0
  %4059 = vmatprep.mubr.f32.mxu0 %v556
  %4060 = vmatmul.mubr.f32.gmra.mrb[0].mxu0 %v182
  %v4061 = vpop.f32.mrb[0].mxu0
  %v4062 = vadd.f32 0.0, %v4061
  %v4063 = vpop.f32.mrb[0].mxu0
  %4064 = vmatprep.mubr.f32.mxu0 %v559
  %4065 = vmatmul.mubr.f32.gmra.mrb[0].mxu0 %v184
  %v4066 = vpop.f32.mrb[0].mxu0
  %v4067 = vadd.f32 0.0, %v4066
  %v4068 = vpop.f32.mrb[0].mxu0
  %4069 = vmatprep.mubr.f32.mxu0 %v562
  %4070 = vmatmul.mubr.f32.gmra.mrb[0].mxu0 %v186
  %v4071 = vpop.f32.mrb[0].mxu0
  %v4072 = vadd.f32 0.0, %v4071
  %v4073 = vpop.f32.mrb[0].mxu0
  %4074 = vmatprep.mubr.f32.mxu0 %v565
  %4075 = vmatmul.mubr.f32.gmra.mrb[0].mxu0 %v188
  %v4076 = vpop.f32.mrb[0].mxu0
  %v4077 = vadd.f32 0.0, %v4076
  %v4078 = vpop.f32.mrb[0].mxu0
  %4079 = vmatprep.mubr.f32.mxu0 %v568
  %4080 = vmatmul.mubr.f32.gmra.mrb[0].mxu0 %v190
  %v4081 = vpop.f32.mrb[0].mxu0
  %v4082 = vadd.f32 0.0, %v4081
  %v4083 = vpop.f32.mrb[0].mxu0
  %4084 = vmatprep.mubr.f32.mxu0 %v571
  %4085 = vmatmul.mubr.f32.gmra.mrb[0].mxu0 %v192
  %v4086 = vpop.f32.mrb[0].mxu0
  %v4087 = vadd.f32 0.0, %v4086
  %v4088 = vpop.f32.mrb[0].mxu0
  %4089 = vmatprep.mubr.f32.mxu0 %v574
  %4090 = vmatmul.mubr.f32.gmra.mrb[0].mxu0 %v194
  %v4091 = vpop.f32.mrb[0].mxu0
  %v4092 = vadd.f32 0.0, %v4091
  %v4093 = vpop.f32.mrb[0].mxu0
  %4094 = vmatprep.mubr.f32.mxu0 %v577
  %4095 = vmatmul.mubr.f32.gmra.mrb[0].mxu0 %v196
  %v4096 = vpop.f32.mrb[0].mxu0
  %v4097 = vadd.f32 0.0, %v4096
  %v4098 = vpop.f32.mrb[0].mxu0
  %4099 = vmatprep.mubr.f32.mxu0 %v580
  %4100 = vmatmul.mubr.f32.gmra.mrb[0].mxu0 %v198
  %v4101 = vpop.f32.mrb[0].mxu0
  %v4102 = vadd.f32 0.0, %v4101
  %v4103 = vpop.f32.mrb[0].mxu0
  %4104 = vmatprep.mubr.f32.mxu0 %v583
  %4105 = vmatmul.mubr.f32.gmra.mrb[0].mxu0 %v200
  %v4106 = vpop.f32.mrb[0].mxu0
  %v4107 = vadd.f32 0.0, %v4106
  %v4108 = vpop.f32.mrb[0].mxu0
  %4109 = vmatprep.mubr.f32.mxu0 %v586
  %4110 = vmatmul.mubr.f32.gmra.mrb[0].mxu0 %v202
  %v4111 = vpop.f32.mrb[0].mxu0
  %v4112 = vadd.f32 0.0, %v4111
  %v4113 = vpop.f32.mrb[0].mxu0
  %4114 = vmatprep.mubr.f32.mxu0 %v589
  %4115 = vmatmul.mubr.f32.gmra.mrb[0].mxu0 %v204
  %v4116 = vpop.f32.mrb[0].mxu0
  %v4117 = vadd.f32 0.0, %v4116
  %v4118 = vpop.f32.mrb[0].mxu0
  %4119 = vmatprep.mubr.f32.mxu0 %v592
  %4120 = vmatmul.mubr.f32.gmra.mrb[0].mxu0 %v206
  %v4121 = vpop.f32.mrb[0].mxu0
  %v4122 = vadd.f32 0.0, %v4121
  %v4123 = vpop.f32.mrb[0].mxu0
  %4124 = vmatprep.mubr.f32.mxu0 %v595
  %4125 = vmatmul.mubr.f32.gmra.mrb[0].mxu0 %v208
  %v4126 = vpop.f32.mrb[0].mxu0
  %v4127 = vadd.f32 0.0, %v4126
  %v4128 = vpop.f32.mrb[0].mxu0
  %4129 = vmatprep.mubr.f32.mxu0 %v598
  %4130 = vmatmul.mubr.f32.gmra.mrb[0].mxu0 %v210
  %v4131 = vpop.f32.mrb[0].mxu0
  %v4132 = vadd.f32 0.0, %v4131
  %v4133 = vpop.f32.mrb[0].mxu0
  %4134 = vmatprep.mubr.f32.mxu0 %v601
  %4135 = vmatmul.mubr.f32.gmra.mrb[0].mxu0 %v212
  %v4136 = vpop.f32.mrb[0].mxu0
  %v4137 = vadd.f32 0.0, %v4136
  %v4138 = vpop.f32.mrb[0].mxu0
  %4139 = vmatprep.mubr.f32.mxu0 %v604
  %4140 = vmatmul.mubr.f32.gmra.mrb[0].mxu0 %v214
  %v4141 = vpop.f32.mrb[0].mxu0
  %v4142 = vadd.f32 0.0, %v4141
  %v4143 = vpop.f32.mrb[0].mxu0
  %4144 = vmatprep.mubr.f32.mxu0 %v607
  %4145 = vmatmul.mubr.f32.gmra.mrb[0].mxu0 %v216
  %v4146 = vpop.f32.mrb[0].mxu0
  %v4147 = vadd.f32 0.0, %v4146
  %v4148 = vpop.f32.mrb[0].mxu0
  %4149 = vmatprep.mubr.f32.mxu0 %v610
  %4150 = vmatmul.mubr.f32.gmra.mrb[0].mxu0 %v218
  %v4151 = vpop.f32.mrb[0].mxu0
  %v4152 = vadd.f32 0.0, %v4151
  %v4153 = vpop.f32.mrb[0].mxu0
  %4154 = vmatprep.mubr.f32.mxu0 %v613
  %4155 = vmatmul.mubr.f32.gmra.mrb[0].mxu0 %v220
  %v4156 = vpop.f32.mrb[0].mxu0
  %v4157 = vadd.f32 0.0, %v4156
  %v4158 = vpop.f32.mrb[0].mxu0
  %4159 = vmatprep.mubr.f32.mxu0 %v616
  %4160 = vmatmul.mubr.f32.gmra.mrb[0].mxu0 %v222
  %v4161 = vpop.f32.mrb[0].mxu0
  %v4162 = vadd.f32 0.0, %v4161
  %v4163 = vpop.f32.mrb[0].mxu0
  %4164 = vmatprep.mubr.f32.mxu0 %v619
  %4165 = vmatmul.mubr.f32.gmra.mrb[0].mxu0 %v224
  %v4166 = vpop.f32.mrb[0].mxu0
  %v4167 = vadd.f32 0.0, %v4166
  %v4168 = vpop.f32.mrb[0].mxu0
  %4169 = vmatprep.mubr.f32.mxu0 %v622
  %4170 = vmatmul.mubr.f32.gmra.mrb[0].mxu0 %v226
  %v4171 = vpop.f32.mrb[0].mxu0
  %v4172 = vadd.f32 0.0, %v4171
  %v4173 = vpop.f32.mrb[0].mxu0
  %4174 = vmatprep.mubr.f32.mxu0 %v625
  %4175 = vmatmul.mubr.f32.gmra.mrb[0].mxu0 %v228
  %v4176 = vpop.f32.mrb[0].mxu0
  %v4177 = vadd.f32 0.0, %v4176
  %v4178 = vpop.f32.mrb[0].mxu0
  %4179 = vmatprep.mubr.f32.mxu0 %v628
  %4180 = vmatmul.mubr.f32.gmra.mrb[0].mxu0 %v230
  %v4181 = vpop.f32.mrb[0].mxu0
  %v4182 = vadd.f32 0.0, %v4181
  %v4183 = vpop.f32.mrb[0].mxu0
  %4184 = vmatprep.mubr.f32.mxu0 %v631
  %4185 = vmatmul.mubr.f32.gmra.mrb[0].mxu0 %v232
  %v4186 = vpop.f32.mrb[0].mxu0
  %v4187 = vadd.f32 0.0, %v4186
  %v4188 = vpop.f32.mrb[0].mxu0
  %4189 = vmatprep.mubr.f32.mxu0 %v634
  %4190 = vmatmul.mubr.f32.gmra.mrb[0].mxu0 %v234
  %v4191 = vpop.f32.mrb[0].mxu0
  %v4192 = vadd.f32 0.0, %v4191
  %v4193 = vpop.f32.mrb[0].mxu0
  %4194 = vmatprep.mubr.f32.mxu0 %v637
  %4195 = vmatmul.mubr.f32.gmra.mrb[0].mxu0 %v236
  %v4196 = vpop.f32.mrb[0].mxu0
  %v4197 = vadd.f32 0.0, %v4196
  %v4198 = vpop.f32.mrb[0].mxu0
  %4199 = vmatprep.mubr.f32.mxu0 %v640
  %4200 = vmatmul.mubr.f32.gmra.mrb[0].mxu0 %v238
  %v4201 = vpop.f32.mrb[0].mxu0
  %v4202 = vadd.f32 0.0, %v4201
  %v4203 = vpop.f32.mrb[0].mxu0
  %4204 = vmatprep.mubr.f32.mxu0 %v643
  %4205 = vmatmul.mubr.f32.gmra.mrb[0].mxu0 %v240
  %v4206 = vpop.f32.mrb[0].mxu0
  %v4207 = vadd.f32 0.0, %v4206
  %v4208 = vpop.f32.mrb[0].mxu0
  %4209 = vmatprep.mubr.f32.mxu0 %v646
  %4210 = vmatmul.mubr.f32.gmra.mrb[0].mxu0 %v242
  %v4211 = vpop.f32.mrb[0].mxu0
  %v4212 = vadd.f32 0.0, %v4211
  %v4213 = vpop.f32.mrb[0].mxu0
  %4214 = vmatprep.mubr.f32.mxu0 %v649
  %4215 = vmatmul.mubr.f32.gmra.mrb[0].mxu0 %v244
  %v4216 = vpop.f32.mrb[0].mxu0
  %v4217 = vadd.f32 0.0, %v4216
  %v4218 = vpop.f32.mrb[0].mxu0
  %4219 = vmatprep.mubr.f32.mxu0 %v652
  %4220 = vmatmul.mubr.f32.gmra.mrb[0].mxu0 %v246
  %v4221 = vpop.f32.mrb[0].mxu0
  %v4222 = vadd.f32 0.0, %v4221
  %v4223 = vpop.f32.mrb[0].mxu0
  %4224 = vmatprep.mubr.f32.mxu0 %v655
  %4225 = vmatmul.mubr.f32.gmra.mrb[0].mxu0 %v248
  %v4226 = vpop.f32.mrb[0].mxu0
  %v4227 = vadd.f32 0.0, %v4226
  %v4228 = vpop.f32.mrb[0].mxu0
  %4229 = vmatprep.mubr.f32.mxu0 %v658
  %4230 = vmatmul.mubr.f32.gmra.mrb[0].mxu0 %v250
  %v4231 = vpop.f32.mrb[0].mxu0
  %v4232 = vadd.f32 0.0, %v4231
  %v4233 = vpop.f32.mrb[0].mxu0
  %4234 = vmatprep.mubr.f32.mxu0 %v661
  %4235 = vmatmul.mubr.f32.gmra.mrb[0].mxu0 %v252
  %v4236 = vpop.f32.mrb[0].mxu0
  %v4237 = vadd.f32 0.0, %v4236
  %v4238 = vpop.f32.mrb[0].mxu0
  %4239 = vmatprep.mubr.f32.mxu0 %v664
  %4240 = vmatmul.mubr.f32.gmra.mrb[0].mxu0 %v254
  %v4241 = vpop.f32.mrb[0].mxu0
  %v4242 = vadd.f32 0.0, %v4241
  %v4243 = vpop.f32.mrb[0].mxu0
  %4244 = vmatprep.mubr.f32.mxu0 %v667
  %4245 = vmatmul.mubr.f32.gmra.mrb[0].mxu0 %v256
  %v4246 = vpop.f32.mrb[0].mxu0
  %v4247 = vadd.f32 0.0, %v4246
  %v4248 = vpop.f32.mrb[0].mxu0
  %4249 = vmatprep.mubr.f32.mxu0 %v670
  %4250 = vmatmul.mubr.f32.gmra.mrb[0].mxu0 %v258
  %v4251 = vpop.f32.mrb[0].mxu0
  %v4252 = vadd.f32 0.0, %v4251
  %v4253 = vpop.f32.mrb[0].mxu0
  %4254 = vdwg.mxu0
  %v4255 = vmax.f32 %v3657, %v3807
  %v4256 = vmax.f32 %v3662, %v3812
  %v4257 = vmax.f32 %v3667, %v3817
  %v4258 = vmax.f32 %v3672, %v3822
  %v4259 = vmax.f32 %v3677, %v3827
  %v4260 = vmax.f32 %v3682, %v3832
  %v4261 = vmax.f32 %v3687, %v3837
  %v4262 = vmax.f32 %v3692, %v3842
  %v4263 = vmax.f32 %v3697, %v3847
  %v4264 = vmax.f32 %v3702, %v3852
  %v4265 = vmax.f32 %v3707, %v3857
  %v4266 = vmax.f32 %v3712, %v3862
  %v4267 = vmax.f32 %v3717, %v3867
  %v4268 = vmax.f32 %v3722, %v3872
  %v4269 = vmax.f32 %v3727, %v3877
  %v4270 = vmax.f32 %v3732, %v3882
  %v4271 = vmax.f32 %v3737, %v3887
  %v4272 = vmax.f32 %v3742, %v3892
  %v4273 = vmax.f32 %v3747, %v3897
  %v4274 = vmax.f32 %v3752, %v3902
  %v4275 = vmax.f32 %v3757, %v3907
  %v4276 = vmax.f32 %v3762, %v3912
  %v4277 = vmax.f32 %v3767, %v3917
  %v4278 = vmax.f32 %v3772, %v3922
  %v4279 = vmax.f32 %v3777, %v3927
  %v4280 = vmax.f32 %v3782, %v3932
  %v4281 = vmax.f32 %v3787, %v3937
  %v4282 = vmax.f32 %v3792, %v3942
  %v4283 = vmax.f32 %v3797, %v3947
  %v4284 = vmax.f32 %v3802, %v3952
  %v4285 = vmax.f32 %v3957, %v4107
  %v4286 = vmax.f32 %v3962, %v4112
  %v4287 = vmax.f32 %v3967, %v4117
  %v4288 = vmax.f32 %v3972, %v4122
  %v4289 = vmax.f32 %v3977, %v4127
  %v4290 = vmax.f32 %v3982, %v4132
  %v4291 = vmax.f32 %v3987, %v4137
  %v4292 = vmax.f32 %v3992, %v4142
  %v4293 = vmax.f32 %v3997, %v4147
  %v4294 = vmax.f32 %v4002, %v4152
  %v4295 = vmax.f32 %v4007, %v4157
  %v4296 = vmax.f32 %v4012, %v4162
  %v4297 = vmax.f32 %v4017, %v4167
  %v4298 = vmax.f32 %v4022, %v4172
  %v4299 = vmax.f32 %v4027, %v4177
  %v4300 = vmax.f32 %v4032, %v4182
  %v4301 = vmax.f32 %v4037, %v4187
  %v4302 = vmax.f32 %v4042, %v4192
  %v4303 = vmax.f32 %v4047, %v4197
  %v4304 = vmax.f32 %v4052, %v4202
  %v4305 = vmax.f32 %v4057, %v4207
  %v4306 = vmax.f32 %v4062, %v4212
  %v4307 = vmax.f32 %v4067, %v4217
  %v4308 = vmax.f32 %v4072, %v4222
  %v4309 = vmax.f32 %v4077, %v4227
  %v4310 = vmax.f32 %v4082, %v4232
  %v4311 = vmax.f32 %v4087, %v4237
  %v4312 = vmax.f32 %v4092, %v4242
  %v4313 = vmax.f32 %v4097, %v4247
  %v4314 = vmax.f32 %v4102, %v4252
  %v4315 = vmax.f32 %v4255, %v4285
  %v4316 = vmax.f32 %v4256, %v4286
  %v4317 = vmax.f32 %v4257, %v4287
  %v4318 = vmax.f32 %v4258, %v4288
  %v4319 = vmax.f32 %v4259, %v4289
  %v4320 = vmax.f32 %v4260, %v4290
  %v4321 = vmax.f32 %v4261, %v4291
  %v4322 = vmax.f32 %v4262, %v4292
  %v4323 = vmax.f32 %v4263, %v4293
  %v4324 = vmax.f32 %v4264, %v4294
  %v4325 = vmax.f32 %v4265, %v4295
  %v4326 = vmax.f32 %v4266, %v4296
  %v4327 = vmax.f32 %v4267, %v4297
  %v4328 = vmax.f32 %v4268, %v4298
  %v4329 = vmax.f32 %v4269, %v4299
  %v4330 = vmax.f32 %v4270, %v4300
  %v4331 = vmax.f32 %v4271, %v4301
  %v4332 = vmax.f32 %v4272, %v4302
  %v4333 = vmax.f32 %v4273, %v4303
  %v4334 = vmax.f32 %v4274, %v4304
  %v4335 = vmax.f32 %v4275, %v4305
  %v4336 = vmax.f32 %v4276, %v4306
  %v4337 = vmax.f32 %v4277, %v4307
  %v4338 = vmax.f32 %v4278, %v4308
  %v4339 = vmax.f32 %v4279, %v4309
  %v4340 = vmax.f32 %v4280, %v4310
  %v4341 = vmax.f32 %v4281, %v4311
  %v4342 = vmax.f32 %v4282, %v4312
  %v4343 = vmax.f32 %v4283, %v4313
  %v4344 = vmax.f32 %v4284, %v4314
  %v4345 = vadd.f32 %v4315, %v1430
  %v4346 = vadd.f32 %v4316, %v1435
  %v4347 = vadd.f32 %v4317, %v1440
  %v4348 = vadd.f32 %v4318, %v1445
  %v4349 = vadd.f32 %v4319, %v1450
  %v4350 = vadd.f32 %v4320, %v1455
  %v4351 = vadd.f32 %v4321, %v1460
  %v4352 = vadd.f32 %v4322, %v1465
  %v4353 = vadd.f32 %v4323, %v1470
  %v4354 = vadd.f32 %v4324, %v1475
  %v4355 = vadd.f32 %v4325, %v1480
  %v4356 = vadd.f32 %v4326, %v1485
  %v4357 = vadd.f32 %v4327, %v1490
  %v4358 = vadd.f32 %v4328, %v1495
  %v4359 = vadd.f32 %v4329, %v1500
  %v4360 = vadd.f32 %v4330, %v1505
  %v4361 = vadd.f32 %v4331, %v1510
  %v4362 = vadd.f32 %v4332, %v1515
  %v4363 = vadd.f32 %v4333, %v1520
  %v4364 = vadd.f32 %v4334, %v1525
  %v4365 = vadd.f32 %v4335, %v1530
  %v4366 = vadd.f32 %v4336, %v1535
  %v4367 = vadd.f32 %v4337, %v1540
  %v4368 = vadd.f32 %v4338, %v1545
  %v4369 = vadd.f32 %v4339, %v1550
  %v4370 = vadd.f32 %v4340, %v1555
  %v4371 = vadd.f32 %v4341, %v1560
  %v4372 = vadd.f32 %v4342, %v1565
  %v4373 = vadd.f32 %v4343, %v1570
  %v4374 = vadd.f32 %v4344, %v1575
  %v4375 = vmax.f32 %v4345, 0.0
  %v4376 = vmax.f32 %v4346, 0.0
  %v4377 = vmax.f32 %v4347, 0.0
  %v4378 = vmax.f32 %v4348, 0.0
  %v4379 = vmax.f32 %v4349, 0.0
  %v4380 = vmax.f32 %v4350, 0.0
  %v4381 = vmax.f32 %v4351, 0.0
  %v4382 = vmax.f32 %v4352, 0.0
  %v4383 = vmax.f32 %v4353, 0.0
  %v4384 = vmax.f32 %v4354, 0.0
  %v4385 = vmax.f32 %v4355, 0.0
  %v4386 = vmax.f32 %v4356, 0.0
  %v4387 = vmax.f32 %v4357, 0.0
  %v4388 = vmax.f32 %v4358, 0.0
  %v4389 = vmax.f32 %v4359, 0.0
  %v4390 = vmax.f32 %v4360, 0.0
  %v4391 = vmax.f32 %v4361, 0.0
  %v4392 = vmax.f32 %v4362, 0.0
  %v4393 = vmax.f32 %v4363, 0.0
  %v4394 = vmax.f32 %v4364, 0.0
  %v4395 = vmax.f32 %v4365, 0.0
  %v4396 = vmax.f32 %v4366, 0.0
  %v4397 = vmax.f32 %v4367, 0.0
  %v4398 = vmax.f32 %v4368, 0.0
  %v4399 = vmax.f32 %v4369, 0.0
  %v4400 = vmax.f32 %v4370, 0.0
  %v4401 = vmax.f32 %v4371, 0.0
  %v4402 = vmax.f32 %v4372, 0.0
  %v4403 = vmax.f32 %v4373, 0.0
  %v4404 = vmax.f32 %v4374, 0.0
  %s4405 = scalar_lea.vmem %s3, 96
  %v4406 = vld [vmem:[%s4405] sm:$0xff]
  %v4407 = vld [vmem:[%s4405 + $0x8] sm:$0xff]
  %v4408 = vld [vmem:[%s4405 + $0x10] sm:$0x3]
  %v4409 = vld [vmem:[%s4405 + $0x18] sm:$0x3]
  %v4411 = vsel %vm2482, %v4407, 0
  %v4414 = vsel %vm2482, %v4409, 0
  %4416 = vmatprep.subr.mxu0 0.0
  %4417 = vmatpush1.msra.mxu0 %v4375
  %4418 = vmatprep.subr.mxu0 0.0
  %4419 = vmatpush1.msra.mxu0 %v4376
  %4420 = vmatprep.subr.mxu0 0.0
  %4421 = vmatpush1.msra.mxu0 %v4377
  %4422 = vmatprep.subr.mxu0 0.0
  %4423 = vmatpush1.msra.mxu0 %v4378
  %4424 = vmatprep.subr.mxu0 0.0
  %4425 = vmatpush1.msra.mxu0 %v4379
  %4426 = vmatprep.subr.mxu0 0.0
  %4427 = vmatpush1.msra.mxu0 %v4380
  %4428 = vmatprep.subr.mxu0 0.0
  %4429 = vmatpush1.msra.mxu0 %v4381
  %4430 = vmatprep.subr.mxu0 0.0
  %4431 = vmatpush1.msra.mxu0 %v4382
  %4432 = vmatprep.subr.mxu0 0.0
  %4433 = vmatpush1.msra.mxu0 %v4383
  %4434 = vmatprep.subr.mxu0 0.0
  %4435 = vmatpush1.msra.mxu0 %v4384
  %4436 = vmatprep.subr.mxu0 0.0
  %4437 = vmatpush1.msra.mxu0 %v4385
  %4438 = vmatprep.subr.mxu0 0.0
  %4439 = vmatpush1.msra.mxu0 %v4386
  %4440 = vmatprep.subr.mxu0 0.0
  %4441 = vmatpush1.msra.mxu0 %v4387
  %4442 = vmatprep.subr.mxu0 0.0
  %4443 = vmatpush1.msra.mxu0 %v4388
  %4444 = vmatprep.subr.mxu0 0.0
  %4445 = vmatpush1.msra.mxu0 %v4389
  %4446 = vmatprep.subr.mxu0 0.0
  %4447 = vmatpush1.msra.mxu0 %v4390
  %4448 = vmatprep.subr.mxu0 0.0
  %4449 = vmatpush1.msra.mxu0 %v4391
  %4450 = vmatprep.subr.mxu0 0.0
  %4451 = vmatpush1.msra.mxu0 %v4392
  %4452 = vmatprep.subr.mxu0 0.0
  %4453 = vmatpush1.msra.mxu0 %v4393
  %4454 = vmatprep.subr.mxu0 0.0
  %4455 = vmatpush1.msra.mxu0 %v4394
  %4456 = vmatprep.subr.mxu0 0.0
  %4457 = vmatpush1.msra.mxu0 %v4395
  %4458 = vmatprep.subr.mxu0 0.0
  %4459 = vmatpush1.msra.mxu0 %v4396
  %4460 = vmatprep.subr.mxu0 0.0
  %4461 = vmatpush1.msra.mxu0 %v4397
  %4462 = vmatprep.subr.mxu0 0.0
  %4463 = vmatpush1.msra.mxu0 %v4398
  %4464 = vmatprep.subr.mxu0 0.0
  %4465 = vmatpush1.msra.mxu0 %v4399
  %4466 = vmatprep.subr.mxu0 0.0
  %4467 = vmatpush1.msra.mxu0 %v4400
  %4468 = vmatprep.subr.mxu0 0.0
  %4469 = vmatpush1.msra.mxu0 %v4401
  %4470 = vmatprep.subr.mxu0 0.0
  %4471 = vmatpush1.msra.mxu0 %v4402
  %4472 = vmatprep.subr.mxu0 0.0
  %4473 = vmatpush1.msra.mxu0 %v4403
  %4474 = vmatprep.subr.mxu0 0.0
  %4475 = vmatpush1.msra.mxu0 %v4404
  %4476 = vmatprep.subr.mxu0 0.0
  %4477 = vmatpush1.msra.mxu0 0.0
  %4478 = vmatprep.subr.mxu0 0.0
  %4479 = vmatpush1.msra.mxu0 0.0
  %4480 = vmatprep.mubr.f32.mxu0 %v4411
  %4481 = vmatmul.mubr.f32.gmra.mrb[0].mxu0 %v4406
  %v4482 = vpop.f32.mrb[0].mxu0
  %v4483 = vadd.f32 0.0, %v4482
  %v4484 = vpop.f32.mrb[0].mxu0
  %4485 = vmatprep.mubr.f32.mxu0 %v4414
  %4486 = vmatmul.mubr.f32.gmra.mrb[0].mxu0 %v4408
  %v4487 = vpop.f32.mrb[0].mxu0
  %v4488 = vadd.f32 0.0, %v4487
  %v4489 = vpop.f32.mrb[0].mxu0
  %4490 = vdwg.mxu0
  %v4491 = vadd.f32 %v3567, %v4483
  %v4492 = vadd.f32 %v3568, %v4488
  %v4493 = vld [vmem:[%s0 + $0xe0] sm:$0xff]
  %v4494 = vld [vmem:[%s0 + $0xe8] sm:$0xff]
  %v4495 = vld [vmem:[%s0 + $0xf0] sm:$0xff]
  %v4496 = vld [vmem:[%s0 + $0xf8] sm:$0xff]
  %v4497 = vld [vmem:[%s0 + $0x100] sm:$0xff]
  %v4498 = vld [vmem:[%s0 + $0x108] sm:$0xff]
  %v4499 = vld [vmem:[%s0 + $0x110] sm:$0xff]
  %v4500 = vld [vmem:[%s0 + $0x118] sm:$0xff]
  %v4501 = vld [vmem:[%s0 + $0x120] sm:$0xff]
  %v4502 = vld [vmem:[%s0 + $0x128] sm:$0xff]
  %v4503 = vld [vmem:[%s0 + $0x130] sm:$0xff]
  %v4504 = vld [vmem:[%s0 + $0x138] sm:$0xff]
  %v4505 = vld [vmem:[%s0 + $0x140] sm:$0xff]
  %v4506 = vld [vmem:[%s0 + $0x148] sm:$0xff]
  %v4507 = vld [vmem:[%s0 + $0x150] sm:$0xff]
  %v4508 = vld [vmem:[%s0 + $0x158] sm:$0xff]
  %v4509 = vld [vmem:[%s0 + $0x160] sm:$0xff]
  %v4510 = vld [vmem:[%s0 + $0x168] sm:$0xff]
  %v4511 = vld [vmem:[%s0 + $0x170] sm:$0xff]
  %v4512 = vld [vmem:[%s0 + $0x178] sm:$0xff]
  %v4513 = vld [vmem:[%s0 + $0x180] sm:$0xff]
  %4514 = vmatprep.subr.mxu0 0.0
  %4515 = vmatpush1.msra.mxu0 %v4493
  %4516 = vmatprep.subr.mxu0 0.0
  %4517 = vmatpush1.msra.mxu0 %v4494
  %4518 = vmatprep.subr.mxu0 0.0
  %4519 = vmatpush1.msra.mxu0 %v4495
  %4520 = vmatprep.subr.mxu0 0.0
  %4521 = vmatpush1.msra.mxu0 %v4496
  %4522 = vmatprep.subr.mxu0 0.0
  %4523 = vmatpush1.msra.mxu0 %v4497
  %4524 = vmatprep.subr.mxu0 0.0
  %4525 = vmatpush1.msra.mxu0 %v4498
  %4526 = vmatprep.subr.mxu0 0.0
  %4527 = vmatpush1.msra.mxu0 %v4499
  %4528 = vmatprep.subr.mxu0 0.0
  %4529 = vmatpush1.msra.mxu0 %v4500
  %4530 = vmatprep.subr.mxu0 0.0
  %4531 = vmatpush1.msra.mxu0 %v4501
  %4532 = vmatprep.subr.mxu0 0.0
  %4533 = vmatpush1.msra.mxu0 %v4502
  %4534 = vmatprep.subr.mxu0 0.0
  %4535 = vmatpush1.msra.mxu0 %v4503
  %4536 = vmatprep.subr.mxu0 0.0
  %4537 = vmatpush1.msra.mxu0 %v4504
  %4538 = vmatprep.subr.mxu0 0.0
  %4539 = vmatpush1.msra.mxu0 %v4505
  %4540 = vmatprep.subr.mxu0 0.0
  %4541 = vmatpush1.msra.mxu0 %v4506
  %4542 = vmatprep.subr.mxu0 0.0
  %4543 = vmatpush1.msra.mxu0 %v4507
  %4544 = vmatprep.subr.mxu0 0.0
  %4545 = vmatpush1.msra.mxu0 %v4508
  %4546 = vmatprep.subr.mxu0 0.0
  %4547 = vmatpush1.msra.mxu0 %v4509
  %4548 = vmatprep.subr.mxu0 0.0
  %4549 = vmatpush1.msra.mxu0 %v4510
  %4550 = vmatprep.subr.mxu0 0.0
  %4551 = vmatpush1.msra.mxu0 %v4511
  %4552 = vmatprep.subr.mxu0 0.0
  %4553 = vmatpush1.msra.mxu0 %v4512
  %4554 = vmatprep.subr.mxu0 0.0
  %4555 = vmatpush1.msra.mxu0 %v4513
  %4556 = vmatprep.subr.mxu0 0.0
  %4557 = vmatpush1.msra.mxu0 0.0
  %4558 = vmatprep.subr.mxu0 0.0
  %4559 = vmatpush1.msra.mxu0 0.0
  %4560 = vmatprep.subr.mxu0 0.0
  %4561 = vmatpush1.msra.mxu0 0.0
  %4562 = vmatprep.subr.mxu0 0.0
  %4563 = vmatpush1.msra.mxu0 0.0
  %4564 = vmatprep.subr.mxu0 0.0
  %4565 = vmatpush1.msra.mxu0 0.0
  %4566 = vmatprep.subr.mxu0 0.0
  %4567 = vmatpush1.msra.mxu0 0.0
  %4568 = vmatprep.subr.mxu0 0.0
  %4569 = vmatpush1.msra.mxu0 0.0
  %4570 = vmatprep.subr.mxu0 0.0
  %4571 = vmatpush1.msra.mxu0 0.0
  %4572 = vmatprep.subr.mxu0 0.0
  %4573 = vmatpush1.msra.mxu0 0.0
  %4574 = vmatprep.subr.mxu0 0.0
  %4575 = vmatpush1.msra.mxu0 0.0
  %4576 = vmatprep.subr.mxu0 0.0
  %4577 = vmatpush1.msra.mxu0 0.0
  %4578 = vmatprep.mubr.f32.mxu0 %v313
  %4579 = vmatmul.mubr.f32.gmra.mrb[0].mxu0 %v20
  %v4580 = vpop.f32.mrb[0].mxu0
  %v4581 = vadd.f32 0.0, %v4580
  %v4582 = vpop.f32.mrb[0].mxu0
  %4583 = vmatprep.mubr.f32.mxu0 %v316
  %4584 = vmatmul.mubr.f32.gmra.mrb[0].mxu0 %v22
  %v4585 = vpop.f32.mrb[0].mxu0
  %v4586 = vadd.f32 0.0, %v4585
  %v4587 = vpop.f32.mrb[0].mxu0
  %4588 = vmatprep.mubr.f32.mxu0 %v319
  %4589 = vmatmul.mubr.f32.gmra.mrb[0].mxu0 %v24
  %v4590 = vpop.f32.mrb[0].mxu0
  %v4591 = vadd.f32 0.0, %v4590
  %v4592 = vpop.f32.mrb[0].mxu0
  %4593 = vmatprep.mubr.f32.mxu0 %v322
  %4594 = vmatmul.mubr.f32.gmra.mrb[0].mxu0 %v26
  %v4595 = vpop.f32.mrb[0].mxu0
  %v4596 = vadd.f32 0.0, %v4595
  %v4597 = vpop.f32.mrb[0].mxu0
  %4598 = vmatprep.mubr.f32.mxu0 %v325
  %4599 = vmatmul.mubr.f32.gmra.mrb[0].mxu0 %v28
  %v4600 = vpop.f32.mrb[0].mxu0
  %v4601 = vadd.f32 0.0, %v4600
  %v4602 = vpop.f32.mrb[0].mxu0
  %4603 = vmatprep.mubr.f32.mxu0 %v328
  %4604 = vmatmul.mubr.f32.gmra.mrb[0].mxu0 %v30
  %v4605 = vpop.f32.mrb[0].mxu0
  %v4606 = vadd.f32 0.0, %v4605
  %v4607 = vpop.f32.mrb[0].mxu0
  %4608 = vmatprep.mubr.f32.mxu0 %v331
  %4609 = vmatmul.mubr.f32.gmra.mrb[0].mxu0 %v32
  %v4610 = vpop.f32.mrb[0].mxu0
  %v4611 = vadd.f32 0.0, %v4610
  %v4612 = vpop.f32.mrb[0].mxu0
  %4613 = vmatprep.mubr.f32.mxu0 %v334
  %4614 = vmatmul.mubr.f32.gmra.mrb[0].mxu0 %v34
  %v4615 = vpop.f32.mrb[0].mxu0
  %v4616 = vadd.f32 0.0, %v4615
  %v4617 = vpop.f32.mrb[0].mxu0
  %4618 = vmatprep.mubr.f32.mxu0 %v337
  %4619 = vmatmul.mubr.f32.gmra.mrb[0].mxu0 %v36
  %v4620 = vpop.f32.mrb[0].mxu0
  %v4621 = vadd.f32 0.0, %v4620
  %v4622 = vpop.f32.mrb[0].mxu0
  %4623 = vmatprep.mubr.f32.mxu0 %v340
  %4624 = vmatmul.mubr.f32.gmra.mrb[0].mxu0 %v38
  %v4625 = vpop.f32.mrb[0].mxu0
  %v4626 = vadd.f32 0.0, %v4625
  %v4627 = vpop.f32.mrb[0].mxu0
  %4628 = vmatprep.mubr.f32.mxu0 %v343
  %4629 = vmatmul.mubr.f32.gmra.mrb[0].mxu0 %v40
  %v4630 = vpop.f32.mrb[0].mxu0
  %v4631 = vadd.f32 0.0, %v4630
  %v4632 = vpop.f32.mrb[0].mxu0
  %4633 = vmatprep.mubr.f32.mxu0 %v346
  %4634 = vmatmul.mubr.f32.gmra.mrb[0].mxu0 %v42
  %v4635 = vpop.f32.mrb[0].mxu0
  %v4636 = vadd.f32 0.0, %v4635
  %v4637 = vpop.f32.mrb[0].mxu0
  %4638 = vmatprep.mubr.f32.mxu0 %v349
  %4639 = vmatmul.mubr.f32.gmra.mrb[0].mxu0 %v44
  %v4640 = vpop.f32.mrb[0].mxu0
  %v4641 = vadd.f32 0.0, %v4640
  %v4642 = vpop.f32.mrb[0].mxu0
  %4643 = vmatprep.mubr.f32.mxu0 %v352
  %4644 = vmatmul.mubr.f32.gmra.mrb[0].mxu0 %v46
  %v4645 = vpop.f32.mrb[0].mxu0
  %v4646 = vadd.f32 0.0, %v4645
  %v4647 = vpop.f32.mrb[0].mxu0
  %4648 = vmatprep.mubr.f32.mxu0 %v355
  %4649 = vmatmul.mubr.f32.gmra.mrb[0].mxu0 %v48
  %v4650 = vpop.f32.mrb[0].mxu0
  %v4651 = vadd.f32 0.0, %v4650
  %v4652 = vpop.f32.mrb[0].mxu0
  %4653 = vmatprep.mubr.f32.mxu0 %v358
  %4654 = vmatmul.mubr.f32.gmra.mrb[0].mxu0 %v50
  %v4655 = vpop.f32.mrb[0].mxu0
  %v4656 = vadd.f32 0.0, %v4655
  %v4657 = vpop.f32.mrb[0].mxu0
  %4658 = vmatprep.mubr.f32.mxu0 %v361
  %4659 = vmatmul.mubr.f32.gmra.mrb[0].mxu0 %v52
  %v4660 = vpop.f32.mrb[0].mxu0
  %v4661 = vadd.f32 0.0, %v4660
  %v4662 = vpop.f32.mrb[0].mxu0
  %4663 = vmatprep.mubr.f32.mxu0 %v364
  %4664 = vmatmul.mubr.f32.gmra.mrb[0].mxu0 %v54
  %v4665 = vpop.f32.mrb[0].mxu0
  %v4666 = vadd.f32 0.0, %v4665
  %v4667 = vpop.f32.mrb[0].mxu0
  %4668 = vmatprep.mubr.f32.mxu0 %v367
  %4669 = vmatmul.mubr.f32.gmra.mrb[0].mxu0 %v56
  %v4670 = vpop.f32.mrb[0].mxu0
  %v4671 = vadd.f32 0.0, %v4670
  %v4672 = vpop.f32.mrb[0].mxu0
  %4673 = vmatprep.mubr.f32.mxu0 %v370
  %4674 = vmatmul.mubr.f32.gmra.mrb[0].mxu0 %v58
  %v4675 = vpop.f32.mrb[0].mxu0
  %v4676 = vadd.f32 0.0, %v4675
  %v4677 = vpop.f32.mrb[0].mxu0
  %4678 = vmatprep.mubr.f32.mxu0 %v373
  %4679 = vmatmul.mubr.f32.gmra.mrb[0].mxu0 %v60
  %v4680 = vpop.f32.mrb[0].mxu0
  %v4681 = vadd.f32 0.0, %v4680
  %v4682 = vpop.f32.mrb[0].mxu0
  %4683 = vmatprep.mubr.f32.mxu0 %v376
  %4684 = vmatmul.mubr.f32.gmra.mrb[0].mxu0 %v62
  %v4685 = vpop.f32.mrb[0].mxu0
  %v4686 = vadd.f32 0.0, %v4685
  %v4687 = vpop.f32.mrb[0].mxu0
  %4688 = vmatprep.mubr.f32.mxu0 %v379
  %4689 = vmatmul.mubr.f32.gmra.mrb[0].mxu0 %v64
  %v4690 = vpop.f32.mrb[0].mxu0
  %v4691 = vadd.f32 0.0, %v4690
  %v4692 = vpop.f32.mrb[0].mxu0
  %4693 = vmatprep.mubr.f32.mxu0 %v382
  %4694 = vmatmul.mubr.f32.gmra.mrb[0].mxu0 %v66
  %v4695 = vpop.f32.mrb[0].mxu0
  %v4696 = vadd.f32 0.0, %v4695
  %v4697 = vpop.f32.mrb[0].mxu0
  %4698 = vmatprep.mubr.f32.mxu0 %v385
  %4699 = vmatmul.mubr.f32.gmra.mrb[0].mxu0 %v68
  %v4700 = vpop.f32.mrb[0].mxu0
  %v4701 = vadd.f32 0.0, %v4700
  %v4702 = vpop.f32.mrb[0].mxu0
  %4703 = vmatprep.mubr.f32.mxu0 %v388
  %4704 = vmatmul.mubr.f32.gmra.mrb[0].mxu0 %v70
  %v4705 = vpop.f32.mrb[0].mxu0
  %v4706 = vadd.f32 0.0, %v4705
  %v4707 = vpop.f32.mrb[0].mxu0
  %4708 = vmatprep.mubr.f32.mxu0 %v391
  %4709 = vmatmul.mubr.f32.gmra.mrb[0].mxu0 %v72
  %v4710 = vpop.f32.mrb[0].mxu0
  %v4711 = vadd.f32 0.0, %v4710
  %v4712 = vpop.f32.mrb[0].mxu0
  %4713 = vmatprep.mubr.f32.mxu0 %v394
  %4714 = vmatmul.mubr.f32.gmra.mrb[0].mxu0 %v74
  %v4715 = vpop.f32.mrb[0].mxu0
  %v4716 = vadd.f32 0.0, %v4715
  %v4717 = vpop.f32.mrb[0].mxu0
  %4718 = vmatprep.mubr.f32.mxu0 %v397
  %4719 = vmatmul.mubr.f32.gmra.mrb[0].mxu0 %v76
  %v4720 = vpop.f32.mrb[0].mxu0
  %v4721 = vadd.f32 0.0, %v4720
  %v4722 = vpop.f32.mrb[0].mxu0
  %4723 = vmatprep.mubr.f32.mxu0 %v400
  %4724 = vmatmul.mubr.f32.gmra.mrb[0].mxu0 %v78
  %v4725 = vpop.f32.mrb[0].mxu0
  %v4726 = vadd.f32 0.0, %v4725
  %v4727 = vpop.f32.mrb[0].mxu0
  %4728 = vmatprep.mubr.f32.mxu0 %v403
  %4729 = vmatmul.mubr.f32.gmra.mrb[0].mxu0 %v80
  %v4730 = vpop.f32.mrb[0].mxu0
  %v4731 = vadd.f32 0.0, %v4730
  %v4732 = vpop.f32.mrb[0].mxu0
  %4733 = vmatprep.mubr.f32.mxu0 %v406
  %4734 = vmatmul.mubr.f32.gmra.mrb[0].mxu0 %v82
  %v4735 = vpop.f32.mrb[0].mxu0
  %v4736 = vadd.f32 0.0, %v4735
  %v4737 = vpop.f32.mrb[0].mxu0
  %4738 = vmatprep.mubr.f32.mxu0 %v409
  %4739 = vmatmul.mubr.f32.gmra.mrb[0].mxu0 %v84
  %v4740 = vpop.f32.mrb[0].mxu0
  %v4741 = vadd.f32 0.0, %v4740
  %v4742 = vpop.f32.mrb[0].mxu0
  %4743 = vmatprep.mubr.f32.mxu0 %v412
  %4744 = vmatmul.mubr.f32.gmra.mrb[0].mxu0 %v86
  %v4745 = vpop.f32.mrb[0].mxu0
  %v4746 = vadd.f32 0.0, %v4745
  %v4747 = vpop.f32.mrb[0].mxu0
  %4748 = vmatprep.mubr.f32.mxu0 %v415
  %4749 = vmatmul.mubr.f32.gmra.mrb[0].mxu0 %v88
  %v4750 = vpop.f32.mrb[0].mxu0
  %v4751 = vadd.f32 0.0, %v4750
  %v4752 = vpop.f32.mrb[0].mxu0
  %4753 = vmatprep.mubr.f32.mxu0 %v418
  %4754 = vmatmul.mubr.f32.gmra.mrb[0].mxu0 %v90
  %v4755 = vpop.f32.mrb[0].mxu0
  %v4756 = vadd.f32 0.0, %v4755
  %v4757 = vpop.f32.mrb[0].mxu0
  %4758 = vmatprep.mubr.f32.mxu0 %v421
  %4759 = vmatmul.mubr.f32.gmra.mrb[0].mxu0 %v92
  %v4760 = vpop.f32.mrb[0].mxu0
  %v4761 = vadd.f32 0.0, %v4760
  %v4762 = vpop.f32.mrb[0].mxu0
  %4763 = vmatprep.mubr.f32.mxu0 %v424
  %4764 = vmatmul.mubr.f32.gmra.mrb[0].mxu0 %v94
  %v4765 = vpop.f32.mrb[0].mxu0
  %v4766 = vadd.f32 0.0, %v4765
  %v4767 = vpop.f32.mrb[0].mxu0
  %4768 = vmatprep.mubr.f32.mxu0 %v427
  %4769 = vmatmul.mubr.f32.gmra.mrb[0].mxu0 %v96
  %v4770 = vpop.f32.mrb[0].mxu0
  %v4771 = vadd.f32 0.0, %v4770
  %v4772 = vpop.f32.mrb[0].mxu0
  %4773 = vmatprep.mubr.f32.mxu0 %v430
  %4774 = vmatmul.mubr.f32.gmra.mrb[0].mxu0 %v98
  %v4775 = vpop.f32.mrb[0].mxu0
  %v4776 = vadd.f32 0.0, %v4775
  %v4777 = vpop.f32.mrb[0].mxu0
  %4778 = vmatprep.mubr.f32.mxu0 %v433
  %4779 = vmatmul.mubr.f32.gmra.mrb[0].mxu0 %v100
  %v4780 = vpop.f32.mrb[0].mxu0
  %v4781 = vadd.f32 0.0, %v4780
  %v4782 = vpop.f32.mrb[0].mxu0
  %4783 = vmatprep.mubr.f32.mxu0 %v436
  %4784 = vmatmul.mubr.f32.gmra.mrb[0].mxu0 %v102
  %v4785 = vpop.f32.mrb[0].mxu0
  %v4786 = vadd.f32 0.0, %v4785
  %v4787 = vpop.f32.mrb[0].mxu0
  %4788 = vmatprep.mubr.f32.mxu0 %v439
  %4789 = vmatmul.mubr.f32.gmra.mrb[0].mxu0 %v104
  %v4790 = vpop.f32.mrb[0].mxu0
  %v4791 = vadd.f32 0.0, %v4790
  %v4792 = vpop.f32.mrb[0].mxu0
  %4793 = vmatprep.mubr.f32.mxu0 %v442
  %4794 = vmatmul.mubr.f32.gmra.mrb[0].mxu0 %v106
  %v4795 = vpop.f32.mrb[0].mxu0
  %v4796 = vadd.f32 0.0, %v4795
  %v4797 = vpop.f32.mrb[0].mxu0
  %4798 = vmatprep.mubr.f32.mxu0 %v445
  %4799 = vmatmul.mubr.f32.gmra.mrb[0].mxu0 %v108
  %v4800 = vpop.f32.mrb[0].mxu0
  %v4801 = vadd.f32 0.0, %v4800
  %v4802 = vpop.f32.mrb[0].mxu0
  %4803 = vmatprep.mubr.f32.mxu0 %v448
  %4804 = vmatmul.mubr.f32.gmra.mrb[0].mxu0 %v110
  %v4805 = vpop.f32.mrb[0].mxu0
  %v4806 = vadd.f32 0.0, %v4805
  %v4807 = vpop.f32.mrb[0].mxu0
  %4808 = vmatprep.mubr.f32.mxu0 %v451
  %4809 = vmatmul.mubr.f32.gmra.mrb[0].mxu0 %v112
  %v4810 = vpop.f32.mrb[0].mxu0
  %v4811 = vadd.f32 0.0, %v4810
  %v4812 = vpop.f32.mrb[0].mxu0
  %4813 = vmatprep.mubr.f32.mxu0 %v454
  %4814 = vmatmul.mubr.f32.gmra.mrb[0].mxu0 %v114
  %v4815 = vpop.f32.mrb[0].mxu0
  %v4816 = vadd.f32 0.0, %v4815
  %v4817 = vpop.f32.mrb[0].mxu0
  %4818 = vmatprep.mubr.f32.mxu0 %v457
  %4819 = vmatmul.mubr.f32.gmra.mrb[0].mxu0 %v116
  %v4820 = vpop.f32.mrb[0].mxu0
  %v4821 = vadd.f32 0.0, %v4820
  %v4822 = vpop.f32.mrb[0].mxu0
  %4823 = vmatprep.mubr.f32.mxu0 %v460
  %4824 = vmatmul.mubr.f32.gmra.mrb[0].mxu0 %v118
  %v4825 = vpop.f32.mrb[0].mxu0
  %v4826 = vadd.f32 0.0, %v4825
  %v4827 = vpop.f32.mrb[0].mxu0
  %4828 = vmatprep.mubr.f32.mxu0 %v463
  %4829 = vmatmul.mubr.f32.gmra.mrb[0].mxu0 %v120
  %v4830 = vpop.f32.mrb[0].mxu0
  %v4831 = vadd.f32 0.0, %v4830
  %v4832 = vpop.f32.mrb[0].mxu0
  %4833 = vmatprep.mubr.f32.mxu0 %v466
  %4834 = vmatmul.mubr.f32.gmra.mrb[0].mxu0 %v122
  %v4835 = vpop.f32.mrb[0].mxu0
  %v4836 = vadd.f32 0.0, %v4835
  %v4837 = vpop.f32.mrb[0].mxu0
  %4838 = vmatprep.mubr.f32.mxu0 %v469
  %4839 = vmatmul.mubr.f32.gmra.mrb[0].mxu0 %v124
  %v4840 = vpop.f32.mrb[0].mxu0
  %v4841 = vadd.f32 0.0, %v4840
  %v4842 = vpop.f32.mrb[0].mxu0
  %4843 = vmatprep.mubr.f32.mxu0 %v472
  %4844 = vmatmul.mubr.f32.gmra.mrb[0].mxu0 %v126
  %v4845 = vpop.f32.mrb[0].mxu0
  %v4846 = vadd.f32 0.0, %v4845
  %v4847 = vpop.f32.mrb[0].mxu0
  %4848 = vmatprep.mubr.f32.mxu0 %v475
  %4849 = vmatmul.mubr.f32.gmra.mrb[0].mxu0 %v128
  %v4850 = vpop.f32.mrb[0].mxu0
  %v4851 = vadd.f32 0.0, %v4850
  %v4852 = vpop.f32.mrb[0].mxu0
  %4853 = vmatprep.mubr.f32.mxu0 %v478
  %4854 = vmatmul.mubr.f32.gmra.mrb[0].mxu0 %v130
  %v4855 = vpop.f32.mrb[0].mxu0
  %v4856 = vadd.f32 0.0, %v4855
  %v4857 = vpop.f32.mrb[0].mxu0
  %4858 = vmatprep.mubr.f32.mxu0 %v481
  %4859 = vmatmul.mubr.f32.gmra.mrb[0].mxu0 %v132
  %v4860 = vpop.f32.mrb[0].mxu0
  %v4861 = vadd.f32 0.0, %v4860
  %v4862 = vpop.f32.mrb[0].mxu0
  %4863 = vmatprep.mubr.f32.mxu0 %v484
  %4864 = vmatmul.mubr.f32.gmra.mrb[0].mxu0 %v134
  %v4865 = vpop.f32.mrb[0].mxu0
  %v4866 = vadd.f32 0.0, %v4865
  %v4867 = vpop.f32.mrb[0].mxu0
  %4868 = vmatprep.mubr.f32.mxu0 %v487
  %4869 = vmatmul.mubr.f32.gmra.mrb[0].mxu0 %v136
  %v4870 = vpop.f32.mrb[0].mxu0
  %v4871 = vadd.f32 0.0, %v4870
  %v4872 = vpop.f32.mrb[0].mxu0
  %4873 = vmatprep.mubr.f32.mxu0 %v490
  %4874 = vmatmul.mubr.f32.gmra.mrb[0].mxu0 %v138
  %v4875 = vpop.f32.mrb[0].mxu0
  %v4876 = vadd.f32 0.0, %v4875
  %v4877 = vpop.f32.mrb[0].mxu0
  %4878 = vmatprep.mubr.f32.mxu0 %v493
  %4879 = vmatmul.mubr.f32.gmra.mrb[0].mxu0 %v140
  %v4880 = vpop.f32.mrb[0].mxu0
  %v4881 = vadd.f32 0.0, %v4880
  %v4882 = vpop.f32.mrb[0].mxu0
  %4883 = vmatprep.mubr.f32.mxu0 %v496
  %4884 = vmatmul.mubr.f32.gmra.mrb[0].mxu0 %v142
  %v4885 = vpop.f32.mrb[0].mxu0
  %v4886 = vadd.f32 0.0, %v4885
  %v4887 = vpop.f32.mrb[0].mxu0
  %4888 = vmatprep.mubr.f32.mxu0 %v499
  %4889 = vmatmul.mubr.f32.gmra.mrb[0].mxu0 %v144
  %v4890 = vpop.f32.mrb[0].mxu0
  %v4891 = vadd.f32 0.0, %v4890
  %v4892 = vpop.f32.mrb[0].mxu0
  %4893 = vmatprep.mubr.f32.mxu0 %v502
  %4894 = vmatmul.mubr.f32.gmra.mrb[0].mxu0 %v146
  %v4895 = vpop.f32.mrb[0].mxu0
  %v4896 = vadd.f32 0.0, %v4895
  %v4897 = vpop.f32.mrb[0].mxu0
  %4898 = vmatprep.mubr.f32.mxu0 %v505
  %4899 = vmatmul.mubr.f32.gmra.mrb[0].mxu0 %v148
  %v4900 = vpop.f32.mrb[0].mxu0
  %v4901 = vadd.f32 0.0, %v4900
  %v4902 = vpop.f32.mrb[0].mxu0
  %4903 = vmatprep.mubr.f32.mxu0 %v508
  %4904 = vmatmul.mubr.f32.gmra.mrb[0].mxu0 %v150
  %v4905 = vpop.f32.mrb[0].mxu0
  %v4906 = vadd.f32 0.0, %v4905
  %v4907 = vpop.f32.mrb[0].mxu0
  %4908 = vmatprep.mubr.f32.mxu0 %v511
  %4909 = vmatmul.mubr.f32.gmra.mrb[0].mxu0 %v152
  %v4910 = vpop.f32.mrb[0].mxu0
  %v4911 = vadd.f32 0.0, %v4910
  %v4912 = vpop.f32.mrb[0].mxu0
  %4913 = vmatprep.mubr.f32.mxu0 %v514
  %4914 = vmatmul.mubr.f32.gmra.mrb[0].mxu0 %v154
  %v4915 = vpop.f32.mrb[0].mxu0
  %v4916 = vadd.f32 0.0, %v4915
  %v4917 = vpop.f32.mrb[0].mxu0
  %4918 = vmatprep.mubr.f32.mxu0 %v517
  %4919 = vmatmul.mubr.f32.gmra.mrb[0].mxu0 %v156
  %v4920 = vpop.f32.mrb[0].mxu0
  %v4921 = vadd.f32 0.0, %v4920
  %v4922 = vpop.f32.mrb[0].mxu0
  %4923 = vmatprep.mubr.f32.mxu0 %v520
  %4924 = vmatmul.mubr.f32.gmra.mrb[0].mxu0 %v158
  %v4925 = vpop.f32.mrb[0].mxu0
  %v4926 = vadd.f32 0.0, %v4925
  %v4927 = vpop.f32.mrb[0].mxu0
  %4928 = vmatprep.mubr.f32.mxu0 %v523
  %4929 = vmatmul.mubr.f32.gmra.mrb[0].mxu0 %v160
  %v4930 = vpop.f32.mrb[0].mxu0
  %v4931 = vadd.f32 0.0, %v4930
  %v4932 = vpop.f32.mrb[0].mxu0
  %4933 = vmatprep.mubr.f32.mxu0 %v526
  %4934 = vmatmul.mubr.f32.gmra.mrb[0].mxu0 %v162
  %v4935 = vpop.f32.mrb[0].mxu0
  %v4936 = vadd.f32 0.0, %v4935
  %v4937 = vpop.f32.mrb[0].mxu0
  %4938 = vmatprep.mubr.f32.mxu0 %v529
  %4939 = vmatmul.mubr.f32.gmra.mrb[0].mxu0 %v164
  %v4940 = vpop.f32.mrb[0].mxu0
  %v4941 = vadd.f32 0.0, %v4940
  %v4942 = vpop.f32.mrb[0].mxu0
  %4943 = vmatprep.mubr.f32.mxu0 %v532
  %4944 = vmatmul.mubr.f32.gmra.mrb[0].mxu0 %v166
  %v4945 = vpop.f32.mrb[0].mxu0
  %v4946 = vadd.f32 0.0, %v4945
  %v4947 = vpop.f32.mrb[0].mxu0
  %4948 = vmatprep.mubr.f32.mxu0 %v535
  %4949 = vmatmul.mubr.f32.gmra.mrb[0].mxu0 %v168
  %v4950 = vpop.f32.mrb[0].mxu0
  %v4951 = vadd.f32 0.0, %v4950
  %v4952 = vpop.f32.mrb[0].mxu0
  %4953 = vmatprep.mubr.f32.mxu0 %v538
  %4954 = vmatmul.mubr.f32.gmra.mrb[0].mxu0 %v170
  %v4955 = vpop.f32.mrb[0].mxu0
  %v4956 = vadd.f32 0.0, %v4955
  %v4957 = vpop.f32.mrb[0].mxu0
  %4958 = vmatprep.mubr.f32.mxu0 %v541
  %4959 = vmatmul.mubr.f32.gmra.mrb[0].mxu0 %v172
  %v4960 = vpop.f32.mrb[0].mxu0
  %v4961 = vadd.f32 0.0, %v4960
  %v4962 = vpop.f32.mrb[0].mxu0
  %4963 = vmatprep.mubr.f32.mxu0 %v544
  %4964 = vmatmul.mubr.f32.gmra.mrb[0].mxu0 %v174
  %v4965 = vpop.f32.mrb[0].mxu0
  %v4966 = vadd.f32 0.0, %v4965
  %v4967 = vpop.f32.mrb[0].mxu0
  %4968 = vmatprep.mubr.f32.mxu0 %v547
  %4969 = vmatmul.mubr.f32.gmra.mrb[0].mxu0 %v176
  %v4970 = vpop.f32.mrb[0].mxu0
  %v4971 = vadd.f32 0.0, %v4970
  %v4972 = vpop.f32.mrb[0].mxu0
  %4973 = vmatprep.mubr.f32.mxu0 %v550
  %4974 = vmatmul.mubr.f32.gmra.mrb[0].mxu0 %v178
  %v4975 = vpop.f32.mrb[0].mxu0
  %v4976 = vadd.f32 0.0, %v4975
  %v4977 = vpop.f32.mrb[0].mxu0
  %4978 = vmatprep.mubr.f32.mxu0 %v553
  %4979 = vmatmul.mubr.f32.gmra.mrb[0].mxu0 %v180
  %v4980 = vpop.f32.mrb[0].mxu0
  %v4981 = vadd.f32 0.0, %v4980
  %v4982 = vpop.f32.mrb[0].mxu0
  %4983 = vmatprep.mubr.f32.mxu0 %v556
  %4984 = vmatmul.mubr.f32.gmra.mrb[0].mxu0 %v182
  %v4985 = vpop.f32.mrb[0].mxu0
  %v4986 = vadd.f32 0.0, %v4985
  %v4987 = vpop.f32.mrb[0].mxu0
  %4988 = vmatprep.mubr.f32.mxu0 %v559
  %4989 = vmatmul.mubr.f32.gmra.mrb[0].mxu0 %v184
  %v4990 = vpop.f32.mrb[0].mxu0
  %v4991 = vadd.f32 0.0, %v4990
  %v4992 = vpop.f32.mrb[0].mxu0
  %4993 = vmatprep.mubr.f32.mxu0 %v562
  %4994 = vmatmul.mubr.f32.gmra.mrb[0].mxu0 %v186
  %v4995 = vpop.f32.mrb[0].mxu0
  %v4996 = vadd.f32 0.0, %v4995
  %v4997 = vpop.f32.mrb[0].mxu0
  %4998 = vmatprep.mubr.f32.mxu0 %v565
  %4999 = vmatmul.mubr.f32.gmra.mrb[0].mxu0 %v188
  %v5000 = vpop.f32.mrb[0].mxu0
  %v5001 = vadd.f32 0.0, %v5000
  %v5002 = vpop.f32.mrb[0].mxu0
  %5003 = vmatprep.mubr.f32.mxu0 %v568
  %5004 = vmatmul.mubr.f32.gmra.mrb[0].mxu0 %v190
  %v5005 = vpop.f32.mrb[0].mxu0
  %v5006 = vadd.f32 0.0, %v5005
  %v5007 = vpop.f32.mrb[0].mxu0
  %5008 = vmatprep.mubr.f32.mxu0 %v571
  %5009 = vmatmul.mubr.f32.gmra.mrb[0].mxu0 %v192
  %v5010 = vpop.f32.mrb[0].mxu0
  %v5011 = vadd.f32 0.0, %v5010
  %v5012 = vpop.f32.mrb[0].mxu0
  %5013 = vmatprep.mubr.f32.mxu0 %v574
  %5014 = vmatmul.mubr.f32.gmra.mrb[0].mxu0 %v194
  %v5015 = vpop.f32.mrb[0].mxu0
  %v5016 = vadd.f32 0.0, %v5015
  %v5017 = vpop.f32.mrb[0].mxu0
  %5018 = vmatprep.mubr.f32.mxu0 %v577
  %5019 = vmatmul.mubr.f32.gmra.mrb[0].mxu0 %v196
  %v5020 = vpop.f32.mrb[0].mxu0
  %v5021 = vadd.f32 0.0, %v5020
  %v5022 = vpop.f32.mrb[0].mxu0
  %5023 = vmatprep.mubr.f32.mxu0 %v580
  %5024 = vmatmul.mubr.f32.gmra.mrb[0].mxu0 %v198
  %v5025 = vpop.f32.mrb[0].mxu0
  %v5026 = vadd.f32 0.0, %v5025
  %v5027 = vpop.f32.mrb[0].mxu0
  %5028 = vmatprep.mubr.f32.mxu0 %v583
  %5029 = vmatmul.mubr.f32.gmra.mrb[0].mxu0 %v200
  %v5030 = vpop.f32.mrb[0].mxu0
  %v5031 = vadd.f32 0.0, %v5030
  %v5032 = vpop.f32.mrb[0].mxu0
  %5033 = vmatprep.mubr.f32.mxu0 %v586
  %5034 = vmatmul.mubr.f32.gmra.mrb[0].mxu0 %v202
  %v5035 = vpop.f32.mrb[0].mxu0
  %v5036 = vadd.f32 0.0, %v5035
  %v5037 = vpop.f32.mrb[0].mxu0
  %5038 = vmatprep.mubr.f32.mxu0 %v589
  %5039 = vmatmul.mubr.f32.gmra.mrb[0].mxu0 %v204
  %v5040 = vpop.f32.mrb[0].mxu0
  %v5041 = vadd.f32 0.0, %v5040
  %v5042 = vpop.f32.mrb[0].mxu0
  %5043 = vmatprep.mubr.f32.mxu0 %v592
  %5044 = vmatmul.mubr.f32.gmra.mrb[0].mxu0 %v206
  %v5045 = vpop.f32.mrb[0].mxu0
  %v5046 = vadd.f32 0.0, %v5045
  %v5047 = vpop.f32.mrb[0].mxu0
  %5048 = vmatprep.mubr.f32.mxu0 %v595
  %5049 = vmatmul.mubr.f32.gmra.mrb[0].mxu0 %v208
  %v5050 = vpop.f32.mrb[0].mxu0
  %v5051 = vadd.f32 0.0, %v5050
  %v5052 = vpop.f32.mrb[0].mxu0
  %5053 = vmatprep.mubr.f32.mxu0 %v598
  %5054 = vmatmul.mubr.f32.gmra.mrb[0].mxu0 %v210
  %v5055 = vpop.f32.mrb[0].mxu0
  %v5056 = vadd.f32 0.0, %v5055
  %v5057 = vpop.f32.mrb[0].mxu0
  %5058 = vmatprep.mubr.f32.mxu0 %v601
  %5059 = vmatmul.mubr.f32.gmra.mrb[0].mxu0 %v212
  %v5060 = vpop.f32.mrb[0].mxu0
  %v5061 = vadd.f32 0.0, %v5060
  %v5062 = vpop.f32.mrb[0].mxu0
  %5063 = vmatprep.mubr.f32.mxu0 %v604
  %5064 = vmatmul.mubr.f32.gmra.mrb[0].mxu0 %v214
  %v5065 = vpop.f32.mrb[0].mxu0
  %v5066 = vadd.f32 0.0, %v5065
  %v5067 = vpop.f32.mrb[0].mxu0
  %5068 = vmatprep.mubr.f32.mxu0 %v607
  %5069 = vmatmul.mubr.f32.gmra.mrb[0].mxu0 %v216
  %v5070 = vpop.f32.mrb[0].mxu0
  %v5071 = vadd.f32 0.0, %v5070
  %v5072 = vpop.f32.mrb[0].mxu0
  %5073 = vmatprep.mubr.f32.mxu0 %v610
  %5074 = vmatmul.mubr.f32.gmra.mrb[0].mxu0 %v218
  %v5075 = vpop.f32.mrb[0].mxu0
  %v5076 = vadd.f32 0.0, %v5075
  %v5077 = vpop.f32.mrb[0].mxu0
  %5078 = vmatprep.mubr.f32.mxu0 %v613
  %5079 = vmatmul.mubr.f32.gmra.mrb[0].mxu0 %v220
  %v5080 = vpop.f32.mrb[0].mxu0
  %v5081 = vadd.f32 0.0, %v5080
  %v5082 = vpop.f32.mrb[0].mxu0
  %5083 = vmatprep.mubr.f32.mxu0 %v616
  %5084 = vmatmul.mubr.f32.gmra.mrb[0].mxu0 %v222
  %v5085 = vpop.f32.mrb[0].mxu0
  %v5086 = vadd.f32 0.0, %v5085
  %v5087 = vpop.f32.mrb[0].mxu0
  %5088 = vmatprep.mubr.f32.mxu0 %v619
  %5089 = vmatmul.mubr.f32.gmra.mrb[0].mxu0 %v224
  %v5090 = vpop.f32.mrb[0].mxu0
  %v5091 = vadd.f32 0.0, %v5090
  %v5092 = vpop.f32.mrb[0].mxu0
  %5093 = vmatprep.mubr.f32.mxu0 %v622
  %5094 = vmatmul.mubr.f32.gmra.mrb[0].mxu0 %v226
  %v5095 = vpop.f32.mrb[0].mxu0
  %v5096 = vadd.f32 0.0, %v5095
  %v5097 = vpop.f32.mrb[0].mxu0
  %5098 = vmatprep.mubr.f32.mxu0 %v625
  %5099 = vmatmul.mubr.f32.gmra.mrb[0].mxu0 %v228
  %v5100 = vpop.f32.mrb[0].mxu0
  %v5101 = vadd.f32 0.0, %v5100
  %v5102 = vpop.f32.mrb[0].mxu0
  %5103 = vmatprep.mubr.f32.mxu0 %v628
  %5104 = vmatmul.mubr.f32.gmra.mrb[0].mxu0 %v230
  %v5105 = vpop.f32.mrb[0].mxu0
  %v5106 = vadd.f32 0.0, %v5105
  %v5107 = vpop.f32.mrb[0].mxu0
  %5108 = vmatprep.mubr.f32.mxu0 %v631
  %5109 = vmatmul.mubr.f32.gmra.mrb[0].mxu0 %v232
  %v5110 = vpop.f32.mrb[0].mxu0
  %v5111 = vadd.f32 0.0, %v5110
  %v5112 = vpop.f32.mrb[0].mxu0
  %5113 = vmatprep.mubr.f32.mxu0 %v634
  %5114 = vmatmul.mubr.f32.gmra.mrb[0].mxu0 %v234
  %v5115 = vpop.f32.mrb[0].mxu0
  %v5116 = vadd.f32 0.0, %v5115
  %v5117 = vpop.f32.mrb[0].mxu0
  %5118 = vmatprep.mubr.f32.mxu0 %v637
  %5119 = vmatmul.mubr.f32.gmra.mrb[0].mxu0 %v236
  %v5120 = vpop.f32.mrb[0].mxu0
  %v5121 = vadd.f32 0.0, %v5120
  %v5122 = vpop.f32.mrb[0].mxu0
  %5123 = vmatprep.mubr.f32.mxu0 %v640
  %5124 = vmatmul.mubr.f32.gmra.mrb[0].mxu0 %v238
  %v5125 = vpop.f32.mrb[0].mxu0
  %v5126 = vadd.f32 0.0, %v5125
  %v5127 = vpop.f32.mrb[0].mxu0
  %5128 = vmatprep.mubr.f32.mxu0 %v643
  %5129 = vmatmul.mubr.f32.gmra.mrb[0].mxu0 %v240
  %v5130 = vpop.f32.mrb[0].mxu0
  %v5131 = vadd.f32 0.0, %v5130
  %v5132 = vpop.f32.mrb[0].mxu0
  %5133 = vmatprep.mubr.f32.mxu0 %v646
  %5134 = vmatmul.mubr.f32.gmra.mrb[0].mxu0 %v242
  %v5135 = vpop.f32.mrb[0].mxu0
  %v5136 = vadd.f32 0.0, %v5135
  %v5137 = vpop.f32.mrb[0].mxu0
  %5138 = vmatprep.mubr.f32.mxu0 %v649
  %5139 = vmatmul.mubr.f32.gmra.mrb[0].mxu0 %v244
  %v5140 = vpop.f32.mrb[0].mxu0
  %v5141 = vadd.f32 0.0, %v5140
  %v5142 = vpop.f32.mrb[0].mxu0
  %5143 = vmatprep.mubr.f32.mxu0 %v652
  %5144 = vmatmul.mubr.f32.gmra.mrb[0].mxu0 %v246
  %v5145 = vpop.f32.mrb[0].mxu0
  %v5146 = vadd.f32 0.0, %v5145
  %v5147 = vpop.f32.mrb[0].mxu0
  %5148 = vmatprep.mubr.f32.mxu0 %v655
  %5149 = vmatmul.mubr.f32.gmra.mrb[0].mxu0 %v248
  %v5150 = vpop.f32.mrb[0].mxu0
  %v5151 = vadd.f32 0.0, %v5150
  %v5152 = vpop.f32.mrb[0].mxu0
  %5153 = vmatprep.mubr.f32.mxu0 %v658
  %5154 = vmatmul.mubr.f32.gmra.mrb[0].mxu0 %v250
  %v5155 = vpop.f32.mrb[0].mxu0
  %v5156 = vadd.f32 0.0, %v5155
  %v5157 = vpop.f32.mrb[0].mxu0
  %5158 = vmatprep.mubr.f32.mxu0 %v661
  %5159 = vmatmul.mubr.f32.gmra.mrb[0].mxu0 %v252
  %v5160 = vpop.f32.mrb[0].mxu0
  %v5161 = vadd.f32 0.0, %v5160
  %v5162 = vpop.f32.mrb[0].mxu0
  %5163 = vmatprep.mubr.f32.mxu0 %v664
  %5164 = vmatmul.mubr.f32.gmra.mrb[0].mxu0 %v254
  %v5165 = vpop.f32.mrb[0].mxu0
  %v5166 = vadd.f32 0.0, %v5165
  %v5167 = vpop.f32.mrb[0].mxu0
  %5168 = vmatprep.mubr.f32.mxu0 %v667
  %5169 = vmatmul.mubr.f32.gmra.mrb[0].mxu0 %v256
  %v5170 = vpop.f32.mrb[0].mxu0
  %v5171 = vadd.f32 0.0, %v5170
  %v5172 = vpop.f32.mrb[0].mxu0
  %5173 = vmatprep.mubr.f32.mxu0 %v670
  %5174 = vmatmul.mubr.f32.gmra.mrb[0].mxu0 %v258
  %v5175 = vpop.f32.mrb[0].mxu0
  %v5176 = vadd.f32 0.0, %v5175
  %v5177 = vpop.f32.mrb[0].mxu0
  %5178 = vdwg.mxu0
  %v5179 = vmax.f32 %v4581, %v4731
  %v5180 = vmax.f32 %v4586, %v4736
  %v5181 = vmax.f32 %v4591, %v4741
  %v5182 = vmax.f32 %v4596, %v4746
  %v5183 = vmax.f32 %v4601, %v4751
  %v5184 = vmax.f32 %v4606, %v4756
  %v5185 = vmax.f32 %v4611, %v4761
  %v5186 = vmax.f32 %v4616, %v4766
  %v5187 = vmax.f32 %v4621, %v4771
  %v5188 = vmax.f32 %v4626, %v4776
  %v5189 = vmax.f32 %v4631, %v4781
  %v5190 = vmax.f32 %v4636, %v4786
  %v5191 = vmax.f32 %v4641, %v4791
  %v5192 = vmax.f32 %v4646, %v4796
  %v5193 = vmax.f32 %v4651, %v4801
  %v5194 = vmax.f32 %v4656, %v4806
  %v5195 = vmax.f32 %v4661, %v4811
  %v5196 = vmax.f32 %v4666, %v4816
  %v5197 = vmax.f32 %v4671, %v4821
  %v5198 = vmax.f32 %v4676, %v4826
  %v5199 = vmax.f32 %v4681, %v4831
  %v5200 = vmax.f32 %v4686, %v4836
  %v5201 = vmax.f32 %v4691, %v4841
  %v5202 = vmax.f32 %v4696, %v4846
  %v5203 = vmax.f32 %v4701, %v4851
  %v5204 = vmax.f32 %v4706, %v4856
  %v5205 = vmax.f32 %v4711, %v4861
  %v5206 = vmax.f32 %v4716, %v4866
  %v5207 = vmax.f32 %v4721, %v4871
  %v5208 = vmax.f32 %v4726, %v4876
  %v5209 = vmax.f32 %v4881, %v5031
  %v5210 = vmax.f32 %v4886, %v5036
  %v5211 = vmax.f32 %v4891, %v5041
  %v5212 = vmax.f32 %v4896, %v5046
  %v5213 = vmax.f32 %v4901, %v5051
  %v5214 = vmax.f32 %v4906, %v5056
  %v5215 = vmax.f32 %v4911, %v5061
  %v5216 = vmax.f32 %v4916, %v5066
  %v5217 = vmax.f32 %v4921, %v5071
  %v5218 = vmax.f32 %v4926, %v5076
  %v5219 = vmax.f32 %v4931, %v5081
  %v5220 = vmax.f32 %v4936, %v5086
  %v5221 = vmax.f32 %v4941, %v5091
  %v5222 = vmax.f32 %v4946, %v5096
  %v5223 = vmax.f32 %v4951, %v5101
  %v5224 = vmax.f32 %v4956, %v5106
  %v5225 = vmax.f32 %v4961, %v5111
  %v5226 = vmax.f32 %v4966, %v5116
  %v5227 = vmax.f32 %v4971, %v5121
  %v5228 = vmax.f32 %v4976, %v5126
  %v5229 = vmax.f32 %v4981, %v5131
  %v5230 = vmax.f32 %v4986, %v5136
  %v5231 = vmax.f32 %v4991, %v5141
  %v5232 = vmax.f32 %v4996, %v5146
  %v5233 = vmax.f32 %v5001, %v5151
  %v5234 = vmax.f32 %v5006, %v5156
  %v5235 = vmax.f32 %v5011, %v5161
  %v5236 = vmax.f32 %v5016, %v5166
  %v5237 = vmax.f32 %v5021, %v5171
  %v5238 = vmax.f32 %v5026, %v5176
  %v5239 = vmax.f32 %v5179, %v5209
  %v5240 = vmax.f32 %v5180, %v5210
  %v5241 = vmax.f32 %v5181, %v5211
  %v5242 = vmax.f32 %v5182, %v5212
  %v5243 = vmax.f32 %v5183, %v5213
  %v5244 = vmax.f32 %v5184, %v5214
  %v5245 = vmax.f32 %v5185, %v5215
  %v5246 = vmax.f32 %v5186, %v5216
  %v5247 = vmax.f32 %v5187, %v5217
  %v5248 = vmax.f32 %v5188, %v5218
  %v5249 = vmax.f32 %v5189, %v5219
  %v5250 = vmax.f32 %v5190, %v5220
  %v5251 = vmax.f32 %v5191, %v5221
  %v5252 = vmax.f32 %v5192, %v5222
  %v5253 = vmax.f32 %v5193, %v5223
  %v5254 = vmax.f32 %v5194, %v5224
  %v5255 = vmax.f32 %v5195, %v5225
  %v5256 = vmax.f32 %v5196, %v5226
  %v5257 = vmax.f32 %v5197, %v5227
  %v5258 = vmax.f32 %v5198, %v5228
  %v5259 = vmax.f32 %v5199, %v5229
  %v5260 = vmax.f32 %v5200, %v5230
  %v5261 = vmax.f32 %v5201, %v5231
  %v5262 = vmax.f32 %v5202, %v5232
  %v5263 = vmax.f32 %v5203, %v5233
  %v5264 = vmax.f32 %v5204, %v5234
  %v5265 = vmax.f32 %v5205, %v5235
  %v5266 = vmax.f32 %v5206, %v5236
  %v5267 = vmax.f32 %v5207, %v5237
  %v5268 = vmax.f32 %v5208, %v5238
  %v5269 = vadd.f32 %v5239, %v1430
  %v5270 = vadd.f32 %v5240, %v1435
  %v5271 = vadd.f32 %v5241, %v1440
  %v5272 = vadd.f32 %v5242, %v1445
  %v5273 = vadd.f32 %v5243, %v1450
  %v5274 = vadd.f32 %v5244, %v1455
  %v5275 = vadd.f32 %v5245, %v1460
  %v5276 = vadd.f32 %v5246, %v1465
  %v5277 = vadd.f32 %v5247, %v1470
  %v5278 = vadd.f32 %v5248, %v1475
  %v5279 = vadd.f32 %v5249, %v1480
  %v5280 = vadd.f32 %v5250, %v1485
  %v5281 = vadd.f32 %v5251, %v1490
  %v5282 = vadd.f32 %v5252, %v1495
  %v5283 = vadd.f32 %v5253, %v1500
  %v5284 = vadd.f32 %v5254, %v1505
  %v5285 = vadd.f32 %v5255, %v1510
  %v5286 = vadd.f32 %v5256, %v1515
  %v5287 = vadd.f32 %v5257, %v1520
  %v5288 = vadd.f32 %v5258, %v1525
  %v5289 = vadd.f32 %v5259, %v1530
  %v5290 = vadd.f32 %v5260, %v1535
  %v5291 = vadd.f32 %v5261, %v1540
  %v5292 = vadd.f32 %v5262, %v1545
  %v5293 = vadd.f32 %v5263, %v1550
  %v5294 = vadd.f32 %v5264, %v1555
  %v5295 = vadd.f32 %v5265, %v1560
  %v5296 = vadd.f32 %v5266, %v1565
  %v5297 = vadd.f32 %v5267, %v1570
  %v5298 = vadd.f32 %v5268, %v1575
  %v5299 = vmax.f32 %v5269, 0.0
  %v5300 = vmax.f32 %v5270, 0.0
  %v5301 = vmax.f32 %v5271, 0.0
  %v5302 = vmax.f32 %v5272, 0.0
  %v5303 = vmax.f32 %v5273, 0.0
  %v5304 = vmax.f32 %v5274, 0.0
  %v5305 = vmax.f32 %v5275, 0.0
  %v5306 = vmax.f32 %v5276, 0.0
  %v5307 = vmax.f32 %v5277, 0.0
  %v5308 = vmax.f32 %v5278, 0.0
  %v5309 = vmax.f32 %v5279, 0.0
  %v5310 = vmax.f32 %v5280, 0.0
  %v5311 = vmax.f32 %v5281, 0.0
  %v5312 = vmax.f32 %v5282, 0.0
  %v5313 = vmax.f32 %v5283, 0.0
  %v5314 = vmax.f32 %v5284, 0.0
  %v5315 = vmax.f32 %v5285, 0.0
  %v5316 = vmax.f32 %v5286, 0.0
  %v5317 = vmax.f32 %v5287, 0.0
  %v5318 = vmax.f32 %v5288, 0.0
  %v5319 = vmax.f32 %v5289, 0.0
  %v5320 = vmax.f32 %v5290, 0.0
  %v5321 = vmax.f32 %v5291, 0.0
  %v5322 = vmax.f32 %v5292, 0.0
  %v5323 = vmax.f32 %v5293, 0.0
  %v5324 = vmax.f32 %v5294, 0.0
  %v5325 = vmax.f32 %v5295, 0.0
  %v5326 = vmax.f32 %v5296, 0.0
  %v5327 = vmax.f32 %v5297, 0.0
  %v5328 = vmax.f32 %v5298, 0.0
  %s5329 = scalar_lea.vmem %s3, 128
  %v5330 = vld [vmem:[%s5329] sm:$0xff]
  %v5331 = vld [vmem:[%s5329 + $0x8] sm:$0xff]
  %v5332 = vld [vmem:[%s5329 + $0x10] sm:$0x3]
  %v5333 = vld [vmem:[%s5329 + $0x18] sm:$0x3]
  %v5335 = vsel %vm2482, %v5331, 0
  %v5338 = vsel %vm2482, %v5333, 0
  %5340 = vmatprep.subr.mxu0 0.0
  %5341 = vmatpush1.msra.mxu0 %v5299
  %5342 = vmatprep.subr.mxu0 0.0
  %5343 = vmatpush1.msra.mxu0 %v5300
  %5344 = vmatprep.subr.mxu0 0.0
  %5345 = vmatpush1.msra.mxu0 %v5301
  %5346 = vmatprep.subr.mxu0 0.0
  %5347 = vmatpush1.msra.mxu0 %v5302
  %5348 = vmatprep.subr.mxu0 0.0
  %5349 = vmatpush1.msra.mxu0 %v5303
  %5350 = vmatprep.subr.mxu0 0.0
  %5351 = vmatpush1.msra.mxu0 %v5304
  %5352 = vmatprep.subr.mxu0 0.0
  %5353 = vmatpush1.msra.mxu0 %v5305
  %5354 = vmatprep.subr.mxu0 0.0
  %5355 = vmatpush1.msra.mxu0 %v5306
  %5356 = vmatprep.subr.mxu0 0.0
  %5357 = vmatpush1.msra.mxu0 %v5307
  %5358 = vmatprep.subr.mxu0 0.0
  %5359 = vmatpush1.msra.mxu0 %v5308
  %5360 = vmatprep.subr.mxu0 0.0
  %5361 = vmatpush1.msra.mxu0 %v5309
  %5362 = vmatprep.subr.mxu0 0.0
  %5363 = vmatpush1.msra.mxu0 %v5310
  %5364 = vmatprep.subr.mxu0 0.0
  %5365 = vmatpush1.msra.mxu0 %v5311
  %5366 = vmatprep.subr.mxu0 0.0
  %5367 = vmatpush1.msra.mxu0 %v5312
  %5368 = vmatprep.subr.mxu0 0.0
  %5369 = vmatpush1.msra.mxu0 %v5313
  %5370 = vmatprep.subr.mxu0 0.0
  %5371 = vmatpush1.msra.mxu0 %v5314
  %5372 = vmatprep.subr.mxu0 0.0
  %5373 = vmatpush1.msra.mxu0 %v5315
  %5374 = vmatprep.subr.mxu0 0.0
  %5375 = vmatpush1.msra.mxu0 %v5316
  %5376 = vmatprep.subr.mxu0 0.0
  %5377 = vmatpush1.msra.mxu0 %v5317
  %5378 = vmatprep.subr.mxu0 0.0
  %5379 = vmatpush1.msra.mxu0 %v5318
  %5380 = vmatprep.subr.mxu0 0.0
  %5381 = vmatpush1.msra.mxu0 %v5319
  %5382 = vmatprep.subr.mxu0 0.0
  %5383 = vmatpush1.msra.mxu0 %v5320
  %5384 = vmatprep.subr.mxu0 0.0
  %5385 = vmatpush1.msra.mxu0 %v5321
  %5386 = vmatprep.subr.mxu0 0.0
  %5387 = vmatpush1.msra.mxu0 %v5322
  %5388 = vmatprep.subr.mxu0 0.0
  %5389 = vmatpush1.msra.mxu0 %v5323
  %5390 = vmatprep.subr.mxu0 0.0
  %5391 = vmatpush1.msra.mxu0 %v5324
  %5392 = vmatprep.subr.mxu0 0.0
  %5393 = vmatpush1.msra.mxu0 %v5325
  %5394 = vmatprep.subr.mxu0 0.0
  %5395 = vmatpush1.msra.mxu0 %v5326
  %5396 = vmatprep.subr.mxu0 0.0
  %5397 = vmatpush1.msra.mxu0 %v5327
  %5398 = vmatprep.subr.mxu0 0.0
  %5399 = vmatpush1.msra.mxu0 %v5328
  %5400 = vmatprep.subr.mxu0 0.0
  %5401 = vmatpush1.msra.mxu0 0.0
  %5402 = vmatprep.subr.mxu0 0.0
  %5403 = vmatpush1.msra.mxu0 0.0
  %5404 = vmatprep.mubr.f32.mxu0 %v5335
  %5405 = vmatmul.mubr.f32.gmra.mrb[0].mxu0 %v5330
  %v5406 = vpop.f32.mrb[0].mxu0
  %v5407 = vadd.f32 0.0, %v5406
  %v5408 = vpop.f32.mrb[0].mxu0
  %5409 = vmatprep.mubr.f32.mxu0 %v5338
  %5410 = vmatmul.mubr.f32.gmra.mrb[0].mxu0 %v5332
  %v5411 = vpop.f32.mrb[0].mxu0
  %v5412 = vadd.f32 0.0, %v5411
  %v5413 = vpop.f32.mrb[0].mxu0
  %5414 = vdwg.mxu0
  %v5415 = vadd.f32 %v4491, %v5407
  %v5416 = vadd.f32 %v4492, %v5412
  %v5417 = vld [vmem:[%s0 + $0x118] sm:$0xff]
  %v5418 = vld [vmem:[%s0 + $0x120] sm:$0xff]
  %v5419 = vld [vmem:[%s0 + $0x128] sm:$0xff]
  %v5420 = vld [vmem:[%s0 + $0x130] sm:$0xff]
  %v5421 = vld [vmem:[%s0 + $0x138] sm:$0xff]
  %v5422 = vld [vmem:[%s0 + $0x140] sm:$0xff]
  %v5423 = vld [vmem:[%s0 + $0x148] sm:$0xff]
  %v5424 = vld [vmem:[%s0 + $0x150] sm:$0xff]
  %v5425 = vld [vmem:[%s0 + $0x158] sm:$0xff]
  %v5426 = vld [vmem:[%s0 + $0x160] sm:$0xff]
  %v5427 = vld [vmem:[%s0 + $0x168] sm:$0xff]
  %v5428 = vld [vmem:[%s0 + $0x170] sm:$0xff]
  %v5429 = vld [vmem:[%s0 + $0x178] sm:$0xff]
  %v5430 = vld [vmem:[%s0 + $0x180] sm:$0xff]
  %v5431 = vld [vmem:[%s0 + $0x188] sm:$0xff]
  %v5432 = vld [vmem:[%s0 + $0x190] sm:$0xff]
  %v5433 = vld [vmem:[%s0 + $0x198] sm:$0xff]
  %v5434 = vld [vmem:[%s0 + $0x1a0] sm:$0xff]
  %v5435 = vld [vmem:[%s0 + $0x1a8] sm:$0xff]
  %v5436 = vld [vmem:[%s0 + $0x1b0] sm:$0xff]
  %v5437 = vld [vmem:[%s0 + $0x1b8] sm:$0xff]
  %5438 = vmatprep.subr.mxu0 0.0
  %5439 = vmatpush1.msra.mxu0 %v5417
  %5440 = vmatprep.subr.mxu0 0.0
  %5441 = vmatpush1.msra.mxu0 %v5418
  %5442 = vmatprep.subr.mxu0 0.0
  %5443 = vmatpush1.msra.mxu0 %v5419
  %5444 = vmatprep.subr.mxu0 0.0
  %5445 = vmatpush1.msra.mxu0 %v5420
  %5446 = vmatprep.subr.mxu0 0.0
  %5447 = vmatpush1.msra.mxu0 %v5421
  %5448 = vmatprep.subr.mxu0 0.0
  %5449 = vmatpush1.msra.mxu0 %v5422
  %5450 = vmatprep.subr.mxu0 0.0
  %5451 = vmatpush1.msra.mxu0 %v5423
  %5452 = vmatprep.subr.mxu0 0.0
  %5453 = vmatpush1.msra.mxu0 %v5424
  %5454 = vmatprep.subr.mxu0 0.0
  %5455 = vmatpush1.msra.mxu0 %v5425
  %5456 = vmatprep.subr.mxu0 0.0
  %5457 = vmatpush1.msra.mxu0 %v5426
  %5458 = vmatprep.subr.mxu0 0.0
  %5459 = vmatpush1.msra.mxu0 %v5427
  %5460 = vmatprep.subr.mxu0 0.0
  %5461 = vmatpush1.msra.mxu0 %v5428
  %5462 = vmatprep.subr.mxu0 0.0
  %5463 = vmatpush1.msra.mxu0 %v5429
  %5464 = vmatprep.subr.mxu0 0.0
  %5465 = vmatpush1.msra.mxu0 %v5430
  %5466 = vmatprep.subr.mxu0 0.0
  %5467 = vmatpush1.msra.mxu0 %v5431
  %5468 = vmatprep.subr.mxu0 0.0
  %5469 = vmatpush1.msra.mxu0 %v5432
  %5470 = vmatprep.subr.mxu0 0.0
  %5471 = vmatpush1.msra.mxu0 %v5433
  %5472 = vmatprep.subr.mxu0 0.0
  %5473 = vmatpush1.msra.mxu0 %v5434
  %5474 = vmatprep.subr.mxu0 0.0
  %5475 = vmatpush1.msra.mxu0 %v5435
  %5476 = vmatprep.subr.mxu0 0.0
  %5477 = vmatpush1.msra.mxu0 %v5436
  %5478 = vmatprep.subr.mxu0 0.0
  %5479 = vmatpush1.msra.mxu0 %v5437
  %5480 = vmatprep.subr.mxu0 0.0
  %5481 = vmatpush1.msra.mxu0 0.0
  %5482 = vmatprep.subr.mxu0 0.0
  %5483 = vmatpush1.msra.mxu0 0.0
  %5484 = vmatprep.subr.mxu0 0.0
  %5485 = vmatpush1.msra.mxu0 0.0
  %5486 = vmatprep.subr.mxu0 0.0
  %5487 = vmatpush1.msra.mxu0 0.0
  %5488 = vmatprep.subr.mxu0 0.0
  %5489 = vmatpush1.msra.mxu0 0.0
  %5490 = vmatprep.subr.mxu0 0.0
  %5491 = vmatpush1.msra.mxu0 0.0
  %5492 = vmatprep.subr.mxu0 0.0
  %5493 = vmatpush1.msra.mxu0 0.0
  %5494 = vmatprep.subr.mxu0 0.0
  %5495 = vmatpush1.msra.mxu0 0.0
  %5496 = vmatprep.subr.mxu0 0.0
  %5497 = vmatpush1.msra.mxu0 0.0
  %5498 = vmatprep.subr.mxu0 0.0
  %5499 = vmatpush1.msra.mxu0 0.0
  %5500 = vmatprep.subr.mxu0 0.0
  %5501 = vmatpush1.msra.mxu0 0.0
  %5502 = vmatprep.mubr.f32.mxu0 %v313
  %5503 = vmatmul.mubr.f32.gmra.mrb[0].mxu0 %v20
  %v5504 = vpop.f32.mrb[0].mxu0
  %v5505 = vadd.f32 0.0, %v5504
  %v5506 = vpop.f32.mrb[0].mxu0
  %5507 = vmatprep.mubr.f32.mxu0 %v316
  %5508 = vmatmul.mubr.f32.gmra.mrb[0].mxu0 %v22
  %v5509 = vpop.f32.mrb[0].mxu0
  %v5510 = vadd.f32 0.0, %v5509
  %v5511 = vpop.f32.mrb[0].mxu0
  %5512 = vmatprep.mubr.f32.mxu0 %v319
  %5513 = vmatmul.mubr.f32.gmra.mrb[0].mxu0 %v24
  %v5514 = vpop.f32.mrb[0].mxu0
  %v5515 = vadd.f32 0.0, %v5514
  %v5516 = vpop.f32.mrb[0].mxu0
  %5517 = vmatprep.mubr.f32.mxu0 %v322
  %5518 = vmatmul.mubr.f32.gmra.mrb[0].mxu0 %v26
  %v5519 = vpop.f32.mrb[0].mxu0
  %v5520 = vadd.f32 0.0, %v5519
  %v5521 = vpop.f32.mrb[0].mxu0
  %5522 = vmatprep.mubr.f32.mxu0 %v325
  %5523 = vmatmul.mubr.f32.gmra.mrb[0].mxu0 %v28
  %v5524 = vpop.f32.mrb[0].mxu0
  %v5525 = vadd.f32 0.0, %v5524
  %v5526 = vpop.f32.mrb[0].mxu0
  %5527 = vmatprep.mubr.f32.mxu0 %v328
  %5528 = vmatmul.mubr.f32.gmra.mrb[0].mxu0 %v30
  %v5529 = vpop.f32.mrb[0].mxu0
  %v5530 = vadd.f32 0.0, %v5529
  %v5531 = vpop.f32.mrb[0].mxu0
  %5532 = vmatprep.mubr.f32.mxu0 %v331
  %5533 = vmatmul.mubr.f32.gmra.mrb[0].mxu0 %v32
  %v5534 = vpop.f32.mrb[0].mxu0
  %v5535 = vadd.f32 0.0, %v5534
  %v5536 = vpop.f32.mrb[0].mxu0
  %5537 = vmatprep.mubr.f32.mxu0 %v334
  %5538 = vmatmul.mubr.f32.gmra.mrb[0].mxu0 %v34
  %v5539 = vpop.f32.mrb[0].mxu0
  %v5540 = vadd.f32 0.0, %v5539
  %v5541 = vpop.f32.mrb[0].mxu0
  %5542 = vmatprep.mubr.f32.mxu0 %v337
  %5543 = vmatmul.mubr.f32.gmra.mrb[0].mxu0 %v36
  %v5544 = vpop.f32.mrb[0].mxu0
  %v5545 = vadd.f32 0.0, %v5544
  %v5546 = vpop.f32.mrb[0].mxu0
  %5547 = vmatprep.mubr.f32.mxu0 %v340
  %5548 = vmatmul.mubr.f32.gmra.mrb[0].mxu0 %v38
  %v5549 = vpop.f32.mrb[0].mxu0
  %v5550 = vadd.f32 0.0, %v5549
  %v5551 = vpop.f32.mrb[0].mxu0
  %5552 = vmatprep.mubr.f32.mxu0 %v343
  %5553 = vmatmul.mubr.f32.gmra.mrb[0].mxu0 %v40
  %v5554 = vpop.f32.mrb[0].mxu0
  %v5555 = vadd.f32 0.0, %v5554
  %v5556 = vpop.f32.mrb[0].mxu0
  %5557 = vmatprep.mubr.f32.mxu0 %v346
  %5558 = vmatmul.mubr.f32.gmra.mrb[0].mxu0 %v42
  %v5559 = vpop.f32.mrb[0].mxu0
  %v5560 = vadd.f32 0.0, %v5559
  %v5561 = vpop.f32.mrb[0].mxu0
  %5562 = vmatprep.mubr.f32.mxu0 %v349
  %5563 = vmatmul.mubr.f32.gmra.mrb[0].mxu0 %v44
  %v5564 = vpop.f32.mrb[0].mxu0
  %v5565 = vadd.f32 0.0, %v5564
  %v5566 = vpop.f32.mrb[0].mxu0
  %5567 = vmatprep.mubr.f32.mxu0 %v352
  %5568 = vmatmul.mubr.f32.gmra.mrb[0].mxu0 %v46
  %v5569 = vpop.f32.mrb[0].mxu0
  %v5570 = vadd.f32 0.0, %v5569
  %v5571 = vpop.f32.mrb[0].mxu0
  %5572 = vmatprep.mubr.f32.mxu0 %v355
  %5573 = vmatmul.mubr.f32.gmra.mrb[0].mxu0 %v48
  %v5574 = vpop.f32.mrb[0].mxu0
  %v5575 = vadd.f32 0.0, %v5574
  %v5576 = vpop.f32.mrb[0].mxu0
  %5577 = vmatprep.mubr.f32.mxu0 %v358
  %5578 = vmatmul.mubr.f32.gmra.mrb[0].mxu0 %v50
  %v5579 = vpop.f32.mrb[0].mxu0
  %v5580 = vadd.f32 0.0, %v5579
  %v5581 = vpop.f32.mrb[0].mxu0
  %5582 = vmatprep.mubr.f32.mxu0 %v361
  %5583 = vmatmul.mubr.f32.gmra.mrb[0].mxu0 %v52
  %v5584 = vpop.f32.mrb[0].mxu0
  %v5585 = vadd.f32 0.0, %v5584
  %v5586 = vpop.f32.mrb[0].mxu0
  %5587 = vmatprep.mubr.f32.mxu0 %v364
  %5588 = vmatmul.mubr.f32.gmra.mrb[0].mxu0 %v54
  %v5589 = vpop.f32.mrb[0].mxu0
  %v5590 = vadd.f32 0.0, %v5589
  %v5591 = vpop.f32.mrb[0].mxu0
  %5592 = vmatprep.mubr.f32.mxu0 %v367
  %5593 = vmatmul.mubr.f32.gmra.mrb[0].mxu0 %v56
  %v5594 = vpop.f32.mrb[0].mxu0
  %v5595 = vadd.f32 0.0, %v5594
  %v5596 = vpop.f32.mrb[0].mxu0
  %5597 = vmatprep.mubr.f32.mxu0 %v370
  %5598 = vmatmul.mubr.f32.gmra.mrb[0].mxu0 %v58
  %v5599 = vpop.f32.mrb[0].mxu0
  %v5600 = vadd.f32 0.0, %v5599
  %v5601 = vpop.f32.mrb[0].mxu0
  %5602 = vmatprep.mubr.f32.mxu0 %v373
  %5603 = vmatmul.mubr.f32.gmra.mrb[0].mxu0 %v60
  %v5604 = vpop.f32.mrb[0].mxu0
  %v5605 = vadd.f32 0.0, %v5604
  %v5606 = vpop.f32.mrb[0].mxu0
  %5607 = vmatprep.mubr.f32.mxu0 %v376
  %5608 = vmatmul.mubr.f32.gmra.mrb[0].mxu0 %v62
  %v5609 = vpop.f32.mrb[0].mxu0
  %v5610 = vadd.f32 0.0, %v5609
  %v5611 = vpop.f32.mrb[0].mxu0
  %5612 = vmatprep.mubr.f32.mxu0 %v379
  %5613 = vmatmul.mubr.f32.gmra.mrb[0].mxu0 %v64
  %v5614 = vpop.f32.mrb[0].mxu0
  %v5615 = vadd.f32 0.0, %v5614
  %v5616 = vpop.f32.mrb[0].mxu0
  %5617 = vmatprep.mubr.f32.mxu0 %v382
  %5618 = vmatmul.mubr.f32.gmra.mrb[0].mxu0 %v66
  %v5619 = vpop.f32.mrb[0].mxu0
  %v5620 = vadd.f32 0.0, %v5619
  %v5621 = vpop.f32.mrb[0].mxu0
  %5622 = vmatprep.mubr.f32.mxu0 %v385
  %5623 = vmatmul.mubr.f32.gmra.mrb[0].mxu0 %v68
  %v5624 = vpop.f32.mrb[0].mxu0
  %v5625 = vadd.f32 0.0, %v5624
  %v5626 = vpop.f32.mrb[0].mxu0
  %5627 = vmatprep.mubr.f32.mxu0 %v388
  %5628 = vmatmul.mubr.f32.gmra.mrb[0].mxu0 %v70
  %v5629 = vpop.f32.mrb[0].mxu0
  %v5630 = vadd.f32 0.0, %v5629
  %v5631 = vpop.f32.mrb[0].mxu0
  %5632 = vmatprep.mubr.f32.mxu0 %v391
  %5633 = vmatmul.mubr.f32.gmra.mrb[0].mxu0 %v72
  %v5634 = vpop.f32.mrb[0].mxu0
  %v5635 = vadd.f32 0.0, %v5634
  %v5636 = vpop.f32.mrb[0].mxu0
  %5637 = vmatprep.mubr.f32.mxu0 %v394
  %5638 = vmatmul.mubr.f32.gmra.mrb[0].mxu0 %v74
  %v5639 = vpop.f32.mrb[0].mxu0
  %v5640 = vadd.f32 0.0, %v5639
  %v5641 = vpop.f32.mrb[0].mxu0
  %5642 = vmatprep.mubr.f32.mxu0 %v397
  %5643 = vmatmul.mubr.f32.gmra.mrb[0].mxu0 %v76
  %v5644 = vpop.f32.mrb[0].mxu0
  %v5645 = vadd.f32 0.0, %v5644
  %v5646 = vpop.f32.mrb[0].mxu0
  %5647 = vmatprep.mubr.f32.mxu0 %v400
  %5648 = vmatmul.mubr.f32.gmra.mrb[0].mxu0 %v78
  %v5649 = vpop.f32.mrb[0].mxu0
  %v5650 = vadd.f32 0.0, %v5649
  %v5651 = vpop.f32.mrb[0].mxu0
  %5652 = vmatprep.mubr.f32.mxu0 %v403
  %5653 = vmatmul.mubr.f32.gmra.mrb[0].mxu0 %v80
  %v5654 = vpop.f32.mrb[0].mxu0
  %v5655 = vadd.f32 0.0, %v5654
  %v5656 = vpop.f32.mrb[0].mxu0
  %5657 = vmatprep.mubr.f32.mxu0 %v406
  %5658 = vmatmul.mubr.f32.gmra.mrb[0].mxu0 %v82
  %v5659 = vpop.f32.mrb[0].mxu0
  %v5660 = vadd.f32 0.0, %v5659
  %v5661 = vpop.f32.mrb[0].mxu0
  %5662 = vmatprep.mubr.f32.mxu0 %v409
  %5663 = vmatmul.mubr.f32.gmra.mrb[0].mxu0 %v84
  %v5664 = vpop.f32.mrb[0].mxu0
  %v5665 = vadd.f32 0.0, %v5664
  %v5666 = vpop.f32.mrb[0].mxu0
  %5667 = vmatprep.mubr.f32.mxu0 %v412
  %5668 = vmatmul.mubr.f32.gmra.mrb[0].mxu0 %v86
  %v5669 = vpop.f32.mrb[0].mxu0
  %v5670 = vadd.f32 0.0, %v5669
  %v5671 = vpop.f32.mrb[0].mxu0
  %5672 = vmatprep.mubr.f32.mxu0 %v415
  %5673 = vmatmul.mubr.f32.gmra.mrb[0].mxu0 %v88
  %v5674 = vpop.f32.mrb[0].mxu0
  %v5675 = vadd.f32 0.0, %v5674
  %v5676 = vpop.f32.mrb[0].mxu0
  %5677 = vmatprep.mubr.f32.mxu0 %v418
  %5678 = vmatmul.mubr.f32.gmra.mrb[0].mxu0 %v90
  %v5679 = vpop.f32.mrb[0].mxu0
  %v5680 = vadd.f32 0.0, %v5679
  %v5681 = vpop.f32.mrb[0].mxu0
  %5682 = vmatprep.mubr.f32.mxu0 %v421
  %5683 = vmatmul.mubr.f32.gmra.mrb[0].mxu0 %v92
  %v5684 = vpop.f32.mrb[0].mxu0
  %v5685 = vadd.f32 0.0, %v5684
  %v5686 = vpop.f32.mrb[0].mxu0
  %5687 = vmatprep.mubr.f32.mxu0 %v424
  %5688 = vmatmul.mubr.f32.gmra.mrb[0].mxu0 %v94
  %v5689 = vpop.f32.mrb[0].mxu0
  %v5690 = vadd.f32 0.0, %v5689
  %v5691 = vpop.f32.mrb[0].mxu0
  %5692 = vmatprep.mubr.f32.mxu0 %v427
  %5693 = vmatmul.mubr.f32.gmra.mrb[0].mxu0 %v96
  %v5694 = vpop.f32.mrb[0].mxu0
  %v5695 = vadd.f32 0.0, %v5694
  %v5696 = vpop.f32.mrb[0].mxu0
  %5697 = vmatprep.mubr.f32.mxu0 %v430
  %5698 = vmatmul.mubr.f32.gmra.mrb[0].mxu0 %v98
  %v5699 = vpop.f32.mrb[0].mxu0
  %v5700 = vadd.f32 0.0, %v5699
  %v5701 = vpop.f32.mrb[0].mxu0
  %5702 = vmatprep.mubr.f32.mxu0 %v433
  %5703 = vmatmul.mubr.f32.gmra.mrb[0].mxu0 %v100
  %v5704 = vpop.f32.mrb[0].mxu0
  %v5705 = vadd.f32 0.0, %v5704
  %v5706 = vpop.f32.mrb[0].mxu0
  %5707 = vmatprep.mubr.f32.mxu0 %v436
  %5708 = vmatmul.mubr.f32.gmra.mrb[0].mxu0 %v102
  %v5709 = vpop.f32.mrb[0].mxu0
  %v5710 = vadd.f32 0.0, %v5709
  %v5711 = vpop.f32.mrb[0].mxu0
  %5712 = vmatprep.mubr.f32.mxu0 %v439
  %5713 = vmatmul.mubr.f32.gmra.mrb[0].mxu0 %v104
  %v5714 = vpop.f32.mrb[0].mxu0
  %v5715 = vadd.f32 0.0, %v5714
  %v5716 = vpop.f32.mrb[0].mxu0
  %5717 = vmatprep.mubr.f32.mxu0 %v442
  %5718 = vmatmul.mubr.f32.gmra.mrb[0].mxu0 %v106
  %v5719 = vpop.f32.mrb[0].mxu0
  %v5720 = vadd.f32 0.0, %v5719
  %v5721 = vpop.f32.mrb[0].mxu0
  %5722 = vmatprep.mubr.f32.mxu0 %v445
  %5723 = vmatmul.mubr.f32.gmra.mrb[0].mxu0 %v108
  %v5724 = vpop.f32.mrb[0].mxu0
  %v5725 = vadd.f32 0.0, %v5724
  %v5726 = vpop.f32.mrb[0].mxu0
  %5727 = vmatprep.mubr.f32.mxu0 %v448
  %5728 = vmatmul.mubr.f32.gmra.mrb[0].mxu0 %v110
  %v5729 = vpop.f32.mrb[0].mxu0
  %v5730 = vadd.f32 0.0, %v5729
  %v5731 = vpop.f32.mrb[0].mxu0
  %5732 = vmatprep.mubr.f32.mxu0 %v451
  %5733 = vmatmul.mubr.f32.gmra.mrb[0].mxu0 %v112
  %v5734 = vpop.f32.mrb[0].mxu0
  %v5735 = vadd.f32 0.0, %v5734
  %v5736 = vpop.f32.mrb[0].mxu0
  %5737 = vmatprep.mubr.f32.mxu0 %v454
  %5738 = vmatmul.mubr.f32.gmra.mrb[0].mxu0 %v114
  %v5739 = vpop.f32.mrb[0].mxu0
  %v5740 = vadd.f32 0.0, %v5739
  %v5741 = vpop.f32.mrb[0].mxu0
  %5742 = vmatprep.mubr.f32.mxu0 %v457
  %5743 = vmatmul.mubr.f32.gmra.mrb[0].mxu0 %v116
  %v5744 = vpop.f32.mrb[0].mxu0
  %v5745 = vadd.f32 0.0, %v5744
  %v5746 = vpop.f32.mrb[0].mxu0
  %5747 = vmatprep.mubr.f32.mxu0 %v460
  %5748 = vmatmul.mubr.f32.gmra.mrb[0].mxu0 %v118
  %v5749 = vpop.f32.mrb[0].mxu0
  %v5750 = vadd.f32 0.0, %v5749
  %v5751 = vpop.f32.mrb[0].mxu0
  %5752 = vmatprep.mubr.f32.mxu0 %v463
  %5753 = vmatmul.mubr.f32.gmra.mrb[0].mxu0 %v120
  %v5754 = vpop.f32.mrb[0].mxu0
  %v5755 = vadd.f32 0.0, %v5754
  %v5756 = vpop.f32.mrb[0].mxu0
  %5757 = vmatprep.mubr.f32.mxu0 %v466
  %5758 = vmatmul.mubr.f32.gmra.mrb[0].mxu0 %v122
  %v5759 = vpop.f32.mrb[0].mxu0
  %v5760 = vadd.f32 0.0, %v5759
  %v5761 = vpop.f32.mrb[0].mxu0
  %5762 = vmatprep.mubr.f32.mxu0 %v469
  %5763 = vmatmul.mubr.f32.gmra.mrb[0].mxu0 %v124
  %v5764 = vpop.f32.mrb[0].mxu0
  %v5765 = vadd.f32 0.0, %v5764
  %v5766 = vpop.f32.mrb[0].mxu0
  %5767 = vmatprep.mubr.f32.mxu0 %v472
  %5768 = vmatmul.mubr.f32.gmra.mrb[0].mxu0 %v126
  %v5769 = vpop.f32.mrb[0].mxu0
  %v5770 = vadd.f32 0.0, %v5769
  %v5771 = vpop.f32.mrb[0].mxu0
  %5772 = vmatprep.mubr.f32.mxu0 %v475
  %5773 = vmatmul.mubr.f32.gmra.mrb[0].mxu0 %v128
  %v5774 = vpop.f32.mrb[0].mxu0
  %v5775 = vadd.f32 0.0, %v5774
  %v5776 = vpop.f32.mrb[0].mxu0
  %5777 = vmatprep.mubr.f32.mxu0 %v478
  %5778 = vmatmul.mubr.f32.gmra.mrb[0].mxu0 %v130
  %v5779 = vpop.f32.mrb[0].mxu0
  %v5780 = vadd.f32 0.0, %v5779
  %v5781 = vpop.f32.mrb[0].mxu0
  %5782 = vmatprep.mubr.f32.mxu0 %v481
  %5783 = vmatmul.mubr.f32.gmra.mrb[0].mxu0 %v132
  %v5784 = vpop.f32.mrb[0].mxu0
  %v5785 = vadd.f32 0.0, %v5784
  %v5786 = vpop.f32.mrb[0].mxu0
  %5787 = vmatprep.mubr.f32.mxu0 %v484
  %5788 = vmatmul.mubr.f32.gmra.mrb[0].mxu0 %v134
  %v5789 = vpop.f32.mrb[0].mxu0
  %v5790 = vadd.f32 0.0, %v5789
  %v5791 = vpop.f32.mrb[0].mxu0
  %5792 = vmatprep.mubr.f32.mxu0 %v487
  %5793 = vmatmul.mubr.f32.gmra.mrb[0].mxu0 %v136
  %v5794 = vpop.f32.mrb[0].mxu0
  %v5795 = vadd.f32 0.0, %v5794
  %v5796 = vpop.f32.mrb[0].mxu0
  %5797 = vmatprep.mubr.f32.mxu0 %v490
  %5798 = vmatmul.mubr.f32.gmra.mrb[0].mxu0 %v138
  %v5799 = vpop.f32.mrb[0].mxu0
  %v5800 = vadd.f32 0.0, %v5799
  %v5801 = vpop.f32.mrb[0].mxu0
  %5802 = vmatprep.mubr.f32.mxu0 %v493
  %5803 = vmatmul.mubr.f32.gmra.mrb[0].mxu0 %v140
  %v5804 = vpop.f32.mrb[0].mxu0
  %v5805 = vadd.f32 0.0, %v5804
  %v5806 = vpop.f32.mrb[0].mxu0
  %5807 = vmatprep.mubr.f32.mxu0 %v496
  %5808 = vmatmul.mubr.f32.gmra.mrb[0].mxu0 %v142
  %v5809 = vpop.f32.mrb[0].mxu0
  %v5810 = vadd.f32 0.0, %v5809
  %v5811 = vpop.f32.mrb[0].mxu0
  %5812 = vmatprep.mubr.f32.mxu0 %v499
  %5813 = vmatmul.mubr.f32.gmra.mrb[0].mxu0 %v144
  %v5814 = vpop.f32.mrb[0].mxu0
  %v5815 = vadd.f32 0.0, %v5814
  %v5816 = vpop.f32.mrb[0].mxu0
  %5817 = vmatprep.mubr.f32.mxu0 %v502
  %5818 = vmatmul.mubr.f32.gmra.mrb[0].mxu0 %v146
  %v5819 = vpop.f32.mrb[0].mxu0
  %v5820 = vadd.f32 0.0, %v5819
  %v5821 = vpop.f32.mrb[0].mxu0
  %5822 = vmatprep.mubr.f32.mxu0 %v505
  %5823 = vmatmul.mubr.f32.gmra.mrb[0].mxu0 %v148
  %v5824 = vpop.f32.mrb[0].mxu0
  %v5825 = vadd.f32 0.0, %v5824
  %v5826 = vpop.f32.mrb[0].mxu0
  %5827 = vmatprep.mubr.f32.mxu0 %v508
  %5828 = vmatmul.mubr.f32.gmra.mrb[0].mxu0 %v150
  %v5829 = vpop.f32.mrb[0].mxu0
  %v5830 = vadd.f32 0.0, %v5829
  %v5831 = vpop.f32.mrb[0].mxu0
  %5832 = vmatprep.mubr.f32.mxu0 %v511
  %5833 = vmatmul.mubr.f32.gmra.mrb[0].mxu0 %v152
  %v5834 = vpop.f32.mrb[0].mxu0
  %v5835 = vadd.f32 0.0, %v5834
  %v5836 = vpop.f32.mrb[0].mxu0
  %5837 = vmatprep.mubr.f32.mxu0 %v514
  %5838 = vmatmul.mubr.f32.gmra.mrb[0].mxu0 %v154
  %v5839 = vpop.f32.mrb[0].mxu0
  %v5840 = vadd.f32 0.0, %v5839
  %v5841 = vpop.f32.mrb[0].mxu0
  %5842 = vmatprep.mubr.f32.mxu0 %v517
  %5843 = vmatmul.mubr.f32.gmra.mrb[0].mxu0 %v156
  %v5844 = vpop.f32.mrb[0].mxu0
  %v5845 = vadd.f32 0.0, %v5844
  %v5846 = vpop.f32.mrb[0].mxu0
  %5847 = vmatprep.mubr.f32.mxu0 %v520
  %5848 = vmatmul.mubr.f32.gmra.mrb[0].mxu0 %v158
  %v5849 = vpop.f32.mrb[0].mxu0
  %v5850 = vadd.f32 0.0, %v5849
  %v5851 = vpop.f32.mrb[0].mxu0
  %5852 = vmatprep.mubr.f32.mxu0 %v523
  %5853 = vmatmul.mubr.f32.gmra.mrb[0].mxu0 %v160
  %v5854 = vpop.f32.mrb[0].mxu0
  %v5855 = vadd.f32 0.0, %v5854
  %v5856 = vpop.f32.mrb[0].mxu0
  %5857 = vmatprep.mubr.f32.mxu0 %v526
  %5858 = vmatmul.mubr.f32.gmra.mrb[0].mxu0 %v162
  %v5859 = vpop.f32.mrb[0].mxu0
  %v5860 = vadd.f32 0.0, %v5859
  %v5861 = vpop.f32.mrb[0].mxu0
  %5862 = vmatprep.mubr.f32.mxu0 %v529
  %5863 = vmatmul.mubr.f32.gmra.mrb[0].mxu0 %v164
  %v5864 = vpop.f32.mrb[0].mxu0
  %v5865 = vadd.f32 0.0, %v5864
  %v5866 = vpop.f32.mrb[0].mxu0
  %5867 = vmatprep.mubr.f32.mxu0 %v532
  %5868 = vmatmul.mubr.f32.gmra.mrb[0].mxu0 %v166
  %v5869 = vpop.f32.mrb[0].mxu0
  %v5870 = vadd.f32 0.0, %v5869
  %v5871 = vpop.f32.mrb[0].mxu0
  %5872 = vmatprep.mubr.f32.mxu0 %v535
  %5873 = vmatmul.mubr.f32.gmra.mrb[0].mxu0 %v168
  %v5874 = vpop.f32.mrb[0].mxu0
  %v5875 = vadd.f32 0.0, %v5874
  %v5876 = vpop.f32.mrb[0].mxu0
  %5877 = vmatprep.mubr.f32.mxu0 %v538
  %5878 = vmatmul.mubr.f32.gmra.mrb[0].mxu0 %v170
  %v5879 = vpop.f32.mrb[0].mxu0
  %v5880 = vadd.f32 0.0, %v5879
  %v5881 = vpop.f32.mrb[0].mxu0
  %5882 = vmatprep.mubr.f32.mxu0 %v541
  %5883 = vmatmul.mubr.f32.gmra.mrb[0].mxu0 %v172
  %v5884 = vpop.f32.mrb[0].mxu0
  %v5885 = vadd.f32 0.0, %v5884
  %v5886 = vpop.f32.mrb[0].mxu0
  %5887 = vmatprep.mubr.f32.mxu0 %v544
  %5888 = vmatmul.mubr.f32.gmra.mrb[0].mxu0 %v174
  %v5889 = vpop.f32.mrb[0].mxu0
  %v5890 = vadd.f32 0.0, %v5889
  %v5891 = vpop.f32.mrb[0].mxu0
  %5892 = vmatprep.mubr.f32.mxu0 %v547
  %5893 = vmatmul.mubr.f32.gmra.mrb[0].mxu0 %v176
  %v5894 = vpop.f32.mrb[0].mxu0
  %v5895 = vadd.f32 0.0, %v5894
  %v5896 = vpop.f32.mrb[0].mxu0
  %5897 = vmatprep.mubr.f32.mxu0 %v550
  %5898 = vmatmul.mubr.f32.gmra.mrb[0].mxu0 %v178
  %v5899 = vpop.f32.mrb[0].mxu0
  %v5900 = vadd.f32 0.0, %v5899
  %v5901 = vpop.f32.mrb[0].mxu0
  %5902 = vmatprep.mubr.f32.mxu0 %v553
  %5903 = vmatmul.mubr.f32.gmra.mrb[0].mxu0 %v180
  %v5904 = vpop.f32.mrb[0].mxu0
  %v5905 = vadd.f32 0.0, %v5904
  %v5906 = vpop.f32.mrb[0].mxu0
  %5907 = vmatprep.mubr.f32.mxu0 %v556
  %5908 = vmatmul.mubr.f32.gmra.mrb[0].mxu0 %v182
  %v5909 = vpop.f32.mrb[0].mxu0
  %v5910 = vadd.f32 0.0, %v5909
  %v5911 = vpop.f32.mrb[0].mxu0
  %5912 = vmatprep.mubr.f32.mxu0 %v559
  %5913 = vmatmul.mubr.f32.gmra.mrb[0].mxu0 %v184
  %v5914 = vpop.f32.mrb[0].mxu0
  %v5915 = vadd.f32 0.0, %v5914
  %v5916 = vpop.f32.mrb[0].mxu0
  %5917 = vmatprep.mubr.f32.mxu0 %v562
  %5918 = vmatmul.mubr.f32.gmra.mrb[0].mxu0 %v186
  %v5919 = vpop.f32.mrb[0].mxu0
  %v5920 = vadd.f32 0.0, %v5919
  %v5921 = vpop.f32.mrb[0].mxu0
  %5922 = vmatprep.mubr.f32.mxu0 %v565
  %5923 = vmatmul.mubr.f32.gmra.mrb[0].mxu0 %v188
  %v5924 = vpop.f32.mrb[0].mxu0
  %v5925 = vadd.f32 0.0, %v5924
  %v5926 = vpop.f32.mrb[0].mxu0
  %5927 = vmatprep.mubr.f32.mxu0 %v568
  %5928 = vmatmul.mubr.f32.gmra.mrb[0].mxu0 %v190
  %v5929 = vpop.f32.mrb[0].mxu0
  %v5930 = vadd.f32 0.0, %v5929
  %v5931 = vpop.f32.mrb[0].mxu0
  %5932 = vmatprep.mubr.f32.mxu0 %v571
  %5933 = vmatmul.mubr.f32.gmra.mrb[0].mxu0 %v192
  %v5934 = vpop.f32.mrb[0].mxu0
  %v5935 = vadd.f32 0.0, %v5934
  %v5936 = vpop.f32.mrb[0].mxu0
  %5937 = vmatprep.mubr.f32.mxu0 %v574
  %5938 = vmatmul.mubr.f32.gmra.mrb[0].mxu0 %v194
  %v5939 = vpop.f32.mrb[0].mxu0
  %v5940 = vadd.f32 0.0, %v5939
  %v5941 = vpop.f32.mrb[0].mxu0
  %5942 = vmatprep.mubr.f32.mxu0 %v577
  %5943 = vmatmul.mubr.f32.gmra.mrb[0].mxu0 %v196
  %v5944 = vpop.f32.mrb[0].mxu0
  %v5945 = vadd.f32 0.0, %v5944
  %v5946 = vpop.f32.mrb[0].mxu0
  %5947 = vmatprep.mubr.f32.mxu0 %v580
  %5948 = vmatmul.mubr.f32.gmra.mrb[0].mxu0 %v198
  %v5949 = vpop.f32.mrb[0].mxu0
  %v5950 = vadd.f32 0.0, %v5949
  %v5951 = vpop.f32.mrb[0].mxu0
  %5952 = vmatprep.mubr.f32.mxu0 %v583
  %5953 = vmatmul.mubr.f32.gmra.mrb[0].mxu0 %v200
  %v5954 = vpop.f32.mrb[0].mxu0
  %v5955 = vadd.f32 0.0, %v5954
  %v5956 = vpop.f32.mrb[0].mxu0
  %5957 = vmatprep.mubr.f32.mxu0 %v586
  %5958 = vmatmul.mubr.f32.gmra.mrb[0].mxu0 %v202
  %v5959 = vpop.f32.mrb[0].mxu0
  %v5960 = vadd.f32 0.0, %v5959
  %v5961 = vpop.f32.mrb[0].mxu0
  %5962 = vmatprep.mubr.f32.mxu0 %v589
  %5963 = vmatmul.mubr.f32.gmra.mrb[0].mxu0 %v204
  %v5964 = vpop.f32.mrb[0].mxu0
  %v5965 = vadd.f32 0.0, %v5964
  %v5966 = vpop.f32.mrb[0].mxu0
  %5967 = vmatprep.mubr.f32.mxu0 %v592
  %5968 = vmatmul.mubr.f32.gmra.mrb[0].mxu0 %v206
  %v5969 = vpop.f32.mrb[0].mxu0
  %v5970 = vadd.f32 0.0, %v5969
  %v5971 = vpop.f32.mrb[0].mxu0
  %5972 = vmatprep.mubr.f32.mxu0 %v595
  %5973 = vmatmul.mubr.f32.gmra.mrb[0].mxu0 %v208
  %v5974 = vpop.f32.mrb[0].mxu0
  %v5975 = vadd.f32 0.0, %v5974
  %v5976 = vpop.f32.mrb[0].mxu0
  %5977 = vmatprep.mubr.f32.mxu0 %v598
  %5978 = vmatmul.mubr.f32.gmra.mrb[0].mxu0 %v210
  %v5979 = vpop.f32.mrb[0].mxu0
  %v5980 = vadd.f32 0.0, %v5979
  %v5981 = vpop.f32.mrb[0].mxu0
  %5982 = vmatprep.mubr.f32.mxu0 %v601
  %5983 = vmatmul.mubr.f32.gmra.mrb[0].mxu0 %v212
  %v5984 = vpop.f32.mrb[0].mxu0
  %v5985 = vadd.f32 0.0, %v5984
  %v5986 = vpop.f32.mrb[0].mxu0
  %5987 = vmatprep.mubr.f32.mxu0 %v604
  %5988 = vmatmul.mubr.f32.gmra.mrb[0].mxu0 %v214
  %v5989 = vpop.f32.mrb[0].mxu0
  %v5990 = vadd.f32 0.0, %v5989
  %v5991 = vpop.f32.mrb[0].mxu0
  %5992 = vmatprep.mubr.f32.mxu0 %v607
  %5993 = vmatmul.mubr.f32.gmra.mrb[0].mxu0 %v216
  %v5994 = vpop.f32.mrb[0].mxu0
  %v5995 = vadd.f32 0.0, %v5994
  %v5996 = vpop.f32.mrb[0].mxu0
  %5997 = vmatprep.mubr.f32.mxu0 %v610
  %5998 = vmatmul.mubr.f32.gmra.mrb[0].mxu0 %v218
  %v5999 = vpop.f32.mrb[0].mxu0
  %v6000 = vadd.f32 0.0, %v5999
  %v6001 = vpop.f32.mrb[0].mxu0
  %6002 = vmatprep.mubr.f32.mxu0 %v613
  %6003 = vmatmul.mubr.f32.gmra.mrb[0].mxu0 %v220
  %v6004 = vpop.f32.mrb[0].mxu0
  %v6005 = vadd.f32 0.0, %v6004
  %v6006 = vpop.f32.mrb[0].mxu0
  %6007 = vmatprep.mubr.f32.mxu0 %v616
  %6008 = vmatmul.mubr.f32.gmra.mrb[0].mxu0 %v222
  %v6009 = vpop.f32.mrb[0].mxu0
  %v6010 = vadd.f32 0.0, %v6009
  %v6011 = vpop.f32.mrb[0].mxu0
  %6012 = vmatprep.mubr.f32.mxu0 %v619
  %6013 = vmatmul.mubr.f32.gmra.mrb[0].mxu0 %v224
  %v6014 = vpop.f32.mrb[0].mxu0
  %v6015 = vadd.f32 0.0, %v6014
  %v6016 = vpop.f32.mrb[0].mxu0
  %6017 = vmatprep.mubr.f32.mxu0 %v622
  %6018 = vmatmul.mubr.f32.gmra.mrb[0].mxu0 %v226
  %v6019 = vpop.f32.mrb[0].mxu0
  %v6020 = vadd.f32 0.0, %v6019
  %v6021 = vpop.f32.mrb[0].mxu0
  %6022 = vmatprep.mubr.f32.mxu0 %v625
  %6023 = vmatmul.mubr.f32.gmra.mrb[0].mxu0 %v228
  %v6024 = vpop.f32.mrb[0].mxu0
  %v6025 = vadd.f32 0.0, %v6024
  %v6026 = vpop.f32.mrb[0].mxu0
  %6027 = vmatprep.mubr.f32.mxu0 %v628
  %6028 = vmatmul.mubr.f32.gmra.mrb[0].mxu0 %v230
  %v6029 = vpop.f32.mrb[0].mxu0
  %v6030 = vadd.f32 0.0, %v6029
  %v6031 = vpop.f32.mrb[0].mxu0
  %6032 = vmatprep.mubr.f32.mxu0 %v631
  %6033 = vmatmul.mubr.f32.gmra.mrb[0].mxu0 %v232
  %v6034 = vpop.f32.mrb[0].mxu0
  %v6035 = vadd.f32 0.0, %v6034
  %v6036 = vpop.f32.mrb[0].mxu0
  %6037 = vmatprep.mubr.f32.mxu0 %v634
  %6038 = vmatmul.mubr.f32.gmra.mrb[0].mxu0 %v234
  %v6039 = vpop.f32.mrb[0].mxu0
  %v6040 = vadd.f32 0.0, %v6039
  %v6041 = vpop.f32.mrb[0].mxu0
  %6042 = vmatprep.mubr.f32.mxu0 %v637
  %6043 = vmatmul.mubr.f32.gmra.mrb[0].mxu0 %v236
  %v6044 = vpop.f32.mrb[0].mxu0
  %v6045 = vadd.f32 0.0, %v6044
  %v6046 = vpop.f32.mrb[0].mxu0
  %6047 = vmatprep.mubr.f32.mxu0 %v640
  %6048 = vmatmul.mubr.f32.gmra.mrb[0].mxu0 %v238
  %v6049 = vpop.f32.mrb[0].mxu0
  %v6050 = vadd.f32 0.0, %v6049
  %v6051 = vpop.f32.mrb[0].mxu0
  %6052 = vmatprep.mubr.f32.mxu0 %v643
  %6053 = vmatmul.mubr.f32.gmra.mrb[0].mxu0 %v240
  %v6054 = vpop.f32.mrb[0].mxu0
  %v6055 = vadd.f32 0.0, %v6054
  %v6056 = vpop.f32.mrb[0].mxu0
  %6057 = vmatprep.mubr.f32.mxu0 %v646
  %6058 = vmatmul.mubr.f32.gmra.mrb[0].mxu0 %v242
  %v6059 = vpop.f32.mrb[0].mxu0
  %v6060 = vadd.f32 0.0, %v6059
  %v6061 = vpop.f32.mrb[0].mxu0
  %6062 = vmatprep.mubr.f32.mxu0 %v649
  %6063 = vmatmul.mubr.f32.gmra.mrb[0].mxu0 %v244
  %v6064 = vpop.f32.mrb[0].mxu0
  %v6065 = vadd.f32 0.0, %v6064
  %v6066 = vpop.f32.mrb[0].mxu0
  %6067 = vmatprep.mubr.f32.mxu0 %v652
  %6068 = vmatmul.mubr.f32.gmra.mrb[0].mxu0 %v246
  %v6069 = vpop.f32.mrb[0].mxu0
  %v6070 = vadd.f32 0.0, %v6069
  %v6071 = vpop.f32.mrb[0].mxu0
  %6072 = vmatprep.mubr.f32.mxu0 %v655
  %6073 = vmatmul.mubr.f32.gmra.mrb[0].mxu0 %v248
  %v6074 = vpop.f32.mrb[0].mxu0
  %v6075 = vadd.f32 0.0, %v6074
  %v6076 = vpop.f32.mrb[0].mxu0
  %6077 = vmatprep.mubr.f32.mxu0 %v658
  %6078 = vmatmul.mubr.f32.gmra.mrb[0].mxu0 %v250
  %v6079 = vpop.f32.mrb[0].mxu0
  %v6080 = vadd.f32 0.0, %v6079
  %v6081 = vpop.f32.mrb[0].mxu0
  %6082 = vmatprep.mubr.f32.mxu0 %v661
  %6083 = vmatmul.mubr.f32.gmra.mrb[0].mxu0 %v252
  %v6084 = vpop.f32.mrb[0].mxu0
  %v6085 = vadd.f32 0.0, %v6084
  %v6086 = vpop.f32.mrb[0].mxu0
  %6087 = vmatprep.mubr.f32.mxu0 %v664
  %6088 = vmatmul.mubr.f32.gmra.mrb[0].mxu0 %v254
  %v6089 = vpop.f32.mrb[0].mxu0
  %v6090 = vadd.f32 0.0, %v6089
  %v6091 = vpop.f32.mrb[0].mxu0
  %6092 = vmatprep.mubr.f32.mxu0 %v667
  %6093 = vmatmul.mubr.f32.gmra.mrb[0].mxu0 %v256
  %v6094 = vpop.f32.mrb[0].mxu0
  %v6095 = vadd.f32 0.0, %v6094
  %v6096 = vpop.f32.mrb[0].mxu0
  %6097 = vmatprep.mubr.f32.mxu0 %v670
  %6098 = vmatmul.mubr.f32.gmra.mrb[0].mxu0 %v258
  %v6099 = vpop.f32.mrb[0].mxu0
  %v6100 = vadd.f32 0.0, %v6099
  %v6101 = vpop.f32.mrb[0].mxu0
  %6102 = vdwg.mxu0
  %v6103 = vmax.f32 %v5505, %v5655
  %v6104 = vmax.f32 %v5510, %v5660
  %v6105 = vmax.f32 %v5515, %v5665
  %v6106 = vmax.f32 %v5520, %v5670
  %v6107 = vmax.f32 %v5525, %v5675
  %v6108 = vmax.f32 %v5530, %v5680
  %v6109 = vmax.f32 %v5535, %v5685
  %v6110 = vmax.f32 %v5540, %v5690
  %v6111 = vmax.f32 %v5545, %v5695
  %v6112 = vmax.f32 %v5550, %v5700
  %v6113 = vmax.f32 %v5555, %v5705
  %v6114 = vmax.f32 %v5560, %v5710
  %v6115 = vmax.f32 %v5565, %v5715
  %v6116 = vmax.f32 %v5570, %v5720
  %v6117 = vmax.f32 %v5575, %v5725
  %v6118 = vmax.f32 %v5580, %v5730
  %v6119 = vmax.f32 %v5585, %v5735
  %v6120 = vmax.f32 %v5590, %v5740
  %v6121 = vmax.f32 %v5595, %v5745
  %v6122 = vmax.f32 %v5600, %v5750
  %v6123 = vmax.f32 %v5605, %v5755
  %v6124 = vmax.f32 %v5610, %v5760
  %v6125 = vmax.f32 %v5615, %v5765
  %v6126 = vmax.f32 %v5620, %v5770
  %v6127 = vmax.f32 %v5625, %v5775
  %v6128 = vmax.f32 %v5630, %v5780
  %v6129 = vmax.f32 %v5635, %v5785
  %v6130 = vmax.f32 %v5640, %v5790
  %v6131 = vmax.f32 %v5645, %v5795
  %v6132 = vmax.f32 %v5650, %v5800
  %v6133 = vmax.f32 %v5805, %v5955
  %v6134 = vmax.f32 %v5810, %v5960
  %v6135 = vmax.f32 %v5815, %v5965
  %v6136 = vmax.f32 %v5820, %v5970
  %v6137 = vmax.f32 %v5825, %v5975
  %v6138 = vmax.f32 %v5830, %v5980
  %v6139 = vmax.f32 %v5835, %v5985
  %v6140 = vmax.f32 %v5840, %v5990
  %v6141 = vmax.f32 %v5845, %v5995
  %v6142 = vmax.f32 %v5850, %v6000
  %v6143 = vmax.f32 %v5855, %v6005
  %v6144 = vmax.f32 %v5860, %v6010
  %v6145 = vmax.f32 %v5865, %v6015
  %v6146 = vmax.f32 %v5870, %v6020
  %v6147 = vmax.f32 %v5875, %v6025
  %v6148 = vmax.f32 %v5880, %v6030
  %v6149 = vmax.f32 %v5885, %v6035
  %v6150 = vmax.f32 %v5890, %v6040
  %v6151 = vmax.f32 %v5895, %v6045
  %v6152 = vmax.f32 %v5900, %v6050
  %v6153 = vmax.f32 %v5905, %v6055
  %v6154 = vmax.f32 %v5910, %v6060
  %v6155 = vmax.f32 %v5915, %v6065
  %v6156 = vmax.f32 %v5920, %v6070
  %v6157 = vmax.f32 %v5925, %v6075
  %v6158 = vmax.f32 %v5930, %v6080
  %v6159 = vmax.f32 %v5935, %v6085
  %v6160 = vmax.f32 %v5940, %v6090
  %v6161 = vmax.f32 %v5945, %v6095
  %v6162 = vmax.f32 %v5950, %v6100
  %v6163 = vmax.f32 %v6103, %v6133
  %v6164 = vmax.f32 %v6104, %v6134
  %v6165 = vmax.f32 %v6105, %v6135
  %v6166 = vmax.f32 %v6106, %v6136
  %v6167 = vmax.f32 %v6107, %v6137
  %v6168 = vmax.f32 %v6108, %v6138
  %v6169 = vmax.f32 %v6109, %v6139
  %v6170 = vmax.f32 %v6110, %v6140
  %v6171 = vmax.f32 %v6111, %v6141
  %v6172 = vmax.f32 %v6112, %v6142
  %v6173 = vmax.f32 %v6113, %v6143
  %v6174 = vmax.f32 %v6114, %v6144
  %v6175 = vmax.f32 %v6115, %v6145
  %v6176 = vmax.f32 %v6116, %v6146
  %v6177 = vmax.f32 %v6117, %v6147
  %v6178 = vmax.f32 %v6118, %v6148
  %v6179 = vmax.f32 %v6119, %v6149
  %v6180 = vmax.f32 %v6120, %v6150
  %v6181 = vmax.f32 %v6121, %v6151
  %v6182 = vmax.f32 %v6122, %v6152
  %v6183 = vmax.f32 %v6123, %v6153
  %v6184 = vmax.f32 %v6124, %v6154
  %v6185 = vmax.f32 %v6125, %v6155
  %v6186 = vmax.f32 %v6126, %v6156
  %v6187 = vmax.f32 %v6127, %v6157
  %v6188 = vmax.f32 %v6128, %v6158
  %v6189 = vmax.f32 %v6129, %v6159
  %v6190 = vmax.f32 %v6130, %v6160
  %v6191 = vmax.f32 %v6131, %v6161
  %v6192 = vmax.f32 %v6132, %v6162
  %v6193 = vadd.f32 %v6163, %v1430
  %v6194 = vadd.f32 %v6164, %v1435
  %v6195 = vadd.f32 %v6165, %v1440
  %v6196 = vadd.f32 %v6166, %v1445
  %v6197 = vadd.f32 %v6167, %v1450
  %v6198 = vadd.f32 %v6168, %v1455
  %v6199 = vadd.f32 %v6169, %v1460
  %v6200 = vadd.f32 %v6170, %v1465
  %v6201 = vadd.f32 %v6171, %v1470
  %v6202 = vadd.f32 %v6172, %v1475
  %v6203 = vadd.f32 %v6173, %v1480
  %v6204 = vadd.f32 %v6174, %v1485
  %v6205 = vadd.f32 %v6175, %v1490
  %v6206 = vadd.f32 %v6176, %v1495
  %v6207 = vadd.f32 %v6177, %v1500
  %v6208 = vadd.f32 %v6178, %v1505
  %v6209 = vadd.f32 %v6179, %v1510
  %v6210 = vadd.f32 %v6180, %v1515
  %v6211 = vadd.f32 %v6181, %v1520
  %v6212 = vadd.f32 %v6182, %v1525
  %v6213 = vadd.f32 %v6183, %v1530
  %v6214 = vadd.f32 %v6184, %v1535
  %v6215 = vadd.f32 %v6185, %v1540
  %v6216 = vadd.f32 %v6186, %v1545
  %v6217 = vadd.f32 %v6187, %v1550
  %v6218 = vadd.f32 %v6188, %v1555
  %v6219 = vadd.f32 %v6189, %v1560
  %v6220 = vadd.f32 %v6190, %v1565
  %v6221 = vadd.f32 %v6191, %v1570
  %v6222 = vadd.f32 %v6192, %v1575
  %v6223 = vmax.f32 %v6193, 0.0
  %v6224 = vmax.f32 %v6194, 0.0
  %v6225 = vmax.f32 %v6195, 0.0
  %v6226 = vmax.f32 %v6196, 0.0
  %v6227 = vmax.f32 %v6197, 0.0
  %v6228 = vmax.f32 %v6198, 0.0
  %v6229 = vmax.f32 %v6199, 0.0
  %v6230 = vmax.f32 %v6200, 0.0
  %v6231 = vmax.f32 %v6201, 0.0
  %v6232 = vmax.f32 %v6202, 0.0
  %v6233 = vmax.f32 %v6203, 0.0
  %v6234 = vmax.f32 %v6204, 0.0
  %v6235 = vmax.f32 %v6205, 0.0
  %v6236 = vmax.f32 %v6206, 0.0
  %v6237 = vmax.f32 %v6207, 0.0
  %v6238 = vmax.f32 %v6208, 0.0
  %v6239 = vmax.f32 %v6209, 0.0
  %v6240 = vmax.f32 %v6210, 0.0
  %v6241 = vmax.f32 %v6211, 0.0
  %v6242 = vmax.f32 %v6212, 0.0
  %v6243 = vmax.f32 %v6213, 0.0
  %v6244 = vmax.f32 %v6214, 0.0
  %v6245 = vmax.f32 %v6215, 0.0
  %v6246 = vmax.f32 %v6216, 0.0
  %v6247 = vmax.f32 %v6217, 0.0
  %v6248 = vmax.f32 %v6218, 0.0
  %v6249 = vmax.f32 %v6219, 0.0
  %v6250 = vmax.f32 %v6220, 0.0
  %v6251 = vmax.f32 %v6221, 0.0
  %v6252 = vmax.f32 %v6222, 0.0
  %s6253 = scalar_lea.vmem %s3, 160
  %v6254 = vld [vmem:[%s6253] sm:$0xff]
  %v6255 = vld [vmem:[%s6253 + $0x8] sm:$0xff]
  %v6256 = vld [vmem:[%s6253 + $0x10] sm:$0x3]
  %v6257 = vld [vmem:[%s6253 + $0x18] sm:$0x3]
  %v6259 = vsel %vm2482, %v6255, 0
  %v6262 = vsel %vm2482, %v6257, 0
  %6264 = vmatprep.subr.mxu0 0.0
  %6265 = vmatpush1.msra.mxu0 %v6223
  %6266 = vmatprep.subr.mxu0 0.0
  %6267 = vmatpush1.msra.mxu0 %v6224
  %6268 = vmatprep.subr.mxu0 0.0
  %6269 = vmatpush1.msra.mxu0 %v6225
  %6270 = vmatprep.subr.mxu0 0.0
  %6271 = vmatpush1.msra.mxu0 %v6226
  %6272 = vmatprep.subr.mxu0 0.0
  %6273 = vmatpush1.msra.mxu0 %v6227
  %6274 = vmatprep.subr.mxu0 0.0
  %6275 = vmatpush1.msra.mxu0 %v6228
  %6276 = vmatprep.subr.mxu0 0.0
  %6277 = vmatpush1.msra.mxu0 %v6229
  %6278 = vmatprep.subr.mxu0 0.0
  %6279 = vmatpush1.msra.mxu0 %v6230
  %6280 = vmatprep.subr.mxu0 0.0
  %6281 = vmatpush1.msra.mxu0 %v6231
  %6282 = vmatprep.subr.mxu0 0.0
  %6283 = vmatpush1.msra.mxu0 %v6232
  %6284 = vmatprep.subr.mxu0 0.0
  %6285 = vmatpush1.msra.mxu0 %v6233
  %6286 = vmatprep.subr.mxu0 0.0
  %6287 = vmatpush1.msra.mxu0 %v6234
  %6288 = vmatprep.subr.mxu0 0.0
  %6289 = vmatpush1.msra.mxu0 %v6235
  %6290 = vmatprep.subr.mxu0 0.0
  %6291 = vmatpush1.msra.mxu0 %v6236
  %6292 = vmatprep.subr.mxu0 0.0
  %6293 = vmatpush1.msra.mxu0 %v6237
  %6294 = vmatprep.subr.mxu0 0.0
  %6295 = vmatpush1.msra.mxu0 %v6238
  %6296 = vmatprep.subr.mxu0 0.0
  %6297 = vmatpush1.msra.mxu0 %v6239
  %6298 = vmatprep.subr.mxu0 0.0
  %6299 = vmatpush1.msra.mxu0 %v6240
  %6300 = vmatprep.subr.mxu0 0.0
  %6301 = vmatpush1.msra.mxu0 %v6241
  %6302 = vmatprep.subr.mxu0 0.0
  %6303 = vmatpush1.msra.mxu0 %v6242
  %6304 = vmatprep.subr.mxu0 0.0
  %6305 = vmatpush1.msra.mxu0 %v6243
  %6306 = vmatprep.subr.mxu0 0.0
  %6307 = vmatpush1.msra.mxu0 %v6244
  %6308 = vmatprep.subr.mxu0 0.0
  %6309 = vmatpush1.msra.mxu0 %v6245
  %6310 = vmatprep.subr.mxu0 0.0
  %6311 = vmatpush1.msra.mxu0 %v6246
  %6312 = vmatprep.subr.mxu0 0.0
  %6313 = vmatpush1.msra.mxu0 %v6247
  %6314 = vmatprep.subr.mxu0 0.0
  %6315 = vmatpush1.msra.mxu0 %v6248
  %6316 = vmatprep.subr.mxu0 0.0
  %6317 = vmatpush1.msra.mxu0 %v6249
  %6318 = vmatprep.subr.mxu0 0.0
  %6319 = vmatpush1.msra.mxu0 %v6250
  %6320 = vmatprep.subr.mxu0 0.0
  %6321 = vmatpush1.msra.mxu0 %v6251
  %6322 = vmatprep.subr.mxu0 0.0
  %6323 = vmatpush1.msra.mxu0 %v6252
  %6324 = vmatprep.subr.mxu0 0.0
  %6325 = vmatpush1.msra.mxu0 0.0
  %6326 = vmatprep.subr.mxu0 0.0
  %6327 = vmatpush1.msra.mxu0 0.0
  %6328 = vmatprep.mubr.f32.mxu0 %v6259
  %6329 = vmatmul.mubr.f32.gmra.mrb[0].mxu0 %v6254
  %v6330 = vpop.f32.mrb[0].mxu0
  %v6331 = vadd.f32 0.0, %v6330
  %v6332 = vpop.f32.mrb[0].mxu0
  %6333 = vmatprep.mubr.f32.mxu0 %v6262
  %6334 = vmatmul.mubr.f32.gmra.mrb[0].mxu0 %v6256
  %v6335 = vpop.f32.mrb[0].mxu0
  %v6336 = vadd.f32 0.0, %v6335
  %v6337 = vpop.f32.mrb[0].mxu0
  %6338 = vdwg.mxu0
  %v6339 = vadd.f32 %v5415, %v6331
  %v6340 = vadd.f32 %v5416, %v6336
  %v6341 = vld [vmem:[%s0 + $0x150] sm:$0xff]
  %v6342 = vld [vmem:[%s0 + $0x158] sm:$0xff]
  %v6343 = vld [vmem:[%s0 + $0x160] sm:$0xff]
  %v6344 = vld [vmem:[%s0 + $0x168] sm:$0xff]
  %v6345 = vld [vmem:[%s0 + $0x170] sm:$0xff]
  %v6346 = vld [vmem:[%s0 + $0x178] sm:$0xff]
  %v6347 = vld [vmem:[%s0 + $0x180] sm:$0xff]
  %v6348 = vld [vmem:[%s0 + $0x188] sm:$0xff]
  %v6349 = vld [vmem:[%s0 + $0x190] sm:$0xff]
  %v6350 = vld [vmem:[%s0 + $0x198] sm:$0xff]
  %v6351 = vld [vmem:[%s0 + $0x1a0] sm:$0xff]
  %v6352 = vld [vmem:[%s0 + $0x1a8] sm:$0xff]
  %v6353 = vld [vmem:[%s0 + $0x1b0] sm:$0xff]
  %v6354 = vld [vmem:[%s0 + $0x1b8] sm:$0xff]
  %v6355 = vld [vmem:[%s0 + $0x1c0] sm:$0xff]
  %v6356 = vld [vmem:[%s0 + $0x1c8] sm:$0xff]
  %v6357 = vld [vmem:[%s0 + $0x1d0] sm:$0xff]
  %v6358 = vld [vmem:[%s0 + $0x1d8] sm:$0xff]
  %v6359 = vld [vmem:[%s0 + $0x1e0] sm:$0xff]
  %v6360 = vld [vmem:[%s0 + $0x1e8] sm:$0xff]
  %v6361 = vld [vmem:[%s0 + $0x1f0] sm:$0xff]
  %6362 = vmatprep.subr.mxu0 0.0
  %6363 = vmatpush1.msra.mxu0 %v6341
  %6364 = vmatprep.subr.mxu0 0.0
  %6365 = vmatpush1.msra.mxu0 %v6342
  %6366 = vmatprep.subr.mxu0 0.0
  %6367 = vmatpush1.msra.mxu0 %v6343
  %6368 = vmatprep.subr.mxu0 0.0
  %6369 = vmatpush1.msra.mxu0 %v6344
  %6370 = vmatprep.subr.mxu0 0.0
  %6371 = vmatpush1.msra.mxu0 %v6345
  %6372 = vmatprep.subr.mxu0 0.0
  %6373 = vmatpush1.msra.mxu0 %v6346
  %6374 = vmatprep.subr.mxu0 0.0
  %6375 = vmatpush1.msra.mxu0 %v6347
  %6376 = vmatprep.subr.mxu0 0.0
  %6377 = vmatpush1.msra.mxu0 %v6348
  %6378 = vmatprep.subr.mxu0 0.0
  %6379 = vmatpush1.msra.mxu0 %v6349
  %6380 = vmatprep.subr.mxu0 0.0
  %6381 = vmatpush1.msra.mxu0 %v6350
  %6382 = vmatprep.subr.mxu0 0.0
  %6383 = vmatpush1.msra.mxu0 %v6351
  %6384 = vmatprep.subr.mxu0 0.0
  %6385 = vmatpush1.msra.mxu0 %v6352
  %6386 = vmatprep.subr.mxu0 0.0
  %6387 = vmatpush1.msra.mxu0 %v6353
  %6388 = vmatprep.subr.mxu0 0.0
  %6389 = vmatpush1.msra.mxu0 %v6354
  %6390 = vmatprep.subr.mxu0 0.0
  %6391 = vmatpush1.msra.mxu0 %v6355
  %6392 = vmatprep.subr.mxu0 0.0
  %6393 = vmatpush1.msra.mxu0 %v6356
  %6394 = vmatprep.subr.mxu0 0.0
  %6395 = vmatpush1.msra.mxu0 %v6357
  %6396 = vmatprep.subr.mxu0 0.0
  %6397 = vmatpush1.msra.mxu0 %v6358
  %6398 = vmatprep.subr.mxu0 0.0
  %6399 = vmatpush1.msra.mxu0 %v6359
  %6400 = vmatprep.subr.mxu0 0.0
  %6401 = vmatpush1.msra.mxu0 %v6360
  %6402 = vmatprep.subr.mxu0 0.0
  %6403 = vmatpush1.msra.mxu0 %v6361
  %6404 = vmatprep.subr.mxu0 0.0
  %6405 = vmatpush1.msra.mxu0 0.0
  %6406 = vmatprep.subr.mxu0 0.0
  %6407 = vmatpush1.msra.mxu0 0.0
  %6408 = vmatprep.subr.mxu0 0.0
  %6409 = vmatpush1.msra.mxu0 0.0
  %6410 = vmatprep.subr.mxu0 0.0
  %6411 = vmatpush1.msra.mxu0 0.0
  %6412 = vmatprep.subr.mxu0 0.0
  %6413 = vmatpush1.msra.mxu0 0.0
  %6414 = vmatprep.subr.mxu0 0.0
  %6415 = vmatpush1.msra.mxu0 0.0
  %6416 = vmatprep.subr.mxu0 0.0
  %6417 = vmatpush1.msra.mxu0 0.0
  %6418 = vmatprep.subr.mxu0 0.0
  %6419 = vmatpush1.msra.mxu0 0.0
  %6420 = vmatprep.subr.mxu0 0.0
  %6421 = vmatpush1.msra.mxu0 0.0
  %6422 = vmatprep.subr.mxu0 0.0
  %6423 = vmatpush1.msra.mxu0 0.0
  %6424 = vmatprep.subr.mxu0 0.0
  %6425 = vmatpush1.msra.mxu0 0.0
  %6426 = vmatprep.mubr.f32.mxu0 %v313
  %6427 = vmatmul.mubr.f32.gmra.mrb[0].mxu0 %v20
  %v6428 = vpop.f32.mrb[0].mxu0
  %v6429 = vadd.f32 0.0, %v6428
  %v6430 = vpop.f32.mrb[0].mxu0
  %6431 = vmatprep.mubr.f32.mxu0 %v316
  %6432 = vmatmul.mubr.f32.gmra.mrb[0].mxu0 %v22
  %v6433 = vpop.f32.mrb[0].mxu0
  %v6434 = vadd.f32 0.0, %v6433
  %v6435 = vpop.f32.mrb[0].mxu0
  %6436 = vmatprep.mubr.f32.mxu0 %v319
  %6437 = vmatmul.mubr.f32.gmra.mrb[0].mxu0 %v24
  %v6438 = vpop.f32.mrb[0].mxu0
  %v6439 = vadd.f32 0.0, %v6438
  %v6440 = vpop.f32.mrb[0].mxu0
  %6441 = vmatprep.mubr.f32.mxu0 %v322
  %6442 = vmatmul.mubr.f32.gmra.mrb[0].mxu0 %v26
  %v6443 = vpop.f32.mrb[0].mxu0
  %v6444 = vadd.f32 0.0, %v6443
  %v6445 = vpop.f32.mrb[0].mxu0
  %6446 = vmatprep.mubr.f32.mxu0 %v325
  %6447 = vmatmul.mubr.f32.gmra.mrb[0].mxu0 %v28
  %v6448 = vpop.f32.mrb[0].mxu0
  %v6449 = vadd.f32 0.0, %v6448
  %v6450 = vpop.f32.mrb[0].mxu0
  %6451 = vmatprep.mubr.f32.mxu0 %v328
  %6452 = vmatmul.mubr.f32.gmra.mrb[0].mxu0 %v30
  %v6453 = vpop.f32.mrb[0].mxu0
  %v6454 = vadd.f32 0.0, %v6453
  %v6455 = vpop.f32.mrb[0].mxu0
  %6456 = vmatprep.mubr.f32.mxu0 %v331
  %6457 = vmatmul.mubr.f32.gmra.mrb[0].mxu0 %v32
  %v6458 = vpop.f32.mrb[0].mxu0
  %v6459 = vadd.f32 0.0, %v6458
  %v6460 = vpop.f32.mrb[0].mxu0
  %6461 = vmatprep.mubr.f32.mxu0 %v334
  %6462 = vmatmul.mubr.f32.gmra.mrb[0].mxu0 %v34
  %v6463 = vpop.f32.mrb[0].mxu0
  %v6464 = vadd.f32 0.0, %v6463
  %v6465 = vpop.f32.mrb[0].mxu0
  %6466 = vmatprep.mubr.f32.mxu0 %v337
  %6467 = vmatmul.mubr.f32.gmra.mrb[0].mxu0 %v36
  %v6468 = vpop.f32.mrb[0].mxu0
  %v6469 = vadd.f32 0.0, %v6468
  %v6470 = vpop.f32.mrb[0].mxu0
  %6471 = vmatprep.mubr.f32.mxu0 %v340
  %6472 = vmatmul.mubr.f32.gmra.mrb[0].mxu0 %v38
  %v6473 = vpop.f32.mrb[0].mxu0
  %v6474 = vadd.f32 0.0, %v6473
  %v6475 = vpop.f32.mrb[0].mxu0
  %6476 = vmatprep.mubr.f32.mxu0 %v343
  %6477 = vmatmul.mubr.f32.gmra.mrb[0].mxu0 %v40
  %v6478 = vpop.f32.mrb[0].mxu0
  %v6479 = vadd.f32 0.0, %v6478
  %v6480 = vpop.f32.mrb[0].mxu0
  %6481 = vmatprep.mubr.f32.mxu0 %v346
  %6482 = vmatmul.mubr.f32.gmra.mrb[0].mxu0 %v42
  %v6483 = vpop.f32.mrb[0].mxu0
  %v6484 = vadd.f32 0.0, %v6483
  %v6485 = vpop.f32.mrb[0].mxu0
  %6486 = vmatprep.mubr.f32.mxu0 %v349
  %6487 = vmatmul.mubr.f32.gmra.mrb[0].mxu0 %v44
  %v6488 = vpop.f32.mrb[0].mxu0
  %v6489 = vadd.f32 0.0, %v6488
  %v6490 = vpop.f32.mrb[0].mxu0
  %6491 = vmatprep.mubr.f32.mxu0 %v352
  %6492 = vmatmul.mubr.f32.gmra.mrb[0].mxu0 %v46
  %v6493 = vpop.f32.mrb[0].mxu0
  %v6494 = vadd.f32 0.0, %v6493
  %v6495 = vpop.f32.mrb[0].mxu0
  %6496 = vmatprep.mubr.f32.mxu0 %v355
  %6497 = vmatmul.mubr.f32.gmra.mrb[0].mxu0 %v48
  %v6498 = vpop.f32.mrb[0].mxu0
  %v6499 = vadd.f32 0.0, %v6498
  %v6500 = vpop.f32.mrb[0].mxu0
  %6501 = vmatprep.mubr.f32.mxu0 %v358
  %6502 = vmatmul.mubr.f32.gmra.mrb[0].mxu0 %v50
  %v6503 = vpop.f32.mrb[0].mxu0
  %v6504 = vadd.f32 0.0, %v6503
  %v6505 = vpop.f32.mrb[0].mxu0
  %6506 = vmatprep.mubr.f32.mxu0 %v361
  %6507 = vmatmul.mubr.f32.gmra.mrb[0].mxu0 %v52
  %v6508 = vpop.f32.mrb[0].mxu0
  %v6509 = vadd.f32 0.0, %v6508
  %v6510 = vpop.f32.mrb[0].mxu0
  %6511 = vmatprep.mubr.f32.mxu0 %v364
  %6512 = vmatmul.mubr.f32.gmra.mrb[0].mxu0 %v54
  %v6513 = vpop.f32.mrb[0].mxu0
  %v6514 = vadd.f32 0.0, %v6513
  %v6515 = vpop.f32.mrb[0].mxu0
  %6516 = vmatprep.mubr.f32.mxu0 %v367
  %6517 = vmatmul.mubr.f32.gmra.mrb[0].mxu0 %v56
  %v6518 = vpop.f32.mrb[0].mxu0
  %v6519 = vadd.f32 0.0, %v6518
  %v6520 = vpop.f32.mrb[0].mxu0
  %6521 = vmatprep.mubr.f32.mxu0 %v370
  %6522 = vmatmul.mubr.f32.gmra.mrb[0].mxu0 %v58
  %v6523 = vpop.f32.mrb[0].mxu0
  %v6524 = vadd.f32 0.0, %v6523
  %v6525 = vpop.f32.mrb[0].mxu0
  %6526 = vmatprep.mubr.f32.mxu0 %v373
  %6527 = vmatmul.mubr.f32.gmra.mrb[0].mxu0 %v60
  %v6528 = vpop.f32.mrb[0].mxu0
  %v6529 = vadd.f32 0.0, %v6528
  %v6530 = vpop.f32.mrb[0].mxu0
  %6531 = vmatprep.mubr.f32.mxu0 %v376
  %6532 = vmatmul.mubr.f32.gmra.mrb[0].mxu0 %v62
  %v6533 = vpop.f32.mrb[0].mxu0
  %v6534 = vadd.f32 0.0, %v6533
  %v6535 = vpop.f32.mrb[0].mxu0
  %6536 = vmatprep.mubr.f32.mxu0 %v379
  %6537 = vmatmul.mubr.f32.gmra.mrb[0].mxu0 %v64
  %v6538 = vpop.f32.mrb[0].mxu0
  %v6539 = vadd.f32 0.0, %v6538
  %v6540 = vpop.f32.mrb[0].mxu0
  %6541 = vmatprep.mubr.f32.mxu0 %v382
  %6542 = vmatmul.mubr.f32.gmra.mrb[0].mxu0 %v66
  %v6543 = vpop.f32.mrb[0].mxu0
  %v6544 = vadd.f32 0.0, %v6543
  %v6545 = vpop.f32.mrb[0].mxu0
  %6546 = vmatprep.mubr.f32.mxu0 %v385
  %6547 = vmatmul.mubr.f32.gmra.mrb[0].mxu0 %v68
  %v6548 = vpop.f32.mrb[0].mxu0
  %v6549 = vadd.f32 0.0, %v6548
  %v6550 = vpop.f32.mrb[0].mxu0
  %6551 = vmatprep.mubr.f32.mxu0 %v388
  %6552 = vmatmul.mubr.f32.gmra.mrb[0].mxu0 %v70
  %v6553 = vpop.f32.mrb[0].mxu0
  %v6554 = vadd.f32 0.0, %v6553
  %v6555 = vpop.f32.mrb[0].mxu0
  %6556 = vmatprep.mubr.f32.mxu0 %v391
  %6557 = vmatmul.mubr.f32.gmra.mrb[0].mxu0 %v72
  %v6558 = vpop.f32.mrb[0].mxu0
  %v6559 = vadd.f32 0.0, %v6558
  %v6560 = vpop.f32.mrb[0].mxu0
  %6561 = vmatprep.mubr.f32.mxu0 %v394
  %6562 = vmatmul.mubr.f32.gmra.mrb[0].mxu0 %v74
  %v6563 = vpop.f32.mrb[0].mxu0
  %v6564 = vadd.f32 0.0, %v6563
  %v6565 = vpop.f32.mrb[0].mxu0
  %6566 = vmatprep.mubr.f32.mxu0 %v397
  %6567 = vmatmul.mubr.f32.gmra.mrb[0].mxu0 %v76
  %v6568 = vpop.f32.mrb[0].mxu0
  %v6569 = vadd.f32 0.0, %v6568
  %v6570 = vpop.f32.mrb[0].mxu0
  %6571 = vmatprep.mubr.f32.mxu0 %v400
  %6572 = vmatmul.mubr.f32.gmra.mrb[0].mxu0 %v78
  %v6573 = vpop.f32.mrb[0].mxu0
  %v6574 = vadd.f32 0.0, %v6573
  %v6575 = vpop.f32.mrb[0].mxu0
  %6576 = vmatprep.mubr.f32.mxu0 %v403
  %6577 = vmatmul.mubr.f32.gmra.mrb[0].mxu0 %v80
  %v6578 = vpop.f32.mrb[0].mxu0
  %v6579 = vadd.f32 0.0, %v6578
  %v6580 = vpop.f32.mrb[0].mxu0
  %6581 = vmatprep.mubr.f32.mxu0 %v406
  %6582 = vmatmul.mubr.f32.gmra.mrb[0].mxu0 %v82
  %v6583 = vpop.f32.mrb[0].mxu0
  %v6584 = vadd.f32 0.0, %v6583
  %v6585 = vpop.f32.mrb[0].mxu0
  %6586 = vmatprep.mubr.f32.mxu0 %v409
  %6587 = vmatmul.mubr.f32.gmra.mrb[0].mxu0 %v84
  %v6588 = vpop.f32.mrb[0].mxu0
  %v6589 = vadd.f32 0.0, %v6588
  %v6590 = vpop.f32.mrb[0].mxu0
  %6591 = vmatprep.mubr.f32.mxu0 %v412
  %6592 = vmatmul.mubr.f32.gmra.mrb[0].mxu0 %v86
  %v6593 = vpop.f32.mrb[0].mxu0
  %v6594 = vadd.f32 0.0, %v6593
  %v6595 = vpop.f32.mrb[0].mxu0
  %6596 = vmatprep.mubr.f32.mxu0 %v415
  %6597 = vmatmul.mubr.f32.gmra.mrb[0].mxu0 %v88
  %v6598 = vpop.f32.mrb[0].mxu0
  %v6599 = vadd.f32 0.0, %v6598
  %v6600 = vpop.f32.mrb[0].mxu0
  %6601 = vmatprep.mubr.f32.mxu0 %v418
  %6602 = vmatmul.mubr.f32.gmra.mrb[0].mxu0 %v90
  %v6603 = vpop.f32.mrb[0].mxu0
  %v6604 = vadd.f32 0.0, %v6603
  %v6605 = vpop.f32.mrb[0].mxu0
  %6606 = vmatprep.mubr.f32.mxu0 %v421
  %6607 = vmatmul.mubr.f32.gmra.mrb[0].mxu0 %v92
  %v6608 = vpop.f32.mrb[0].mxu0
  %v6609 = vadd.f32 0.0, %v6608
  %v6610 = vpop.f32.mrb[0].mxu0
  %6611 = vmatprep.mubr.f32.mxu0 %v424
  %6612 = vmatmul.mubr.f32.gmra.mrb[0].mxu0 %v94
  %v6613 = vpop.f32.mrb[0].mxu0
  %v6614 = vadd.f32 0.0, %v6613
  %v6615 = vpop.f32.mrb[0].mxu0
  %6616 = vmatprep.mubr.f32.mxu0 %v427
  %6617 = vmatmul.mubr.f32.gmra.mrb[0].mxu0 %v96
  %v6618 = vpop.f32.mrb[0].mxu0
  %v6619 = vadd.f32 0.0, %v6618
  %v6620 = vpop.f32.mrb[0].mxu0
  %6621 = vmatprep.mubr.f32.mxu0 %v430
  %6622 = vmatmul.mubr.f32.gmra.mrb[0].mxu0 %v98
  %v6623 = vpop.f32.mrb[0].mxu0
  %v6624 = vadd.f32 0.0, %v6623
  %v6625 = vpop.f32.mrb[0].mxu0
  %6626 = vmatprep.mubr.f32.mxu0 %v433
  %6627 = vmatmul.mubr.f32.gmra.mrb[0].mxu0 %v100
  %v6628 = vpop.f32.mrb[0].mxu0
  %v6629 = vadd.f32 0.0, %v6628
  %v6630 = vpop.f32.mrb[0].mxu0
  %6631 = vmatprep.mubr.f32.mxu0 %v436
  %6632 = vmatmul.mubr.f32.gmra.mrb[0].mxu0 %v102
  %v6633 = vpop.f32.mrb[0].mxu0
  %v6634 = vadd.f32 0.0, %v6633
  %v6635 = vpop.f32.mrb[0].mxu0
  %6636 = vmatprep.mubr.f32.mxu0 %v439
  %6637 = vmatmul.mubr.f32.gmra.mrb[0].mxu0 %v104
  %v6638 = vpop.f32.mrb[0].mxu0
  %v6639 = vadd.f32 0.0, %v6638
  %v6640 = vpop.f32.mrb[0].mxu0
  %6641 = vmatprep.mubr.f32.mxu0 %v442
  %6642 = vmatmul.mubr.f32.gmra.mrb[0].mxu0 %v106
  %v6643 = vpop.f32.mrb[0].mxu0
  %v6644 = vadd.f32 0.0, %v6643
  %v6645 = vpop.f32.mrb[0].mxu0
  %6646 = vmatprep.mubr.f32.mxu0 %v445
  %6647 = vmatmul.mubr.f32.gmra.mrb[0].mxu0 %v108
  %v6648 = vpop.f32.mrb[0].mxu0
  %v6649 = vadd.f32 0.0, %v6648
  %v6650 = vpop.f32.mrb[0].mxu0
  %6651 = vmatprep.mubr.f32.mxu0 %v448
  %6652 = vmatmul.mubr.f32.gmra.mrb[0].mxu0 %v110
  %v6653 = vpop.f32.mrb[0].mxu0
  %v6654 = vadd.f32 0.0, %v6653
  %v6655 = vpop.f32.mrb[0].mxu0
  %6656 = vmatprep.mubr.f32.mxu0 %v451
  %6657 = vmatmul.mubr.f32.gmra.mrb[0].mxu0 %v112
  %v6658 = vpop.f32.mrb[0].mxu0
  %v6659 = vadd.f32 0.0, %v6658
  %v6660 = vpop.f32.mrb[0].mxu0
  %6661 = vmatprep.mubr.f32.mxu0 %v454
  %6662 = vmatmul.mubr.f32.gmra.mrb[0].mxu0 %v114
  %v6663 = vpop.f32.mrb[0].mxu0
  %v6664 = vadd.f32 0.0, %v6663
  %v6665 = vpop.f32.mrb[0].mxu0
  %6666 = vmatprep.mubr.f32.mxu0 %v457
  %6667 = vmatmul.mubr.f32.gmra.mrb[0].mxu0 %v116
  %v6668 = vpop.f32.mrb[0].mxu0
  %v6669 = vadd.f32 0.0, %v6668
  %v6670 = vpop.f32.mrb[0].mxu0
  %6671 = vmatprep.mubr.f32.mxu0 %v460
  %6672 = vmatmul.mubr.f32.gmra.mrb[0].mxu0 %v118
  %v6673 = vpop.f32.mrb[0].mxu0
  %v6674 = vadd.f32 0.0, %v6673
  %v6675 = vpop.f32.mrb[0].mxu0
  %6676 = vmatprep.mubr.f32.mxu0 %v463
  %6677 = vmatmul.mubr.f32.gmra.mrb[0].mxu0 %v120
  %v6678 = vpop.f32.mrb[0].mxu0
  %v6679 = vadd.f32 0.0, %v6678
  %v6680 = vpop.f32.mrb[0].mxu0
  %6681 = vmatprep.mubr.f32.mxu0 %v466
  %6682 = vmatmul.mubr.f32.gmra.mrb[0].mxu0 %v122
  %v6683 = vpop.f32.mrb[0].mxu0
  %v6684 = vadd.f32 0.0, %v6683
  %v6685 = vpop.f32.mrb[0].mxu0
  %6686 = vmatprep.mubr.f32.mxu0 %v469
  %6687 = vmatmul.mubr.f32.gmra.mrb[0].mxu0 %v124
  %v6688 = vpop.f32.mrb[0].mxu0
  %v6689 = vadd.f32 0.0, %v6688
  %v6690 = vpop.f32.mrb[0].mxu0
  %6691 = vmatprep.mubr.f32.mxu0 %v472
  %6692 = vmatmul.mubr.f32.gmra.mrb[0].mxu0 %v126
  %v6693 = vpop.f32.mrb[0].mxu0
  %v6694 = vadd.f32 0.0, %v6693
  %v6695 = vpop.f32.mrb[0].mxu0
  %6696 = vmatprep.mubr.f32.mxu0 %v475
  %6697 = vmatmul.mubr.f32.gmra.mrb[0].mxu0 %v128
  %v6698 = vpop.f32.mrb[0].mxu0
  %v6699 = vadd.f32 0.0, %v6698
  %v6700 = vpop.f32.mrb[0].mxu0
  %6701 = vmatprep.mubr.f32.mxu0 %v478
  %6702 = vmatmul.mubr.f32.gmra.mrb[0].mxu0 %v130
  %v6703 = vpop.f32.mrb[0].mxu0
  %v6704 = vadd.f32 0.0, %v6703
  %v6705 = vpop.f32.mrb[0].mxu0
  %6706 = vmatprep.mubr.f32.mxu0 %v481
  %6707 = vmatmul.mubr.f32.gmra.mrb[0].mxu0 %v132
  %v6708 = vpop.f32.mrb[0].mxu0
  %v6709 = vadd.f32 0.0, %v6708
  %v6710 = vpop.f32.mrb[0].mxu0
  %6711 = vmatprep.mubr.f32.mxu0 %v484
  %6712 = vmatmul.mubr.f32.gmra.mrb[0].mxu0 %v134
  %v6713 = vpop.f32.mrb[0].mxu0
  %v6714 = vadd.f32 0.0, %v6713
  %v6715 = vpop.f32.mrb[0].mxu0
  %6716 = vmatprep.mubr.f32.mxu0 %v487
  %6717 = vmatmul.mubr.f32.gmra.mrb[0].mxu0 %v136
  %v6718 = vpop.f32.mrb[0].mxu0
  %v6719 = vadd.f32 0.0, %v6718
  %v6720 = vpop.f32.mrb[0].mxu0
  %6721 = vmatprep.mubr.f32.mxu0 %v490
  %6722 = vmatmul.mubr.f32.gmra.mrb[0].mxu0 %v138
  %v6723 = vpop.f32.mrb[0].mxu0
  %v6724 = vadd.f32 0.0, %v6723
  %v6725 = vpop.f32.mrb[0].mxu0
  %6726 = vmatprep.mubr.f32.mxu0 %v493
  %6727 = vmatmul.mubr.f32.gmra.mrb[0].mxu0 %v140
  %v6728 = vpop.f32.mrb[0].mxu0
  %v6729 = vadd.f32 0.0, %v6728
  %v6730 = vpop.f32.mrb[0].mxu0
  %6731 = vmatprep.mubr.f32.mxu0 %v496
  %6732 = vmatmul.mubr.f32.gmra.mrb[0].mxu0 %v142
  %v6733 = vpop.f32.mrb[0].mxu0
  %v6734 = vadd.f32 0.0, %v6733
  %v6735 = vpop.f32.mrb[0].mxu0
  %6736 = vmatprep.mubr.f32.mxu0 %v499
  %6737 = vmatmul.mubr.f32.gmra.mrb[0].mxu0 %v144
  %v6738 = vpop.f32.mrb[0].mxu0
  %v6739 = vadd.f32 0.0, %v6738
  %v6740 = vpop.f32.mrb[0].mxu0
  %6741 = vmatprep.mubr.f32.mxu0 %v502
  %6742 = vmatmul.mubr.f32.gmra.mrb[0].mxu0 %v146
  %v6743 = vpop.f32.mrb[0].mxu0
  %v6744 = vadd.f32 0.0, %v6743
  %v6745 = vpop.f32.mrb[0].mxu0
  %6746 = vmatprep.mubr.f32.mxu0 %v505
  %6747 = vmatmul.mubr.f32.gmra.mrb[0].mxu0 %v148
  %v6748 = vpop.f32.mrb[0].mxu0
  %v6749 = vadd.f32 0.0, %v6748
  %v6750 = vpop.f32.mrb[0].mxu0
  %6751 = vmatprep.mubr.f32.mxu0 %v508
  %6752 = vmatmul.mubr.f32.gmra.mrb[0].mxu0 %v150
  %v6753 = vpop.f32.mrb[0].mxu0
  %v6754 = vadd.f32 0.0, %v6753
  %v6755 = vpop.f32.mrb[0].mxu0
  %6756 = vmatprep.mubr.f32.mxu0 %v511
  %6757 = vmatmul.mubr.f32.gmra.mrb[0].mxu0 %v152
  %v6758 = vpop.f32.mrb[0].mxu0
  %v6759 = vadd.f32 0.0, %v6758
  %v6760 = vpop.f32.mrb[0].mxu0
  %6761 = vmatprep.mubr.f32.mxu0 %v514
  %6762 = vmatmul.mubr.f32.gmra.mrb[0].mxu0 %v154
  %v6763 = vpop.f32.mrb[0].mxu0
  %v6764 = vadd.f32 0.0, %v6763
  %v6765 = vpop.f32.mrb[0].mxu0
  %6766 = vmatprep.mubr.f32.mxu0 %v517
  %6767 = vmatmul.mubr.f32.gmra.mrb[0].mxu0 %v156
  %v6768 = vpop.f32.mrb[0].mxu0
  %v6769 = vadd.f32 0.0, %v6768
  %v6770 = vpop.f32.mrb[0].mxu0
  %6771 = vmatprep.mubr.f32.mxu0 %v520
  %6772 = vmatmul.mubr.f32.gmra.mrb[0].mxu0 %v158
  %v6773 = vpop.f32.mrb[0].mxu0
  %v6774 = vadd.f32 0.0, %v6773
  %v6775 = vpop.f32.mrb[0].mxu0
  %6776 = vmatprep.mubr.f32.mxu0 %v523
  %6777 = vmatmul.mubr.f32.gmra.mrb[0].mxu0 %v160
  %v6778 = vpop.f32.mrb[0].mxu0
  %v6779 = vadd.f32 0.0, %v6778
  %v6780 = vpop.f32.mrb[0].mxu0
  %6781 = vmatprep.mubr.f32.mxu0 %v526
  %6782 = vmatmul.mubr.f32.gmra.mrb[0].mxu0 %v162
  %v6783 = vpop.f32.mrb[0].mxu0
  %v6784 = vadd.f32 0.0, %v6783
  %v6785 = vpop.f32.mrb[0].mxu0
  %6786 = vmatprep.mubr.f32.mxu0 %v529
  %6787 = vmatmul.mubr.f32.gmra.mrb[0].mxu0 %v164
  %v6788 = vpop.f32.mrb[0].mxu0
  %v6789 = vadd.f32 0.0, %v6788
  %v6790 = vpop.f32.mrb[0].mxu0
  %6791 = vmatprep.mubr.f32.mxu0 %v532
  %6792 = vmatmul.mubr.f32.gmra.mrb[0].mxu0 %v166
  %v6793 = vpop.f32.mrb[0].mxu0
  %v6794 = vadd.f32 0.0, %v6793
  %v6795 = vpop.f32.mrb[0].mxu0
  %6796 = vmatprep.mubr.f32.mxu0 %v535
  %6797 = vmatmul.mubr.f32.gmra.mrb[0].mxu0 %v168
  %v6798 = vpop.f32.mrb[0].mxu0
  %v6799 = vadd.f32 0.0, %v6798
  %v6800 = vpop.f32.mrb[0].mxu0
  %6801 = vmatprep.mubr.f32.mxu0 %v538
  %6802 = vmatmul.mubr.f32.gmra.mrb[0].mxu0 %v170
  %v6803 = vpop.f32.mrb[0].mxu0
  %v6804 = vadd.f32 0.0, %v6803
  %v6805 = vpop.f32.mrb[0].mxu0
  %6806 = vmatprep.mubr.f32.mxu0 %v541
  %6807 = vmatmul.mubr.f32.gmra.mrb[0].mxu0 %v172
  %v6808 = vpop.f32.mrb[0].mxu0
  %v6809 = vadd.f32 0.0, %v6808
  %v6810 = vpop.f32.mrb[0].mxu0
  %6811 = vmatprep.mubr.f32.mxu0 %v544
  %6812 = vmatmul.mubr.f32.gmra.mrb[0].mxu0 %v174
  %v6813 = vpop.f32.mrb[0].mxu0
  %v6814 = vadd.f32 0.0, %v6813
  %v6815 = vpop.f32.mrb[0].mxu0
  %6816 = vmatprep.mubr.f32.mxu0 %v547
  %6817 = vmatmul.mubr.f32.gmra.mrb[0].mxu0 %v176
  %v6818 = vpop.f32.mrb[0].mxu0
  %v6819 = vadd.f32 0.0, %v6818
  %v6820 = vpop.f32.mrb[0].mxu0
  %6821 = vmatprep.mubr.f32.mxu0 %v550
  %6822 = vmatmul.mubr.f32.gmra.mrb[0].mxu0 %v178
  %v6823 = vpop.f32.mrb[0].mxu0
  %v6824 = vadd.f32 0.0, %v6823
  %v6825 = vpop.f32.mrb[0].mxu0
  %6826 = vmatprep.mubr.f32.mxu0 %v553
  %6827 = vmatmul.mubr.f32.gmra.mrb[0].mxu0 %v180
  %v6828 = vpop.f32.mrb[0].mxu0
  %v6829 = vadd.f32 0.0, %v6828
  %v6830 = vpop.f32.mrb[0].mxu0
  %6831 = vmatprep.mubr.f32.mxu0 %v556
  %6832 = vmatmul.mubr.f32.gmra.mrb[0].mxu0 %v182
  %v6833 = vpop.f32.mrb[0].mxu0
  %v6834 = vadd.f32 0.0, %v6833
  %v6835 = vpop.f32.mrb[0].mxu0
  %6836 = vmatprep.mubr.f32.mxu0 %v559
  %6837 = vmatmul.mubr.f32.gmra.mrb[0].mxu0 %v184
  %v6838 = vpop.f32.mrb[0].mxu0
  %v6839 = vadd.f32 0.0, %v6838
  %v6840 = vpop.f32.mrb[0].mxu0
  %6841 = vmatprep.mubr.f32.mxu0 %v562
  %6842 = vmatmul.mubr.f32.gmra.mrb[0].mxu0 %v186
  %v6843 = vpop.f32.mrb[0].mxu0
  %v6844 = vadd.f32 0.0, %v6843
  %v6845 = vpop.f32.mrb[0].mxu0
  %6846 = vmatprep.mubr.f32.mxu0 %v565
  %6847 = vmatmul.mubr.f32.gmra.mrb[0].mxu0 %v188
  %v6848 = vpop.f32.mrb[0].mxu0
  %v6849 = vadd.f32 0.0, %v6848
  %v6850 = vpop.f32.mrb[0].mxu0
  %6851 = vmatprep.mubr.f32.mxu0 %v568
  %6852 = vmatmul.mubr.f32.gmra.mrb[0].mxu0 %v190
  %v6853 = vpop.f32.mrb[0].mxu0
  %v6854 = vadd.f32 0.0, %v6853
  %v6855 = vpop.f32.mrb[0].mxu0
  %6856 = vmatprep.mubr.f32.mxu0 %v571
  %6857 = vmatmul.mubr.f32.gmra.mrb[0].mxu0 %v192
  %v6858 = vpop.f32.mrb[0].mxu0
  %v6859 = vadd.f32 0.0, %v6858
  %v6860 = vpop.f32.mrb[0].mxu0
  %6861 = vmatprep.mubr.f32.mxu0 %v574
  %6862 = vmatmul.mubr.f32.gmra.mrb[0].mxu0 %v194
  %v6863 = vpop.f32.mrb[0].mxu0
  %v6864 = vadd.f32 0.0, %v6863
  %v6865 = vpop.f32.mrb[0].mxu0
  %6866 = vmatprep.mubr.f32.mxu0 %v577
  %6867 = vmatmul.mubr.f32.gmra.mrb[0].mxu0 %v196
  %v6868 = vpop.f32.mrb[0].mxu0
  %v6869 = vadd.f32 0.0, %v6868
  %v6870 = vpop.f32.mrb[0].mxu0
  %6871 = vmatprep.mubr.f32.mxu0 %v580
  %6872 = vmatmul.mubr.f32.gmra.mrb[0].mxu0 %v198
  %v6873 = vpop.f32.mrb[0].mxu0
  %v6874 = vadd.f32 0.0, %v6873
  %v6875 = vpop.f32.mrb[0].mxu0
  %6876 = vmatprep.mubr.f32.mxu0 %v583
  %6877 = vmatmul.mubr.f32.gmra.mrb[0].mxu0 %v200
  %v6878 = vpop.f32.mrb[0].mxu0
  %v6879 = vadd.f32 0.0, %v6878
  %v6880 = vpop.f32.mrb[0].mxu0
  %6881 = vmatprep.mubr.f32.mxu0 %v586
  %6882 = vmatmul.mubr.f32.gmra.mrb[0].mxu0 %v202
  %v6883 = vpop.f32.mrb[0].mxu0
  %v6884 = vadd.f32 0.0, %v6883
  %v6885 = vpop.f32.mrb[0].mxu0
  %6886 = vmatprep.mubr.f32.mxu0 %v589
  %6887 = vmatmul.mubr.f32.gmra.mrb[0].mxu0 %v204
  %v6888 = vpop.f32.mrb[0].mxu0
  %v6889 = vadd.f32 0.0, %v6888
  %v6890 = vpop.f32.mrb[0].mxu0
  %6891 = vmatprep.mubr.f32.mxu0 %v592
  %6892 = vmatmul.mubr.f32.gmra.mrb[0].mxu0 %v206
  %v6893 = vpop.f32.mrb[0].mxu0
  %v6894 = vadd.f32 0.0, %v6893
  %v6895 = vpop.f32.mrb[0].mxu0
  %6896 = vmatprep.mubr.f32.mxu0 %v595
  %6897 = vmatmul.mubr.f32.gmra.mrb[0].mxu0 %v208
  %v6898 = vpop.f32.mrb[0].mxu0
  %v6899 = vadd.f32 0.0, %v6898
  %v6900 = vpop.f32.mrb[0].mxu0
  %6901 = vmatprep.mubr.f32.mxu0 %v598
  %6902 = vmatmul.mubr.f32.gmra.mrb[0].mxu0 %v210
  %v6903 = vpop.f32.mrb[0].mxu0
  %v6904 = vadd.f32 0.0, %v6903
  %v6905 = vpop.f32.mrb[0].mxu0
  %6906 = vmatprep.mubr.f32.mxu0 %v601
  %6907 = vmatmul.mubr.f32.gmra.mrb[0].mxu0 %v212
  %v6908 = vpop.f32.mrb[0].mxu0
  %v6909 = vadd.f32 0.0, %v6908
  %v6910 = vpop.f32.mrb[0].mxu0
  %6911 = vmatprep.mubr.f32.mxu0 %v604
  %6912 = vmatmul.mubr.f32.gmra.mrb[0].mxu0 %v214
  %v6913 = vpop.f32.mrb[0].mxu0
  %v6914 = vadd.f32 0.0, %v6913
  %v6915 = vpop.f32.mrb[0].mxu0
  %6916 = vmatprep.mubr.f32.mxu0 %v607
  %6917 = vmatmul.mubr.f32.gmra.mrb[0].mxu0 %v216
  %v6918 = vpop.f32.mrb[0].mxu0
  %v6919 = vadd.f32 0.0, %v6918
  %v6920 = vpop.f32.mrb[0].mxu0
  %6921 = vmatprep.mubr.f32.mxu0 %v610
  %6922 = vmatmul.mubr.f32.gmra.mrb[0].mxu0 %v218
  %v6923 = vpop.f32.mrb[0].mxu0
  %v6924 = vadd.f32 0.0, %v6923
  %v6925 = vpop.f32.mrb[0].mxu0
  %6926 = vmatprep.mubr.f32.mxu0 %v613
  %6927 = vmatmul.mubr.f32.gmra.mrb[0].mxu0 %v220
  %v6928 = vpop.f32.mrb[0].mxu0
  %v6929 = vadd.f32 0.0, %v6928
  %v6930 = vpop.f32.mrb[0].mxu0
  %6931 = vmatprep.mubr.f32.mxu0 %v616
  %6932 = vmatmul.mubr.f32.gmra.mrb[0].mxu0 %v222
  %v6933 = vpop.f32.mrb[0].mxu0
  %v6934 = vadd.f32 0.0, %v6933
  %v6935 = vpop.f32.mrb[0].mxu0
  %6936 = vmatprep.mubr.f32.mxu0 %v619
  %6937 = vmatmul.mubr.f32.gmra.mrb[0].mxu0 %v224
  %v6938 = vpop.f32.mrb[0].mxu0
  %v6939 = vadd.f32 0.0, %v6938
  %v6940 = vpop.f32.mrb[0].mxu0
  %6941 = vmatprep.mubr.f32.mxu0 %v622
  %6942 = vmatmul.mubr.f32.gmra.mrb[0].mxu0 %v226
  %v6943 = vpop.f32.mrb[0].mxu0
  %v6944 = vadd.f32 0.0, %v6943
  %v6945 = vpop.f32.mrb[0].mxu0
  %6946 = vmatprep.mubr.f32.mxu0 %v625
  %6947 = vmatmul.mubr.f32.gmra.mrb[0].mxu0 %v228
  %v6948 = vpop.f32.mrb[0].mxu0
  %v6949 = vadd.f32 0.0, %v6948
  %v6950 = vpop.f32.mrb[0].mxu0
  %6951 = vmatprep.mubr.f32.mxu0 %v628
  %6952 = vmatmul.mubr.f32.gmra.mrb[0].mxu0 %v230
  %v6953 = vpop.f32.mrb[0].mxu0
  %v6954 = vadd.f32 0.0, %v6953
  %v6955 = vpop.f32.mrb[0].mxu0
  %6956 = vmatprep.mubr.f32.mxu0 %v631
  %6957 = vmatmul.mubr.f32.gmra.mrb[0].mxu0 %v232
  %v6958 = vpop.f32.mrb[0].mxu0
  %v6959 = vadd.f32 0.0, %v6958
  %v6960 = vpop.f32.mrb[0].mxu0
  %6961 = vmatprep.mubr.f32.mxu0 %v634
  %6962 = vmatmul.mubr.f32.gmra.mrb[0].mxu0 %v234
  %v6963 = vpop.f32.mrb[0].mxu0
  %v6964 = vadd.f32 0.0, %v6963
  %v6965 = vpop.f32.mrb[0].mxu0
  %6966 = vmatprep.mubr.f32.mxu0 %v637
  %6967 = vmatmul.mubr.f32.gmra.mrb[0].mxu0 %v236
  %v6968 = vpop.f32.mrb[0].mxu0
  %v6969 = vadd.f32 0.0, %v6968
  %v6970 = vpop.f32.mrb[0].mxu0
  %6971 = vmatprep.mubr.f32.mxu0 %v640
  %6972 = vmatmul.mubr.f32.gmra.mrb[0].mxu0 %v238
  %v6973 = vpop.f32.mrb[0].mxu0
  %v6974 = vadd.f32 0.0, %v6973
  %v6975 = vpop.f32.mrb[0].mxu0
  %6976 = vmatprep.mubr.f32.mxu0 %v643
  %6977 = vmatmul.mubr.f32.gmra.mrb[0].mxu0 %v240
  %v6978 = vpop.f32.mrb[0].mxu0
  %v6979 = vadd.f32 0.0, %v6978
  %v6980 = vpop.f32.mrb[0].mxu0
  %6981 = vmatprep.mubr.f32.mxu0 %v646
  %6982 = vmatmul.mubr.f32.gmra.mrb[0].mxu0 %v242
  %v6983 = vpop.f32.mrb[0].mxu0
  %v6984 = vadd.f32 0.0, %v6983
  %v6985 = vpop.f32.mrb[0].mxu0
  %6986 = vmatprep.mubr.f32.mxu0 %v649
  %6987 = vmatmul.mubr.f32.gmra.mrb[0].mxu0 %v244
  %v6988 = vpop.f32.mrb[0].mxu0
  %v6989 = vadd.f32 0.0, %v6988
  %v6990 = vpop.f32.mrb[0].mxu0
  %6991 = vmatprep.mubr.f32.mxu0 %v652
  %6992 = vmatmul.mubr.f32.gmra.mrb[0].mxu0 %v246
  %v6993 = vpop.f32.mrb[0].mxu0
  %v6994 = vadd.f32 0.0, %v6993
  %v6995 = vpop.f32.mrb[0].mxu0
  %6996 = vmatprep.mubr.f32.mxu0 %v655
  %6997 = vmatmul.mubr.f32.gmra.mrb[0].mxu0 %v248
  %v6998 = vpop.f32.mrb[0].mxu0
  %v6999 = vadd.f32 0.0, %v6998
  %v7000 = vpop.f32.mrb[0].mxu0
  %7001 = vmatprep.mubr.f32.mxu0 %v658
  %7002 = vmatmul.mubr.f32.gmra.mrb[0].mxu0 %v250
  %v7003 = vpop.f32.mrb[0].mxu0
  %v7004 = vadd.f32 0.0, %v7003
  %v7005 = vpop.f32.mrb[0].mxu0
  %7006 = vmatprep.mubr.f32.mxu0 %v661
  %7007 = vmatmul.mubr.f32.gmra.mrb[0].mxu0 %v252
  %v7008 = vpop.f32.mrb[0].mxu0
  %v7009 = vadd.f32 0.0, %v7008
  %v7010 = vpop.f32.mrb[0].mxu0
  %7011 = vmatprep.mubr.f32.mxu0 %v664
  %7012 = vmatmul.mubr.f32.gmra.mrb[0].mxu0 %v254
  %v7013 = vpop.f32.mrb[0].mxu0
  %v7014 = vadd.f32 0.0, %v7013
  %v7015 = vpop.f32.mrb[0].mxu0
  %7016 = vmatprep.mubr.f32.mxu0 %v667
  %7017 = vmatmul.mubr.f32.gmra.mrb[0].mxu0 %v256
  %v7018 = vpop.f32.mrb[0].mxu0
  %v7019 = vadd.f32 0.0, %v7018
  %v7020 = vpop.f32.mrb[0].mxu0
  %7021 = vmatprep.mubr.f32.mxu0 %v670
  %7022 = vmatmul.mubr.f32.gmra.mrb[0].mxu0 %v258
  %v7023 = vpop.f32.mrb[0].mxu0
  %v7024 = vadd.f32 0.0, %v7023
  %v7025 = vpop.f32.mrb[0].mxu0
  %7026 = vdwg.mxu0
  %v7027 = vmax.f32 %v6429, %v6579
  %v7028 = vmax.f32 %v6434, %v6584
  %v7029 = vmax.f32 %v6439, %v6589
  %v7030 = vmax.f32 %v6444, %v6594
  %v7031 = vmax.f32 %v6449, %v6599
  %v7032 = vmax.f32 %v6454, %v6604
  %v7033 = vmax.f32 %v6459, %v6609
  %v7034 = vmax.f32 %v6464, %v6614
  %v7035 = vmax.f32 %v6469, %v6619
  %v7036 = vmax.f32 %v6474, %v6624
  %v7037 = vmax.f32 %v6479, %v6629
  %v7038 = vmax.f32 %v6484, %v6634
  %v7039 = vmax.f32 %v6489, %v6639
  %v7040 = vmax.f32 %v6494, %v6644
  %v7041 = vmax.f32 %v6499, %v6649
  %v7042 = vmax.f32 %v6504, %v6654
  %v7043 = vmax.f32 %v6509, %v6659
  %v7044 = vmax.f32 %v6514, %v6664
  %v7045 = vmax.f32 %v6519, %v6669
  %v7046 = vmax.f32 %v6524, %v6674
  %v7047 = vmax.f32 %v6529, %v6679
  %v7048 = vmax.f32 %v6534, %v6684
  %v7049 = vmax.f32 %v6539, %v6689
  %v7050 = vmax.f32 %v6544, %v6694
  %v7051 = vmax.f32 %v6549, %v6699
  %v7052 = vmax.f32 %v6554, %v6704
  %v7053 = vmax.f32 %v6559, %v6709
  %v7054 = vmax.f32 %v6564, %v6714
  %v7055 = vmax.f32 %v6569, %v6719
  %v7056 = vmax.f32 %v6574, %v6724
  %v7057 = vmax.f32 %v6729, %v6879
  %v7058 = vmax.f32 %v6734, %v6884
  %v7059 = vmax.f32 %v6739, %v6889
  %v7060 = vmax.f32 %v6744, %v6894
  %v7061 = vmax.f32 %v6749, %v6899
  %v7062 = vmax.f32 %v6754, %v6904
  %v7063 = vmax.f32 %v6759, %v6909
  %v7064 = vmax.f32 %v6764, %v6914
  %v7065 = vmax.f32 %v6769, %v6919
  %v7066 = vmax.f32 %v6774, %v6924
  %v7067 = vmax.f32 %v6779, %v6929
  %v7068 = vmax.f32 %v6784, %v6934
  %v7069 = vmax.f32 %v6789, %v6939
  %v7070 = vmax.f32 %v6794, %v6944
  %v7071 = vmax.f32 %v6799, %v6949
  %v7072 = vmax.f32 %v6804, %v6954
  %v7073 = vmax.f32 %v6809, %v6959
  %v7074 = vmax.f32 %v6814, %v6964
  %v7075 = vmax.f32 %v6819, %v6969
  %v7076 = vmax.f32 %v6824, %v6974
  %v7077 = vmax.f32 %v6829, %v6979
  %v7078 = vmax.f32 %v6834, %v6984
  %v7079 = vmax.f32 %v6839, %v6989
  %v7080 = vmax.f32 %v6844, %v6994
  %v7081 = vmax.f32 %v6849, %v6999
  %v7082 = vmax.f32 %v6854, %v7004
  %v7083 = vmax.f32 %v6859, %v7009
  %v7084 = vmax.f32 %v6864, %v7014
  %v7085 = vmax.f32 %v6869, %v7019
  %v7086 = vmax.f32 %v6874, %v7024
  %v7087 = vmax.f32 %v7027, %v7057
  %v7088 = vmax.f32 %v7028, %v7058
  %v7089 = vmax.f32 %v7029, %v7059
  %v7090 = vmax.f32 %v7030, %v7060
  %v7091 = vmax.f32 %v7031, %v7061
  %v7092 = vmax.f32 %v7032, %v7062
  %v7093 = vmax.f32 %v7033, %v7063
  %v7094 = vmax.f32 %v7034, %v7064
  %v7095 = vmax.f32 %v7035, %v7065
  %v7096 = vmax.f32 %v7036, %v7066
  %v7097 = vmax.f32 %v7037, %v7067
  %v7098 = vmax.f32 %v7038, %v7068
  %v7099 = vmax.f32 %v7039, %v7069
  %v7100 = vmax.f32 %v7040, %v7070
  %v7101 = vmax.f32 %v7041, %v7071
  %v7102 = vmax.f32 %v7042, %v7072
  %v7103 = vmax.f32 %v7043, %v7073
  %v7104 = vmax.f32 %v7044, %v7074
  %v7105 = vmax.f32 %v7045, %v7075
  %v7106 = vmax.f32 %v7046, %v7076
  %v7107 = vmax.f32 %v7047, %v7077
  %v7108 = vmax.f32 %v7048, %v7078
  %v7109 = vmax.f32 %v7049, %v7079
  %v7110 = vmax.f32 %v7050, %v7080
  %v7111 = vmax.f32 %v7051, %v7081
  %v7112 = vmax.f32 %v7052, %v7082
  %v7113 = vmax.f32 %v7053, %v7083
  %v7114 = vmax.f32 %v7054, %v7084
  %v7115 = vmax.f32 %v7055, %v7085
  %v7116 = vmax.f32 %v7056, %v7086
  %v7117 = vadd.f32 %v7087, %v1430
  %v7118 = vadd.f32 %v7088, %v1435
  %v7119 = vadd.f32 %v7089, %v1440
  %v7120 = vadd.f32 %v7090, %v1445
  %v7121 = vadd.f32 %v7091, %v1450
  %v7122 = vadd.f32 %v7092, %v1455
  %v7123 = vadd.f32 %v7093, %v1460
  %v7124 = vadd.f32 %v7094, %v1465
  %v7125 = vadd.f32 %v7095, %v1470
  %v7126 = vadd.f32 %v7096, %v1475
  %v7127 = vadd.f32 %v7097, %v1480
  %v7128 = vadd.f32 %v7098, %v1485
  %v7129 = vadd.f32 %v7099, %v1490
  %v7130 = vadd.f32 %v7100, %v1495
  %v7131 = vadd.f32 %v7101, %v1500
  %v7132 = vadd.f32 %v7102, %v1505
  %v7133 = vadd.f32 %v7103, %v1510
  %v7134 = vadd.f32 %v7104, %v1515
  %v7135 = vadd.f32 %v7105, %v1520
  %v7136 = vadd.f32 %v7106, %v1525
  %v7137 = vadd.f32 %v7107, %v1530
  %v7138 = vadd.f32 %v7108, %v1535
  %v7139 = vadd.f32 %v7109, %v1540
  %v7140 = vadd.f32 %v7110, %v1545
  %v7141 = vadd.f32 %v7111, %v1550
  %v7142 = vadd.f32 %v7112, %v1555
  %v7143 = vadd.f32 %v7113, %v1560
  %v7144 = vadd.f32 %v7114, %v1565
  %v7145 = vadd.f32 %v7115, %v1570
  %v7146 = vadd.f32 %v7116, %v1575
  %v7147 = vmax.f32 %v7117, 0.0
  %v7148 = vmax.f32 %v7118, 0.0
  %v7149 = vmax.f32 %v7119, 0.0
  %v7150 = vmax.f32 %v7120, 0.0
  %v7151 = vmax.f32 %v7121, 0.0
  %v7152 = vmax.f32 %v7122, 0.0
  %v7153 = vmax.f32 %v7123, 0.0
  %v7154 = vmax.f32 %v7124, 0.0
  %v7155 = vmax.f32 %v7125, 0.0
  %v7156 = vmax.f32 %v7126, 0.0
  %v7157 = vmax.f32 %v7127, 0.0
  %v7158 = vmax.f32 %v7128, 0.0
  %v7159 = vmax.f32 %v7129, 0.0
  %v7160 = vmax.f32 %v7130, 0.0
  %v7161 = vmax.f32 %v7131, 0.0
  %v7162 = vmax.f32 %v7132, 0.0
  %v7163 = vmax.f32 %v7133, 0.0
  %v7164 = vmax.f32 %v7134, 0.0
  %v7165 = vmax.f32 %v7135, 0.0
  %v7166 = vmax.f32 %v7136, 0.0
  %v7167 = vmax.f32 %v7137, 0.0
  %v7168 = vmax.f32 %v7138, 0.0
  %v7169 = vmax.f32 %v7139, 0.0
  %v7170 = vmax.f32 %v7140, 0.0
  %v7171 = vmax.f32 %v7141, 0.0
  %v7172 = vmax.f32 %v7142, 0.0
  %v7173 = vmax.f32 %v7143, 0.0
  %v7174 = vmax.f32 %v7144, 0.0
  %v7175 = vmax.f32 %v7145, 0.0
  %v7176 = vmax.f32 %v7146, 0.0
  %s7177 = scalar_lea.vmem %s3, 192
  %v7178 = vld [vmem:[%s7177] sm:$0xff]
  %v7179 = vld [vmem:[%s7177 + $0x8] sm:$0xff]
  %v7180 = vld [vmem:[%s7177 + $0x10] sm:$0x3]
  %v7181 = vld [vmem:[%s7177 + $0x18] sm:$0x3]
  %v7183 = vsel %vm2482, %v7179, 0
  %v7186 = vsel %vm2482, %v7181, 0
  %7188 = vmatprep.subr.mxu0 0.0
  %7189 = vmatpush1.msra.mxu0 %v7147
  %7190 = vmatprep.subr.mxu0 0.0
  %7191 = vmatpush1.msra.mxu0 %v7148
  %7192 = vmatprep.subr.mxu0 0.0
  %7193 = vmatpush1.msra.mxu0 %v7149
  %7194 = vmatprep.subr.mxu0 0.0
  %7195 = vmatpush1.msra.mxu0 %v7150
  %7196 = vmatprep.subr.mxu0 0.0
  %7197 = vmatpush1.msra.mxu0 %v7151
  %7198 = vmatprep.subr.mxu0 0.0
  %7199 = vmatpush1.msra.mxu0 %v7152
  %7200 = vmatprep.subr.mxu0 0.0
  %7201 = vmatpush1.msra.mxu0 %v7153
  %7202 = vmatprep.subr.mxu0 0.0
  %7203 = vmatpush1.msra.mxu0 %v7154
  %7204 = vmatprep.subr.mxu0 0.0
  %7205 = vmatpush1.msra.mxu0 %v7155
  %7206 = vmatprep.subr.mxu0 0.0
  %7207 = vmatpush1.msra.mxu0 %v7156
  %7208 = vmatprep.subr.mxu0 0.0
  %7209 = vmatpush1.msra.mxu0 %v7157
  %7210 = vmatprep.subr.mxu0 0.0
  %7211 = vmatpush1.msra.mxu0 %v7158
  %7212 = vmatprep.subr.mxu0 0.0
  %7213 = vmatpush1.msra.mxu0 %v7159
  %7214 = vmatprep.subr.mxu0 0.0
  %7215 = vmatpush1.msra.mxu0 %v7160
  %7216 = vmatprep.subr.mxu0 0.0
  %7217 = vmatpush1.msra.mxu0 %v7161
  %7218 = vmatprep.subr.mxu0 0.0
  %7219 = vmatpush1.msra.mxu0 %v7162
  %7220 = vmatprep.subr.mxu0 0.0
  %7221 = vmatpush1.msra.mxu0 %v7163
  %7222 = vmatprep.subr.mxu0 0.0
  %7223 = vmatpush1.msra.mxu0 %v7164
  %7224 = vmatprep.subr.mxu0 0.0
  %7225 = vmatpush1.msra.mxu0 %v7165
  %7226 = vmatprep.subr.mxu0 0.0
  %7227 = vmatpush1.msra.mxu0 %v7166
  %7228 = vmatprep.subr.mxu0 0.0
  %7229 = vmatpush1.msra.mxu0 %v7167
  %7230 = vmatprep.subr.mxu0 0.0
  %7231 = vmatpush1.msra.mxu0 %v7168
  %7232 = vmatprep.subr.mxu0 0.0
  %7233 = vmatpush1.msra.mxu0 %v7169
  %7234 = vmatprep.subr.mxu0 0.0
  %7235 = vmatpush1.msra.mxu0 %v7170
  %7236 = vmatprep.subr.mxu0 0.0
  %7237 = vmatpush1.msra.mxu0 %v7171
  %7238 = vmatprep.subr.mxu0 0.0
  %7239 = vmatpush1.msra.mxu0 %v7172
  %7240 = vmatprep.subr.mxu0 0.0
  %7241 = vmatpush1.msra.mxu0 %v7173
  %7242 = vmatprep.subr.mxu0 0.0
  %7243 = vmatpush1.msra.mxu0 %v7174
  %7244 = vmatprep.subr.mxu0 0.0
  %7245 = vmatpush1.msra.mxu0 %v7175
  %7246 = vmatprep.subr.mxu0 0.0
  %7247 = vmatpush1.msra.mxu0 %v7176
  %7248 = vmatprep.subr.mxu0 0.0
  %7249 = vmatpush1.msra.mxu0 0.0
  %7250 = vmatprep.subr.mxu0 0.0
  %7251 = vmatpush1.msra.mxu0 0.0
  %7252 = vmatprep.mubr.f32.mxu0 %v7183
  %7253 = vmatmul.mubr.f32.gmra.mrb[0].mxu0 %v7178
  %v7254 = vpop.f32.mrb[0].mxu0
  %v7255 = vadd.f32 0.0, %v7254
  %v7256 = vpop.f32.mrb[0].mxu0
  %7257 = vmatprep.mubr.f32.mxu0 %v7186
  %7258 = vmatmul.mubr.f32.gmra.mrb[0].mxu0 %v7180
  %v7259 = vpop.f32.mrb[0].mxu0
  %v7260 = vadd.f32 0.0, %v7259
  %v7261 = vpop.f32.mrb[0].mxu0
  %7262 = vdwg.mxu0
  %v7263 = vadd.f32 %v6339, %v7255
  %v7264 = vadd.f32 %v6340, %v7260
  %v7265 = vld [vmem:[%s0 + $0x188] sm:$0xff]
  %v7266 = vld [vmem:[%s0 + $0x190] sm:$0xff]
  %v7267 = vld [vmem:[%s0 + $0x198] sm:$0xff]
  %v7268 = vld [vmem:[%s0 + $0x1a0] sm:$0xff]
  %v7269 = vld [vmem:[%s0 + $0x1a8] sm:$0xff]
  %v7270 = vld [vmem:[%s0 + $0x1b0] sm:$0xff]
  %v7271 = vld [vmem:[%s0 + $0x1b8] sm:$0xff]
  %v7272 = vld [vmem:[%s0 + $0x1c0] sm:$0xff]
  %v7273 = vld [vmem:[%s0 + $0x1c8] sm:$0xff]
  %v7274 = vld [vmem:[%s0 + $0x1d0] sm:$0xff]
  %v7275 = vld [vmem:[%s0 + $0x1d8] sm:$0xff]
  %v7276 = vld [vmem:[%s0 + $0x1e0] sm:$0xff]
  %v7277 = vld [vmem:[%s0 + $0x1e8] sm:$0xff]
  %v7278 = vld [vmem:[%s0 + $0x1f0] sm:$0xff]
  %v7279 = vld [vmem:[%s0 + $0x1f8] sm:$0xff]
  %v7280 = vld [vmem:[%s0 + $0x200] sm:$0xff]
  %v7281 = vld [vmem:[%s0 + $0x208] sm:$0xff]
  %v7282 = vld [vmem:[%s0 + $0x210] sm:$0xff]
  %v7283 = vld [vmem:[%s0 + $0x218] sm:$0xff]
  %v7284 = vld [vmem:[%s0 + $0x220] sm:$0xff]
  %v7285 = vld [vmem:[%s0 + $0x228] sm:$0xff]
  %7286 = vmatprep.subr.mxu0 0.0
  %7287 = vmatpush1.msra.mxu0 %v7265
  %7288 = vmatprep.subr.mxu0 0.0
  %7289 = vmatpush1.msra.mxu0 %v7266
  %7290 = vmatprep.subr.mxu0 0.0
  %7291 = vmatpush1.msra.mxu0 %v7267
  %7292 = vmatprep.subr.mxu0 0.0
  %7293 = vmatpush1.msra.mxu0 %v7268
  %7294 = vmatprep.subr.mxu0 0.0
  %7295 = vmatpush1.msra.mxu0 %v7269
  %7296 = vmatprep.subr.mxu0 0.0
  %7297 = vmatpush1.msra.mxu0 %v7270
  %7298 = vmatprep.subr.mxu0 0.0
  %7299 = vmatpush1.msra.mxu0 %v7271
  %7300 = vmatprep.subr.mxu0 0.0
  %7301 = vmatpush1.msra.mxu0 %v7272
  %7302 = vmatprep.subr.mxu0 0.0
  %7303 = vmatpush1.msra.mxu0 %v7273
  %7304 = vmatprep.subr.mxu0 0.0
  %7305 = vmatpush1.msra.mxu0 %v7274
  %7306 = vmatprep.subr.mxu0 0.0
  %7307 = vmatpush1.msra.mxu0 %v7275
  %7308 = vmatprep.subr.mxu0 0.0
  %7309 = vmatpush1.msra.mxu0 %v7276
  %7310 = vmatprep.subr.mxu0 0.0
  %7311 = vmatpush1.msra.mxu0 %v7277
  %7312 = vmatprep.subr.mxu0 0.0
  %7313 = vmatpush1.msra.mxu0 %v7278
  %7314 = vmatprep.subr.mxu0 0.0
  %7315 = vmatpush1.msra.mxu0 %v7279
  %7316 = vmatprep.subr.mxu0 0.0
  %7317 = vmatpush1.msra.mxu0 %v7280
  %7318 = vmatprep.subr.mxu0 0.0
  %7319 = vmatpush1.msra.mxu0 %v7281
  %7320 = vmatprep.subr.mxu0 0.0
  %7321 = vmatpush1.msra.mxu0 %v7282
  %7322 = vmatprep.subr.mxu0 0.0
  %7323 = vmatpush1.msra.mxu0 %v7283
  %7324 = vmatprep.subr.mxu0 0.0
  %7325 = vmatpush1.msra.mxu0 %v7284
  %7326 = vmatprep.subr.mxu0 0.0
  %7327 = vmatpush1.msra.mxu0 %v7285
  %7328 = vmatprep.subr.mxu0 0.0
  %7329 = vmatpush1.msra.mxu0 0.0
  %7330 = vmatprep.subr.mxu0 0.0
  %7331 = vmatpush1.msra.mxu0 0.0
  %7332 = vmatprep.subr.mxu0 0.0
  %7333 = vmatpush1.msra.mxu0 0.0
  %7334 = vmatprep.subr.mxu0 0.0
  %7335 = vmatpush1.msra.mxu0 0.0
  %7336 = vmatprep.subr.mxu0 0.0
  %7337 = vmatpush1.msra.mxu0 0.0
  %7338 = vmatprep.subr.mxu0 0.0
  %7339 = vmatpush1.msra.mxu0 0.0
  %7340 = vmatprep.subr.mxu0 0.0
  %7341 = vmatpush1.msra.mxu0 0.0
  %7342 = vmatprep.subr.mxu0 0.0
  %7343 = vmatpush1.msra.mxu0 0.0
  %7344 = vmatprep.subr.mxu0 0.0
  %7345 = vmatpush1.msra.mxu0 0.0
  %7346 = vmatprep.subr.mxu0 0.0
  %7347 = vmatpush1.msra.mxu0 0.0
  %7348 = vmatprep.subr.mxu0 0.0
  %7349 = vmatpush1.msra.mxu0 0.0
  %7350 = vmatprep.mubr.f32.mxu0 %v313
  %7351 = vmatmul.mubr.f32.gmra.mrb[0].mxu0 %v20
  %v7352 = vpop.f32.mrb[0].mxu0
  %v7353 = vadd.f32 0.0, %v7352
  %v7354 = vpop.f32.mrb[0].mxu0
  %7355 = vmatprep.mubr.f32.mxu0 %v316
  %7356 = vmatmul.mubr.f32.gmra.mrb[0].mxu0 %v22
  %v7357 = vpop.f32.mrb[0].mxu0
  %v7358 = vadd.f32 0.0, %v7357
  %v7359 = vpop.f32.mrb[0].mxu0
  %7360 = vmatprep.mubr.f32.mxu0 %v319
  %7361 = vmatmul.mubr.f32.gmra.mrb[0].mxu0 %v24
  %v7362 = vpop.f32.mrb[0].mxu0
  %v7363 = vadd.f32 0.0, %v7362
  %v7364 = vpop.f32.mrb[0].mxu0
  %7365 = vmatprep.mubr.f32.mxu0 %v322
  %7366 = vmatmul.mubr.f32.gmra.mrb[0].mxu0 %v26
  %v7367 = vpop.f32.mrb[0].mxu0
  %v7368 = vadd.f32 0.0, %v7367
  %v7369 = vpop.f32.mrb[0].mxu0
  %7370 = vmatprep.mubr.f32.mxu0 %v325
  %7371 = vmatmul.mubr.f32.gmra.mrb[0].mxu0 %v28
  %v7372 = vpop.f32.mrb[0].mxu0
  %v7373 = vadd.f32 0.0, %v7372
  %v7374 = vpop.f32.mrb[0].mxu0
  %7375 = vmatprep.mubr.f32.mxu0 %v328
  %7376 = vmatmul.mubr.f32.gmra.mrb[0].mxu0 %v30
  %v7377 = vpop.f32.mrb[0].mxu0
  %v7378 = vadd.f32 0.0, %v7377
  %v7379 = vpop.f32.mrb[0].mxu0
  %7380 = vmatprep.mubr.f32.mxu0 %v331
  %7381 = vmatmul.mubr.f32.gmra.mrb[0].mxu0 %v32
  %v7382 = vpop.f32.mrb[0].mxu0
  %v7383 = vadd.f32 0.0, %v7382
  %v7384 = vpop.f32.mrb[0].mxu0
  %7385 = vmatprep.mubr.f32.mxu0 %v334
  %7386 = vmatmul.mubr.f32.gmra.mrb[0].mxu0 %v34
  %v7387 = vpop.f32.mrb[0].mxu0
  %v7388 = vadd.f32 0.0, %v7387
  %v7389 = vpop.f32.mrb[0].mxu0
  %7390 = vmatprep.mubr.f32.mxu0 %v337
  %7391 = vmatmul.mubr.f32.gmra.mrb[0].mxu0 %v36
  %v7392 = vpop.f32.mrb[0].mxu0
  %v7393 = vadd.f32 0.0, %v7392
  %v7394 = vpop.f32.mrb[0].mxu0
  %7395 = vmatprep.mubr.f32.mxu0 %v340
  %7396 = vmatmul.mubr.f32.gmra.mrb[0].mxu0 %v38
  %v7397 = vpop.f32.mrb[0].mxu0
  %v7398 = vadd.f32 0.0, %v7397
  %v7399 = vpop.f32.mrb[0].mxu0
  %7400 = vmatprep.mubr.f32.mxu0 %v343
  %7401 = vmatmul.mubr.f32.gmra.mrb[0].mxu0 %v40
  %v7402 = vpop.f32.mrb[0].mxu0
  %v7403 = vadd.f32 0.0, %v7402
  %v7404 = vpop.f32.mrb[0].mxu0
  %7405 = vmatprep.mubr.f32.mxu0 %v346
  %7406 = vmatmul.mubr.f32.gmra.mrb[0].mxu0 %v42
  %v7407 = vpop.f32.mrb[0].mxu0
  %v7408 = vadd.f32 0.0, %v7407
  %v7409 = vpop.f32.mrb[0].mxu0
  %7410 = vmatprep.mubr.f32.mxu0 %v349
  %7411 = vmatmul.mubr.f32.gmra.mrb[0].mxu0 %v44
  %v7412 = vpop.f32.mrb[0].mxu0
  %v7413 = vadd.f32 0.0, %v7412
  %v7414 = vpop.f32.mrb[0].mxu0
  %7415 = vmatprep.mubr.f32.mxu0 %v352
  %7416 = vmatmul.mubr.f32.gmra.mrb[0].mxu0 %v46
  %v7417 = vpop.f32.mrb[0].mxu0
  %v7418 = vadd.f32 0.0, %v7417
  %v7419 = vpop.f32.mrb[0].mxu0
  %7420 = vmatprep.mubr.f32.mxu0 %v355
  %7421 = vmatmul.mubr.f32.gmra.mrb[0].mxu0 %v48
  %v7422 = vpop.f32.mrb[0].mxu0
  %v7423 = vadd.f32 0.0, %v7422
  %v7424 = vpop.f32.mrb[0].mxu0
  %7425 = vmatprep.mubr.f32.mxu0 %v358
  %7426 = vmatmul.mubr.f32.gmra.mrb[0].mxu0 %v50
  %v7427 = vpop.f32.mrb[0].mxu0
  %v7428 = vadd.f32 0.0, %v7427
  %v7429 = vpop.f32.mrb[0].mxu0
  %7430 = vmatprep.mubr.f32.mxu0 %v361
  %7431 = vmatmul.mubr.f32.gmra.mrb[0].mxu0 %v52
  %v7432 = vpop.f32.mrb[0].mxu0
  %v7433 = vadd.f32 0.0, %v7432
  %v7434 = vpop.f32.mrb[0].mxu0
  %7435 = vmatprep.mubr.f32.mxu0 %v364
  %7436 = vmatmul.mubr.f32.gmra.mrb[0].mxu0 %v54
  %v7437 = vpop.f32.mrb[0].mxu0
  %v7438 = vadd.f32 0.0, %v7437
  %v7439 = vpop.f32.mrb[0].mxu0
  %7440 = vmatprep.mubr.f32.mxu0 %v367
  %7441 = vmatmul.mubr.f32.gmra.mrb[0].mxu0 %v56
  %v7442 = vpop.f32.mrb[0].mxu0
  %v7443 = vadd.f32 0.0, %v7442
  %v7444 = vpop.f32.mrb[0].mxu0
  %7445 = vmatprep.mubr.f32.mxu0 %v370
  %7446 = vmatmul.mubr.f32.gmra.mrb[0].mxu0 %v58
  %v7447 = vpop.f32.mrb[0].mxu0
  %v7448 = vadd.f32 0.0, %v7447
  %v7449 = vpop.f32.mrb[0].mxu0
  %7450 = vmatprep.mubr.f32.mxu0 %v373
  %7451 = vmatmul.mubr.f32.gmra.mrb[0].mxu0 %v60
  %v7452 = vpop.f32.mrb[0].mxu0
  %v7453 = vadd.f32 0.0, %v7452
  %v7454 = vpop.f32.mrb[0].mxu0
  %7455 = vmatprep.mubr.f32.mxu0 %v376
  %7456 = vmatmul.mubr.f32.gmra.mrb[0].mxu0 %v62
  %v7457 = vpop.f32.mrb[0].mxu0
  %v7458 = vadd.f32 0.0, %v7457
  %v7459 = vpop.f32.mrb[0].mxu0
  %7460 = vmatprep.mubr.f32.mxu0 %v379
  %7461 = vmatmul.mubr.f32.gmra.mrb[0].mxu0 %v64
  %v7462 = vpop.f32.mrb[0].mxu0
  %v7463 = vadd.f32 0.0, %v7462
  %v7464 = vpop.f32.mrb[0].mxu0
  %7465 = vmatprep.mubr.f32.mxu0 %v382
  %7466 = vmatmul.mubr.f32.gmra.mrb[0].mxu0 %v66
  %v7467 = vpop.f32.mrb[0].mxu0
  %v7468 = vadd.f32 0.0, %v7467
  %v7469 = vpop.f32.mrb[0].mxu0
  %7470 = vmatprep.mubr.f32.mxu0 %v385
  %7471 = vmatmul.mubr.f32.gmra.mrb[0].mxu0 %v68
  %v7472 = vpop.f32.mrb[0].mxu0
  %v7473 = vadd.f32 0.0, %v7472
  %v7474 = vpop.f32.mrb[0].mxu0
  %7475 = vmatprep.mubr.f32.mxu0 %v388
  %7476 = vmatmul.mubr.f32.gmra.mrb[0].mxu0 %v70
  %v7477 = vpop.f32.mrb[0].mxu0
  %v7478 = vadd.f32 0.0, %v7477
  %v7479 = vpop.f32.mrb[0].mxu0
  %7480 = vmatprep.mubr.f32.mxu0 %v391
  %7481 = vmatmul.mubr.f32.gmra.mrb[0].mxu0 %v72
  %v7482 = vpop.f32.mrb[0].mxu0
  %v7483 = vadd.f32 0.0, %v7482
  %v7484 = vpop.f32.mrb[0].mxu0
  %7485 = vmatprep.mubr.f32.mxu0 %v394
  %7486 = vmatmul.mubr.f32.gmra.mrb[0].mxu0 %v74
  %v7487 = vpop.f32.mrb[0].mxu0
  %v7488 = vadd.f32 0.0, %v7487
  %v7489 = vpop.f32.mrb[0].mxu0
  %7490 = vmatprep.mubr.f32.mxu0 %v397
  %7491 = vmatmul.mubr.f32.gmra.mrb[0].mxu0 %v76
  %v7492 = vpop.f32.mrb[0].mxu0
  %v7493 = vadd.f32 0.0, %v7492
  %v7494 = vpop.f32.mrb[0].mxu0
  %7495 = vmatprep.mubr.f32.mxu0 %v400
  %7496 = vmatmul.mubr.f32.gmra.mrb[0].mxu0 %v78
  %v7497 = vpop.f32.mrb[0].mxu0
  %v7498 = vadd.f32 0.0, %v7497
  %v7499 = vpop.f32.mrb[0].mxu0
  %7500 = vmatprep.mubr.f32.mxu0 %v403
  %7501 = vmatmul.mubr.f32.gmra.mrb[0].mxu0 %v80
  %v7502 = vpop.f32.mrb[0].mxu0
  %v7503 = vadd.f32 0.0, %v7502
  %v7504 = vpop.f32.mrb[0].mxu0
  %7505 = vmatprep.mubr.f32.mxu0 %v406
  %7506 = vmatmul.mubr.f32.gmra.mrb[0].mxu0 %v82
  %v7507 = vpop.f32.mrb[0].mxu0
  %v7508 = vadd.f32 0.0, %v7507
  %v7509 = vpop.f32.mrb[0].mxu0
  %7510 = vmatprep.mubr.f32.mxu0 %v409
  %7511 = vmatmul.mubr.f32.gmra.mrb[0].mxu0 %v84
  %v7512 = vpop.f32.mrb[0].mxu0
  %v7513 = vadd.f32 0.0, %v7512
  %v7514 = vpop.f32.mrb[0].mxu0
  %7515 = vmatprep.mubr.f32.mxu0 %v412
  %7516 = vmatmul.mubr.f32.gmra.mrb[0].mxu0 %v86
  %v7517 = vpop.f32.mrb[0].mxu0
  %v7518 = vadd.f32 0.0, %v7517
  %v7519 = vpop.f32.mrb[0].mxu0
  %7520 = vmatprep.mubr.f32.mxu0 %v415
  %7521 = vmatmul.mubr.f32.gmra.mrb[0].mxu0 %v88
  %v7522 = vpop.f32.mrb[0].mxu0
  %v7523 = vadd.f32 0.0, %v7522
  %v7524 = vpop.f32.mrb[0].mxu0
  %7525 = vmatprep.mubr.f32.mxu0 %v418
  %7526 = vmatmul.mubr.f32.gmra.mrb[0].mxu0 %v90
  %v7527 = vpop.f32.mrb[0].mxu0
  %v7528 = vadd.f32 0.0, %v7527
  %v7529 = vpop.f32.mrb[0].mxu0
  %7530 = vmatprep.mubr.f32.mxu0 %v421
  %7531 = vmatmul.mubr.f32.gmra.mrb[0].mxu0 %v92
  %v7532 = vpop.f32.mrb[0].mxu0
  %v7533 = vadd.f32 0.0, %v7532
  %v7534 = vpop.f32.mrb[0].mxu0
  %7535 = vmatprep.mubr.f32.mxu0 %v424
  %7536 = vmatmul.mubr.f32.gmra.mrb[0].mxu0 %v94
  %v7537 = vpop.f32.mrb[0].mxu0
  %v7538 = vadd.f32 0.0, %v7537
  %v7539 = vpop.f32.mrb[0].mxu0
  %7540 = vmatprep.mubr.f32.mxu0 %v427
  %7541 = vmatmul.mubr.f32.gmra.mrb[0].mxu0 %v96
  %v7542 = vpop.f32.mrb[0].mxu0
  %v7543 = vadd.f32 0.0, %v7542
  %v7544 = vpop.f32.mrb[0].mxu0
  %7545 = vmatprep.mubr.f32.mxu0 %v430
  %7546 = vmatmul.mubr.f32.gmra.mrb[0].mxu0 %v98
  %v7547 = vpop.f32.mrb[0].mxu0
  %v7548 = vadd.f32 0.0, %v7547
  %v7549 = vpop.f32.mrb[0].mxu0
  %7550 = vmatprep.mubr.f32.mxu0 %v433
  %7551 = vmatmul.mubr.f32.gmra.mrb[0].mxu0 %v100
  %v7552 = vpop.f32.mrb[0].mxu0
  %v7553 = vadd.f32 0.0, %v7552
  %v7554 = vpop.f32.mrb[0].mxu0
  %7555 = vmatprep.mubr.f32.mxu0 %v436
  %7556 = vmatmul.mubr.f32.gmra.mrb[0].mxu0 %v102
  %v7557 = vpop.f32.mrb[0].mxu0
  %v7558 = vadd.f32 0.0, %v7557
  %v7559 = vpop.f32.mrb[0].mxu0
  %7560 = vmatprep.mubr.f32.mxu0 %v439
  %7561 = vmatmul.mubr.f32.gmra.mrb[0].mxu0 %v104
  %v7562 = vpop.f32.mrb[0].mxu0
  %v7563 = vadd.f32 0.0, %v7562
  %v7564 = vpop.f32.mrb[0].mxu0
  %7565 = vmatprep.mubr.f32.mxu0 %v442
  %7566 = vmatmul.mubr.f32.gmra.mrb[0].mxu0 %v106
  %v7567 = vpop.f32.mrb[0].mxu0
  %v7568 = vadd.f32 0.0, %v7567
  %v7569 = vpop.f32.mrb[0].mxu0
  %7570 = vmatprep.mubr.f32.mxu0 %v445
  %7571 = vmatmul.mubr.f32.gmra.mrb[0].mxu0 %v108
  %v7572 = vpop.f32.mrb[0].mxu0
  %v7573 = vadd.f32 0.0, %v7572
  %v7574 = vpop.f32.mrb[0].mxu0
  %7575 = vmatprep.mubr.f32.mxu0 %v448
  %7576 = vmatmul.mubr.f32.gmra.mrb[0].mxu0 %v110
  %v7577 = vpop.f32.mrb[0].mxu0
  %v7578 = vadd.f32 0.0, %v7577
  %v7579 = vpop.f32.mrb[0].mxu0
  %7580 = vmatprep.mubr.f32.mxu0 %v451
  %7581 = vmatmul.mubr.f32.gmra.mrb[0].mxu0 %v112
  %v7582 = vpop.f32.mrb[0].mxu0
  %v7583 = vadd.f32 0.0, %v7582
  %v7584 = vpop.f32.mrb[0].mxu0
  %7585 = vmatprep.mubr.f32.mxu0 %v454
  %7586 = vmatmul.mubr.f32.gmra.mrb[0].mxu0 %v114
  %v7587 = vpop.f32.mrb[0].mxu0
  %v7588 = vadd.f32 0.0, %v7587
  %v7589 = vpop.f32.mrb[0].mxu0
  %7590 = vmatprep.mubr.f32.mxu0 %v457
  %7591 = vmatmul.mubr.f32.gmra.mrb[0].mxu0 %v116
  %v7592 = vpop.f32.mrb[0].mxu0
  %v7593 = vadd.f32 0.0, %v7592
  %v7594 = vpop.f32.mrb[0].mxu0
  %7595 = vmatprep.mubr.f32.mxu0 %v460
  %7596 = vmatmul.mubr.f32.gmra.mrb[0].mxu0 %v118
  %v7597 = vpop.f32.mrb[0].mxu0
  %v7598 = vadd.f32 0.0, %v7597
  %v7599 = vpop.f32.mrb[0].mxu0
  %7600 = vmatprep.mubr.f32.mxu0 %v463
  %7601 = vmatmul.mubr.f32.gmra.mrb[0].mxu0 %v120
  %v7602 = vpop.f32.mrb[0].mxu0
  %v7603 = vadd.f32 0.0, %v7602
  %v7604 = vpop.f32.mrb[0].mxu0
  %7605 = vmatprep.mubr.f32.mxu0 %v466
  %7606 = vmatmul.mubr.f32.gmra.mrb[0].mxu0 %v122
  %v7607 = vpop.f32.mrb[0].mxu0
  %v7608 = vadd.f32 0.0, %v7607
  %v7609 = vpop.f32.mrb[0].mxu0
  %7610 = vmatprep.mubr.f32.mxu0 %v469
  %7611 = vmatmul.mubr.f32.gmra.mrb[0].mxu0 %v124
  %v7612 = vpop.f32.mrb[0].mxu0
  %v7613 = vadd.f32 0.0, %v7612
  %v7614 = vpop.f32.mrb[0].mxu0
  %7615 = vmatprep.mubr.f32.mxu0 %v472
  %7616 = vmatmul.mubr.f32.gmra.mrb[0].mxu0 %v126
  %v7617 = vpop.f32.mrb[0].mxu0
  %v7618 = vadd.f32 0.0, %v7617
  %v7619 = vpop.f32.mrb[0].mxu0
  %7620 = vmatprep.mubr.f32.mxu0 %v475
  %7621 = vmatmul.mubr.f32.gmra.mrb[0].mxu0 %v128
  %v7622 = vpop.f32.mrb[0].mxu0
  %v7623 = vadd.f32 0.0, %v7622
  %v7624 = vpop.f32.mrb[0].mxu0
  %7625 = vmatprep.mubr.f32.mxu0 %v478
  %7626 = vmatmul.mubr.f32.gmra.mrb[0].mxu0 %v130
  %v7627 = vpop.f32.mrb[0].mxu0
  %v7628 = vadd.f32 0.0, %v7627
  %v7629 = vpop.f32.mrb[0].mxu0
  %7630 = vmatprep.mubr.f32.mxu0 %v481
  %7631 = vmatmul.mubr.f32.gmra.mrb[0].mxu0 %v132
  %v7632 = vpop.f32.mrb[0].mxu0
  %v7633 = vadd.f32 0.0, %v7632
  %v7634 = vpop.f32.mrb[0].mxu0
  %7635 = vmatprep.mubr.f32.mxu0 %v484
  %7636 = vmatmul.mubr.f32.gmra.mrb[0].mxu0 %v134
  %v7637 = vpop.f32.mrb[0].mxu0
  %v7638 = vadd.f32 0.0, %v7637
  %v7639 = vpop.f32.mrb[0].mxu0
  %7640 = vmatprep.mubr.f32.mxu0 %v487
  %7641 = vmatmul.mubr.f32.gmra.mrb[0].mxu0 %v136
  %v7642 = vpop.f32.mrb[0].mxu0
  %v7643 = vadd.f32 0.0, %v7642
  %v7644 = vpop.f32.mrb[0].mxu0
  %7645 = vmatprep.mubr.f32.mxu0 %v490
  %7646 = vmatmul.mubr.f32.gmra.mrb[0].mxu0 %v138
  %v7647 = vpop.f32.mrb[0].mxu0
  %v7648 = vadd.f32 0.0, %v7647
  %v7649 = vpop.f32.mrb[0].mxu0
  %7650 = vmatprep.mubr.f32.mxu0 %v493
  %7651 = vmatmul.mubr.f32.gmra.mrb[0].mxu0 %v140
  %v7652 = vpop.f32.mrb[0].mxu0
  %v7653 = vadd.f32 0.0, %v7652
  %v7654 = vpop.f32.mrb[0].mxu0
  %7655 = vmatprep.mubr.f32.mxu0 %v496
  %7656 = vmatmul.mubr.f32.gmra.mrb[0].mxu0 %v142
  %v7657 = vpop.f32.mrb[0].mxu0
  %v7658 = vadd.f32 0.0, %v7657
  %v7659 = vpop.f32.mrb[0].mxu0
  %7660 = vmatprep.mubr.f32.mxu0 %v499
  %7661 = vmatmul.mubr.f32.gmra.mrb[0].mxu0 %v144
  %v7662 = vpop.f32.mrb[0].mxu0
  %v7663 = vadd.f32 0.0, %v7662
  %v7664 = vpop.f32.mrb[0].mxu0
  %7665 = vmatprep.mubr.f32.mxu0 %v502
  %7666 = vmatmul.mubr.f32.gmra.mrb[0].mxu0 %v146
  %v7667 = vpop.f32.mrb[0].mxu0
  %v7668 = vadd.f32 0.0, %v7667
  %v7669 = vpop.f32.mrb[0].mxu0
  %7670 = vmatprep.mubr.f32.mxu0 %v505
  %7671 = vmatmul.mubr.f32.gmra.mrb[0].mxu0 %v148
  %v7672 = vpop.f32.mrb[0].mxu0
  %v7673 = vadd.f32 0.0, %v7672
  %v7674 = vpop.f32.mrb[0].mxu0
  %7675 = vmatprep.mubr.f32.mxu0 %v508
  %7676 = vmatmul.mubr.f32.gmra.mrb[0].mxu0 %v150
  %v7677 = vpop.f32.mrb[0].mxu0
  %v7678 = vadd.f32 0.0, %v7677
  %v7679 = vpop.f32.mrb[0].mxu0
  %7680 = vmatprep.mubr.f32.mxu0 %v511
  %7681 = vmatmul.mubr.f32.gmra.mrb[0].mxu0 %v152
  %v7682 = vpop.f32.mrb[0].mxu0
  %v7683 = vadd.f32 0.0, %v7682
  %v7684 = vpop.f32.mrb[0].mxu0
  %7685 = vmatprep.mubr.f32.mxu0 %v514
  %7686 = vmatmul.mubr.f32.gmra.mrb[0].mxu0 %v154
  %v7687 = vpop.f32.mrb[0].mxu0
  %v7688 = vadd.f32 0.0, %v7687
  %v7689 = vpop.f32.mrb[0].mxu0
  %7690 = vmatprep.mubr.f32.mxu0 %v517
  %7691 = vmatmul.mubr.f32.gmra.mrb[0].mxu0 %v156
  %v7692 = vpop.f32.mrb[0].mxu0
  %v7693 = vadd.f32 0.0, %v7692
  %v7694 = vpop.f32.mrb[0].mxu0
  %7695 = vmatprep.mubr.f32.mxu0 %v520
  %7696 = vmatmul.mubr.f32.gmra.mrb[0].mxu0 %v158
  %v7697 = vpop.f32.mrb[0].mxu0
  %v7698 = vadd.f32 0.0, %v7697
  %v7699 = vpop.f32.mrb[0].mxu0
  %7700 = vmatprep.mubr.f32.mxu0 %v523
  %7701 = vmatmul.mubr.f32.gmra.mrb[0].mxu0 %v160
  %v7702 = vpop.f32.mrb[0].mxu0
  %v7703 = vadd.f32 0.0, %v7702
  %v7704 = vpop.f32.mrb[0].mxu0
  %7705 = vmatprep.mubr.f32.mxu0 %v526
  %7706 = vmatmul.mubr.f32.gmra.mrb[0].mxu0 %v162
  %v7707 = vpop.f32.mrb[0].mxu0
  %v7708 = vadd.f32 0.0, %v7707
  %v7709 = vpop.f32.mrb[0].mxu0
  %7710 = vmatprep.mubr.f32.mxu0 %v529
  %7711 = vmatmul.mubr.f32.gmra.mrb[0].mxu0 %v164
  %v7712 = vpop.f32.mrb[0].mxu0
  %v7713 = vadd.f32 0.0, %v7712
  %v7714 = vpop.f32.mrb[0].mxu0
  %7715 = vmatprep.mubr.f32.mxu0 %v532
  %7716 = vmatmul.mubr.f32.gmra.mrb[0].mxu0 %v166
  %v7717 = vpop.f32.mrb[0].mxu0
  %v7718 = vadd.f32 0.0, %v7717
  %v7719 = vpop.f32.mrb[0].mxu0
  %7720 = vmatprep.mubr.f32.mxu0 %v535
  %7721 = vmatmul.mubr.f32.gmra.mrb[0].mxu0 %v168
  %v7722 = vpop.f32.mrb[0].mxu0
  %v7723 = vadd.f32 0.0, %v7722
  %v7724 = vpop.f32.mrb[0].mxu0
  %7725 = vmatprep.mubr.f32.mxu0 %v538
  %7726 = vmatmul.mubr.f32.gmra.mrb[0].mxu0 %v170
  %v7727 = vpop.f32.mrb[0].mxu0
  %v7728 = vadd.f32 0.0, %v7727
  %v7729 = vpop.f32.mrb[0].mxu0
  %7730 = vmatprep.mubr.f32.mxu0 %v541
  %7731 = vmatmul.mubr.f32.gmra.mrb[0].mxu0 %v172
  %v7732 = vpop.f32.mrb[0].mxu0
  %v7733 = vadd.f32 0.0, %v7732
  %v7734 = vpop.f32.mrb[0].mxu0
  %7735 = vmatprep.mubr.f32.mxu0 %v544
  %7736 = vmatmul.mubr.f32.gmra.mrb[0].mxu0 %v174
  %v7737 = vpop.f32.mrb[0].mxu0
  %v7738 = vadd.f32 0.0, %v7737
  %v7739 = vpop.f32.mrb[0].mxu0
  %7740 = vmatprep.mubr.f32.mxu0 %v547
  %7741 = vmatmul.mubr.f32.gmra.mrb[0].mxu0 %v176
  %v7742 = vpop.f32.mrb[0].mxu0
  %v7743 = vadd.f32 0.0, %v7742
  %v7744 = vpop.f32.mrb[0].mxu0
  %7745 = vmatprep.mubr.f32.mxu0 %v550
  %7746 = vmatmul.mubr.f32.gmra.mrb[0].mxu0 %v178
  %v7747 = vpop.f32.mrb[0].mxu0
  %v7748 = vadd.f32 0.0, %v7747
  %v7749 = vpop.f32.mrb[0].mxu0
  %7750 = vmatprep.mubr.f32.mxu0 %v553
  %7751 = vmatmul.mubr.f32.gmra.mrb[0].mxu0 %v180
  %v7752 = vpop.f32.mrb[0].mxu0
  %v7753 = vadd.f32 0.0, %v7752
  %v7754 = vpop.f32.mrb[0].mxu0
  %7755 = vmatprep.mubr.f32.mxu0 %v556
  %7756 = vmatmul.mubr.f32.gmra.mrb[0].mxu0 %v182
  %v7757 = vpop.f32.mrb[0].mxu0
  %v7758 = vadd.f32 0.0, %v7757
  %v7759 = vpop.f32.mrb[0].mxu0
  %7760 = vmatprep.mubr.f32.mxu0 %v559
  %7761 = vmatmul.mubr.f32.gmra.mrb[0].mxu0 %v184
  %v7762 = vpop.f32.mrb[0].mxu0
  %v7763 = vadd.f32 0.0, %v7762
  %v7764 = vpop.f32.mrb[0].mxu0
  %7765 = vmatprep.mubr.f32.mxu0 %v562
  %7766 = vmatmul.mubr.f32.gmra.mrb[0].mxu0 %v186
  %v7767 = vpop.f32.mrb[0].mxu0
  %v7768 = vadd.f32 0.0, %v7767
  %v7769 = vpop.f32.mrb[0].mxu0
  %7770 = vmatprep.mubr.f32.mxu0 %v565
  %7771 = vmatmul.mubr.f32.gmra.mrb[0].mxu0 %v188
  %v7772 = vpop.f32.mrb[0].mxu0
  %v7773 = vadd.f32 0.0, %v7772
  %v7774 = vpop.f32.mrb[0].mxu0
  %7775 = vmatprep.mubr.f32.mxu0 %v568
  %7776 = vmatmul.mubr.f32.gmra.mrb[0].mxu0 %v190
  %v7777 = vpop.f32.mrb[0].mxu0
  %v7778 = vadd.f32 0.0, %v7777
  %v7779 = vpop.f32.mrb[0].mxu0
  %7780 = vmatprep.mubr.f32.mxu0 %v571
  %7781 = vmatmul.mubr.f32.gmra.mrb[0].mxu0 %v192
  %v7782 = vpop.f32.mrb[0].mxu0
  %v7783 = vadd.f32 0.0, %v7782
  %v7784 = vpop.f32.mrb[0].mxu0
  %7785 = vmatprep.mubr.f32.mxu0 %v574
  %7786 = vmatmul.mubr.f32.gmra.mrb[0].mxu0 %v194
  %v7787 = vpop.f32.mrb[0].mxu0
  %v7788 = vadd.f32 0.0, %v7787
  %v7789 = vpop.f32.mrb[0].mxu0
  %7790 = vmatprep.mubr.f32.mxu0 %v577
  %7791 = vmatmul.mubr.f32.gmra.mrb[0].mxu0 %v196
  %v7792 = vpop.f32.mrb[0].mxu0
  %v7793 = vadd.f32 0.0, %v7792
  %v7794 = vpop.f32.mrb[0].mxu0
  %7795 = vmatprep.mubr.f32.mxu0 %v580
  %7796 = vmatmul.mubr.f32.gmra.mrb[0].mxu0 %v198
  %v7797 = vpop.f32.mrb[0].mxu0
  %v7798 = vadd.f32 0.0, %v7797
  %v7799 = vpop.f32.mrb[0].mxu0
  %7800 = vmatprep.mubr.f32.mxu0 %v583
  %7801 = vmatmul.mubr.f32.gmra.mrb[0].mxu0 %v200
  %v7802 = vpop.f32.mrb[0].mxu0
  %v7803 = vadd.f32 0.0, %v7802
  %v7804 = vpop.f32.mrb[0].mxu0
  %7805 = vmatprep.mubr.f32.mxu0 %v586
  %7806 = vmatmul.mubr.f32.gmra.mrb[0].mxu0 %v202
  %v7807 = vpop.f32.mrb[0].mxu0
  %v7808 = vadd.f32 0.0, %v7807
  %v7809 = vpop.f32.mrb[0].mxu0
  %7810 = vmatprep.mubr.f32.mxu0 %v589
  %7811 = vmatmul.mubr.f32.gmra.mrb[0].mxu0 %v204
  %v7812 = vpop.f32.mrb[0].mxu0
  %v7813 = vadd.f32 0.0, %v7812
  %v7814 = vpop.f32.mrb[0].mxu0
  %7815 = vmatprep.mubr.f32.mxu0 %v592
  %7816 = vmatmul.mubr.f32.gmra.mrb[0].mxu0 %v206
  %v7817 = vpop.f32.mrb[0].mxu0
  %v7818 = vadd.f32 0.0, %v7817
  %v7819 = vpop.f32.mrb[0].mxu0
  %7820 = vmatprep.mubr.f32.mxu0 %v595
  %7821 = vmatmul.mubr.f32.gmra.mrb[0].mxu0 %v208
  %v7822 = vpop.f32.mrb[0].mxu0
  %v7823 = vadd.f32 0.0, %v7822
  %v7824 = vpop.f32.mrb[0].mxu0
  %7825 = vmatprep.mubr.f32.mxu0 %v598
  %7826 = vmatmul.mubr.f32.gmra.mrb[0].mxu0 %v210
  %v7827 = vpop.f32.mrb[0].mxu0
  %v7828 = vadd.f32 0.0, %v7827
  %v7829 = vpop.f32.mrb[0].mxu0
  %7830 = vmatprep.mubr.f32.mxu0 %v601
  %7831 = vmatmul.mubr.f32.gmra.mrb[0].mxu0 %v212
  %v7832 = vpop.f32.mrb[0].mxu0
  %v7833 = vadd.f32 0.0, %v7832
  %v7834 = vpop.f32.mrb[0].mxu0
  %7835 = vmatprep.mubr.f32.mxu0 %v604
  %7836 = vmatmul.mubr.f32.gmra.mrb[0].mxu0 %v214
  %v7837 = vpop.f32.mrb[0].mxu0
  %v7838 = vadd.f32 0.0, %v7837
  %v7839 = vpop.f32.mrb[0].mxu0
  %7840 = vmatprep.mubr.f32.mxu0 %v607
  %7841 = vmatmul.mubr.f32.gmra.mrb[0].mxu0 %v216
  %v7842 = vpop.f32.mrb[0].mxu0
  %v7843 = vadd.f32 0.0, %v7842
  %v7844 = vpop.f32.mrb[0].mxu0
  %7845 = vmatprep.mubr.f32.mxu0 %v610
  %7846 = vmatmul.mubr.f32.gmra.mrb[0].mxu0 %v218
  %v7847 = vpop.f32.mrb[0].mxu0
  %v7848 = vadd.f32 0.0, %v7847
  %v7849 = vpop.f32.mrb[0].mxu0
  %7850 = vmatprep.mubr.f32.mxu0 %v613
  %7851 = vmatmul.mubr.f32.gmra.mrb[0].mxu0 %v220
  %v7852 = vpop.f32.mrb[0].mxu0
  %v7853 = vadd.f32 0.0, %v7852
  %v7854 = vpop.f32.mrb[0].mxu0
  %7855 = vmatprep.mubr.f32.mxu0 %v616
  %7856 = vmatmul.mubr.f32.gmra.mrb[0].mxu0 %v222
  %v7857 = vpop.f32.mrb[0].mxu0
  %v7858 = vadd.f32 0.0, %v7857
  %v7859 = vpop.f32.mrb[0].mxu0
  %7860 = vmatprep.mubr.f32.mxu0 %v619
  %7861 = vmatmul.mubr.f32.gmra.mrb[0].mxu0 %v224
  %v7862 = vpop.f32.mrb[0].mxu0
  %v7863 = vadd.f32 0.0, %v7862
  %v7864 = vpop.f32.mrb[0].mxu0
  %7865 = vmatprep.mubr.f32.mxu0 %v622
  %7866 = vmatmul.mubr.f32.gmra.mrb[0].mxu0 %v226
  %v7867 = vpop.f32.mrb[0].mxu0
  %v7868 = vadd.f32 0.0, %v7867
  %v7869 = vpop.f32.mrb[0].mxu0
  %7870 = vmatprep.mubr.f32.mxu0 %v625
  %7871 = vmatmul.mubr.f32.gmra.mrb[0].mxu0 %v228
  %v7872 = vpop.f32.mrb[0].mxu0
  %v7873 = vadd.f32 0.0, %v7872
  %v7874 = vpop.f32.mrb[0].mxu0
  %7875 = vmatprep.mubr.f32.mxu0 %v628
  %7876 = vmatmul.mubr.f32.gmra.mrb[0].mxu0 %v230
  %v7877 = vpop.f32.mrb[0].mxu0
  %v7878 = vadd.f32 0.0, %v7877
  %v7879 = vpop.f32.mrb[0].mxu0
  %7880 = vmatprep.mubr.f32.mxu0 %v631
  %7881 = vmatmul.mubr.f32.gmra.mrb[0].mxu0 %v232
  %v7882 = vpop.f32.mrb[0].mxu0
  %v7883 = vadd.f32 0.0, %v7882
  %v7884 = vpop.f32.mrb[0].mxu0
  %7885 = vmatprep.mubr.f32.mxu0 %v634
  %7886 = vmatmul.mubr.f32.gmra.mrb[0].mxu0 %v234
  %v7887 = vpop.f32.mrb[0].mxu0
  %v7888 = vadd.f32 0.0, %v7887
  %v7889 = vpop.f32.mrb[0].mxu0
  %7890 = vmatprep.mubr.f32.mxu0 %v637
  %7891 = vmatmul.mubr.f32.gmra.mrb[0].mxu0 %v236
  %v7892 = vpop.f32.mrb[0].mxu0
  %v7893 = vadd.f32 0.0, %v7892
  %v7894 = vpop.f32.mrb[0].mxu0
  %7895 = vmatprep.mubr.f32.mxu0 %v640
  %7896 = vmatmul.mubr.f32.gmra.mrb[0].mxu0 %v238
  %v7897 = vpop.f32.mrb[0].mxu0
  %v7898 = vadd.f32 0.0, %v7897
  %v7899 = vpop.f32.mrb[0].mxu0
  %7900 = vmatprep.mubr.f32.mxu0 %v643
  %7901 = vmatmul.mubr.f32.gmra.mrb[0].mxu0 %v240
  %v7902 = vpop.f32.mrb[0].mxu0
  %v7903 = vadd.f32 0.0, %v7902
  %v7904 = vpop.f32.mrb[0].mxu0
  %7905 = vmatprep.mubr.f32.mxu0 %v646
  %7906 = vmatmul.mubr.f32.gmra.mrb[0].mxu0 %v242
  %v7907 = vpop.f32.mrb[0].mxu0
  %v7908 = vadd.f32 0.0, %v7907
  %v7909 = vpop.f32.mrb[0].mxu0
  %7910 = vmatprep.mubr.f32.mxu0 %v649
  %7911 = vmatmul.mubr.f32.gmra.mrb[0].mxu0 %v244
  %v7912 = vpop.f32.mrb[0].mxu0
  %v7913 = vadd.f32 0.0, %v7912
  %v7914 = vpop.f32.mrb[0].mxu0
  %7915 = vmatprep.mubr.f32.mxu0 %v652
  %7916 = vmatmul.mubr.f32.gmra.mrb[0].mxu0 %v246
  %v7917 = vpop.f32.mrb[0].mxu0
  %v7918 = vadd.f32 0.0, %v7917
  %v7919 = vpop.f32.mrb[0].mxu0
  %7920 = vmatprep.mubr.f32.mxu0 %v655
  %7921 = vmatmul.mubr.f32.gmra.mrb[0].mxu0 %v248
  %v7922 = vpop.f32.mrb[0].mxu0
  %v7923 = vadd.f32 0.0, %v7922
  %v7924 = vpop.f32.mrb[0].mxu0
  %7925 = vmatprep.mubr.f32.mxu0 %v658
  %7926 = vmatmul.mubr.f32.gmra.mrb[0].mxu0 %v250
  %v7927 = vpop.f32.mrb[0].mxu0
  %v7928 = vadd.f32 0.0, %v7927
  %v7929 = vpop.f32.mrb[0].mxu0
  %7930 = vmatprep.mubr.f32.mxu0 %v661
  %7931 = vmatmul.mubr.f32.gmra.mrb[0].mxu0 %v252
  %v7932 = vpop.f32.mrb[0].mxu0
  %v7933 = vadd.f32 0.0, %v7932
  %v7934 = vpop.f32.mrb[0].mxu0
  %7935 = vmatprep.mubr.f32.mxu0 %v664
  %7936 = vmatmul.mubr.f32.gmra.mrb[0].mxu0 %v254
  %v7937 = vpop.f32.mrb[0].mxu0
  %v7938 = vadd.f32 0.0, %v7937
  %v7939 = vpop.f32.mrb[0].mxu0
  %7940 = vmatprep.mubr.f32.mxu0 %v667
  %7941 = vmatmul.mubr.f32.gmra.mrb[0].mxu0 %v256
  %v7942 = vpop.f32.mrb[0].mxu0
  %v7943 = vadd.f32 0.0, %v7942
  %v7944 = vpop.f32.mrb[0].mxu0
  %7945 = vmatprep.mubr.f32.mxu0 %v670
  %7946 = vmatmul.mubr.f32.gmra.mrb[0].mxu0 %v258
  %v7947 = vpop.f32.mrb[0].mxu0
  %v7948 = vadd.f32 0.0, %v7947
  %v7949 = vpop.f32.mrb[0].mxu0
  %7950 = vdwg.mxu0
  %v7951 = vmax.f32 %v7353, %v7503
  %v7952 = vmax.f32 %v7358, %v7508
  %v7953 = vmax.f32 %v7363, %v7513
  %v7954 = vmax.f32 %v7368, %v7518
  %v7955 = vmax.f32 %v7373, %v7523
  %v7956 = vmax.f32 %v7378, %v7528
  %v7957 = vmax.f32 %v7383, %v7533
  %v7958 = vmax.f32 %v7388, %v7538
  %v7959 = vmax.f32 %v7393, %v7543
  %v7960 = vmax.f32 %v7398, %v7548
  %v7961 = vmax.f32 %v7403, %v7553
  %v7962 = vmax.f32 %v7408, %v7558
  %v7963 = vmax.f32 %v7413, %v7563
  %v7964 = vmax.f32 %v7418, %v7568
  %v7965 = vmax.f32 %v7423, %v7573
  %v7966 = vmax.f32 %v7428, %v7578
  %v7967 = vmax.f32 %v7433, %v7583
  %v7968 = vmax.f32 %v7438, %v7588
  %v7969 = vmax.f32 %v7443, %v7593
  %v7970 = vmax.f32 %v7448, %v7598
  %v7971 = vmax.f32 %v7453, %v7603
  %v7972 = vmax.f32 %v7458, %v7608
  %v7973 = vmax.f32 %v7463, %v7613
  %v7974 = vmax.f32 %v7468, %v7618
  %v7975 = vmax.f32 %v7473, %v7623
  %v7976 = vmax.f32 %v7478, %v7628
  %v7977 = vmax.f32 %v7483, %v7633
  %v7978 = vmax.f32 %v7488, %v7638
  %v7979 = vmax.f32 %v7493, %v7643
  %v7980 = vmax.f32 %v7498, %v7648
  %v7981 = vmax.f32 %v7653, %v7803
  %v7982 = vmax.f32 %v7658, %v7808
  %v7983 = vmax.f32 %v7663, %v7813
  %v7984 = vmax.f32 %v7668, %v7818
  %v7985 = vmax.f32 %v7673, %v7823
  %v7986 = vmax.f32 %v7678, %v7828
  %v7987 = vmax.f32 %v7683, %v7833
  %v7988 = vmax.f32 %v7688, %v7838
  %v7989 = vmax.f32 %v7693, %v7843
  %v7990 = vmax.f32 %v7698, %v7848
  %v7991 = vmax.f32 %v7703, %v7853
  %v7992 = vmax.f32 %v7708, %v7858
  %v7993 = vmax.f32 %v7713, %v7863
  %v7994 = vmax.f32 %v7718, %v7868
  %v7995 = vmax.f32 %v7723, %v7873
  %v7996 = vmax.f32 %v7728, %v7878
  %v7997 = vmax.f32 %v7733, %v7883
  %v7998 = vmax.f32 %v7738, %v7888
  %v7999 = vmax.f32 %v7743, %v7893
  %v8000 = vmax.f32 %v7748, %v7898
  %v8001 = vmax.f32 %v7753, %v7903
  %v8002 = vmax.f32 %v7758, %v7908
  %v8003 = vmax.f32 %v7763, %v7913
  %v8004 = vmax.f32 %v7768, %v7918
  %v8005 = vmax.f32 %v7773, %v7923
  %v8006 = vmax.f32 %v7778, %v7928
  %v8007 = vmax.f32 %v7783, %v7933
  %v8008 = vmax.f32 %v7788, %v7938
  %v8009 = vmax.f32 %v7793, %v7943
  %v8010 = vmax.f32 %v7798, %v7948
  %v8011 = vmax.f32 %v7951, %v7981
  %v8012 = vmax.f32 %v7952, %v7982
  %v8013 = vmax.f32 %v7953, %v7983
  %v8014 = vmax.f32 %v7954, %v7984
  %v8015 = vmax.f32 %v7955, %v7985
  %v8016 = vmax.f32 %v7956, %v7986
  %v8017 = vmax.f32 %v7957, %v7987
  %v8018 = vmax.f32 %v7958, %v7988
  %v8019 = vmax.f32 %v7959, %v7989
  %v8020 = vmax.f32 %v7960, %v7990
  %v8021 = vmax.f32 %v7961, %v7991
  %v8022 = vmax.f32 %v7962, %v7992
  %v8023 = vmax.f32 %v7963, %v7993
  %v8024 = vmax.f32 %v7964, %v7994
  %v8025 = vmax.f32 %v7965, %v7995
  %v8026 = vmax.f32 %v7966, %v7996
  %v8027 = vmax.f32 %v7967, %v7997
  %v8028 = vmax.f32 %v7968, %v7998
  %v8029 = vmax.f32 %v7969, %v7999
  %v8030 = vmax.f32 %v7970, %v8000
  %v8031 = vmax.f32 %v7971, %v8001
  %v8032 = vmax.f32 %v7972, %v8002
  %v8033 = vmax.f32 %v7973, %v8003
  %v8034 = vmax.f32 %v7974, %v8004
  %v8035 = vmax.f32 %v7975, %v8005
  %v8036 = vmax.f32 %v7976, %v8006
  %v8037 = vmax.f32 %v7977, %v8007
  %v8038 = vmax.f32 %v7978, %v8008
  %v8039 = vmax.f32 %v7979, %v8009
  %v8040 = vmax.f32 %v7980, %v8010
  %v8041 = vadd.f32 %v8011, %v1430
  %v8042 = vadd.f32 %v8012, %v1435
  %v8043 = vadd.f32 %v8013, %v1440
  %v8044 = vadd.f32 %v8014, %v1445
  %v8045 = vadd.f32 %v8015, %v1450
  %v8046 = vadd.f32 %v8016, %v1455
  %v8047 = vadd.f32 %v8017, %v1460
  %v8048 = vadd.f32 %v8018, %v1465
  %v8049 = vadd.f32 %v8019, %v1470
  %v8050 = vadd.f32 %v8020, %v1475
  %v8051 = vadd.f32 %v8021, %v1480
  %v8052 = vadd.f32 %v8022, %v1485
  %v8053 = vadd.f32 %v8023, %v1490
  %v8054 = vadd.f32 %v8024, %v1495
  %v8055 = vadd.f32 %v8025, %v1500
  %v8056 = vadd.f32 %v8026, %v1505
  %v8057 = vadd.f32 %v8027, %v1510
  %v8058 = vadd.f32 %v8028, %v1515
  %v8059 = vadd.f32 %v8029, %v1520
  %v8060 = vadd.f32 %v8030, %v1525
  %v8061 = vadd.f32 %v8031, %v1530
  %v8062 = vadd.f32 %v8032, %v1535
  %v8063 = vadd.f32 %v8033, %v1540
  %v8064 = vadd.f32 %v8034, %v1545
  %v8065 = vadd.f32 %v8035, %v1550
  %v8066 = vadd.f32 %v8036, %v1555
  %v8067 = vadd.f32 %v8037, %v1560
  %v8068 = vadd.f32 %v8038, %v1565
  %v8069 = vadd.f32 %v8039, %v1570
  %v8070 = vadd.f32 %v8040, %v1575
  %v8071 = vmax.f32 %v8041, 0.0
  %v8072 = vmax.f32 %v8042, 0.0
  %v8073 = vmax.f32 %v8043, 0.0
  %v8074 = vmax.f32 %v8044, 0.0
  %v8075 = vmax.f32 %v8045, 0.0
  %v8076 = vmax.f32 %v8046, 0.0
  %v8077 = vmax.f32 %v8047, 0.0
  %v8078 = vmax.f32 %v8048, 0.0
  %v8079 = vmax.f32 %v8049, 0.0
  %v8080 = vmax.f32 %v8050, 0.0
  %v8081 = vmax.f32 %v8051, 0.0
  %v8082 = vmax.f32 %v8052, 0.0
  %v8083 = vmax.f32 %v8053, 0.0
  %v8084 = vmax.f32 %v8054, 0.0
  %v8085 = vmax.f32 %v8055, 0.0
  %v8086 = vmax.f32 %v8056, 0.0
  %v8087 = vmax.f32 %v8057, 0.0
  %v8088 = vmax.f32 %v8058, 0.0
  %v8089 = vmax.f32 %v8059, 0.0
  %v8090 = vmax.f32 %v8060, 0.0
  %v8091 = vmax.f32 %v8061, 0.0
  %v8092 = vmax.f32 %v8062, 0.0
  %v8093 = vmax.f32 %v8063, 0.0
  %v8094 = vmax.f32 %v8064, 0.0
  %v8095 = vmax.f32 %v8065, 0.0
  %v8096 = vmax.f32 %v8066, 0.0
  %v8097 = vmax.f32 %v8067, 0.0
  %v8098 = vmax.f32 %v8068, 0.0
  %v8099 = vmax.f32 %v8069, 0.0
  %v8100 = vmax.f32 %v8070, 0.0
  %s8101 = scalar_lea.vmem %s3, 224
  %v8102 = vld [vmem:[%s8101] sm:$0xff]
  %v8103 = vld [vmem:[%s8101 + $0x8] sm:$0xff]
  %v8104 = vld [vmem:[%s8101 + $0x10] sm:$0x3]
  %v8105 = vld [vmem:[%s8101 + $0x18] sm:$0x3]
  %v8107 = vsel %vm2482, %v8103, 0
  %v8110 = vsel %vm2482, %v8105, 0
  %8112 = vmatprep.subr.mxu0 0.0
  %8113 = vmatpush1.msra.mxu0 %v8071
  %8114 = vmatprep.subr.mxu0 0.0
  %8115 = vmatpush1.msra.mxu0 %v8072
  %8116 = vmatprep.subr.mxu0 0.0
  %8117 = vmatpush1.msra.mxu0 %v8073
  %8118 = vmatprep.subr.mxu0 0.0
  %8119 = vmatpush1.msra.mxu0 %v8074
  %8120 = vmatprep.subr.mxu0 0.0
  %8121 = vmatpush1.msra.mxu0 %v8075
  %8122 = vmatprep.subr.mxu0 0.0
  %8123 = vmatpush1.msra.mxu0 %v8076
  %8124 = vmatprep.subr.mxu0 0.0
  %8125 = vmatpush1.msra.mxu0 %v8077
  %8126 = vmatprep.subr.mxu0 0.0
  %8127 = vmatpush1.msra.mxu0 %v8078
  %8128 = vmatprep.subr.mxu0 0.0
  %8129 = vmatpush1.msra.mxu0 %v8079
  %8130 = vmatprep.subr.mxu0 0.0
  %8131 = vmatpush1.msra.mxu0 %v8080
  %8132 = vmatprep.subr.mxu0 0.0
  %8133 = vmatpush1.msra.mxu0 %v8081
  %8134 = vmatprep.subr.mxu0 0.0
  %8135 = vmatpush1.msra.mxu0 %v8082
  %8136 = vmatprep.subr.mxu0 0.0
  %8137 = vmatpush1.msra.mxu0 %v8083
  %8138 = vmatprep.subr.mxu0 0.0
  %8139 = vmatpush1.msra.mxu0 %v8084
  %8140 = vmatprep.subr.mxu0 0.0
  %8141 = vmatpush1.msra.mxu0 %v8085
  %8142 = vmatprep.subr.mxu0 0.0
  %8143 = vmatpush1.msra.mxu0 %v8086
  %8144 = vmatprep.subr.mxu0 0.0
  %8145 = vmatpush1.msra.mxu0 %v8087
  %8146 = vmatprep.subr.mxu0 0.0
  %8147 = vmatpush1.msra.mxu0 %v8088
  %8148 = vmatprep.subr.mxu0 0.0
  %8149 = vmatpush1.msra.mxu0 %v8089
  %8150 = vmatprep.subr.mxu0 0.0
  %8151 = vmatpush1.msra.mxu0 %v8090
  %8152 = vmatprep.subr.mxu0 0.0
  %8153 = vmatpush1.msra.mxu0 %v8091
  %8154 = vmatprep.subr.mxu0 0.0
  %8155 = vmatpush1.msra.mxu0 %v8092
  %8156 = vmatprep.subr.mxu0 0.0
  %8157 = vmatpush1.msra.mxu0 %v8093
  %8158 = vmatprep.subr.mxu0 0.0
  %8159 = vmatpush1.msra.mxu0 %v8094
  %8160 = vmatprep.subr.mxu0 0.0
  %8161 = vmatpush1.msra.mxu0 %v8095
  %8162 = vmatprep.subr.mxu0 0.0
  %8163 = vmatpush1.msra.mxu0 %v8096
  %8164 = vmatprep.subr.mxu0 0.0
  %8165 = vmatpush1.msra.mxu0 %v8097
  %8166 = vmatprep.subr.mxu0 0.0
  %8167 = vmatpush1.msra.mxu0 %v8098
  %8168 = vmatprep.subr.mxu0 0.0
  %8169 = vmatpush1.msra.mxu0 %v8099
  %8170 = vmatprep.subr.mxu0 0.0
  %8171 = vmatpush1.msra.mxu0 %v8100
  %8172 = vmatprep.subr.mxu0 0.0
  %8173 = vmatpush1.msra.mxu0 0.0
  %8174 = vmatprep.subr.mxu0 0.0
  %8175 = vmatpush1.msra.mxu0 0.0
  %8176 = vmatprep.mubr.f32.mxu0 %v8107
  %8177 = vmatmul.mubr.f32.gmra.mrb[0].mxu0 %v8102
  %v8178 = vpop.f32.mrb[0].mxu0
  %v8179 = vadd.f32 0.0, %v8178
  %v8180 = vpop.f32.mrb[0].mxu0
  %8181 = vmatprep.mubr.f32.mxu0 %v8110
  %8182 = vmatmul.mubr.f32.gmra.mrb[0].mxu0 %v8104
  %v8183 = vpop.f32.mrb[0].mxu0
  %v8184 = vadd.f32 0.0, %v8183
  %v8185 = vpop.f32.mrb[0].mxu0
  %8186 = vdwg.mxu0
  %v8187 = vadd.f32 %v7263, %v8179
  %v8188 = vadd.f32 %v7264, %v8184
  %v8189 = vld [vmem:[%s0 + $0x1c0] sm:$0xff]
  %v8190 = vld [vmem:[%s0 + $0x1c8] sm:$0xff]
  %v8191 = vld [vmem:[%s0 + $0x1d0] sm:$0xff]
  %v8192 = vld [vmem:[%s0 + $0x1d8] sm:$0xff]
  %v8193 = vld [vmem:[%s0 + $0x1e0] sm:$0xff]
  %v8194 = vld [vmem:[%s0 + $0x1e8] sm:$0xff]
  %v8195 = vld [vmem:[%s0 + $0x1f0] sm:$0xff]
  %v8196 = vld [vmem:[%s0 + $0x1f8] sm:$0xff]
  %v8197 = vld [vmem:[%s0 + $0x200] sm:$0xff]
  %v8198 = vld [vmem:[%s0 + $0x208] sm:$0xff]
  %v8199 = vld [vmem:[%s0 + $0x210] sm:$0xff]
  %v8200 = vld [vmem:[%s0 + $0x218] sm:$0xff]
  %v8201 = vld [vmem:[%s0 + $0x220] sm:$0xff]
  %v8202 = vld [vmem:[%s0 + $0x228] sm:$0xff]
  %v8203 = vld [vmem:[%s0 + $0x230] sm:$0xff]
  %v8204 = vld [vmem:[%s0 + $0x238] sm:$0xff]
  %v8205 = vld [vmem:[%s0 + $0x240] sm:$0xff]
  %v8206 = vld [vmem:[%s0 + $0x248] sm:$0xff]
  %v8207 = vld [vmem:[%s0 + $0x250] sm:$0xff]
  %v8208 = vld [vmem:[%s0 + $0x258] sm:$0xff]
  %v8209 = vld [vmem:[%s0 + $0x260] sm:$0xff]
  %8210 = vmatprep.subr.mxu0 0.0
  %8211 = vmatpush1.msra.mxu0 %v8189
  %8212 = vmatprep.subr.mxu0 0.0
  %8213 = vmatpush1.msra.mxu0 %v8190
  %8214 = vmatprep.subr.mxu0 0.0
  %8215 = vmatpush1.msra.mxu0 %v8191
  %8216 = vmatprep.subr.mxu0 0.0
  %8217 = vmatpush1.msra.mxu0 %v8192
  %8218 = vmatprep.subr.mxu0 0.0
  %8219 = vmatpush1.msra.mxu0 %v8193
  %8220 = vmatprep.subr.mxu0 0.0
  %8221 = vmatpush1.msra.mxu0 %v8194
  %8222 = vmatprep.subr.mxu0 0.0
  %8223 = vmatpush1.msra.mxu0 %v8195
  %8224 = vmatprep.subr.mxu0 0.0
  %8225 = vmatpush1.msra.mxu0 %v8196
  %8226 = vmatprep.subr.mxu0 0.0
  %8227 = vmatpush1.msra.mxu0 %v8197
  %8228 = vmatprep.subr.mxu0 0.0
  %8229 = vmatpush1.msra.mxu0 %v8198
  %8230 = vmatprep.subr.mxu0 0.0
  %8231 = vmatpush1.msra.mxu0 %v8199
  %8232 = vmatprep.subr.mxu0 0.0
  %8233 = vmatpush1.msra.mxu0 %v8200
  %8234 = vmatprep.subr.mxu0 0.0
  %8235 = vmatpush1.msra.mxu0 %v8201
  %8236 = vmatprep.subr.mxu0 0.0
  %8237 = vmatpush1.msra.mxu0 %v8202
  %8238 = vmatprep.subr.mxu0 0.0
  %8239 = vmatpush1.msra.mxu0 %v8203
  %8240 = vmatprep.subr.mxu0 0.0
  %8241 = vmatpush1.msra.mxu0 %v8204
  %8242 = vmatprep.subr.mxu0 0.0
  %8243 = vmatpush1.msra.mxu0 %v8205
  %8244 = vmatprep.subr.mxu0 0.0
  %8245 = vmatpush1.msra.mxu0 %v8206
  %8246 = vmatprep.subr.mxu0 0.0
  %8247 = vmatpush1.msra.mxu0 %v8207
  %8248 = vmatprep.subr.mxu0 0.0
  %8249 = vmatpush1.msra.mxu0 %v8208
  %8250 = vmatprep.subr.mxu0 0.0
  %8251 = vmatpush1.msra.mxu0 %v8209
  %8252 = vmatprep.subr.mxu0 0.0
  %8253 = vmatpush1.msra.mxu0 0.0
  %8254 = vmatprep.subr.mxu0 0.0
  %8255 = vmatpush1.msra.mxu0 0.0
  %8256 = vmatprep.subr.mxu0 0.0
  %8257 = vmatpush1.msra.mxu0 0.0
  %8258 = vmatprep.subr.mxu0 0.0
  %8259 = vmatpush1.msra.mxu0 0.0
  %8260 = vmatprep.subr.mxu0 0.0
  %8261 = vmatpush1.msra.mxu0 0.0
  %8262 = vmatprep.subr.mxu0 0.0
  %8263 = vmatpush1.msra.mxu0 0.0
  %8264 = vmatprep.subr.mxu0 0.0
  %8265 = vmatpush1.msra.mxu0 0.0
  %8266 = vmatprep.subr.mxu0 0.0
  %8267 = vmatpush1.msra.mxu0 0.0
  %8268 = vmatprep.subr.mxu0 0.0
  %8269 = vmatpush1.msra.mxu0 0.0
  %8270 = vmatprep.subr.mxu0 0.0
  %8271 = vmatpush1.msra.mxu0 0.0
  %8272 = vmatprep.subr.mxu0 0.0
  %8273 = vmatpush1.msra.mxu0 0.0
  %8274 = vmatprep.mubr.f32.mxu0 %v313
  %8275 = vmatmul.mubr.f32.gmra.mrb[0].mxu0 %v20
  %v8276 = vpop.f32.mrb[0].mxu0
  %v8277 = vadd.f32 0.0, %v8276
  %v8278 = vpop.f32.mrb[0].mxu0
  %8279 = vmatprep.mubr.f32.mxu0 %v316
  %8280 = vmatmul.mubr.f32.gmra.mrb[0].mxu0 %v22
  %v8281 = vpop.f32.mrb[0].mxu0
  %v8282 = vadd.f32 0.0, %v8281
  %v8283 = vpop.f32.mrb[0].mxu0
  %8284 = vmatprep.mubr.f32.mxu0 %v319
  %8285 = vmatmul.mubr.f32.gmra.mrb[0].mxu0 %v24
  %v8286 = vpop.f32.mrb[0].mxu0
  %v8287 = vadd.f32 0.0, %v8286
  %v8288 = vpop.f32.mrb[0].mxu0
  %8289 = vmatprep.mubr.f32.mxu0 %v322
  %8290 = vmatmul.mubr.f32.gmra.mrb[0].mxu0 %v26
  %v8291 = vpop.f32.mrb[0].mxu0
  %v8292 = vadd.f32 0.0, %v8291
  %v8293 = vpop.f32.mrb[0].mxu0
  %8294 = vmatprep.mubr.f32.mxu0 %v325
  %8295 = vmatmul.mubr.f32.gmra.mrb[0].mxu0 %v28
  %v8296 = vpop.f32.mrb[0].mxu0
  %v8297 = vadd.f32 0.0, %v8296
  %v8298 = vpop.f32.mrb[0].mxu0
  %8299 = vmatprep.mubr.f32.mxu0 %v328
  %8300 = vmatmul.mubr.f32.gmra.mrb[0].mxu0 %v30
  %v8301 = vpop.f32.mrb[0].mxu0
  %v8302 = vadd.f32 0.0, %v8301
  %v8303 = vpop.f32.mrb[0].mxu0
  %8304 = vmatprep.mubr.f32.mxu0 %v331
  %8305 = vmatmul.mubr.f32.gmra.mrb[0].mxu0 %v32
  %v8306 = vpop.f32.mrb[0].mxu0
  %v8307 = vadd.f32 0.0, %v8306
  %v8308 = vpop.f32.mrb[0].mxu0
  %8309 = vmatprep.mubr.f32.mxu0 %v334
  %8310 = vmatmul.mubr.f32.gmra.mrb[0].mxu0 %v34
  %v8311 = vpop.f32.mrb[0].mxu0
  %v8312 = vadd.f32 0.0, %v8311
  %v8313 = vpop.f32.mrb[0].mxu0
  %8314 = vmatprep.mubr.f32.mxu0 %v337
  %8315 = vmatmul.mubr.f32.gmra.mrb[0].mxu0 %v36
  %v8316 = vpop.f32.mrb[0].mxu0
  %v8317 = vadd.f32 0.0, %v8316
  %v8318 = vpop.f32.mrb[0].mxu0
  %8319 = vmatprep.mubr.f32.mxu0 %v340
  %8320 = vmatmul.mubr.f32.gmra.mrb[0].mxu0 %v38
  %v8321 = vpop.f32.mrb[0].mxu0
  %v8322 = vadd.f32 0.0, %v8321
  %v8323 = vpop.f32.mrb[0].mxu0
  %8324 = vmatprep.mubr.f32.mxu0 %v343
  %8325 = vmatmul.mubr.f32.gmra.mrb[0].mxu0 %v40
  %v8326 = vpop.f32.mrb[0].mxu0
  %v8327 = vadd.f32 0.0, %v8326
  %v8328 = vpop.f32.mrb[0].mxu0
  %8329 = vmatprep.mubr.f32.mxu0 %v346
  %8330 = vmatmul.mubr.f32.gmra.mrb[0].mxu0 %v42
  %v8331 = vpop.f32.mrb[0].mxu0
  %v8332 = vadd.f32 0.0, %v8331
  %v8333 = vpop.f32.mrb[0].mxu0
  %8334 = vmatprep.mubr.f32.mxu0 %v349
  %8335 = vmatmul.mubr.f32.gmra.mrb[0].mxu0 %v44
  %v8336 = vpop.f32.mrb[0].mxu0
  %v8337 = vadd.f32 0.0, %v8336
  %v8338 = vpop.f32.mrb[0].mxu0
  %8339 = vmatprep.mubr.f32.mxu0 %v352
  %8340 = vmatmul.mubr.f32.gmra.mrb[0].mxu0 %v46
  %v8341 = vpop.f32.mrb[0].mxu0
  %v8342 = vadd.f32 0.0, %v8341
  %v8343 = vpop.f32.mrb[0].mxu0
  %8344 = vmatprep.mubr.f32.mxu0 %v355
  %8345 = vmatmul.mubr.f32.gmra.mrb[0].mxu0 %v48
  %v8346 = vpop.f32.mrb[0].mxu0
  %v8347 = vadd.f32 0.0, %v8346
  %v8348 = vpop.f32.mrb[0].mxu0
  %8349 = vmatprep.mubr.f32.mxu0 %v358
  %8350 = vmatmul.mubr.f32.gmra.mrb[0].mxu0 %v50
  %v8351 = vpop.f32.mrb[0].mxu0
  %v8352 = vadd.f32 0.0, %v8351
  %v8353 = vpop.f32.mrb[0].mxu0
  %8354 = vmatprep.mubr.f32.mxu0 %v361
  %8355 = vmatmul.mubr.f32.gmra.mrb[0].mxu0 %v52
  %v8356 = vpop.f32.mrb[0].mxu0
  %v8357 = vadd.f32 0.0, %v8356
  %v8358 = vpop.f32.mrb[0].mxu0
  %8359 = vmatprep.mubr.f32.mxu0 %v364
  %8360 = vmatmul.mubr.f32.gmra.mrb[0].mxu0 %v54
  %v8361 = vpop.f32.mrb[0].mxu0
  %v8362 = vadd.f32 0.0, %v8361
  %v8363 = vpop.f32.mrb[0].mxu0
  %8364 = vmatprep.mubr.f32.mxu0 %v367
  %8365 = vmatmul.mubr.f32.gmra.mrb[0].mxu0 %v56
  %v8366 = vpop.f32.mrb[0].mxu0
  %v8367 = vadd.f32 0.0, %v8366
  %v8368 = vpop.f32.mrb[0].mxu0
  %8369 = vmatprep.mubr.f32.mxu0 %v370
  %8370 = vmatmul.mubr.f32.gmra.mrb[0].mxu0 %v58
  %v8371 = vpop.f32.mrb[0].mxu0
  %v8372 = vadd.f32 0.0, %v8371
  %v8373 = vpop.f32.mrb[0].mxu0
  %8374 = vmatprep.mubr.f32.mxu0 %v373
  %8375 = vmatmul.mubr.f32.gmra.mrb[0].mxu0 %v60
  %v8376 = vpop.f32.mrb[0].mxu0
  %v8377 = vadd.f32 0.0, %v8376
  %v8378 = vpop.f32.mrb[0].mxu0
  %8379 = vmatprep.mubr.f32.mxu0 %v376
  %8380 = vmatmul.mubr.f32.gmra.mrb[0].mxu0 %v62
  %v8381 = vpop.f32.mrb[0].mxu0
  %v8382 = vadd.f32 0.0, %v8381
  %v8383 = vpop.f32.mrb[0].mxu0
  %8384 = vmatprep.mubr.f32.mxu0 %v379
  %8385 = vmatmul.mubr.f32.gmra.mrb[0].mxu0 %v64
  %v8386 = vpop.f32.mrb[0].mxu0
  %v8387 = vadd.f32 0.0, %v8386
  %v8388 = vpop.f32.mrb[0].mxu0
  %8389 = vmatprep.mubr.f32.mxu0 %v382
  %8390 = vmatmul.mubr.f32.gmra.mrb[0].mxu0 %v66
  %v8391 = vpop.f32.mrb[0].mxu0
  %v8392 = vadd.f32 0.0, %v8391
  %v8393 = vpop.f32.mrb[0].mxu0
  %8394 = vmatprep.mubr.f32.mxu0 %v385
  %8395 = vmatmul.mubr.f32.gmra.mrb[0].mxu0 %v68
  %v8396 = vpop.f32.mrb[0].mxu0
  %v8397 = vadd.f32 0.0, %v8396
  %v8398 = vpop.f32.mrb[0].mxu0
  %8399 = vmatprep.mubr.f32.mxu0 %v388
  %8400 = vmatmul.mubr.f32.gmra.mrb[0].mxu0 %v70
  %v8401 = vpop.f32.mrb[0].mxu0
  %v8402 = vadd.f32 0.0, %v8401
  %v8403 = vpop.f32.mrb[0].mxu0
  %8404 = vmatprep.mubr.f32.mxu0 %v391
  %8405 = vmatmul.mubr.f32.gmra.mrb[0].mxu0 %v72
  %v8406 = vpop.f32.mrb[0].mxu0
  %v8407 = vadd.f32 0.0, %v8406
  %v8408 = vpop.f32.mrb[0].mxu0
  %8409 = vmatprep.mubr.f32.mxu0 %v394
  %8410 = vmatmul.mubr.f32.gmra.mrb[0].mxu0 %v74
  %v8411 = vpop.f32.mrb[0].mxu0
  %v8412 = vadd.f32 0.0, %v8411
  %v8413 = vpop.f32.mrb[0].mxu0
  %8414 = vmatprep.mubr.f32.mxu0 %v397
  %8415 = vmatmul.mubr.f32.gmra.mrb[0].mxu0 %v76
  %v8416 = vpop.f32.mrb[0].mxu0
  %v8417 = vadd.f32 0.0, %v8416
  %v8418 = vpop.f32.mrb[0].mxu0
  %8419 = vmatprep.mubr.f32.mxu0 %v400
  %8420 = vmatmul.mubr.f32.gmra.mrb[0].mxu0 %v78
  %v8421 = vpop.f32.mrb[0].mxu0
  %v8422 = vadd.f32 0.0, %v8421
  %v8423 = vpop.f32.mrb[0].mxu0
  %8424 = vmatprep.mubr.f32.mxu0 %v403
  %8425 = vmatmul.mubr.f32.gmra.mrb[0].mxu0 %v80
  %v8426 = vpop.f32.mrb[0].mxu0
  %v8427 = vadd.f32 0.0, %v8426
  %v8428 = vpop.f32.mrb[0].mxu0
  %8429 = vmatprep.mubr.f32.mxu0 %v406
  %8430 = vmatmul.mubr.f32.gmra.mrb[0].mxu0 %v82
  %v8431 = vpop.f32.mrb[0].mxu0
  %v8432 = vadd.f32 0.0, %v8431
  %v8433 = vpop.f32.mrb[0].mxu0
  %8434 = vmatprep.mubr.f32.mxu0 %v409
  %8435 = vmatmul.mubr.f32.gmra.mrb[0].mxu0 %v84
  %v8436 = vpop.f32.mrb[0].mxu0
  %v8437 = vadd.f32 0.0, %v8436
  %v8438 = vpop.f32.mrb[0].mxu0
  %8439 = vmatprep.mubr.f32.mxu0 %v412
  %8440 = vmatmul.mubr.f32.gmra.mrb[0].mxu0 %v86
  %v8441 = vpop.f32.mrb[0].mxu0
  %v8442 = vadd.f32 0.0, %v8441
  %v8443 = vpop.f32.mrb[0].mxu0
  %8444 = vmatprep.mubr.f32.mxu0 %v415
  %8445 = vmatmul.mubr.f32.gmra.mrb[0].mxu0 %v88
  %v8446 = vpop.f32.mrb[0].mxu0
  %v8447 = vadd.f32 0.0, %v8446
  %v8448 = vpop.f32.mrb[0].mxu0
  %8449 = vmatprep.mubr.f32.mxu0 %v418
  %8450 = vmatmul.mubr.f32.gmra.mrb[0].mxu0 %v90
  %v8451 = vpop.f32.mrb[0].mxu0
  %v8452 = vadd.f32 0.0, %v8451
  %v8453 = vpop.f32.mrb[0].mxu0
  %8454 = vmatprep.mubr.f32.mxu0 %v421
  %8455 = vmatmul.mubr.f32.gmra.mrb[0].mxu0 %v92
  %v8456 = vpop.f32.mrb[0].mxu0
  %v8457 = vadd.f32 0.0, %v8456
  %v8458 = vpop.f32.mrb[0].mxu0
  %8459 = vmatprep.mubr.f32.mxu0 %v424
  %8460 = vmatmul.mubr.f32.gmra.mrb[0].mxu0 %v94
  %v8461 = vpop.f32.mrb[0].mxu0
  %v8462 = vadd.f32 0.0, %v8461
  %v8463 = vpop.f32.mrb[0].mxu0
  %8464 = vmatprep.mubr.f32.mxu0 %v427
  %8465 = vmatmul.mubr.f32.gmra.mrb[0].mxu0 %v96
  %v8466 = vpop.f32.mrb[0].mxu0
  %v8467 = vadd.f32 0.0, %v8466
  %v8468 = vpop.f32.mrb[0].mxu0
  %8469 = vmatprep.mubr.f32.mxu0 %v430
  %8470 = vmatmul.mubr.f32.gmra.mrb[0].mxu0 %v98
  %v8471 = vpop.f32.mrb[0].mxu0
  %v8472 = vadd.f32 0.0, %v8471
  %v8473 = vpop.f32.mrb[0].mxu0
  %8474 = vmatprep.mubr.f32.mxu0 %v433
  %8475 = vmatmul.mubr.f32.gmra.mrb[0].mxu0 %v100
  %v8476 = vpop.f32.mrb[0].mxu0
  %v8477 = vadd.f32 0.0, %v8476
  %v8478 = vpop.f32.mrb[0].mxu0
  %8479 = vmatprep.mubr.f32.mxu0 %v436
  %8480 = vmatmul.mubr.f32.gmra.mrb[0].mxu0 %v102
  %v8481 = vpop.f32.mrb[0].mxu0
  %v8482 = vadd.f32 0.0, %v8481
  %v8483 = vpop.f32.mrb[0].mxu0
  %8484 = vmatprep.mubr.f32.mxu0 %v439
  %8485 = vmatmul.mubr.f32.gmra.mrb[0].mxu0 %v104
  %v8486 = vpop.f32.mrb[0].mxu0
  %v8487 = vadd.f32 0.0, %v8486
  %v8488 = vpop.f32.mrb[0].mxu0
  %8489 = vmatprep.mubr.f32.mxu0 %v442
  %8490 = vmatmul.mubr.f32.gmra.mrb[0].mxu0 %v106
  %v8491 = vpop.f32.mrb[0].mxu0
  %v8492 = vadd.f32 0.0, %v8491
  %v8493 = vpop.f32.mrb[0].mxu0
  %8494 = vmatprep.mubr.f32.mxu0 %v445
  %8495 = vmatmul.mubr.f32.gmra.mrb[0].mxu0 %v108
  %v8496 = vpop.f32.mrb[0].mxu0
  %v8497 = vadd.f32 0.0, %v8496
  %v8498 = vpop.f32.mrb[0].mxu0
  %8499 = vmatprep.mubr.f32.mxu0 %v448
  %8500 = vmatmul.mubr.f32.gmra.mrb[0].mxu0 %v110
  %v8501 = vpop.f32.mrb[0].mxu0
  %v8502 = vadd.f32 0.0, %v8501
  %v8503 = vpop.f32.mrb[0].mxu0
  %8504 = vmatprep.mubr.f32.mxu0 %v451
  %8505 = vmatmul.mubr.f32.gmra.mrb[0].mxu0 %v112
  %v8506 = vpop.f32.mrb[0].mxu0
  %v8507 = vadd.f32 0.0, %v8506
  %v8508 = vpop.f32.mrb[0].mxu0
  %8509 = vmatprep.mubr.f32.mxu0 %v454
  %8510 = vmatmul.mubr.f32.gmra.mrb[0].mxu0 %v114
  %v8511 = vpop.f32.mrb[0].mxu0
  %v8512 = vadd.f32 0.0, %v8511
  %v8513 = vpop.f32.mrb[0].mxu0
  %8514 = vmatprep.mubr.f32.mxu0 %v457
  %8515 = vmatmul.mubr.f32.gmra.mrb[0].mxu0 %v116
  %v8516 = vpop.f32.mrb[0].mxu0
  %v8517 = vadd.f32 0.0, %v8516
  %v8518 = vpop.f32.mrb[0].mxu0
  %8519 = vmatprep.mubr.f32.mxu0 %v460
  %8520 = vmatmul.mubr.f32.gmra.mrb[0].mxu0 %v118
  %v8521 = vpop.f32.mrb[0].mxu0
  %v8522 = vadd.f32 0.0, %v8521
  %v8523 = vpop.f32.mrb[0].mxu0
  %8524 = vmatprep.mubr.f32.mxu0 %v463
  %8525 = vmatmul.mubr.f32.gmra.mrb[0].mxu0 %v120
  %v8526 = vpop.f32.mrb[0].mxu0
  %v8527 = vadd.f32 0.0, %v8526
  %v8528 = vpop.f32.mrb[0].mxu0
  %8529 = vmatprep.mubr.f32.mxu0 %v466
  %8530 = vmatmul.mubr.f32.gmra.mrb[0].mxu0 %v122
  %v8531 = vpop.f32.mrb[0].mxu0
  %v8532 = vadd.f32 0.0, %v8531
  %v8533 = vpop.f32.mrb[0].mxu0
  %8534 = vmatprep.mubr.f32.mxu0 %v469
  %8535 = vmatmul.mubr.f32.gmra.mrb[0].mxu0 %v124
  %v8536 = vpop.f32.mrb[0].mxu0
  %v8537 = vadd.f32 0.0, %v8536
  %v8538 = vpop.f32.mrb[0].mxu0
  %8539 = vmatprep.mubr.f32.mxu0 %v472
  %8540 = vmatmul.mubr.f32.gmra.mrb[0].mxu0 %v126
  %v8541 = vpop.f32.mrb[0].mxu0
  %v8542 = vadd.f32 0.0, %v8541
  %v8543 = vpop.f32.mrb[0].mxu0
  %8544 = vmatprep.mubr.f32.mxu0 %v475
  %8545 = vmatmul.mubr.f32.gmra.mrb[0].mxu0 %v128
  %v8546 = vpop.f32.mrb[0].mxu0
  %v8547 = vadd.f32 0.0, %v8546
  %v8548 = vpop.f32.mrb[0].mxu0
  %8549 = vmatprep.mubr.f32.mxu0 %v478
  %8550 = vmatmul.mubr.f32.gmra.mrb[0].mxu0 %v130
  %v8551 = vpop.f32.mrb[0].mxu0
  %v8552 = vadd.f32 0.0, %v8551
  %v8553 = vpop.f32.mrb[0].mxu0
  %8554 = vmatprep.mubr.f32.mxu0 %v481
  %8555 = vmatmul.mubr.f32.gmra.mrb[0].mxu0 %v132
  %v8556 = vpop.f32.mrb[0].mxu0
  %v8557 = vadd.f32 0.0, %v8556
  %v8558 = vpop.f32.mrb[0].mxu0
  %8559 = vmatprep.mubr.f32.mxu0 %v484
  %8560 = vmatmul.mubr.f32.gmra.mrb[0].mxu0 %v134
  %v8561 = vpop.f32.mrb[0].mxu0
  %v8562 = vadd.f32 0.0, %v8561
  %v8563 = vpop.f32.mrb[0].mxu0
  %8564 = vmatprep.mubr.f32.mxu0 %v487
  %8565 = vmatmul.mubr.f32.gmra.mrb[0].mxu0 %v136
  %v8566 = vpop.f32.mrb[0].mxu0
  %v8567 = vadd.f32 0.0, %v8566
  %v8568 = vpop.f32.mrb[0].mxu0
  %8569 = vmatprep.mubr.f32.mxu0 %v490
  %8570 = vmatmul.mubr.f32.gmra.mrb[0].mxu0 %v138
  %v8571 = vpop.f32.mrb[0].mxu0
  %v8572 = vadd.f32 0.0, %v8571
  %v8573 = vpop.f32.mrb[0].mxu0
  %8574 = vmatprep.mubr.f32.mxu0 %v493
  %8575 = vmatmul.mubr.f32.gmra.mrb[0].mxu0 %v140
  %v8576 = vpop.f32.mrb[0].mxu0
  %v8577 = vadd.f32 0.0, %v8576
  %v8578 = vpop.f32.mrb[0].mxu0
  %8579 = vmatprep.mubr.f32.mxu0 %v496
  %8580 = vmatmul.mubr.f32.gmra.mrb[0].mxu0 %v142
  %v8581 = vpop.f32.mrb[0].mxu0
  %v8582 = vadd.f32 0.0, %v8581
  %v8583 = vpop.f32.mrb[0].mxu0
  %8584 = vmatprep.mubr.f32.mxu0 %v499
  %8585 = vmatmul.mubr.f32.gmra.mrb[0].mxu0 %v144
  %v8586 = vpop.f32.mrb[0].mxu0
  %v8587 = vadd.f32 0.0, %v8586
  %v8588 = vpop.f32.mrb[0].mxu0
  %8589 = vmatprep.mubr.f32.mxu0 %v502
  %8590 = vmatmul.mubr.f32.gmra.mrb[0].mxu0 %v146
  %v8591 = vpop.f32.mrb[0].mxu0
  %v8592 = vadd.f32 0.0, %v8591
  %v8593 = vpop.f32.mrb[0].mxu0
  %8594 = vmatprep.mubr.f32.mxu0 %v505
  %8595 = vmatmul.mubr.f32.gmra.mrb[0].mxu0 %v148
  %v8596 = vpop.f32.mrb[0].mxu0
  %v8597 = vadd.f32 0.0, %v8596
  %v8598 = vpop.f32.mrb[0].mxu0
  %8599 = vmatprep.mubr.f32.mxu0 %v508
  %8600 = vmatmul.mubr.f32.gmra.mrb[0].mxu0 %v150
  %v8601 = vpop.f32.mrb[0].mxu0
  %v8602 = vadd.f32 0.0, %v8601
  %v8603 = vpop.f32.mrb[0].mxu0
  %8604 = vmatprep.mubr.f32.mxu0 %v511
  %8605 = vmatmul.mubr.f32.gmra.mrb[0].mxu0 %v152
  %v8606 = vpop.f32.mrb[0].mxu0
  %v8607 = vadd.f32 0.0, %v8606
  %v8608 = vpop.f32.mrb[0].mxu0
  %8609 = vmatprep.mubr.f32.mxu0 %v514
  %8610 = vmatmul.mubr.f32.gmra.mrb[0].mxu0 %v154
  %v8611 = vpop.f32.mrb[0].mxu0
  %v8612 = vadd.f32 0.0, %v8611
  %v8613 = vpop.f32.mrb[0].mxu0
  %8614 = vmatprep.mubr.f32.mxu0 %v517
  %8615 = vmatmul.mubr.f32.gmra.mrb[0].mxu0 %v156
  %v8616 = vpop.f32.mrb[0].mxu0
  %v8617 = vadd.f32 0.0, %v8616
  %v8618 = vpop.f32.mrb[0].mxu0
  %8619 = vmatprep.mubr.f32.mxu0 %v520
  %8620 = vmatmul.mubr.f32.gmra.mrb[0].mxu0 %v158
  %v8621 = vpop.f32.mrb[0].mxu0
  %v8622 = vadd.f32 0.0, %v8621
  %v8623 = vpop.f32.mrb[0].mxu0
  %8624 = vmatprep.mubr.f32.mxu0 %v523
  %8625 = vmatmul.mubr.f32.gmra.mrb[0].mxu0 %v160
  %v8626 = vpop.f32.mrb[0].mxu0
  %v8627 = vadd.f32 0.0, %v8626
  %v8628 = vpop.f32.mrb[0].mxu0
  %8629 = vmatprep.mubr.f32.mxu0 %v526
  %8630 = vmatmul.mubr.f32.gmra.mrb[0].mxu0 %v162
  %v8631 = vpop.f32.mrb[0].mxu0
  %v8632 = vadd.f32 0.0, %v8631
  %v8633 = vpop.f32.mrb[0].mxu0
  %8634 = vmatprep.mubr.f32.mxu0 %v529
  %8635 = vmatmul.mubr.f32.gmra.mrb[0].mxu0 %v164
  %v8636 = vpop.f32.mrb[0].mxu0
  %v8637 = vadd.f32 0.0, %v8636
  %v8638 = vpop.f32.mrb[0].mxu0
  %8639 = vmatprep.mubr.f32.mxu0 %v532
  %8640 = vmatmul.mubr.f32.gmra.mrb[0].mxu0 %v166
  %v8641 = vpop.f32.mrb[0].mxu0
  %v8642 = vadd.f32 0.0, %v8641
  %v8643 = vpop.f32.mrb[0].mxu0
  %8644 = vmatprep.mubr.f32.mxu0 %v535
  %8645 = vmatmul.mubr.f32.gmra.mrb[0].mxu0 %v168
  %v8646 = vpop.f32.mrb[0].mxu0
  %v8647 = vadd.f32 0.0, %v8646
  %v8648 = vpop.f32.mrb[0].mxu0
  %8649 = vmatprep.mubr.f32.mxu0 %v538
  %8650 = vmatmul.mubr.f32.gmra.mrb[0].mxu0 %v170
  %v8651 = vpop.f32.mrb[0].mxu0
  %v8652 = vadd.f32 0.0, %v8651
  %v8653 = vpop.f32.mrb[0].mxu0
  %8654 = vmatprep.mubr.f32.mxu0 %v541
  %8655 = vmatmul.mubr.f32.gmra.mrb[0].mxu0 %v172
  %v8656 = vpop.f32.mrb[0].mxu0
  %v8657 = vadd.f32 0.0, %v8656
  %v8658 = vpop.f32.mrb[0].mxu0
  %8659 = vmatprep.mubr.f32.mxu0 %v544
  %8660 = vmatmul.mubr.f32.gmra.mrb[0].mxu0 %v174
  %v8661 = vpop.f32.mrb[0].mxu0
  %v8662 = vadd.f32 0.0, %v8661
  %v8663 = vpop.f32.mrb[0].mxu0
  %8664 = vmatprep.mubr.f32.mxu0 %v547
  %8665 = vmatmul.mubr.f32.gmra.mrb[0].mxu0 %v176
  %v8666 = vpop.f32.mrb[0].mxu0
  %v8667 = vadd.f32 0.0, %v8666
  %v8668 = vpop.f32.mrb[0].mxu0
  %8669 = vmatprep.mubr.f32.mxu0 %v550
  %8670 = vmatmul.mubr.f32.gmra.mrb[0].mxu0 %v178
  %v8671 = vpop.f32.mrb[0].mxu0
  %v8672 = vadd.f32 0.0, %v8671
  %v8673 = vpop.f32.mrb[0].mxu0
  %8674 = vmatprep.mubr.f32.mxu0 %v553
  %8675 = vmatmul.mubr.f32.gmra.mrb[0].mxu0 %v180
  %v8676 = vpop.f32.mrb[0].mxu0
  %v8677 = vadd.f32 0.0, %v8676
  %v8678 = vpop.f32.mrb[0].mxu0
  %8679 = vmatprep.mubr.f32.mxu0 %v556
  %8680 = vmatmul.mubr.f32.gmra.mrb[0].mxu0 %v182
  %v8681 = vpop.f32.mrb[0].mxu0
  %v8682 = vadd.f32 0.0, %v8681
  %v8683 = vpop.f32.mrb[0].mxu0
  %8684 = vmatprep.mubr.f32.mxu0 %v559
  %8685 = vmatmul.mubr.f32.gmra.mrb[0].mxu0 %v184
  %v8686 = vpop.f32.mrb[0].mxu0
  %v8687 = vadd.f32 0.0, %v8686
  %v8688 = vpop.f32.mrb[0].mxu0
  %8689 = vmatprep.mubr.f32.mxu0 %v562
  %8690 = vmatmul.mubr.f32.gmra.mrb[0].mxu0 %v186
  %v8691 = vpop.f32.mrb[0].mxu0
  %v8692 = vadd.f32 0.0, %v8691
  %v8693 = vpop.f32.mrb[0].mxu0
  %8694 = vmatprep.mubr.f32.mxu0 %v565
  %8695 = vmatmul.mubr.f32.gmra.mrb[0].mxu0 %v188
  %v8696 = vpop.f32.mrb[0].mxu0
  %v8697 = vadd.f32 0.0, %v8696
  %v8698 = vpop.f32.mrb[0].mxu0
  %8699 = vmatprep.mubr.f32.mxu0 %v568
  %8700 = vmatmul.mubr.f32.gmra.mrb[0].mxu0 %v190
  %v8701 = vpop.f32.mrb[0].mxu0
  %v8702 = vadd.f32 0.0, %v8701
  %v8703 = vpop.f32.mrb[0].mxu0
  %8704 = vmatprep.mubr.f32.mxu0 %v571
  %8705 = vmatmul.mubr.f32.gmra.mrb[0].mxu0 %v192
  %v8706 = vpop.f32.mrb[0].mxu0
  %v8707 = vadd.f32 0.0, %v8706
  %v8708 = vpop.f32.mrb[0].mxu0
  %8709 = vmatprep.mubr.f32.mxu0 %v574
  %8710 = vmatmul.mubr.f32.gmra.mrb[0].mxu0 %v194
  %v8711 = vpop.f32.mrb[0].mxu0
  %v8712 = vadd.f32 0.0, %v8711
  %v8713 = vpop.f32.mrb[0].mxu0
  %8714 = vmatprep.mubr.f32.mxu0 %v577
  %8715 = vmatmul.mubr.f32.gmra.mrb[0].mxu0 %v196
  %v8716 = vpop.f32.mrb[0].mxu0
  %v8717 = vadd.f32 0.0, %v8716
  %v8718 = vpop.f32.mrb[0].mxu0
  %8719 = vmatprep.mubr.f32.mxu0 %v580
  %8720 = vmatmul.mubr.f32.gmra.mrb[0].mxu0 %v198
  %v8721 = vpop.f32.mrb[0].mxu0
  %v8722 = vadd.f32 0.0, %v8721
  %v8723 = vpop.f32.mrb[0].mxu0
  %8724 = vmatprep.mubr.f32.mxu0 %v583
  %8725 = vmatmul.mubr.f32.gmra.mrb[0].mxu0 %v200
  %v8726 = vpop.f32.mrb[0].mxu0
  %v8727 = vadd.f32 0.0, %v8726
  %v8728 = vpop.f32.mrb[0].mxu0
  %8729 = vmatprep.mubr.f32.mxu0 %v586
  %8730 = vmatmul.mubr.f32.gmra.mrb[0].mxu0 %v202
  %v8731 = vpop.f32.mrb[0].mxu0
  %v8732 = vadd.f32 0.0, %v8731
  %v8733 = vpop.f32.mrb[0].mxu0
  %8734 = vmatprep.mubr.f32.mxu0 %v589
  %8735 = vmatmul.mubr.f32.gmra.mrb[0].mxu0 %v204
  %v8736 = vpop.f32.mrb[0].mxu0
  %v8737 = vadd.f32 0.0, %v8736
  %v8738 = vpop.f32.mrb[0].mxu0
  %8739 = vmatprep.mubr.f32.mxu0 %v592
  %8740 = vmatmul.mubr.f32.gmra.mrb[0].mxu0 %v206
  %v8741 = vpop.f32.mrb[0].mxu0
  %v8742 = vadd.f32 0.0, %v8741
  %v8743 = vpop.f32.mrb[0].mxu0
  %8744 = vmatprep.mubr.f32.mxu0 %v595
  %8745 = vmatmul.mubr.f32.gmra.mrb[0].mxu0 %v208
  %v8746 = vpop.f32.mrb[0].mxu0
  %v8747 = vadd.f32 0.0, %v8746
  %v8748 = vpop.f32.mrb[0].mxu0
  %8749 = vmatprep.mubr.f32.mxu0 %v598
  %8750 = vmatmul.mubr.f32.gmra.mrb[0].mxu0 %v210
  %v8751 = vpop.f32.mrb[0].mxu0
  %v8752 = vadd.f32 0.0, %v8751
  %v8753 = vpop.f32.mrb[0].mxu0
  %8754 = vmatprep.mubr.f32.mxu0 %v601
  %8755 = vmatmul.mubr.f32.gmra.mrb[0].mxu0 %v212
  %v8756 = vpop.f32.mrb[0].mxu0
  %v8757 = vadd.f32 0.0, %v8756
  %v8758 = vpop.f32.mrb[0].mxu0
  %8759 = vmatprep.mubr.f32.mxu0 %v604
  %8760 = vmatmul.mubr.f32.gmra.mrb[0].mxu0 %v214
  %v8761 = vpop.f32.mrb[0].mxu0
  %v8762 = vadd.f32 0.0, %v8761
  %v8763 = vpop.f32.mrb[0].mxu0
  %8764 = vmatprep.mubr.f32.mxu0 %v607
  %8765 = vmatmul.mubr.f32.gmra.mrb[0].mxu0 %v216
  %v8766 = vpop.f32.mrb[0].mxu0
  %v8767 = vadd.f32 0.0, %v8766
  %v8768 = vpop.f32.mrb[0].mxu0
  %8769 = vmatprep.mubr.f32.mxu0 %v610
  %8770 = vmatmul.mubr.f32.gmra.mrb[0].mxu0 %v218
  %v8771 = vpop.f32.mrb[0].mxu0
  %v8772 = vadd.f32 0.0, %v8771
  %v8773 = vpop.f32.mrb[0].mxu0
  %8774 = vmatprep.mubr.f32.mxu0 %v613
  %8775 = vmatmul.mubr.f32.gmra.mrb[0].mxu0 %v220
  %v8776 = vpop.f32.mrb[0].mxu0
  %v8777 = vadd.f32 0.0, %v8776
  %v8778 = vpop.f32.mrb[0].mxu0
  %8779 = vmatprep.mubr.f32.mxu0 %v616
  %8780 = vmatmul.mubr.f32.gmra.mrb[0].mxu0 %v222
  %v8781 = vpop.f32.mrb[0].mxu0
  %v8782 = vadd.f32 0.0, %v8781
  %v8783 = vpop.f32.mrb[0].mxu0
  %8784 = vmatprep.mubr.f32.mxu0 %v619
  %8785 = vmatmul.mubr.f32.gmra.mrb[0].mxu0 %v224
  %v8786 = vpop.f32.mrb[0].mxu0
  %v8787 = vadd.f32 0.0, %v8786
  %v8788 = vpop.f32.mrb[0].mxu0
  %8789 = vmatprep.mubr.f32.mxu0 %v622
  %8790 = vmatmul.mubr.f32.gmra.mrb[0].mxu0 %v226
  %v8791 = vpop.f32.mrb[0].mxu0
  %v8792 = vadd.f32 0.0, %v8791
  %v8793 = vpop.f32.mrb[0].mxu0
  %8794 = vmatprep.mubr.f32.mxu0 %v625
  %8795 = vmatmul.mubr.f32.gmra.mrb[0].mxu0 %v228
  %v8796 = vpop.f32.mrb[0].mxu0
  %v8797 = vadd.f32 0.0, %v8796
  %v8798 = vpop.f32.mrb[0].mxu0
  %8799 = vmatprep.mubr.f32.mxu0 %v628
  %8800 = vmatmul.mubr.f32.gmra.mrb[0].mxu0 %v230
  %v8801 = vpop.f32.mrb[0].mxu0
  %v8802 = vadd.f32 0.0, %v8801
  %v8803 = vpop.f32.mrb[0].mxu0
  %8804 = vmatprep.mubr.f32.mxu0 %v631
  %8805 = vmatmul.mubr.f32.gmra.mrb[0].mxu0 %v232
  %v8806 = vpop.f32.mrb[0].mxu0
  %v8807 = vadd.f32 0.0, %v8806
  %v8808 = vpop.f32.mrb[0].mxu0
  %8809 = vmatprep.mubr.f32.mxu0 %v634
  %8810 = vmatmul.mubr.f32.gmra.mrb[0].mxu0 %v234
  %v8811 = vpop.f32.mrb[0].mxu0
  %v8812 = vadd.f32 0.0, %v8811
  %v8813 = vpop.f32.mrb[0].mxu0
  %8814 = vmatprep.mubr.f32.mxu0 %v637
  %8815 = vmatmul.mubr.f32.gmra.mrb[0].mxu0 %v236
  %v8816 = vpop.f32.mrb[0].mxu0
  %v8817 = vadd.f32 0.0, %v8816
  %v8818 = vpop.f32.mrb[0].mxu0
  %8819 = vmatprep.mubr.f32.mxu0 %v640
  %8820 = vmatmul.mubr.f32.gmra.mrb[0].mxu0 %v238
  %v8821 = vpop.f32.mrb[0].mxu0
  %v8822 = vadd.f32 0.0, %v8821
  %v8823 = vpop.f32.mrb[0].mxu0
  %8824 = vmatprep.mubr.f32.mxu0 %v643
  %8825 = vmatmul.mubr.f32.gmra.mrb[0].mxu0 %v240
  %v8826 = vpop.f32.mrb[0].mxu0
  %v8827 = vadd.f32 0.0, %v8826
  %v8828 = vpop.f32.mrb[0].mxu0
  %8829 = vmatprep.mubr.f32.mxu0 %v646
  %8830 = vmatmul.mubr.f32.gmra.mrb[0].mxu0 %v242
  %v8831 = vpop.f32.mrb[0].mxu0
  %v8832 = vadd.f32 0.0, %v8831
  %v8833 = vpop.f32.mrb[0].mxu0
  %8834 = vmatprep.mubr.f32.mxu0 %v649
  %8835 = vmatmul.mubr.f32.gmra.mrb[0].mxu0 %v244
  %v8836 = vpop.f32.mrb[0].mxu0
  %v8837 = vadd.f32 0.0, %v8836
  %v8838 = vpop.f32.mrb[0].mxu0
  %8839 = vmatprep.mubr.f32.mxu0 %v652
  %8840 = vmatmul.mubr.f32.gmra.mrb[0].mxu0 %v246
  %v8841 = vpop.f32.mrb[0].mxu0
  %v8842 = vadd.f32 0.0, %v8841
  %v8843 = vpop.f32.mrb[0].mxu0
  %8844 = vmatprep.mubr.f32.mxu0 %v655
  %8845 = vmatmul.mubr.f32.gmra.mrb[0].mxu0 %v248
  %v8846 = vpop.f32.mrb[0].mxu0
  %v8847 = vadd.f32 0.0, %v8846
  %v8848 = vpop.f32.mrb[0].mxu0
  %8849 = vmatprep.mubr.f32.mxu0 %v658
  %8850 = vmatmul.mubr.f32.gmra.mrb[0].mxu0 %v250
  %v8851 = vpop.f32.mrb[0].mxu0
  %v8852 = vadd.f32 0.0, %v8851
  %v8853 = vpop.f32.mrb[0].mxu0
  %8854 = vmatprep.mubr.f32.mxu0 %v661
  %8855 = vmatmul.mubr.f32.gmra.mrb[0].mxu0 %v252
  %v8856 = vpop.f32.mrb[0].mxu0
  %v8857 = vadd.f32 0.0, %v8856
  %v8858 = vpop.f32.mrb[0].mxu0
  %8859 = vmatprep.mubr.f32.mxu0 %v664
  %8860 = vmatmul.mubr.f32.gmra.mrb[0].mxu0 %v254
  %v8861 = vpop.f32.mrb[0].mxu0
  %v8862 = vadd.f32 0.0, %v8861
  %v8863 = vpop.f32.mrb[0].mxu0
  %8864 = vmatprep.mubr.f32.mxu0 %v667
  %8865 = vmatmul.mubr.f32.gmra.mrb[0].mxu0 %v256
  %v8866 = vpop.f32.mrb[0].mxu0
  %v8867 = vadd.f32 0.0, %v8866
  %v8868 = vpop.f32.mrb[0].mxu0
  %8869 = vmatprep.mubr.f32.mxu0 %v670
  %8870 = vmatmul.mubr.f32.gmra.mrb[0].mxu0 %v258
  %v8871 = vpop.f32.mrb[0].mxu0
  %v8872 = vadd.f32 0.0, %v8871
  %v8873 = vpop.f32.mrb[0].mxu0
  %8874 = vdwg.mxu0
  %v8875 = vmax.f32 %v8277, %v8427
  %v8876 = vmax.f32 %v8282, %v8432
  %v8877 = vmax.f32 %v8287, %v8437
  %v8878 = vmax.f32 %v8292, %v8442
  %v8879 = vmax.f32 %v8297, %v8447
  %v8880 = vmax.f32 %v8302, %v8452
  %v8881 = vmax.f32 %v8307, %v8457
  %v8882 = vmax.f32 %v8312, %v8462
  %v8883 = vmax.f32 %v8317, %v8467
  %v8884 = vmax.f32 %v8322, %v8472
  %v8885 = vmax.f32 %v8327, %v8477
  %v8886 = vmax.f32 %v8332, %v8482
  %v8887 = vmax.f32 %v8337, %v8487
  %v8888 = vmax.f32 %v8342, %v8492
  %v8889 = vmax.f32 %v8347, %v8497
  %v8890 = vmax.f32 %v8352, %v8502
  %v8891 = vmax.f32 %v8357, %v8507
  %v8892 = vmax.f32 %v8362, %v8512
  %v8893 = vmax.f32 %v8367, %v8517
  %v8894 = vmax.f32 %v8372, %v8522
  %v8895 = vmax.f32 %v8377, %v8527
  %v8896 = vmax.f32 %v8382, %v8532
  %v8897 = vmax.f32 %v8387, %v8537
  %v8898 = vmax.f32 %v8392, %v8542
  %v8899 = vmax.f32 %v8397, %v8547
  %v8900 = vmax.f32 %v8402, %v8552
  %v8901 = vmax.f32 %v8407, %v8557
  %v8902 = vmax.f32 %v8412, %v8562
  %v8903 = vmax.f32 %v8417, %v8567
  %v8904 = vmax.f32 %v8422, %v8572
  %v8905 = vmax.f32 %v8577, %v8727
  %v8906 = vmax.f32 %v8582, %v8732
  %v8907 = vmax.f32 %v8587, %v8737
  %v8908 = vmax.f32 %v8592, %v8742
  %v8909 = vmax.f32 %v8597, %v8747
  %v8910 = vmax.f32 %v8602, %v8752
  %v8911 = vmax.f32 %v8607, %v8757
  %v8912 = vmax.f32 %v8612, %v8762
  %v8913 = vmax.f32 %v8617, %v8767
  %v8914 = vmax.f32 %v8622, %v8772
  %v8915 = vmax.f32 %v8627, %v8777
  %v8916 = vmax.f32 %v8632, %v8782
  %v8917 = vmax.f32 %v8637, %v8787
  %v8918 = vmax.f32 %v8642, %v8792
  %v8919 = vmax.f32 %v8647, %v8797
  %v8920 = vmax.f32 %v8652, %v8802
  %v8921 = vmax.f32 %v8657, %v8807
  %v8922 = vmax.f32 %v8662, %v8812
  %v8923 = vmax.f32 %v8667, %v8817
  %v8924 = vmax.f32 %v8672, %v8822
  %v8925 = vmax.f32 %v8677, %v8827
  %v8926 = vmax.f32 %v8682, %v8832
  %v8927 = vmax.f32 %v8687, %v8837
  %v8928 = vmax.f32 %v8692, %v8842
  %v8929 = vmax.f32 %v8697, %v8847
  %v8930 = vmax.f32 %v8702, %v8852
  %v8931 = vmax.f32 %v8707, %v8857
  %v8932 = vmax.f32 %v8712, %v8862
  %v8933 = vmax.f32 %v8717, %v8867
  %v8934 = vmax.f32 %v8722, %v8872
  %v8935 = vmax.f32 %v8875, %v8905
  %v8936 = vmax.f32 %v8876, %v8906
  %v8937 = vmax.f32 %v8877, %v8907
  %v8938 = vmax.f32 %v8878, %v8908
  %v8939 = vmax.f32 %v8879, %v8909
  %v8940 = vmax.f32 %v8880, %v8910
  %v8941 = vmax.f32 %v8881, %v8911
  %v8942 = vmax.f32 %v8882, %v8912
  %v8943 = vmax.f32 %v8883, %v8913
  %v8944 = vmax.f32 %v8884, %v8914
  %v8945 = vmax.f32 %v8885, %v8915
  %v8946 = vmax.f32 %v8886, %v8916
  %v8947 = vmax.f32 %v8887, %v8917
  %v8948 = vmax.f32 %v8888, %v8918
  %v8949 = vmax.f32 %v8889, %v8919
  %v8950 = vmax.f32 %v8890, %v8920
  %v8951 = vmax.f32 %v8891, %v8921
  %v8952 = vmax.f32 %v8892, %v8922
  %v8953 = vmax.f32 %v8893, %v8923
  %v8954 = vmax.f32 %v8894, %v8924
  %v8955 = vmax.f32 %v8895, %v8925
  %v8956 = vmax.f32 %v8896, %v8926
  %v8957 = vmax.f32 %v8897, %v8927
  %v8958 = vmax.f32 %v8898, %v8928
  %v8959 = vmax.f32 %v8899, %v8929
  %v8960 = vmax.f32 %v8900, %v8930
  %v8961 = vmax.f32 %v8901, %v8931
  %v8962 = vmax.f32 %v8902, %v8932
  %v8963 = vmax.f32 %v8903, %v8933
  %v8964 = vmax.f32 %v8904, %v8934
  %v8965 = vadd.f32 %v8935, %v1430
  %v8966 = vadd.f32 %v8936, %v1435
  %v8967 = vadd.f32 %v8937, %v1440
  %v8968 = vadd.f32 %v8938, %v1445
  %v8969 = vadd.f32 %v8939, %v1450
  %v8970 = vadd.f32 %v8940, %v1455
  %v8971 = vadd.f32 %v8941, %v1460
  %v8972 = vadd.f32 %v8942, %v1465
  %v8973 = vadd.f32 %v8943, %v1470
  %v8974 = vadd.f32 %v8944, %v1475
  %v8975 = vadd.f32 %v8945, %v1480
  %v8976 = vadd.f32 %v8946, %v1485
  %v8977 = vadd.f32 %v8947, %v1490
  %v8978 = vadd.f32 %v8948, %v1495
  %v8979 = vadd.f32 %v8949, %v1500
  %v8980 = vadd.f32 %v8950, %v1505
  %v8981 = vadd.f32 %v8951, %v1510
  %v8982 = vadd.f32 %v8952, %v1515
  %v8983 = vadd.f32 %v8953, %v1520
  %v8984 = vadd.f32 %v8954, %v1525
  %v8985 = vadd.f32 %v8955, %v1530
  %v8986 = vadd.f32 %v8956, %v1535
  %v8987 = vadd.f32 %v8957, %v1540
  %v8988 = vadd.f32 %v8958, %v1545
  %v8989 = vadd.f32 %v8959, %v1550
  %v8990 = vadd.f32 %v8960, %v1555
  %v8991 = vadd.f32 %v8961, %v1560
  %v8992 = vadd.f32 %v8962, %v1565
  %v8993 = vadd.f32 %v8963, %v1570
  %v8994 = vadd.f32 %v8964, %v1575
  %v8995 = vmax.f32 %v8965, 0.0
  %v8996 = vmax.f32 %v8966, 0.0
  %v8997 = vmax.f32 %v8967, 0.0
  %v8998 = vmax.f32 %v8968, 0.0
  %v8999 = vmax.f32 %v8969, 0.0
  %v9000 = vmax.f32 %v8970, 0.0
  %v9001 = vmax.f32 %v8971, 0.0
  %v9002 = vmax.f32 %v8972, 0.0
  %v9003 = vmax.f32 %v8973, 0.0
  %v9004 = vmax.f32 %v8974, 0.0
  %v9005 = vmax.f32 %v8975, 0.0
  %v9006 = vmax.f32 %v8976, 0.0
  %v9007 = vmax.f32 %v8977, 0.0
  %v9008 = vmax.f32 %v8978, 0.0
  %v9009 = vmax.f32 %v8979, 0.0
  %v9010 = vmax.f32 %v8980, 0.0
  %v9011 = vmax.f32 %v8981, 0.0
  %v9012 = vmax.f32 %v8982, 0.0
  %v9013 = vmax.f32 %v8983, 0.0
  %v9014 = vmax.f32 %v8984, 0.0
  %v9015 = vmax.f32 %v8985, 0.0
  %v9016 = vmax.f32 %v8986, 0.0
  %v9017 = vmax.f32 %v8987, 0.0
  %v9018 = vmax.f32 %v8988, 0.0
  %v9019 = vmax.f32 %v8989, 0.0
  %v9020 = vmax.f32 %v8990, 0.0
  %v9021 = vmax.f32 %v8991, 0.0
  %v9022 = vmax.f32 %v8992, 0.0
  %v9023 = vmax.f32 %v8993, 0.0
  %v9024 = vmax.f32 %v8994, 0.0
  %s9025 = scalar_lea.vmem %s3, 256
  %v9026 = vld [vmem:[%s9025] sm:$0xff]
  %v9027 = vld [vmem:[%s9025 + $0x8] sm:$0xff]
  %v9028 = vld [vmem:[%s9025 + $0x10] sm:$0x3]
  %v9029 = vld [vmem:[%s9025 + $0x18] sm:$0x3]
  %v9031 = vsel %vm2482, %v9027, 0
  %v9034 = vsel %vm2482, %v9029, 0
  %9036 = vmatprep.subr.mxu0 0.0
  %9037 = vmatpush1.msra.mxu0 %v8995
  %9038 = vmatprep.subr.mxu0 0.0
  %9039 = vmatpush1.msra.mxu0 %v8996
  %9040 = vmatprep.subr.mxu0 0.0
  %9041 = vmatpush1.msra.mxu0 %v8997
  %9042 = vmatprep.subr.mxu0 0.0
  %9043 = vmatpush1.msra.mxu0 %v8998
  %9044 = vmatprep.subr.mxu0 0.0
  %9045 = vmatpush1.msra.mxu0 %v8999
  %9046 = vmatprep.subr.mxu0 0.0
  %9047 = vmatpush1.msra.mxu0 %v9000
  %9048 = vmatprep.subr.mxu0 0.0
  %9049 = vmatpush1.msra.mxu0 %v9001
  %9050 = vmatprep.subr.mxu0 0.0
  %9051 = vmatpush1.msra.mxu0 %v9002
  %9052 = vmatprep.subr.mxu0 0.0
  %9053 = vmatpush1.msra.mxu0 %v9003
  %9054 = vmatprep.subr.mxu0 0.0
  %9055 = vmatpush1.msra.mxu0 %v9004
  %9056 = vmatprep.subr.mxu0 0.0
  %9057 = vmatpush1.msra.mxu0 %v9005
  %9058 = vmatprep.subr.mxu0 0.0
  %9059 = vmatpush1.msra.mxu0 %v9006
  %9060 = vmatprep.subr.mxu0 0.0
  %9061 = vmatpush1.msra.mxu0 %v9007
  %9062 = vmatprep.subr.mxu0 0.0
  %9063 = vmatpush1.msra.mxu0 %v9008
  %9064 = vmatprep.subr.mxu0 0.0
  %9065 = vmatpush1.msra.mxu0 %v9009
  %9066 = vmatprep.subr.mxu0 0.0
  %9067 = vmatpush1.msra.mxu0 %v9010
  %9068 = vmatprep.subr.mxu0 0.0
  %9069 = vmatpush1.msra.mxu0 %v9011
  %9070 = vmatprep.subr.mxu0 0.0
  %9071 = vmatpush1.msra.mxu0 %v9012
  %9072 = vmatprep.subr.mxu0 0.0
  %9073 = vmatpush1.msra.mxu0 %v9013
  %9074 = vmatprep.subr.mxu0 0.0
  %9075 = vmatpush1.msra.mxu0 %v9014
  %9076 = vmatprep.subr.mxu0 0.0
  %9077 = vmatpush1.msra.mxu0 %v9015
  %9078 = vmatprep.subr.mxu0 0.0
  %9079 = vmatpush1.msra.mxu0 %v9016
  %9080 = vmatprep.subr.mxu0 0.0
  %9081 = vmatpush1.msra.mxu0 %v9017
  %9082 = vmatprep.subr.mxu0 0.0
  %9083 = vmatpush1.msra.mxu0 %v9018
  %9084 = vmatprep.subr.mxu0 0.0
  %9085 = vmatpush1.msra.mxu0 %v9019
  %9086 = vmatprep.subr.mxu0 0.0
  %9087 = vmatpush1.msra.mxu0 %v9020
  %9088 = vmatprep.subr.mxu0 0.0
  %9089 = vmatpush1.msra.mxu0 %v9021
  %9090 = vmatprep.subr.mxu0 0.0
  %9091 = vmatpush1.msra.mxu0 %v9022
  %9092 = vmatprep.subr.mxu0 0.0
  %9093 = vmatpush1.msra.mxu0 %v9023
  %9094 = vmatprep.subr.mxu0 0.0
  %9095 = vmatpush1.msra.mxu0 %v9024
  %9096 = vmatprep.subr.mxu0 0.0
  %9097 = vmatpush1.msra.mxu0 0.0
  %9098 = vmatprep.subr.mxu0 0.0
  %9099 = vmatpush1.msra.mxu0 0.0
  %9100 = vmatprep.mubr.f32.mxu0 %v9031
  %9101 = vmatmul.mubr.f32.gmra.mrb[0].mxu0 %v9026
  %v9102 = vpop.f32.mrb[0].mxu0
  %v9103 = vadd.f32 0.0, %v9102
  %v9104 = vpop.f32.mrb[0].mxu0
  %9105 = vmatprep.mubr.f32.mxu0 %v9034
  %9106 = vmatmul.mubr.f32.gmra.mrb[0].mxu0 %v9028
  %v9107 = vpop.f32.mrb[0].mxu0
  %v9108 = vadd.f32 0.0, %v9107
  %v9109 = vpop.f32.mrb[0].mxu0
  %9110 = vdwg.mxu0
  %v9111 = vadd.f32 %v8187, %v9103
  %v9112 = vadd.f32 %v8188, %v9108
  %v9113 = vld [vmem:[%s0 + $0x1f8] sm:$0xff]
  %v9114 = vld [vmem:[%s0 + $0x200] sm:$0xff]
  %v9115 = vld [vmem:[%s0 + $0x208] sm:$0xff]
  %v9116 = vld [vmem:[%s0 + $0x210] sm:$0xff]
  %v9117 = vld [vmem:[%s0 + $0x218] sm:$0xff]
  %v9118 = vld [vmem:[%s0 + $0x220] sm:$0xff]
  %v9119 = vld [vmem:[%s0 + $0x228] sm:$0xff]
  %v9120 = vld [vmem:[%s0 + $0x230] sm:$0xff]
  %v9121 = vld [vmem:[%s0 + $0x238] sm:$0xff]
  %v9122 = vld [vmem:[%s0 + $0x240] sm:$0xff]
  %v9123 = vld [vmem:[%s0 + $0x248] sm:$0xff]
  %v9124 = vld [vmem:[%s0 + $0x250] sm:$0xff]
  %v9125 = vld [vmem:[%s0 + $0x258] sm:$0xff]
  %v9126 = vld [vmem:[%s0 + $0x260] sm:$0xff]
  %v9127 = vld [vmem:[%s0 + $0x268] sm:$0xff]
  %v9128 = vld [vmem:[%s0 + $0x270] sm:$0xff]
  %v9129 = vld [vmem:[%s0 + $0x278] sm:$0xff]
  %v9130 = vld [vmem:[%s0 + $0x280] sm:$0xff]
  %v9131 = vld [vmem:[%s0 + $0x288] sm:$0xff]
  %v9132 = vld [vmem:[%s0 + $0x290] sm:$0xff]
  %v9133 = vld [vmem:[%s0 + $0x298] sm:$0xff]
  %9134 = vmatprep.subr.mxu0 0.0
  %9135 = vmatpush1.msra.mxu0 %v9113
  %9136 = vmatprep.subr.mxu0 0.0
  %9137 = vmatpush1.msra.mxu0 %v9114
  %9138 = vmatprep.subr.mxu0 0.0
  %9139 = vmatpush1.msra.mxu0 %v9115
  %9140 = vmatprep.subr.mxu0 0.0
  %9141 = vmatpush1.msra.mxu0 %v9116
  %9142 = vmatprep.subr.mxu0 0.0
  %9143 = vmatpush1.msra.mxu0 %v9117
  %9144 = vmatprep.subr.mxu0 0.0
  %9145 = vmatpush1.msra.mxu0 %v9118
  %9146 = vmatprep.subr.mxu0 0.0
  %9147 = vmatpush1.msra.mxu0 %v9119
  %9148 = vmatprep.subr.mxu0 0.0
  %9149 = vmatpush1.msra.mxu0 %v9120
  %9150 = vmatprep.subr.mxu0 0.0
  %9151 = vmatpush1.msra.mxu0 %v9121
  %9152 = vmatprep.subr.mxu0 0.0
  %9153 = vmatpush1.msra.mxu0 %v9122
  %9154 = vmatprep.subr.mxu0 0.0
  %9155 = vmatpush1.msra.mxu0 %v9123
  %9156 = vmatprep.subr.mxu0 0.0
  %9157 = vmatpush1.msra.mxu0 %v9124
  %9158 = vmatprep.subr.mxu0 0.0
  %9159 = vmatpush1.msra.mxu0 %v9125
  %9160 = vmatprep.subr.mxu0 0.0
  %9161 = vmatpush1.msra.mxu0 %v9126
  %9162 = vmatprep.subr.mxu0 0.0
  %9163 = vmatpush1.msra.mxu0 %v9127
  %9164 = vmatprep.subr.mxu0 0.0
  %9165 = vmatpush1.msra.mxu0 %v9128
  %9166 = vmatprep.subr.mxu0 0.0
  %9167 = vmatpush1.msra.mxu0 %v9129
  %9168 = vmatprep.subr.mxu0 0.0
  %9169 = vmatpush1.msra.mxu0 %v9130
  %9170 = vmatprep.subr.mxu0 0.0
  %9171 = vmatpush1.msra.mxu0 %v9131
  %9172 = vmatprep.subr.mxu0 0.0
  %9173 = vmatpush1.msra.mxu0 %v9132
  %9174 = vmatprep.subr.mxu0 0.0
  %9175 = vmatpush1.msra.mxu0 %v9133
  %9176 = vmatprep.subr.mxu0 0.0
  %9177 = vmatpush1.msra.mxu0 0.0
  %9178 = vmatprep.subr.mxu0 0.0
  %9179 = vmatpush1.msra.mxu0 0.0
  %9180 = vmatprep.subr.mxu0 0.0
  %9181 = vmatpush1.msra.mxu0 0.0
  %9182 = vmatprep.subr.mxu0 0.0
  %9183 = vmatpush1.msra.mxu0 0.0
  %9184 = vmatprep.subr.mxu0 0.0
  %9185 = vmatpush1.msra.mxu0 0.0
  %9186 = vmatprep.subr.mxu0 0.0
  %9187 = vmatpush1.msra.mxu0 0.0
  %9188 = vmatprep.subr.mxu0 0.0
  %9189 = vmatpush1.msra.mxu0 0.0
  %9190 = vmatprep.subr.mxu0 0.0
  %9191 = vmatpush1.msra.mxu0 0.0
  %9192 = vmatprep.subr.mxu0 0.0
  %9193 = vmatpush1.msra.mxu0 0.0
  %9194 = vmatprep.subr.mxu0 0.0
  %9195 = vmatpush1.msra.mxu0 0.0
  %9196 = vmatprep.subr.mxu0 0.0
  %9197 = vmatpush1.msra.mxu0 0.0
  %9198 = vmatprep.mubr.f32.mxu0 %v313
  %9199 = vmatmul.mubr.f32.gmra.mrb[0].mxu0 %v20
  %v9200 = vpop.f32.mrb[0].mxu0
  %v9201 = vadd.f32 0.0, %v9200
  %v9202 = vpop.f32.mrb[0].mxu0
  %9203 = vmatprep.mubr.f32.mxu0 %v316
  %9204 = vmatmul.mubr.f32.gmra.mrb[0].mxu0 %v22
  %v9205 = vpop.f32.mrb[0].mxu0
  %v9206 = vadd.f32 0.0, %v9205
  %v9207 = vpop.f32.mrb[0].mxu0
  %9208 = vmatprep.mubr.f32.mxu0 %v319
  %9209 = vmatmul.mubr.f32.gmra.mrb[0].mxu0 %v24
  %v9210 = vpop.f32.mrb[0].mxu0
  %v9211 = vadd.f32 0.0, %v9210
  %v9212 = vpop.f32.mrb[0].mxu0
  %9213 = vmatprep.mubr.f32.mxu0 %v322
  %9214 = vmatmul.mubr.f32.gmra.mrb[0].mxu0 %v26
  %v9215 = vpop.f32.mrb[0].mxu0
  %v9216 = vadd.f32 0.0, %v9215
  %v9217 = vpop.f32.mrb[0].mxu0
  %9218 = vmatprep.mubr.f32.mxu0 %v325
  %9219 = vmatmul.mubr.f32.gmra.mrb[0].mxu0 %v28
  %v9220 = vpop.f32.mrb[0].mxu0
  %v9221 = vadd.f32 0.0, %v9220
  %v9222 = vpop.f32.mrb[0].mxu0
  %9223 = vmatprep.mubr.f32.mxu0 %v328
  %9224 = vmatmul.mubr.f32.gmra.mrb[0].mxu0 %v30
  %v9225 = vpop.f32.mrb[0].mxu0
  %v9226 = vadd.f32 0.0, %v9225
  %v9227 = vpop.f32.mrb[0].mxu0
  %9228 = vmatprep.mubr.f32.mxu0 %v331
  %9229 = vmatmul.mubr.f32.gmra.mrb[0].mxu0 %v32
  %v9230 = vpop.f32.mrb[0].mxu0
  %v9231 = vadd.f32 0.0, %v9230
  %v9232 = vpop.f32.mrb[0].mxu0
  %9233 = vmatprep.mubr.f32.mxu0 %v334
  %9234 = vmatmul.mubr.f32.gmra.mrb[0].mxu0 %v34
  %v9235 = vpop.f32.mrb[0].mxu0
  %v9236 = vadd.f32 0.0, %v9235
  %v9237 = vpop.f32.mrb[0].mxu0
  %9238 = vmatprep.mubr.f32.mxu0 %v337
  %9239 = vmatmul.mubr.f32.gmra.mrb[0].mxu0 %v36
  %v9240 = vpop.f32.mrb[0].mxu0
  %v9241 = vadd.f32 0.0, %v9240
  %v9242 = vpop.f32.mrb[0].mxu0
  %9243 = vmatprep.mubr.f32.mxu0 %v340
  %9244 = vmatmul.mubr.f32.gmra.mrb[0].mxu0 %v38
  %v9245 = vpop.f32.mrb[0].mxu0
  %v9246 = vadd.f32 0.0, %v9245
  %v9247 = vpop.f32.mrb[0].mxu0
  %9248 = vmatprep.mubr.f32.mxu0 %v343
  %9249 = vmatmul.mubr.f32.gmra.mrb[0].mxu0 %v40
  %v9250 = vpop.f32.mrb[0].mxu0
  %v9251 = vadd.f32 0.0, %v9250
  %v9252 = vpop.f32.mrb[0].mxu0
  %9253 = vmatprep.mubr.f32.mxu0 %v346
  %9254 = vmatmul.mubr.f32.gmra.mrb[0].mxu0 %v42
  %v9255 = vpop.f32.mrb[0].mxu0
  %v9256 = vadd.f32 0.0, %v9255
  %v9257 = vpop.f32.mrb[0].mxu0
  %9258 = vmatprep.mubr.f32.mxu0 %v349
  %9259 = vmatmul.mubr.f32.gmra.mrb[0].mxu0 %v44
  %v9260 = vpop.f32.mrb[0].mxu0
  %v9261 = vadd.f32 0.0, %v9260
  %v9262 = vpop.f32.mrb[0].mxu0
  %9263 = vmatprep.mubr.f32.mxu0 %v352
  %9264 = vmatmul.mubr.f32.gmra.mrb[0].mxu0 %v46
  %v9265 = vpop.f32.mrb[0].mxu0
  %v9266 = vadd.f32 0.0, %v9265
  %v9267 = vpop.f32.mrb[0].mxu0
  %9268 = vmatprep.mubr.f32.mxu0 %v355
  %9269 = vmatmul.mubr.f32.gmra.mrb[0].mxu0 %v48
  %v9270 = vpop.f32.mrb[0].mxu0
  %v9271 = vadd.f32 0.0, %v9270
  %v9272 = vpop.f32.mrb[0].mxu0
  %9273 = vmatprep.mubr.f32.mxu0 %v358
  %9274 = vmatmul.mubr.f32.gmra.mrb[0].mxu0 %v50
  %v9275 = vpop.f32.mrb[0].mxu0
  %v9276 = vadd.f32 0.0, %v9275
  %v9277 = vpop.f32.mrb[0].mxu0
  %9278 = vmatprep.mubr.f32.mxu0 %v361
  %9279 = vmatmul.mubr.f32.gmra.mrb[0].mxu0 %v52
  %v9280 = vpop.f32.mrb[0].mxu0
  %v9281 = vadd.f32 0.0, %v9280
  %v9282 = vpop.f32.mrb[0].mxu0
  %9283 = vmatprep.mubr.f32.mxu0 %v364
  %9284 = vmatmul.mubr.f32.gmra.mrb[0].mxu0 %v54
  %v9285 = vpop.f32.mrb[0].mxu0
  %v9286 = vadd.f32 0.0, %v9285
  %v9287 = vpop.f32.mrb[0].mxu0
  %9288 = vmatprep.mubr.f32.mxu0 %v367
  %9289 = vmatmul.mubr.f32.gmra.mrb[0].mxu0 %v56
  %v9290 = vpop.f32.mrb[0].mxu0
  %v9291 = vadd.f32 0.0, %v9290
  %v9292 = vpop.f32.mrb[0].mxu0
  %9293 = vmatprep.mubr.f32.mxu0 %v370
  %9294 = vmatmul.mubr.f32.gmra.mrb[0].mxu0 %v58
  %v9295 = vpop.f32.mrb[0].mxu0
  %v9296 = vadd.f32 0.0, %v9295
  %v9297 = vpop.f32.mrb[0].mxu0
  %9298 = vmatprep.mubr.f32.mxu0 %v373
  %9299 = vmatmul.mubr.f32.gmra.mrb[0].mxu0 %v60
  %v9300 = vpop.f32.mrb[0].mxu0
  %v9301 = vadd.f32 0.0, %v9300
  %v9302 = vpop.f32.mrb[0].mxu0
  %9303 = vmatprep.mubr.f32.mxu0 %v376
  %9304 = vmatmul.mubr.f32.gmra.mrb[0].mxu0 %v62
  %v9305 = vpop.f32.mrb[0].mxu0
  %v9306 = vadd.f32 0.0, %v9305
  %v9307 = vpop.f32.mrb[0].mxu0
  %9308 = vmatprep.mubr.f32.mxu0 %v379
  %9309 = vmatmul.mubr.f32.gmra.mrb[0].mxu0 %v64
  %v9310 = vpop.f32.mrb[0].mxu0
  %v9311 = vadd.f32 0.0, %v9310
  %v9312 = vpop.f32.mrb[0].mxu0
  %9313 = vmatprep.mubr.f32.mxu0 %v382
  %9314 = vmatmul.mubr.f32.gmra.mrb[0].mxu0 %v66
  %v9315 = vpop.f32.mrb[0].mxu0
  %v9316 = vadd.f32 0.0, %v9315
  %v9317 = vpop.f32.mrb[0].mxu0
  %9318 = vmatprep.mubr.f32.mxu0 %v385
  %9319 = vmatmul.mubr.f32.gmra.mrb[0].mxu0 %v68
  %v9320 = vpop.f32.mrb[0].mxu0
  %v9321 = vadd.f32 0.0, %v9320
  %v9322 = vpop.f32.mrb[0].mxu0
  %9323 = vmatprep.mubr.f32.mxu0 %v388
  %9324 = vmatmul.mubr.f32.gmra.mrb[0].mxu0 %v70
  %v9325 = vpop.f32.mrb[0].mxu0
  %v9326 = vadd.f32 0.0, %v9325
  %v9327 = vpop.f32.mrb[0].mxu0
  %9328 = vmatprep.mubr.f32.mxu0 %v391
  %9329 = vmatmul.mubr.f32.gmra.mrb[0].mxu0 %v72
  %v9330 = vpop.f32.mrb[0].mxu0
  %v9331 = vadd.f32 0.0, %v9330
  %v9332 = vpop.f32.mrb[0].mxu0
  %9333 = vmatprep.mubr.f32.mxu0 %v394
  %9334 = vmatmul.mubr.f32.gmra.mrb[0].mxu0 %v74
  %v9335 = vpop.f32.mrb[0].mxu0
  %v9336 = vadd.f32 0.0, %v9335
  %v9337 = vpop.f32.mrb[0].mxu0
  %9338 = vmatprep.mubr.f32.mxu0 %v397
  %9339 = vmatmul.mubr.f32.gmra.mrb[0].mxu0 %v76
  %v9340 = vpop.f32.mrb[0].mxu0
  %v9341 = vadd.f32 0.0, %v9340
  %v9342 = vpop.f32.mrb[0].mxu0
  %9343 = vmatprep.mubr.f32.mxu0 %v400
  %9344 = vmatmul.mubr.f32.gmra.mrb[0].mxu0 %v78
  %v9345 = vpop.f32.mrb[0].mxu0
  %v9346 = vadd.f32 0.0, %v9345
  %v9347 = vpop.f32.mrb[0].mxu0
  %9348 = vmatprep.mubr.f32.mxu0 %v403
  %9349 = vmatmul.mubr.f32.gmra.mrb[0].mxu0 %v80
  %v9350 = vpop.f32.mrb[0].mxu0
  %v9351 = vadd.f32 0.0, %v9350
  %v9352 = vpop.f32.mrb[0].mxu0
  %9353 = vmatprep.mubr.f32.mxu0 %v406
  %9354 = vmatmul.mubr.f32.gmra.mrb[0].mxu0 %v82
  %v9355 = vpop.f32.mrb[0].mxu0
  %v9356 = vadd.f32 0.0, %v9355
  %v9357 = vpop.f32.mrb[0].mxu0
  %9358 = vmatprep.mubr.f32.mxu0 %v409
  %9359 = vmatmul.mubr.f32.gmra.mrb[0].mxu0 %v84
  %v9360 = vpop.f32.mrb[0].mxu0
  %v9361 = vadd.f32 0.0, %v9360
  %v9362 = vpop.f32.mrb[0].mxu0
  %9363 = vmatprep.mubr.f32.mxu0 %v412
  %9364 = vmatmul.mubr.f32.gmra.mrb[0].mxu0 %v86
  %v9365 = vpop.f32.mrb[0].mxu0
  %v9366 = vadd.f32 0.0, %v9365
  %v9367 = vpop.f32.mrb[0].mxu0
  %9368 = vmatprep.mubr.f32.mxu0 %v415
  %9369 = vmatmul.mubr.f32.gmra.mrb[0].mxu0 %v88
  %v9370 = vpop.f32.mrb[0].mxu0
  %v9371 = vadd.f32 0.0, %v9370
  %v9372 = vpop.f32.mrb[0].mxu0
  %9373 = vmatprep.mubr.f32.mxu0 %v418
  %9374 = vmatmul.mubr.f32.gmra.mrb[0].mxu0 %v90
  %v9375 = vpop.f32.mrb[0].mxu0
  %v9376 = vadd.f32 0.0, %v9375
  %v9377 = vpop.f32.mrb[0].mxu0
  %9378 = vmatprep.mubr.f32.mxu0 %v421
  %9379 = vmatmul.mubr.f32.gmra.mrb[0].mxu0 %v92
  %v9380 = vpop.f32.mrb[0].mxu0
  %v9381 = vadd.f32 0.0, %v9380
  %v9382 = vpop.f32.mrb[0].mxu0
  %9383 = vmatprep.mubr.f32.mxu0 %v424
  %9384 = vmatmul.mubr.f32.gmra.mrb[0].mxu0 %v94
  %v9385 = vpop.f32.mrb[0].mxu0
  %v9386 = vadd.f32 0.0, %v9385
  %v9387 = vpop.f32.mrb[0].mxu0
  %9388 = vmatprep.mubr.f32.mxu0 %v427
  %9389 = vmatmul.mubr.f32.gmra.mrb[0].mxu0 %v96
  %v9390 = vpop.f32.mrb[0].mxu0
  %v9391 = vadd.f32 0.0, %v9390
  %v9392 = vpop.f32.mrb[0].mxu0
  %9393 = vmatprep.mubr.f32.mxu0 %v430
  %9394 = vmatmul.mubr.f32.gmra.mrb[0].mxu0 %v98
  %v9395 = vpop.f32.mrb[0].mxu0
  %v9396 = vadd.f32 0.0, %v9395
  %v9397 = vpop.f32.mrb[0].mxu0
  %9398 = vmatprep.mubr.f32.mxu0 %v433
  %9399 = vmatmul.mubr.f32.gmra.mrb[0].mxu0 %v100
  %v9400 = vpop.f32.mrb[0].mxu0
  %v9401 = vadd.f32 0.0, %v9400
  %v9402 = vpop.f32.mrb[0].mxu0
  %9403 = vmatprep.mubr.f32.mxu0 %v436
  %9404 = vmatmul.mubr.f32.gmra.mrb[0].mxu0 %v102
  %v9405 = vpop.f32.mrb[0].mxu0
  %v9406 = vadd.f32 0.0, %v9405
  %v9407 = vpop.f32.mrb[0].mxu0
  %9408 = vmatprep.mubr.f32.mxu0 %v439
  %9409 = vmatmul.mubr.f32.gmra.mrb[0].mxu0 %v104
  %v9410 = vpop.f32.mrb[0].mxu0
  %v9411 = vadd.f32 0.0, %v9410
  %v9412 = vpop.f32.mrb[0].mxu0
  %9413 = vmatprep.mubr.f32.mxu0 %v442
  %9414 = vmatmul.mubr.f32.gmra.mrb[0].mxu0 %v106
  %v9415 = vpop.f32.mrb[0].mxu0
  %v9416 = vadd.f32 0.0, %v9415
  %v9417 = vpop.f32.mrb[0].mxu0
  %9418 = vmatprep.mubr.f32.mxu0 %v445
  %9419 = vmatmul.mubr.f32.gmra.mrb[0].mxu0 %v108
  %v9420 = vpop.f32.mrb[0].mxu0
  %v9421 = vadd.f32 0.0, %v9420
  %v9422 = vpop.f32.mrb[0].mxu0
  %9423 = vmatprep.mubr.f32.mxu0 %v448
  %9424 = vmatmul.mubr.f32.gmra.mrb[0].mxu0 %v110
  %v9425 = vpop.f32.mrb[0].mxu0
  %v9426 = vadd.f32 0.0, %v9425
  %v9427 = vpop.f32.mrb[0].mxu0
  %9428 = vmatprep.mubr.f32.mxu0 %v451
  %9429 = vmatmul.mubr.f32.gmra.mrb[0].mxu0 %v112
  %v9430 = vpop.f32.mrb[0].mxu0
  %v9431 = vadd.f32 0.0, %v9430
  %v9432 = vpop.f32.mrb[0].mxu0
  %9433 = vmatprep.mubr.f32.mxu0 %v454
  %9434 = vmatmul.mubr.f32.gmra.mrb[0].mxu0 %v114
  %v9435 = vpop.f32.mrb[0].mxu0
  %v9436 = vadd.f32 0.0, %v9435
  %v9437 = vpop.f32.mrb[0].mxu0
  %9438 = vmatprep.mubr.f32.mxu0 %v457
  %9439 = vmatmul.mubr.f32.gmra.mrb[0].mxu0 %v116
  %v9440 = vpop.f32.mrb[0].mxu0
  %v9441 = vadd.f32 0.0, %v9440
  %v9442 = vpop.f32.mrb[0].mxu0
  %9443 = vmatprep.mubr.f32.mxu0 %v460
  %9444 = vmatmul.mubr.f32.gmra.mrb[0].mxu0 %v118
  %v9445 = vpop.f32.mrb[0].mxu0
  %v9446 = vadd.f32 0.0, %v9445
  %v9447 = vpop.f32.mrb[0].mxu0
  %9448 = vmatprep.mubr.f32.mxu0 %v463
  %9449 = vmatmul.mubr.f32.gmra.mrb[0].mxu0 %v120
  %v9450 = vpop.f32.mrb[0].mxu0
  %v9451 = vadd.f32 0.0, %v9450
  %v9452 = vpop.f32.mrb[0].mxu0
  %9453 = vmatprep.mubr.f32.mxu0 %v466
  %9454 = vmatmul.mubr.f32.gmra.mrb[0].mxu0 %v122
  %v9455 = vpop.f32.mrb[0].mxu0
  %v9456 = vadd.f32 0.0, %v9455
  %v9457 = vpop.f32.mrb[0].mxu0
  %9458 = vmatprep.mubr.f32.mxu0 %v469
  %9459 = vmatmul.mubr.f32.gmra.mrb[0].mxu0 %v124
  %v9460 = vpop.f32.mrb[0].mxu0
  %v9461 = vadd.f32 0.0, %v9460
  %v9462 = vpop.f32.mrb[0].mxu0
  %9463 = vmatprep.mubr.f32.mxu0 %v472
  %9464 = vmatmul.mubr.f32.gmra.mrb[0].mxu0 %v126
  %v9465 = vpop.f32.mrb[0].mxu0
  %v9466 = vadd.f32 0.0, %v9465
  %v9467 = vpop.f32.mrb[0].mxu0
  %9468 = vmatprep.mubr.f32.mxu0 %v475
  %9469 = vmatmul.mubr.f32.gmra.mrb[0].mxu0 %v128
  %v9470 = vpop.f32.mrb[0].mxu0
  %v9471 = vadd.f32 0.0, %v9470
  %v9472 = vpop.f32.mrb[0].mxu0
  %9473 = vmatprep.mubr.f32.mxu0 %v478
  %9474 = vmatmul.mubr.f32.gmra.mrb[0].mxu0 %v130
  %v9475 = vpop.f32.mrb[0].mxu0
  %v9476 = vadd.f32 0.0, %v9475
  %v9477 = vpop.f32.mrb[0].mxu0
  %9478 = vmatprep.mubr.f32.mxu0 %v481
  %9479 = vmatmul.mubr.f32.gmra.mrb[0].mxu0 %v132
  %v9480 = vpop.f32.mrb[0].mxu0
  %v9481 = vadd.f32 0.0, %v9480
  %v9482 = vpop.f32.mrb[0].mxu0
  %9483 = vmatprep.mubr.f32.mxu0 %v484
  %9484 = vmatmul.mubr.f32.gmra.mrb[0].mxu0 %v134
  %v9485 = vpop.f32.mrb[0].mxu0
  %v9486 = vadd.f32 0.0, %v9485
  %v9487 = vpop.f32.mrb[0].mxu0
  %9488 = vmatprep.mubr.f32.mxu0 %v487
  %9489 = vmatmul.mubr.f32.gmra.mrb[0].mxu0 %v136
  %v9490 = vpop.f32.mrb[0].mxu0
  %v9491 = vadd.f32 0.0, %v9490
  %v9492 = vpop.f32.mrb[0].mxu0
  %9493 = vmatprep.mubr.f32.mxu0 %v490
  %9494 = vmatmul.mubr.f32.gmra.mrb[0].mxu0 %v138
  %v9495 = vpop.f32.mrb[0].mxu0
  %v9496 = vadd.f32 0.0, %v9495
  %v9497 = vpop.f32.mrb[0].mxu0
  %9498 = vmatprep.mubr.f32.mxu0 %v493
  %9499 = vmatmul.mubr.f32.gmra.mrb[0].mxu0 %v140
  %v9500 = vpop.f32.mrb[0].mxu0
  %v9501 = vadd.f32 0.0, %v9500
  %v9502 = vpop.f32.mrb[0].mxu0
  %9503 = vmatprep.mubr.f32.mxu0 %v496
  %9504 = vmatmul.mubr.f32.gmra.mrb[0].mxu0 %v142
  %v9505 = vpop.f32.mrb[0].mxu0
  %v9506 = vadd.f32 0.0, %v9505
  %v9507 = vpop.f32.mrb[0].mxu0
  %9508 = vmatprep.mubr.f32.mxu0 %v499
  %9509 = vmatmul.mubr.f32.gmra.mrb[0].mxu0 %v144
  %v9510 = vpop.f32.mrb[0].mxu0
  %v9511 = vadd.f32 0.0, %v9510
  %v9512 = vpop.f32.mrb[0].mxu0
  %9513 = vmatprep.mubr.f32.mxu0 %v502
  %9514 = vmatmul.mubr.f32.gmra.mrb[0].mxu0 %v146
  %v9515 = vpop.f32.mrb[0].mxu0
  %v9516 = vadd.f32 0.0, %v9515
  %v9517 = vpop.f32.mrb[0].mxu0
  %9518 = vmatprep.mubr.f32.mxu0 %v505
  %9519 = vmatmul.mubr.f32.gmra.mrb[0].mxu0 %v148
  %v9520 = vpop.f32.mrb[0].mxu0
  %v9521 = vadd.f32 0.0, %v9520
  %v9522 = vpop.f32.mrb[0].mxu0
  %9523 = vmatprep.mubr.f32.mxu0 %v508
  %9524 = vmatmul.mubr.f32.gmra.mrb[0].mxu0 %v150
  %v9525 = vpop.f32.mrb[0].mxu0
  %v9526 = vadd.f32 0.0, %v9525
  %v9527 = vpop.f32.mrb[0].mxu0
  %9528 = vmatprep.mubr.f32.mxu0 %v511
  %9529 = vmatmul.mubr.f32.gmra.mrb[0].mxu0 %v152
  %v9530 = vpop.f32.mrb[0].mxu0
  %v9531 = vadd.f32 0.0, %v9530
  %v9532 = vpop.f32.mrb[0].mxu0
  %9533 = vmatprep.mubr.f32.mxu0 %v514
  %9534 = vmatmul.mubr.f32.gmra.mrb[0].mxu0 %v154
  %v9535 = vpop.f32.mrb[0].mxu0
  %v9536 = vadd.f32 0.0, %v9535
  %v9537 = vpop.f32.mrb[0].mxu0
  %9538 = vmatprep.mubr.f32.mxu0 %v517
  %9539 = vmatmul.mubr.f32.gmra.mrb[0].mxu0 %v156
  %v9540 = vpop.f32.mrb[0].mxu0
  %v9541 = vadd.f32 0.0, %v9540
  %v9542 = vpop.f32.mrb[0].mxu0
  %9543 = vmatprep.mubr.f32.mxu0 %v520
  %9544 = vmatmul.mubr.f32.gmra.mrb[0].mxu0 %v158
  %v9545 = vpop.f32.mrb[0].mxu0
  %v9546 = vadd.f32 0.0, %v9545
  %v9547 = vpop.f32.mrb[0].mxu0
  %9548 = vmatprep.mubr.f32.mxu0 %v523
  %9549 = vmatmul.mubr.f32.gmra.mrb[0].mxu0 %v160
  %v9550 = vpop.f32.mrb[0].mxu0
  %v9551 = vadd.f32 0.0, %v9550
  %v9552 = vpop.f32.mrb[0].mxu0
  %9553 = vmatprep.mubr.f32.mxu0 %v526
  %9554 = vmatmul.mubr.f32.gmra.mrb[0].mxu0 %v162
  %v9555 = vpop.f32.mrb[0].mxu0
  %v9556 = vadd.f32 0.0, %v9555
  %v9557 = vpop.f32.mrb[0].mxu0
  %9558 = vmatprep.mubr.f32.mxu0 %v529
  %9559 = vmatmul.mubr.f32.gmra.mrb[0].mxu0 %v164
  %v9560 = vpop.f32.mrb[0].mxu0
  %v9561 = vadd.f32 0.0, %v9560
  %v9562 = vpop.f32.mrb[0].mxu0
  %9563 = vmatprep.mubr.f32.mxu0 %v532
  %9564 = vmatmul.mubr.f32.gmra.mrb[0].mxu0 %v166
  %v9565 = vpop.f32.mrb[0].mxu0
  %v9566 = vadd.f32 0.0, %v9565
  %v9567 = vpop.f32.mrb[0].mxu0
  %9568 = vmatprep.mubr.f32.mxu0 %v535
  %9569 = vmatmul.mubr.f32.gmra.mrb[0].mxu0 %v168
  %v9570 = vpop.f32.mrb[0].mxu0
  %v9571 = vadd.f32 0.0, %v9570
  %v9572 = vpop.f32.mrb[0].mxu0
  %9573 = vmatprep.mubr.f32.mxu0 %v538
  %9574 = vmatmul.mubr.f32.gmra.mrb[0].mxu0 %v170
  %v9575 = vpop.f32.mrb[0].mxu0
  %v9576 = vadd.f32 0.0, %v9575
  %v9577 = vpop.f32.mrb[0].mxu0
  %9578 = vmatprep.mubr.f32.mxu0 %v541
  %9579 = vmatmul.mubr.f32.gmra.mrb[0].mxu0 %v172
  %v9580 = vpop.f32.mrb[0].mxu0
  %v9581 = vadd.f32 0.0, %v9580
  %v9582 = vpop.f32.mrb[0].mxu0
  %9583 = vmatprep.mubr.f32.mxu0 %v544
  %9584 = vmatmul.mubr.f32.gmra.mrb[0].mxu0 %v174
  %v9585 = vpop.f32.mrb[0].mxu0
  %v9586 = vadd.f32 0.0, %v9585
  %v9587 = vpop.f32.mrb[0].mxu0
  %9588 = vmatprep.mubr.f32.mxu0 %v547
  %9589 = vmatmul.mubr.f32.gmra.mrb[0].mxu0 %v176
  %v9590 = vpop.f32.mrb[0].mxu0
  %v9591 = vadd.f32 0.0, %v9590
  %v9592 = vpop.f32.mrb[0].mxu0
  %9593 = vmatprep.mubr.f32.mxu0 %v550
  %9594 = vmatmul.mubr.f32.gmra.mrb[0].mxu0 %v178
  %v9595 = vpop.f32.mrb[0].mxu0
  %v9596 = vadd.f32 0.0, %v9595
  %v9597 = vpop.f32.mrb[0].mxu0
  %9598 = vmatprep.mubr.f32.mxu0 %v553
  %9599 = vmatmul.mubr.f32.gmra.mrb[0].mxu0 %v180
  %v9600 = vpop.f32.mrb[0].mxu0
  %v9601 = vadd.f32 0.0, %v9600
  %v9602 = vpop.f32.mrb[0].mxu0
  %9603 = vmatprep.mubr.f32.mxu0 %v556
  %9604 = vmatmul.mubr.f32.gmra.mrb[0].mxu0 %v182
  %v9605 = vpop.f32.mrb[0].mxu0
  %v9606 = vadd.f32 0.0, %v9605
  %v9607 = vpop.f32.mrb[0].mxu0
  %9608 = vmatprep.mubr.f32.mxu0 %v559
  %9609 = vmatmul.mubr.f32.gmra.mrb[0].mxu0 %v184
  %v9610 = vpop.f32.mrb[0].mxu0
  %v9611 = vadd.f32 0.0, %v9610
  %v9612 = vpop.f32.mrb[0].mxu0
  %9613 = vmatprep.mubr.f32.mxu0 %v562
  %9614 = vmatmul.mubr.f32.gmra.mrb[0].mxu0 %v186
  %v9615 = vpop.f32.mrb[0].mxu0
  %v9616 = vadd.f32 0.0, %v9615
  %v9617 = vpop.f32.mrb[0].mxu0
  %9618 = vmatprep.mubr.f32.mxu0 %v565
  %9619 = vmatmul.mubr.f32.gmra.mrb[0].mxu0 %v188
  %v9620 = vpop.f32.mrb[0].mxu0
  %v9621 = vadd.f32 0.0, %v9620
  %v9622 = vpop.f32.mrb[0].mxu0
  %9623 = vmatprep.mubr.f32.mxu0 %v568
  %9624 = vmatmul.mubr.f32.gmra.mrb[0].mxu0 %v190
  %v9625 = vpop.f32.mrb[0].mxu0
  %v9626 = vadd.f32 0.0, %v9625
  %v9627 = vpop.f32.mrb[0].mxu0
  %9628 = vmatprep.mubr.f32.mxu0 %v571
  %9629 = vmatmul.mubr.f32.gmra.mrb[0].mxu0 %v192
  %v9630 = vpop.f32.mrb[0].mxu0
  %v9631 = vadd.f32 0.0, %v9630
  %v9632 = vpop.f32.mrb[0].mxu0
  %9633 = vmatprep.mubr.f32.mxu0 %v574
  %9634 = vmatmul.mubr.f32.gmra.mrb[0].mxu0 %v194
  %v9635 = vpop.f32.mrb[0].mxu0
  %v9636 = vadd.f32 0.0, %v9635
  %v9637 = vpop.f32.mrb[0].mxu0
  %9638 = vmatprep.mubr.f32.mxu0 %v577
  %9639 = vmatmul.mubr.f32.gmra.mrb[0].mxu0 %v196
  %v9640 = vpop.f32.mrb[0].mxu0
  %v9641 = vadd.f32 0.0, %v9640
  %v9642 = vpop.f32.mrb[0].mxu0
  %9643 = vmatprep.mubr.f32.mxu0 %v580
  %9644 = vmatmul.mubr.f32.gmra.mrb[0].mxu0 %v198
  %v9645 = vpop.f32.mrb[0].mxu0
  %v9646 = vadd.f32 0.0, %v9645
  %v9647 = vpop.f32.mrb[0].mxu0
  %9648 = vmatprep.mubr.f32.mxu0 %v583
  %9649 = vmatmul.mubr.f32.gmra.mrb[0].mxu0 %v200
  %v9650 = vpop.f32.mrb[0].mxu0
  %v9651 = vadd.f32 0.0, %v9650
  %v9652 = vpop.f32.mrb[0].mxu0
  %9653 = vmatprep.mubr.f32.mxu0 %v586
  %9654 = vmatmul.mubr.f32.gmra.mrb[0].mxu0 %v202
  %v9655 = vpop.f32.mrb[0].mxu0
  %v9656 = vadd.f32 0.0, %v9655
  %v9657 = vpop.f32.mrb[0].mxu0
  %9658 = vmatprep.mubr.f32.mxu0 %v589
  %9659 = vmatmul.mubr.f32.gmra.mrb[0].mxu0 %v204
  %v9660 = vpop.f32.mrb[0].mxu0
  %v9661 = vadd.f32 0.0, %v9660
  %v9662 = vpop.f32.mrb[0].mxu0
  %9663 = vmatprep.mubr.f32.mxu0 %v592
  %9664 = vmatmul.mubr.f32.gmra.mrb[0].mxu0 %v206
  %v9665 = vpop.f32.mrb[0].mxu0
  %v9666 = vadd.f32 0.0, %v9665
  %v9667 = vpop.f32.mrb[0].mxu0
  %9668 = vmatprep.mubr.f32.mxu0 %v595
  %9669 = vmatmul.mubr.f32.gmra.mrb[0].mxu0 %v208
  %v9670 = vpop.f32.mrb[0].mxu0
  %v9671 = vadd.f32 0.0, %v9670
  %v9672 = vpop.f32.mrb[0].mxu0
  %9673 = vmatprep.mubr.f32.mxu0 %v598
  %9674 = vmatmul.mubr.f32.gmra.mrb[0].mxu0 %v210
  %v9675 = vpop.f32.mrb[0].mxu0
  %v9676 = vadd.f32 0.0, %v9675
  %v9677 = vpop.f32.mrb[0].mxu0
  %9678 = vmatprep.mubr.f32.mxu0 %v601
  %9679 = vmatmul.mubr.f32.gmra.mrb[0].mxu0 %v212
  %v9680 = vpop.f32.mrb[0].mxu0
  %v9681 = vadd.f32 0.0, %v9680
  %v9682 = vpop.f32.mrb[0].mxu0
  %9683 = vmatprep.mubr.f32.mxu0 %v604
  %9684 = vmatmul.mubr.f32.gmra.mrb[0].mxu0 %v214
  %v9685 = vpop.f32.mrb[0].mxu0
  %v9686 = vadd.f32 0.0, %v9685
  %v9687 = vpop.f32.mrb[0].mxu0
  %9688 = vmatprep.mubr.f32.mxu0 %v607
  %9689 = vmatmul.mubr.f32.gmra.mrb[0].mxu0 %v216
  %v9690 = vpop.f32.mrb[0].mxu0
  %v9691 = vadd.f32 0.0, %v9690
  %v9692 = vpop.f32.mrb[0].mxu0
  %9693 = vmatprep.mubr.f32.mxu0 %v610
  %9694 = vmatmul.mubr.f32.gmra.mrb[0].mxu0 %v218
  %v9695 = vpop.f32.mrb[0].mxu0
  %v9696 = vadd.f32 0.0, %v9695
  %v9697 = vpop.f32.mrb[0].mxu0
  %9698 = vmatprep.mubr.f32.mxu0 %v613
  %9699 = vmatmul.mubr.f32.gmra.mrb[0].mxu0 %v220
  %v9700 = vpop.f32.mrb[0].mxu0
  %v9701 = vadd.f32 0.0, %v9700
  %v9702 = vpop.f32.mrb[0].mxu0
  %9703 = vmatprep.mubr.f32.mxu0 %v616
  %9704 = vmatmul.mubr.f32.gmra.mrb[0].mxu0 %v222
  %v9705 = vpop.f32.mrb[0].mxu0
  %v9706 = vadd.f32 0.0, %v9705
  %v9707 = vpop.f32.mrb[0].mxu0
  %9708 = vmatprep.mubr.f32.mxu0 %v619
  %9709 = vmatmul.mubr.f32.gmra.mrb[0].mxu0 %v224
  %v9710 = vpop.f32.mrb[0].mxu0
  %v9711 = vadd.f32 0.0, %v9710
  %v9712 = vpop.f32.mrb[0].mxu0
  %9713 = vmatprep.mubr.f32.mxu0 %v622
  %9714 = vmatmul.mubr.f32.gmra.mrb[0].mxu0 %v226
  %v9715 = vpop.f32.mrb[0].mxu0
  %v9716 = vadd.f32 0.0, %v9715
  %v9717 = vpop.f32.mrb[0].mxu0
  %9718 = vmatprep.mubr.f32.mxu0 %v625
  %9719 = vmatmul.mubr.f32.gmra.mrb[0].mxu0 %v228
  %v9720 = vpop.f32.mrb[0].mxu0
  %v9721 = vadd.f32 0.0, %v9720
  %v9722 = vpop.f32.mrb[0].mxu0
  %9723 = vmatprep.mubr.f32.mxu0 %v628
  %9724 = vmatmul.mubr.f32.gmra.mrb[0].mxu0 %v230
  %v9725 = vpop.f32.mrb[0].mxu0
  %v9726 = vadd.f32 0.0, %v9725
  %v9727 = vpop.f32.mrb[0].mxu0
  %9728 = vmatprep.mubr.f32.mxu0 %v631
  %9729 = vmatmul.mubr.f32.gmra.mrb[0].mxu0 %v232
  %v9730 = vpop.f32.mrb[0].mxu0
  %v9731 = vadd.f32 0.0, %v9730
  %v9732 = vpop.f32.mrb[0].mxu0
  %9733 = vmatprep.mubr.f32.mxu0 %v634
  %9734 = vmatmul.mubr.f32.gmra.mrb[0].mxu0 %v234
  %v9735 = vpop.f32.mrb[0].mxu0
  %v9736 = vadd.f32 0.0, %v9735
  %v9737 = vpop.f32.mrb[0].mxu0
  %9738 = vmatprep.mubr.f32.mxu0 %v637
  %9739 = vmatmul.mubr.f32.gmra.mrb[0].mxu0 %v236
  %v9740 = vpop.f32.mrb[0].mxu0
  %v9741 = vadd.f32 0.0, %v9740
  %v9742 = vpop.f32.mrb[0].mxu0
  %9743 = vmatprep.mubr.f32.mxu0 %v640
  %9744 = vmatmul.mubr.f32.gmra.mrb[0].mxu0 %v238
  %v9745 = vpop.f32.mrb[0].mxu0
  %v9746 = vadd.f32 0.0, %v9745
  %v9747 = vpop.f32.mrb[0].mxu0
  %9748 = vmatprep.mubr.f32.mxu0 %v643
  %9749 = vmatmul.mubr.f32.gmra.mrb[0].mxu0 %v240
  %v9750 = vpop.f32.mrb[0].mxu0
  %v9751 = vadd.f32 0.0, %v9750
  %v9752 = vpop.f32.mrb[0].mxu0
  %9753 = vmatprep.mubr.f32.mxu0 %v646
  %9754 = vmatmul.mubr.f32.gmra.mrb[0].mxu0 %v242
  %v9755 = vpop.f32.mrb[0].mxu0
  %v9756 = vadd.f32 0.0, %v9755
  %v9757 = vpop.f32.mrb[0].mxu0
  %9758 = vmatprep.mubr.f32.mxu0 %v649
  %9759 = vmatmul.mubr.f32.gmra.mrb[0].mxu0 %v244
  %v9760 = vpop.f32.mrb[0].mxu0
  %v9761 = vadd.f32 0.0, %v9760
  %v9762 = vpop.f32.mrb[0].mxu0
  %9763 = vmatprep.mubr.f32.mxu0 %v652
  %9764 = vmatmul.mubr.f32.gmra.mrb[0].mxu0 %v246
  %v9765 = vpop.f32.mrb[0].mxu0
  %v9766 = vadd.f32 0.0, %v9765
  %v9767 = vpop.f32.mrb[0].mxu0
  %9768 = vmatprep.mubr.f32.mxu0 %v655
  %9769 = vmatmul.mubr.f32.gmra.mrb[0].mxu0 %v248
  %v9770 = vpop.f32.mrb[0].mxu0
  %v9771 = vadd.f32 0.0, %v9770
  %v9772 = vpop.f32.mrb[0].mxu0
  %9773 = vmatprep.mubr.f32.mxu0 %v658
  %9774 = vmatmul.mubr.f32.gmra.mrb[0].mxu0 %v250
  %v9775 = vpop.f32.mrb[0].mxu0
  %v9776 = vadd.f32 0.0, %v9775
  %v9777 = vpop.f32.mrb[0].mxu0
  %9778 = vmatprep.mubr.f32.mxu0 %v661
  %9779 = vmatmul.mubr.f32.gmra.mrb[0].mxu0 %v252
  %v9780 = vpop.f32.mrb[0].mxu0
  %v9781 = vadd.f32 0.0, %v9780
  %v9782 = vpop.f32.mrb[0].mxu0
  %9783 = vmatprep.mubr.f32.mxu0 %v664
  %9784 = vmatmul.mubr.f32.gmra.mrb[0].mxu0 %v254
  %v9785 = vpop.f32.mrb[0].mxu0
  %v9786 = vadd.f32 0.0, %v9785
  %v9787 = vpop.f32.mrb[0].mxu0
  %9788 = vmatprep.mubr.f32.mxu0 %v667
  %9789 = vmatmul.mubr.f32.gmra.mrb[0].mxu0 %v256
  %v9790 = vpop.f32.mrb[0].mxu0
  %v9791 = vadd.f32 0.0, %v9790
  %v9792 = vpop.f32.mrb[0].mxu0
  %9793 = vmatprep.mubr.f32.mxu0 %v670
  %9794 = vmatmul.mubr.f32.gmra.mrb[0].mxu0 %v258
  %v9795 = vpop.f32.mrb[0].mxu0
  %v9796 = vadd.f32 0.0, %v9795
  %v9797 = vpop.f32.mrb[0].mxu0
  %9798 = vdwg.mxu0
  %v9799 = vmax.f32 %v9201, %v9351
  %v9800 = vmax.f32 %v9206, %v9356
  %v9801 = vmax.f32 %v9211, %v9361
  %v9802 = vmax.f32 %v9216, %v9366
  %v9803 = vmax.f32 %v9221, %v9371
  %v9804 = vmax.f32 %v9226, %v9376
  %v9805 = vmax.f32 %v9231, %v9381
  %v9806 = vmax.f32 %v9236, %v9386
  %v9807 = vmax.f32 %v9241, %v9391
  %v9808 = vmax.f32 %v9246, %v9396
  %v9809 = vmax.f32 %v9251, %v9401
  %v9810 = vmax.f32 %v9256, %v9406
  %v9811 = vmax.f32 %v9261, %v9411
  %v9812 = vmax.f32 %v9266, %v9416
  %v9813 = vmax.f32 %v9271, %v9421
  %v9814 = vmax.f32 %v9276, %v9426
  %v9815 = vmax.f32 %v9281, %v9431
  %v9816 = vmax.f32 %v9286, %v9436
  %v9817 = vmax.f32 %v9291, %v9441
  %v9818 = vmax.f32 %v9296, %v9446
  %v9819 = vmax.f32 %v9301, %v9451
  %v9820 = vmax.f32 %v9306, %v9456
  %v9821 = vmax.f32 %v9311, %v9461
  %v9822 = vmax.f32 %v9316, %v9466
  %v9823 = vmax.f32 %v9321, %v9471
  %v9824 = vmax.f32 %v9326, %v9476
  %v9825 = vmax.f32 %v9331, %v9481
  %v9826 = vmax.f32 %v9336, %v9486
  %v9827 = vmax.f32 %v9341, %v9491
  %v9828 = vmax.f32 %v9346, %v9496
  %v9829 = vmax.f32 %v9501, %v9651
  %v9830 = vmax.f32 %v9506, %v9656
  %v9831 = vmax.f32 %v9511, %v9661
  %v9832 = vmax.f32 %v9516, %v9666
  %v9833 = vmax.f32 %v9521, %v9671
  %v9834 = vmax.f32 %v9526, %v9676
  %v9835 = vmax.f32 %v9531, %v9681
  %v9836 = vmax.f32 %v9536, %v9686
  %v9837 = vmax.f32 %v9541, %v9691
  %v9838 = vmax.f32 %v9546, %v9696
  %v9839 = vmax.f32 %v9551, %v9701
  %v9840 = vmax.f32 %v9556, %v9706
  %v9841 = vmax.f32 %v9561, %v9711
  %v9842 = vmax.f32 %v9566, %v9716
  %v9843 = vmax.f32 %v9571, %v9721
  %v9844 = vmax.f32 %v9576, %v9726
  %v9845 = vmax.f32 %v9581, %v9731
  %v9846 = vmax.f32 %v9586, %v9736
  %v9847 = vmax.f32 %v9591, %v9741
  %v9848 = vmax.f32 %v9596, %v9746
  %v9849 = vmax.f32 %v9601, %v9751
  %v9850 = vmax.f32 %v9606, %v9756
  %v9851 = vmax.f32 %v9611, %v9761
  %v9852 = vmax.f32 %v9616, %v9766
  %v9853 = vmax.f32 %v9621, %v9771
  %v9854 = vmax.f32 %v9626, %v9776
  %v9855 = vmax.f32 %v9631, %v9781
  %v9856 = vmax.f32 %v9636, %v9786
  %v9857 = vmax.f32 %v9641, %v9791
  %v9858 = vmax.f32 %v9646, %v9796
  %v9859 = vmax.f32 %v9799, %v9829
  %v9860 = vmax.f32 %v9800, %v9830
  %v9861 = vmax.f32 %v9801, %v9831
  %v9862 = vmax.f32 %v9802, %v9832
  %v9863 = vmax.f32 %v9803, %v9833
  %v9864 = vmax.f32 %v9804, %v9834
  %v9865 = vmax.f32 %v9805, %v9835
  %v9866 = vmax.f32 %v9806, %v9836
  %v9867 = vmax.f32 %v9807, %v9837
  %v9868 = vmax.f32 %v9808, %v9838
  %v9869 = vmax.f32 %v9809, %v9839
  %v9870 = vmax.f32 %v9810, %v9840
  %v9871 = vmax.f32 %v9811, %v9841
  %v9872 = vmax.f32 %v9812, %v9842
  %v9873 = vmax.f32 %v9813, %v9843
  %v9874 = vmax.f32 %v9814, %v9844
  %v9875 = vmax.f32 %v9815, %v9845
  %v9876 = vmax.f32 %v9816, %v9846
  %v9877 = vmax.f32 %v9817, %v9847
  %v9878 = vmax.f32 %v9818, %v9848
  %v9879 = vmax.f32 %v9819, %v9849
  %v9880 = vmax.f32 %v9820, %v9850
  %v9881 = vmax.f32 %v9821, %v9851
  %v9882 = vmax.f32 %v9822, %v9852
  %v9883 = vmax.f32 %v9823, %v9853
  %v9884 = vmax.f32 %v9824, %v9854
  %v9885 = vmax.f32 %v9825, %v9855
  %v9886 = vmax.f32 %v9826, %v9856
  %v9887 = vmax.f32 %v9827, %v9857
  %v9888 = vmax.f32 %v9828, %v9858
  %v9889 = vadd.f32 %v9859, %v1430
  %v9890 = vadd.f32 %v9860, %v1435
  %v9891 = vadd.f32 %v9861, %v1440
  %v9892 = vadd.f32 %v9862, %v1445
  %v9893 = vadd.f32 %v9863, %v1450
  %v9894 = vadd.f32 %v9864, %v1455
  %v9895 = vadd.f32 %v9865, %v1460
  %v9896 = vadd.f32 %v9866, %v1465
  %v9897 = vadd.f32 %v9867, %v1470
  %v9898 = vadd.f32 %v9868, %v1475
  %v9899 = vadd.f32 %v9869, %v1480
  %v9900 = vadd.f32 %v9870, %v1485
  %v9901 = vadd.f32 %v9871, %v1490
  %v9902 = vadd.f32 %v9872, %v1495
  %v9903 = vadd.f32 %v9873, %v1500
  %v9904 = vadd.f32 %v9874, %v1505
  %v9905 = vadd.f32 %v9875, %v1510
  %v9906 = vadd.f32 %v9876, %v1515
  %v9907 = vadd.f32 %v9877, %v1520
  %v9908 = vadd.f32 %v9878, %v1525
  %v9909 = vadd.f32 %v9879, %v1530
  %v9910 = vadd.f32 %v9880, %v1535
  %v9911 = vadd.f32 %v9881, %v1540
  %v9912 = vadd.f32 %v9882, %v1545
  %v9913 = vadd.f32 %v9883, %v1550
  %v9914 = vadd.f32 %v9884, %v1555
  %v9915 = vadd.f32 %v9885, %v1560
  %v9916 = vadd.f32 %v9886, %v1565
  %v9917 = vadd.f32 %v9887, %v1570
  %v9918 = vadd.f32 %v9888, %v1575
  %v9919 = vmax.f32 %v9889, 0.0
  %v9920 = vmax.f32 %v9890, 0.0
  %v9921 = vmax.f32 %v9891, 0.0
  %v9922 = vmax.f32 %v9892, 0.0
  %v9923 = vmax.f32 %v9893, 0.0
  %v9924 = vmax.f32 %v9894, 0.0
  %v9925 = vmax.f32 %v9895, 0.0
  %v9926 = vmax.f32 %v9896, 0.0
  %v9927 = vmax.f32 %v9897, 0.0
  %v9928 = vmax.f32 %v9898, 0.0
  %v9929 = vmax.f32 %v9899, 0.0
  %v9930 = vmax.f32 %v9900, 0.0
  %v9931 = vmax.f32 %v9901, 0.0
  %v9932 = vmax.f32 %v9902, 0.0
  %v9933 = vmax.f32 %v9903, 0.0
  %v9934 = vmax.f32 %v9904, 0.0
  %v9935 = vmax.f32 %v9905, 0.0
  %v9936 = vmax.f32 %v9906, 0.0
  %v9937 = vmax.f32 %v9907, 0.0
  %v9938 = vmax.f32 %v9908, 0.0
  %v9939 = vmax.f32 %v9909, 0.0
  %v9940 = vmax.f32 %v9910, 0.0
  %v9941 = vmax.f32 %v9911, 0.0
  %v9942 = vmax.f32 %v9912, 0.0
  %v9943 = vmax.f32 %v9913, 0.0
  %v9944 = vmax.f32 %v9914, 0.0
  %v9945 = vmax.f32 %v9915, 0.0
  %v9946 = vmax.f32 %v9916, 0.0
  %v9947 = vmax.f32 %v9917, 0.0
  %v9948 = vmax.f32 %v9918, 0.0
  %s9949 = scalar_lea.vmem %s3, 288
  %v9950 = vld [vmem:[%s9949] sm:$0xff]
  %v9951 = vld [vmem:[%s9949 + $0x8] sm:$0xff]
  %v9952 = vld [vmem:[%s9949 + $0x10] sm:$0x3]
  %v9953 = vld [vmem:[%s9949 + $0x18] sm:$0x3]
  %v9955 = vsel %vm2482, %v9951, 0
  %v9958 = vsel %vm2482, %v9953, 0
  %9960 = vmatprep.subr.mxu0 0.0
  %9961 = vmatpush1.msra.mxu0 %v9919
  %9962 = vmatprep.subr.mxu0 0.0
  %9963 = vmatpush1.msra.mxu0 %v9920
  %9964 = vmatprep.subr.mxu0 0.0
  %9965 = vmatpush1.msra.mxu0 %v9921
  %9966 = vmatprep.subr.mxu0 0.0
  %9967 = vmatpush1.msra.mxu0 %v9922
  %9968 = vmatprep.subr.mxu0 0.0
  %9969 = vmatpush1.msra.mxu0 %v9923
  %9970 = vmatprep.subr.mxu0 0.0
  %9971 = vmatpush1.msra.mxu0 %v9924
  %9972 = vmatprep.subr.mxu0 0.0
  %9973 = vmatpush1.msra.mxu0 %v9925
  %9974 = vmatprep.subr.mxu0 0.0
  %9975 = vmatpush1.msra.mxu0 %v9926
  %9976 = vmatprep.subr.mxu0 0.0
  %9977 = vmatpush1.msra.mxu0 %v9927
  %9978 = vmatprep.subr.mxu0 0.0
  %9979 = vmatpush1.msra.mxu0 %v9928
  %9980 = vmatprep.subr.mxu0 0.0
  %9981 = vmatpush1.msra.mxu0 %v9929
  %9982 = vmatprep.subr.mxu0 0.0
  %9983 = vmatpush1.msra.mxu0 %v9930
  %9984 = vmatprep.subr.mxu0 0.0
  %9985 = vmatpush1.msra.mxu0 %v9931
  %9986 = vmatprep.subr.mxu0 0.0
  %9987 = vmatpush1.msra.mxu0 %v9932
  %9988 = vmatprep.subr.mxu0 0.0
  %9989 = vmatpush1.msra.mxu0 %v9933
  %9990 = vmatprep.subr.mxu0 0.0
  %9991 = vmatpush1.msra.mxu0 %v9934
  %9992 = vmatprep.subr.mxu0 0.0
  %9993 = vmatpush1.msra.mxu0 %v9935
  %9994 = vmatprep.subr.mxu0 0.0
  %9995 = vmatpush1.msra.mxu0 %v9936
  %9996 = vmatprep.subr.mxu0 0.0
  %9997 = vmatpush1.msra.mxu0 %v9937
  %9998 = vmatprep.subr.mxu0 0.0
  %9999 = vmatpush1.msra.mxu0 %v9938
  %10000 = vmatprep.subr.mxu0 0.0
  %10001 = vmatpush1.msra.mxu0 %v9939
  %10002 = vmatprep.subr.mxu0 0.0
  %10003 = vmatpush1.msra.mxu0 %v9940
  %10004 = vmatprep.subr.mxu0 0.0
  %10005 = vmatpush1.msra.mxu0 %v9941
  %10006 = vmatprep.subr.mxu0 0.0
  %10007 = vmatpush1.msra.mxu0 %v9942
  %10008 = vmatprep.subr.mxu0 0.0
  %10009 = vmatpush1.msra.mxu0 %v9943
  %10010 = vmatprep.subr.mxu0 0.0
  %10011 = vmatpush1.msra.mxu0 %v9944
  %10012 = vmatprep.subr.mxu0 0.0
  %10013 = vmatpush1.msra.mxu0 %v9945
  %10014 = vmatprep.subr.mxu0 0.0
  %10015 = vmatpush1.msra.mxu0 %v9946
  %10016 = vmatprep.subr.mxu0 0.0
  %10017 = vmatpush1.msra.mxu0 %v9947
  %10018 = vmatprep.subr.mxu0 0.0
  %10019 = vmatpush1.msra.mxu0 %v9948
  %10020 = vmatprep.subr.mxu0 0.0
  %10021 = vmatpush1.msra.mxu0 0.0
  %10022 = vmatprep.subr.mxu0 0.0
  %10023 = vmatpush1.msra.mxu0 0.0
  %10024 = vmatprep.mubr.f32.mxu0 %v9955
  %10025 = vmatmul.mubr.f32.gmra.mrb[0].mxu0 %v9950
  %v10026 = vpop.f32.mrb[0].mxu0
  %v10027 = vadd.f32 0.0, %v10026
  %v10028 = vpop.f32.mrb[0].mxu0
  %10029 = vmatprep.mubr.f32.mxu0 %v9958
  %10030 = vmatmul.mubr.f32.gmra.mrb[0].mxu0 %v9952
  %v10031 = vpop.f32.mrb[0].mxu0
  %v10032 = vadd.f32 0.0, %v10031
  %v10033 = vpop.f32.mrb[0].mxu0
  %10034 = vdwg.mxu0
  %v10035 = vadd.f32 %v9111, %v10027
  %v10036 = vadd.f32 %v9112, %v10032
  %v10037 = vld [vmem:[%s0 + $0x230] sm:$0xff]
  %v10038 = vld [vmem:[%s0 + $0x238] sm:$0xff]
  %v10039 = vld [vmem:[%s0 + $0x240] sm:$0xff]
  %v10040 = vld [vmem:[%s0 + $0x248] sm:$0xff]
  %v10041 = vld [vmem:[%s0 + $0x250] sm:$0xff]
  %v10042 = vld [vmem:[%s0 + $0x258] sm:$0xff]
  %v10043 = vld [vmem:[%s0 + $0x260] sm:$0xff]
  %v10044 = vld [vmem:[%s0 + $0x268] sm:$0xff]
  %v10045 = vld [vmem:[%s0 + $0x270] sm:$0xff]
  %v10046 = vld [vmem:[%s0 + $0x278] sm:$0xff]
  %v10047 = vld [vmem:[%s0 + $0x280] sm:$0xff]
  %v10048 = vld [vmem:[%s0 + $0x288] sm:$0xff]
  %v10049 = vld [vmem:[%s0 + $0x290] sm:$0xff]
  %v10050 = vld [vmem:[%s0 + $0x298] sm:$0xff]
  %v10051 = vld [vmem:[%s0 + $0x2a0] sm:$0xff]
  %v10052 = vld [vmem:[%s0 + $0x2a8] sm:$0xff]
  %v10053 = vld [vmem:[%s0 + $0x2b0] sm:$0xff]
  %v10054 = vld [vmem:[%s0 + $0x2b8] sm:$0xff]
  %v10055 = vld [vmem:[%s0 + $0x2c0] sm:$0xff]
  %v10056 = vld [vmem:[%s0 + $0x2c8] sm:$0xff]
  %v10057 = vld [vmem:[%s0 + $0x2d0] sm:$0xff]
  %10058 = vmatprep.subr.mxu0 0.0
  %10059 = vmatpush1.msra.mxu0 %v10037
  %10060 = vmatprep.subr.mxu0 0.0
  %10061 = vmatpush1.msra.mxu0 %v10038
  %10062 = vmatprep.subr.mxu0 0.0
  %10063 = vmatpush1.msra.mxu0 %v10039
  %10064 = vmatprep.subr.mxu0 0.0
  %10065 = vmatpush1.msra.mxu0 %v10040
  %10066 = vmatprep.subr.mxu0 0.0
  %10067 = vmatpush1.msra.mxu0 %v10041
  %10068 = vmatprep.subr.mxu0 0.0
  %10069 = vmatpush1.msra.mxu0 %v10042
  %10070 = vmatprep.subr.mxu0 0.0
  %10071 = vmatpush1.msra.mxu0 %v10043
  %10072 = vmatprep.subr.mxu0 0.0
  %10073 = vmatpush1.msra.mxu0 %v10044
  %10074 = vmatprep.subr.mxu0 0.0
  %10075 = vmatpush1.msra.mxu0 %v10045
  %10076 = vmatprep.subr.mxu0 0.0
  %10077 = vmatpush1.msra.mxu0 %v10046
  %10078 = vmatprep.subr.mxu0 0.0
  %10079 = vmatpush1.msra.mxu0 %v10047
  %10080 = vmatprep.subr.mxu0 0.0
  %10081 = vmatpush1.msra.mxu0 %v10048
  %10082 = vmatprep.subr.mxu0 0.0
  %10083 = vmatpush1.msra.mxu0 %v10049
  %10084 = vmatprep.subr.mxu0 0.0
  %10085 = vmatpush1.msra.mxu0 %v10050
  %10086 = vmatprep.subr.mxu0 0.0
  %10087 = vmatpush1.msra.mxu0 %v10051
  %10088 = vmatprep.subr.mxu0 0.0
  %10089 = vmatpush1.msra.mxu0 %v10052
  %10090 = vmatprep.subr.mxu0 0.0
  %10091 = vmatpush1.msra.mxu0 %v10053
  %10092 = vmatprep.subr.mxu0 0.0
  %10093 = vmatpush1.msra.mxu0 %v10054
  %10094 = vmatprep.subr.mxu0 0.0
  %10095 = vmatpush1.msra.mxu0 %v10055
  %10096 = vmatprep.subr.mxu0 0.0
  %10097 = vmatpush1.msra.mxu0 %v10056
  %10098 = vmatprep.subr.mxu0 0.0
  %10099 = vmatpush1.msra.mxu0 %v10057
  %10100 = vmatprep.subr.mxu0 0.0
  %10101 = vmatpush1.msra.mxu0 0.0
  %10102 = vmatprep.subr.mxu0 0.0
  %10103 = vmatpush1.msra.mxu0 0.0
  %10104 = vmatprep.subr.mxu0 0.0
  %10105 = vmatpush1.msra.mxu0 0.0
  %10106 = vmatprep.subr.mxu0 0.0
  %10107 = vmatpush1.msra.mxu0 0.0
  %10108 = vmatprep.subr.mxu0 0.0
  %10109 = vmatpush1.msra.mxu0 0.0
  %10110 = vmatprep.subr.mxu0 0.0
  %10111 = vmatpush1.msra.mxu0 0.0
  %10112 = vmatprep.subr.mxu0 0.0
  %10113 = vmatpush1.msra.mxu0 0.0
  %10114 = vmatprep.subr.mxu0 0.0
  %10115 = vmatpush1.msra.mxu0 0.0
  %10116 = vmatprep.subr.mxu0 0.0
  %10117 = vmatpush1.msra.mxu0 0.0
  %10118 = vmatprep.subr.mxu0 0.0
  %10119 = vmatpush1.msra.mxu0 0.0
  %10120 = vmatprep.subr.mxu0 0.0
  %10121 = vmatpush1.msra.mxu0 0.0
  %10122 = vmatprep.mubr.f32.mxu0 %v313
  %10123 = vmatmul.mubr.f32.gmra.mrb[0].mxu0 %v20
  %v10124 = vpop.f32.mrb[0].mxu0
  %v10125 = vadd.f32 0.0, %v10124
  %v10126 = vpop.f32.mrb[0].mxu0
  %10127 = vmatprep.mubr.f32.mxu0 %v316
  %10128 = vmatmul.mubr.f32.gmra.mrb[0].mxu0 %v22
  %v10129 = vpop.f32.mrb[0].mxu0
  %v10130 = vadd.f32 0.0, %v10129
  %v10131 = vpop.f32.mrb[0].mxu0
  %10132 = vmatprep.mubr.f32.mxu0 %v319
  %10133 = vmatmul.mubr.f32.gmra.mrb[0].mxu0 %v24
  %v10134 = vpop.f32.mrb[0].mxu0
  %v10135 = vadd.f32 0.0, %v10134
  %v10136 = vpop.f32.mrb[0].mxu0
  %10137 = vmatprep.mubr.f32.mxu0 %v322
  %10138 = vmatmul.mubr.f32.gmra.mrb[0].mxu0 %v26
  %v10139 = vpop.f32.mrb[0].mxu0
  %v10140 = vadd.f32 0.0, %v10139
  %v10141 = vpop.f32.mrb[0].mxu0
  %10142 = vmatprep.mubr.f32.mxu0 %v325
  %10143 = vmatmul.mubr.f32.gmra.mrb[0].mxu0 %v28
  %v10144 = vpop.f32.mrb[0].mxu0
  %v10145 = vadd.f32 0.0, %v10144
  %v10146 = vpop.f32.mrb[0].mxu0
  %10147 = vmatprep.mubr.f32.mxu0 %v328
  %10148 = vmatmul.mubr.f32.gmra.mrb[0].mxu0 %v30
  %v10149 = vpop.f32.mrb[0].mxu0
  %v10150 = vadd.f32 0.0, %v10149
  %v10151 = vpop.f32.mrb[0].mxu0
  %10152 = vmatprep.mubr.f32.mxu0 %v331
  %10153 = vmatmul.mubr.f32.gmra.mrb[0].mxu0 %v32
  %v10154 = vpop.f32.mrb[0].mxu0
  %v10155 = vadd.f32 0.0, %v10154
  %v10156 = vpop.f32.mrb[0].mxu0
  %10157 = vmatprep.mubr.f32.mxu0 %v334
  %10158 = vmatmul.mubr.f32.gmra.mrb[0].mxu0 %v34
  %v10159 = vpop.f32.mrb[0].mxu0
  %v10160 = vadd.f32 0.0, %v10159
  %v10161 = vpop.f32.mrb[0].mxu0
  %10162 = vmatprep.mubr.f32.mxu0 %v337
  %10163 = vmatmul.mubr.f32.gmra.mrb[0].mxu0 %v36
  %v10164 = vpop.f32.mrb[0].mxu0
  %v10165 = vadd.f32 0.0, %v10164
  %v10166 = vpop.f32.mrb[0].mxu0
  %10167 = vmatprep.mubr.f32.mxu0 %v340
  %10168 = vmatmul.mubr.f32.gmra.mrb[0].mxu0 %v38
  %v10169 = vpop.f32.mrb[0].mxu0
  %v10170 = vadd.f32 0.0, %v10169
  %v10171 = vpop.f32.mrb[0].mxu0
  %10172 = vmatprep.mubr.f32.mxu0 %v343
  %10173 = vmatmul.mubr.f32.gmra.mrb[0].mxu0 %v40
  %v10174 = vpop.f32.mrb[0].mxu0
  %v10175 = vadd.f32 0.0, %v10174
  %v10176 = vpop.f32.mrb[0].mxu0
  %10177 = vmatprep.mubr.f32.mxu0 %v346
  %10178 = vmatmul.mubr.f32.gmra.mrb[0].mxu0 %v42
  %v10179 = vpop.f32.mrb[0].mxu0
  %v10180 = vadd.f32 0.0, %v10179
  %v10181 = vpop.f32.mrb[0].mxu0
  %10182 = vmatprep.mubr.f32.mxu0 %v349
  %10183 = vmatmul.mubr.f32.gmra.mrb[0].mxu0 %v44
  %v10184 = vpop.f32.mrb[0].mxu0
  %v10185 = vadd.f32 0.0, %v10184
  %v10186 = vpop.f32.mrb[0].mxu0
  %10187 = vmatprep.mubr.f32.mxu0 %v352
  %10188 = vmatmul.mubr.f32.gmra.mrb[0].mxu0 %v46
  %v10189 = vpop.f32.mrb[0].mxu0
  %v10190 = vadd.f32 0.0, %v10189
  %v10191 = vpop.f32.mrb[0].mxu0
  %10192 = vmatprep.mubr.f32.mxu0 %v355
  %10193 = vmatmul.mubr.f32.gmra.mrb[0].mxu0 %v48
  %v10194 = vpop.f32.mrb[0].mxu0
  %v10195 = vadd.f32 0.0, %v10194
  %v10196 = vpop.f32.mrb[0].mxu0
  %10197 = vmatprep.mubr.f32.mxu0 %v358
  %10198 = vmatmul.mubr.f32.gmra.mrb[0].mxu0 %v50
  %v10199 = vpop.f32.mrb[0].mxu0
  %v10200 = vadd.f32 0.0, %v10199
  %v10201 = vpop.f32.mrb[0].mxu0
  %10202 = vmatprep.mubr.f32.mxu0 %v361
  %10203 = vmatmul.mubr.f32.gmra.mrb[0].mxu0 %v52
  %v10204 = vpop.f32.mrb[0].mxu0
  %v10205 = vadd.f32 0.0, %v10204
  %v10206 = vpop.f32.mrb[0].mxu0
  %10207 = vmatprep.mubr.f32.mxu0 %v364
  %10208 = vmatmul.mubr.f32.gmra.mrb[0].mxu0 %v54
  %v10209 = vpop.f32.mrb[0].mxu0
  %v10210 = vadd.f32 0.0, %v10209
  %v10211 = vpop.f32.mrb[0].mxu0
  %10212 = vmatprep.mubr.f32.mxu0 %v367
  %10213 = vmatmul.mubr.f32.gmra.mrb[0].mxu0 %v56
  %v10214 = vpop.f32.mrb[0].mxu0
  %v10215 = vadd.f32 0.0, %v10214
  %v10216 = vpop.f32.mrb[0].mxu0
  %10217 = vmatprep.mubr.f32.mxu0 %v370
  %10218 = vmatmul.mubr.f32.gmra.mrb[0].mxu0 %v58
  %v10219 = vpop.f32.mrb[0].mxu0
  %v10220 = vadd.f32 0.0, %v10219
  %v10221 = vpop.f32.mrb[0].mxu0
  %10222 = vmatprep.mubr.f32.mxu0 %v373
  %10223 = vmatmul.mubr.f32.gmra.mrb[0].mxu0 %v60
  %v10224 = vpop.f32.mrb[0].mxu0
  %v10225 = vadd.f32 0.0, %v10224
  %v10226 = vpop.f32.mrb[0].mxu0
  %10227 = vmatprep.mubr.f32.mxu0 %v376
  %10228 = vmatmul.mubr.f32.gmra.mrb[0].mxu0 %v62
  %v10229 = vpop.f32.mrb[0].mxu0
  %v10230 = vadd.f32 0.0, %v10229
  %v10231 = vpop.f32.mrb[0].mxu0
  %10232 = vmatprep.mubr.f32.mxu0 %v379
  %10233 = vmatmul.mubr.f32.gmra.mrb[0].mxu0 %v64
  %v10234 = vpop.f32.mrb[0].mxu0
  %v10235 = vadd.f32 0.0, %v10234
  %v10236 = vpop.f32.mrb[0].mxu0
  %10237 = vmatprep.mubr.f32.mxu0 %v382
  %10238 = vmatmul.mubr.f32.gmra.mrb[0].mxu0 %v66
  %v10239 = vpop.f32.mrb[0].mxu0
  %v10240 = vadd.f32 0.0, %v10239
  %v10241 = vpop.f32.mrb[0].mxu0
  %10242 = vmatprep.mubr.f32.mxu0 %v385
  %10243 = vmatmul.mubr.f32.gmra.mrb[0].mxu0 %v68
  %v10244 = vpop.f32.mrb[0].mxu0
  %v10245 = vadd.f32 0.0, %v10244
  %v10246 = vpop.f32.mrb[0].mxu0
  %10247 = vmatprep.mubr.f32.mxu0 %v388
  %10248 = vmatmul.mubr.f32.gmra.mrb[0].mxu0 %v70
  %v10249 = vpop.f32.mrb[0].mxu0
  %v10250 = vadd.f32 0.0, %v10249
  %v10251 = vpop.f32.mrb[0].mxu0
  %10252 = vmatprep.mubr.f32.mxu0 %v391
  %10253 = vmatmul.mubr.f32.gmra.mrb[0].mxu0 %v72
  %v10254 = vpop.f32.mrb[0].mxu0
  %v10255 = vadd.f32 0.0, %v10254
  %v10256 = vpop.f32.mrb[0].mxu0
  %10257 = vmatprep.mubr.f32.mxu0 %v394
  %10258 = vmatmul.mubr.f32.gmra.mrb[0].mxu0 %v74
  %v10259 = vpop.f32.mrb[0].mxu0
  %v10260 = vadd.f32 0.0, %v10259
  %v10261 = vpop.f32.mrb[0].mxu0
  %10262 = vmatprep.mubr.f32.mxu0 %v397
  %10263 = vmatmul.mubr.f32.gmra.mrb[0].mxu0 %v76
  %v10264 = vpop.f32.mrb[0].mxu0
  %v10265 = vadd.f32 0.0, %v10264
  %v10266 = vpop.f32.mrb[0].mxu0
  %10267 = vmatprep.mubr.f32.mxu0 %v400
  %10268 = vmatmul.mubr.f32.gmra.mrb[0].mxu0 %v78
  %v10269 = vpop.f32.mrb[0].mxu0
  %v10270 = vadd.f32 0.0, %v10269
  %v10271 = vpop.f32.mrb[0].mxu0
  %10272 = vmatprep.mubr.f32.mxu0 %v403
  %10273 = vmatmul.mubr.f32.gmra.mrb[0].mxu0 %v80
  %v10274 = vpop.f32.mrb[0].mxu0
  %v10275 = vadd.f32 0.0, %v10274
  %v10276 = vpop.f32.mrb[0].mxu0
  %10277 = vmatprep.mubr.f32.mxu0 %v406
  %10278 = vmatmul.mubr.f32.gmra.mrb[0].mxu0 %v82
  %v10279 = vpop.f32.mrb[0].mxu0
  %v10280 = vadd.f32 0.0, %v10279
  %v10281 = vpop.f32.mrb[0].mxu0
  %10282 = vmatprep.mubr.f32.mxu0 %v409
  %10283 = vmatmul.mubr.f32.gmra.mrb[0].mxu0 %v84
  %v10284 = vpop.f32.mrb[0].mxu0
  %v10285 = vadd.f32 0.0, %v10284
  %v10286 = vpop.f32.mrb[0].mxu0
  %10287 = vmatprep.mubr.f32.mxu0 %v412
  %10288 = vmatmul.mubr.f32.gmra.mrb[0].mxu0 %v86
  %v10289 = vpop.f32.mrb[0].mxu0
  %v10290 = vadd.f32 0.0, %v10289
  %v10291 = vpop.f32.mrb[0].mxu0
  %10292 = vmatprep.mubr.f32.mxu0 %v415
  %10293 = vmatmul.mubr.f32.gmra.mrb[0].mxu0 %v88
  %v10294 = vpop.f32.mrb[0].mxu0
  %v10295 = vadd.f32 0.0, %v10294
  %v10296 = vpop.f32.mrb[0].mxu0
  %10297 = vmatprep.mubr.f32.mxu0 %v418
  %10298 = vmatmul.mubr.f32.gmra.mrb[0].mxu0 %v90
  %v10299 = vpop.f32.mrb[0].mxu0
  %v10300 = vadd.f32 0.0, %v10299
  %v10301 = vpop.f32.mrb[0].mxu0
  %10302 = vmatprep.mubr.f32.mxu0 %v421
  %10303 = vmatmul.mubr.f32.gmra.mrb[0].mxu0 %v92
  %v10304 = vpop.f32.mrb[0].mxu0
  %v10305 = vadd.f32 0.0, %v10304
  %v10306 = vpop.f32.mrb[0].mxu0
  %10307 = vmatprep.mubr.f32.mxu0 %v424
  %10308 = vmatmul.mubr.f32.gmra.mrb[0].mxu0 %v94
  %v10309 = vpop.f32.mrb[0].mxu0
  %v10310 = vadd.f32 0.0, %v10309
  %v10311 = vpop.f32.mrb[0].mxu0
  %10312 = vmatprep.mubr.f32.mxu0 %v427
  %10313 = vmatmul.mubr.f32.gmra.mrb[0].mxu0 %v96
  %v10314 = vpop.f32.mrb[0].mxu0
  %v10315 = vadd.f32 0.0, %v10314
  %v10316 = vpop.f32.mrb[0].mxu0
  %10317 = vmatprep.mubr.f32.mxu0 %v430
  %10318 = vmatmul.mubr.f32.gmra.mrb[0].mxu0 %v98
  %v10319 = vpop.f32.mrb[0].mxu0
  %v10320 = vadd.f32 0.0, %v10319
  %v10321 = vpop.f32.mrb[0].mxu0
  %10322 = vmatprep.mubr.f32.mxu0 %v433
  %10323 = vmatmul.mubr.f32.gmra.mrb[0].mxu0 %v100
  %v10324 = vpop.f32.mrb[0].mxu0
  %v10325 = vadd.f32 0.0, %v10324
  %v10326 = vpop.f32.mrb[0].mxu0
  %10327 = vmatprep.mubr.f32.mxu0 %v436
  %10328 = vmatmul.mubr.f32.gmra.mrb[0].mxu0 %v102
  %v10329 = vpop.f32.mrb[0].mxu0
  %v10330 = vadd.f32 0.0, %v10329
  %v10331 = vpop.f32.mrb[0].mxu0
  %10332 = vmatprep.mubr.f32.mxu0 %v439
  %10333 = vmatmul.mubr.f32.gmra.mrb[0].mxu0 %v104
  %v10334 = vpop.f32.mrb[0].mxu0
  %v10335 = vadd.f32 0.0, %v10334
  %v10336 = vpop.f32.mrb[0].mxu0
  %10337 = vmatprep.mubr.f32.mxu0 %v442
  %10338 = vmatmul.mubr.f32.gmra.mrb[0].mxu0 %v106
  %v10339 = vpop.f32.mrb[0].mxu0
  %v10340 = vadd.f32 0.0, %v10339
  %v10341 = vpop.f32.mrb[0].mxu0
  %10342 = vmatprep.mubr.f32.mxu0 %v445
  %10343 = vmatmul.mubr.f32.gmra.mrb[0].mxu0 %v108
  %v10344 = vpop.f32.mrb[0].mxu0
  %v10345 = vadd.f32 0.0, %v10344
  %v10346 = vpop.f32.mrb[0].mxu0
  %10347 = vmatprep.mubr.f32.mxu0 %v448
  %10348 = vmatmul.mubr.f32.gmra.mrb[0].mxu0 %v110
  %v10349 = vpop.f32.mrb[0].mxu0
  %v10350 = vadd.f32 0.0, %v10349
  %v10351 = vpop.f32.mrb[0].mxu0
  %10352 = vmatprep.mubr.f32.mxu0 %v451
  %10353 = vmatmul.mubr.f32.gmra.mrb[0].mxu0 %v112
  %v10354 = vpop.f32.mrb[0].mxu0
  %v10355 = vadd.f32 0.0, %v10354
  %v10356 = vpop.f32.mrb[0].mxu0
  %10357 = vmatprep.mubr.f32.mxu0 %v454
  %10358 = vmatmul.mubr.f32.gmra.mrb[0].mxu0 %v114
  %v10359 = vpop.f32.mrb[0].mxu0
  %v10360 = vadd.f32 0.0, %v10359
  %v10361 = vpop.f32.mrb[0].mxu0
  %10362 = vmatprep.mubr.f32.mxu0 %v457
  %10363 = vmatmul.mubr.f32.gmra.mrb[0].mxu0 %v116
  %v10364 = vpop.f32.mrb[0].mxu0
  %v10365 = vadd.f32 0.0, %v10364
  %v10366 = vpop.f32.mrb[0].mxu0
  %10367 = vmatprep.mubr.f32.mxu0 %v460
  %10368 = vmatmul.mubr.f32.gmra.mrb[0].mxu0 %v118
  %v10369 = vpop.f32.mrb[0].mxu0
  %v10370 = vadd.f32 0.0, %v10369
  %v10371 = vpop.f32.mrb[0].mxu0
  %10372 = vmatprep.mubr.f32.mxu0 %v463
  %10373 = vmatmul.mubr.f32.gmra.mrb[0].mxu0 %v120
  %v10374 = vpop.f32.mrb[0].mxu0
  %v10375 = vadd.f32 0.0, %v10374
  %v10376 = vpop.f32.mrb[0].mxu0
  %10377 = vmatprep.mubr.f32.mxu0 %v466
  %10378 = vmatmul.mubr.f32.gmra.mrb[0].mxu0 %v122
  %v10379 = vpop.f32.mrb[0].mxu0
  %v10380 = vadd.f32 0.0, %v10379
  %v10381 = vpop.f32.mrb[0].mxu0
  %10382 = vmatprep.mubr.f32.mxu0 %v469
  %10383 = vmatmul.mubr.f32.gmra.mrb[0].mxu0 %v124
  %v10384 = vpop.f32.mrb[0].mxu0
  %v10385 = vadd.f32 0.0, %v10384
  %v10386 = vpop.f32.mrb[0].mxu0
  %10387 = vmatprep.mubr.f32.mxu0 %v472
  %10388 = vmatmul.mubr.f32.gmra.mrb[0].mxu0 %v126
  %v10389 = vpop.f32.mrb[0].mxu0
  %v10390 = vadd.f32 0.0, %v10389
  %v10391 = vpop.f32.mrb[0].mxu0
  %10392 = vmatprep.mubr.f32.mxu0 %v475
  %10393 = vmatmul.mubr.f32.gmra.mrb[0].mxu0 %v128
  %v10394 = vpop.f32.mrb[0].mxu0
  %v10395 = vadd.f32 0.0, %v10394
  %v10396 = vpop.f32.mrb[0].mxu0
  %10397 = vmatprep.mubr.f32.mxu0 %v478
  %10398 = vmatmul.mubr.f32.gmra.mrb[0].mxu0 %v130
  %v10399 = vpop.f32.mrb[0].mxu0
  %v10400 = vadd.f32 0.0, %v10399
  %v10401 = vpop.f32.mrb[0].mxu0
  %10402 = vmatprep.mubr.f32.mxu0 %v481
  %10403 = vmatmul.mubr.f32.gmra.mrb[0].mxu0 %v132
  %v10404 = vpop.f32.mrb[0].mxu0
  %v10405 = vadd.f32 0.0, %v10404
  %v10406 = vpop.f32.mrb[0].mxu0
  %10407 = vmatprep.mubr.f32.mxu0 %v484
  %10408 = vmatmul.mubr.f32.gmra.mrb[0].mxu0 %v134
  %v10409 = vpop.f32.mrb[0].mxu0
  %v10410 = vadd.f32 0.0, %v10409
  %v10411 = vpop.f32.mrb[0].mxu0
  %10412 = vmatprep.mubr.f32.mxu0 %v487
  %10413 = vmatmul.mubr.f32.gmra.mrb[0].mxu0 %v136
  %v10414 = vpop.f32.mrb[0].mxu0
  %v10415 = vadd.f32 0.0, %v10414
  %v10416 = vpop.f32.mrb[0].mxu0
  %10417 = vmatprep.mubr.f32.mxu0 %v490
  %10418 = vmatmul.mubr.f32.gmra.mrb[0].mxu0 %v138
  %v10419 = vpop.f32.mrb[0].mxu0
  %v10420 = vadd.f32 0.0, %v10419
  %v10421 = vpop.f32.mrb[0].mxu0
  %10422 = vmatprep.mubr.f32.mxu0 %v493
  %10423 = vmatmul.mubr.f32.gmra.mrb[0].mxu0 %v140
  %v10424 = vpop.f32.mrb[0].mxu0
  %v10425 = vadd.f32 0.0, %v10424
  %v10426 = vpop.f32.mrb[0].mxu0
  %10427 = vmatprep.mubr.f32.mxu0 %v496
  %10428 = vmatmul.mubr.f32.gmra.mrb[0].mxu0 %v142
  %v10429 = vpop.f32.mrb[0].mxu0
  %v10430 = vadd.f32 0.0, %v10429
  %v10431 = vpop.f32.mrb[0].mxu0
  %10432 = vmatprep.mubr.f32.mxu0 %v499
  %10433 = vmatmul.mubr.f32.gmra.mrb[0].mxu0 %v144
  %v10434 = vpop.f32.mrb[0].mxu0
  %v10435 = vadd.f32 0.0, %v10434
  %v10436 = vpop.f32.mrb[0].mxu0
  %10437 = vmatprep.mubr.f32.mxu0 %v502
  %10438 = vmatmul.mubr.f32.gmra.mrb[0].mxu0 %v146
  %v10439 = vpop.f32.mrb[0].mxu0
  %v10440 = vadd.f32 0.0, %v10439
  %v10441 = vpop.f32.mrb[0].mxu0
  %10442 = vmatprep.mubr.f32.mxu0 %v505
  %10443 = vmatmul.mubr.f32.gmra.mrb[0].mxu0 %v148
  %v10444 = vpop.f32.mrb[0].mxu0
  %v10445 = vadd.f32 0.0, %v10444
  %v10446 = vpop.f32.mrb[0].mxu0
  %10447 = vmatprep.mubr.f32.mxu0 %v508
  %10448 = vmatmul.mubr.f32.gmra.mrb[0].mxu0 %v150
  %v10449 = vpop.f32.mrb[0].mxu0
  %v10450 = vadd.f32 0.0, %v10449
  %v10451 = vpop.f32.mrb[0].mxu0
  %10452 = vmatprep.mubr.f32.mxu0 %v511
  %10453 = vmatmul.mubr.f32.gmra.mrb[0].mxu0 %v152
  %v10454 = vpop.f32.mrb[0].mxu0
  %v10455 = vadd.f32 0.0, %v10454
  %v10456 = vpop.f32.mrb[0].mxu0
  %10457 = vmatprep.mubr.f32.mxu0 %v514
  %10458 = vmatmul.mubr.f32.gmra.mrb[0].mxu0 %v154
  %v10459 = vpop.f32.mrb[0].mxu0
  %v10460 = vadd.f32 0.0, %v10459
  %v10461 = vpop.f32.mrb[0].mxu0
  %10462 = vmatprep.mubr.f32.mxu0 %v517
  %10463 = vmatmul.mubr.f32.gmra.mrb[0].mxu0 %v156
  %v10464 = vpop.f32.mrb[0].mxu0
  %v10465 = vadd.f32 0.0, %v10464
  %v10466 = vpop.f32.mrb[0].mxu0
  %10467 = vmatprep.mubr.f32.mxu0 %v520
  %10468 = vmatmul.mubr.f32.gmra.mrb[0].mxu0 %v158
  %v10469 = vpop.f32.mrb[0].mxu0
  %v10470 = vadd.f32 0.0, %v10469
  %v10471 = vpop.f32.mrb[0].mxu0
  %10472 = vmatprep.mubr.f32.mxu0 %v523
  %10473 = vmatmul.mubr.f32.gmra.mrb[0].mxu0 %v160
  %v10474 = vpop.f32.mrb[0].mxu0
  %v10475 = vadd.f32 0.0, %v10474
  %v10476 = vpop.f32.mrb[0].mxu0
  %10477 = vmatprep.mubr.f32.mxu0 %v526
  %10478 = vmatmul.mubr.f32.gmra.mrb[0].mxu0 %v162
  %v10479 = vpop.f32.mrb[0].mxu0
  %v10480 = vadd.f32 0.0, %v10479
  %v10481 = vpop.f32.mrb[0].mxu0
  %10482 = vmatprep.mubr.f32.mxu0 %v529
  %10483 = vmatmul.mubr.f32.gmra.mrb[0].mxu0 %v164
  %v10484 = vpop.f32.mrb[0].mxu0
  %v10485 = vadd.f32 0.0, %v10484
  %v10486 = vpop.f32.mrb[0].mxu0
  %10487 = vmatprep.mubr.f32.mxu0 %v532
  %10488 = vmatmul.mubr.f32.gmra.mrb[0].mxu0 %v166
  %v10489 = vpop.f32.mrb[0].mxu0
  %v10490 = vadd.f32 0.0, %v10489
  %v10491 = vpop.f32.mrb[0].mxu0
  %10492 = vmatprep.mubr.f32.mxu0 %v535
  %10493 = vmatmul.mubr.f32.gmra.mrb[0].mxu0 %v168
  %v10494 = vpop.f32.mrb[0].mxu0
  %v10495 = vadd.f32 0.0, %v10494
  %v10496 = vpop.f32.mrb[0].mxu0
  %10497 = vmatprep.mubr.f32.mxu0 %v538
  %10498 = vmatmul.mubr.f32.gmra.mrb[0].mxu0 %v170
  %v10499 = vpop.f32.mrb[0].mxu0
  %v10500 = vadd.f32 0.0, %v10499
  %v10501 = vpop.f32.mrb[0].mxu0
  %10502 = vmatprep.mubr.f32.mxu0 %v541
  %10503 = vmatmul.mubr.f32.gmra.mrb[0].mxu0 %v172
  %v10504 = vpop.f32.mrb[0].mxu0
  %v10505 = vadd.f32 0.0, %v10504
  %v10506 = vpop.f32.mrb[0].mxu0
  %10507 = vmatprep.mubr.f32.mxu0 %v544
  %10508 = vmatmul.mubr.f32.gmra.mrb[0].mxu0 %v174
  %v10509 = vpop.f32.mrb[0].mxu0
  %v10510 = vadd.f32 0.0, %v10509
  %v10511 = vpop.f32.mrb[0].mxu0
  %10512 = vmatprep.mubr.f32.mxu0 %v547
  %10513 = vmatmul.mubr.f32.gmra.mrb[0].mxu0 %v176
  %v10514 = vpop.f32.mrb[0].mxu0
  %v10515 = vadd.f32 0.0, %v10514
  %v10516 = vpop.f32.mrb[0].mxu0
  %10517 = vmatprep.mubr.f32.mxu0 %v550
  %10518 = vmatmul.mubr.f32.gmra.mrb[0].mxu0 %v178
  %v10519 = vpop.f32.mrb[0].mxu0
  %v10520 = vadd.f32 0.0, %v10519
  %v10521 = vpop.f32.mrb[0].mxu0
  %10522 = vmatprep.mubr.f32.mxu0 %v553
  %10523 = vmatmul.mubr.f32.gmra.mrb[0].mxu0 %v180
  %v10524 = vpop.f32.mrb[0].mxu0
  %v10525 = vadd.f32 0.0, %v10524
  %v10526 = vpop.f32.mrb[0].mxu0
  %10527 = vmatprep.mubr.f32.mxu0 %v556
  %10528 = vmatmul.mubr.f32.gmra.mrb[0].mxu0 %v182
  %v10529 = vpop.f32.mrb[0].mxu0
  %v10530 = vadd.f32 0.0, %v10529
  %v10531 = vpop.f32.mrb[0].mxu0
  %10532 = vmatprep.mubr.f32.mxu0 %v559
  %10533 = vmatmul.mubr.f32.gmra.mrb[0].mxu0 %v184
  %v10534 = vpop.f32.mrb[0].mxu0
  %v10535 = vadd.f32 0.0, %v10534
  %v10536 = vpop.f32.mrb[0].mxu0
  %10537 = vmatprep.mubr.f32.mxu0 %v562
  %10538 = vmatmul.mubr.f32.gmra.mrb[0].mxu0 %v186
  %v10539 = vpop.f32.mrb[0].mxu0
  %v10540 = vadd.f32 0.0, %v10539
  %v10541 = vpop.f32.mrb[0].mxu0
  %10542 = vmatprep.mubr.f32.mxu0 %v565
  %10543 = vmatmul.mubr.f32.gmra.mrb[0].mxu0 %v188
  %v10544 = vpop.f32.mrb[0].mxu0
  %v10545 = vadd.f32 0.0, %v10544
  %v10546 = vpop.f32.mrb[0].mxu0
  %10547 = vmatprep.mubr.f32.mxu0 %v568
  %10548 = vmatmul.mubr.f32.gmra.mrb[0].mxu0 %v190
  %v10549 = vpop.f32.mrb[0].mxu0
  %v10550 = vadd.f32 0.0, %v10549
  %v10551 = vpop.f32.mrb[0].mxu0
  %10552 = vmatprep.mubr.f32.mxu0 %v571
  %10553 = vmatmul.mubr.f32.gmra.mrb[0].mxu0 %v192
  %v10554 = vpop.f32.mrb[0].mxu0
  %v10555 = vadd.f32 0.0, %v10554
  %v10556 = vpop.f32.mrb[0].mxu0
  %10557 = vmatprep.mubr.f32.mxu0 %v574
  %10558 = vmatmul.mubr.f32.gmra.mrb[0].mxu0 %v194
  %v10559 = vpop.f32.mrb[0].mxu0
  %v10560 = vadd.f32 0.0, %v10559
  %v10561 = vpop.f32.mrb[0].mxu0
  %10562 = vmatprep.mubr.f32.mxu0 %v577
  %10563 = vmatmul.mubr.f32.gmra.mrb[0].mxu0 %v196
  %v10564 = vpop.f32.mrb[0].mxu0
  %v10565 = vadd.f32 0.0, %v10564
  %v10566 = vpop.f32.mrb[0].mxu0
  %10567 = vmatprep.mubr.f32.mxu0 %v580
  %10568 = vmatmul.mubr.f32.gmra.mrb[0].mxu0 %v198
  %v10569 = vpop.f32.mrb[0].mxu0
  %v10570 = vadd.f32 0.0, %v10569
  %v10571 = vpop.f32.mrb[0].mxu0
  %10572 = vmatprep.mubr.f32.mxu0 %v583
  %10573 = vmatmul.mubr.f32.gmra.mrb[0].mxu0 %v200
  %v10574 = vpop.f32.mrb[0].mxu0
  %v10575 = vadd.f32 0.0, %v10574
  %v10576 = vpop.f32.mrb[0].mxu0
  %10577 = vmatprep.mubr.f32.mxu0 %v586
  %10578 = vmatmul.mubr.f32.gmra.mrb[0].mxu0 %v202
  %v10579 = vpop.f32.mrb[0].mxu0
  %v10580 = vadd.f32 0.0, %v10579
  %v10581 = vpop.f32.mrb[0].mxu0
  %10582 = vmatprep.mubr.f32.mxu0 %v589
  %10583 = vmatmul.mubr.f32.gmra.mrb[0].mxu0 %v204
  %v10584 = vpop.f32.mrb[0].mxu0
  %v10585 = vadd.f32 0.0, %v10584
  %v10586 = vpop.f32.mrb[0].mxu0
  %10587 = vmatprep.mubr.f32.mxu0 %v592
  %10588 = vmatmul.mubr.f32.gmra.mrb[0].mxu0 %v206
  %v10589 = vpop.f32.mrb[0].mxu0
  %v10590 = vadd.f32 0.0, %v10589
  %v10591 = vpop.f32.mrb[0].mxu0
  %10592 = vmatprep.mubr.f32.mxu0 %v595
  %10593 = vmatmul.mubr.f32.gmra.mrb[0].mxu0 %v208
  %v10594 = vpop.f32.mrb[0].mxu0
  %v10595 = vadd.f32 0.0, %v10594
  %v10596 = vpop.f32.mrb[0].mxu0
  %10597 = vmatprep.mubr.f32.mxu0 %v598
  %10598 = vmatmul.mubr.f32.gmra.mrb[0].mxu0 %v210
  %v10599 = vpop.f32.mrb[0].mxu0
  %v10600 = vadd.f32 0.0, %v10599
  %v10601 = vpop.f32.mrb[0].mxu0
  %10602 = vmatprep.mubr.f32.mxu0 %v601
  %10603 = vmatmul.mubr.f32.gmra.mrb[0].mxu0 %v212
  %v10604 = vpop.f32.mrb[0].mxu0
  %v10605 = vadd.f32 0.0, %v10604
  %v10606 = vpop.f32.mrb[0].mxu0
  %10607 = vmatprep.mubr.f32.mxu0 %v604
  %10608 = vmatmul.mubr.f32.gmra.mrb[0].mxu0 %v214
  %v10609 = vpop.f32.mrb[0].mxu0
  %v10610 = vadd.f32 0.0, %v10609
  %v10611 = vpop.f32.mrb[0].mxu0
  %10612 = vmatprep.mubr.f32.mxu0 %v607
  %10613 = vmatmul.mubr.f32.gmra.mrb[0].mxu0 %v216
  %v10614 = vpop.f32.mrb[0].mxu0
  %v10615 = vadd.f32 0.0, %v10614
  %v10616 = vpop.f32.mrb[0].mxu0
  %10617 = vmatprep.mubr.f32.mxu0 %v610
  %10618 = vmatmul.mubr.f32.gmra.mrb[0].mxu0 %v218
  %v10619 = vpop.f32.mrb[0].mxu0
  %v10620 = vadd.f32 0.0, %v10619
  %v10621 = vpop.f32.mrb[0].mxu0
  %10622 = vmatprep.mubr.f32.mxu0 %v613
  %10623 = vmatmul.mubr.f32.gmra.mrb[0].mxu0 %v220
  %v10624 = vpop.f32.mrb[0].mxu0
  %v10625 = vadd.f32 0.0, %v10624
  %v10626 = vpop.f32.mrb[0].mxu0
  %10627 = vmatprep.mubr.f32.mxu0 %v616
  %10628 = vmatmul.mubr.f32.gmra.mrb[0].mxu0 %v222
  %v10629 = vpop.f32.mrb[0].mxu0
  %v10630 = vadd.f32 0.0, %v10629
  %v10631 = vpop.f32.mrb[0].mxu0
  %10632 = vmatprep.mubr.f32.mxu0 %v619
  %10633 = vmatmul.mubr.f32.gmra.mrb[0].mxu0 %v224
  %v10634 = vpop.f32.mrb[0].mxu0
  %v10635 = vadd.f32 0.0, %v10634
  %v10636 = vpop.f32.mrb[0].mxu0
  %10637 = vmatprep.mubr.f32.mxu0 %v622
  %10638 = vmatmul.mubr.f32.gmra.mrb[0].mxu0 %v226
  %v10639 = vpop.f32.mrb[0].mxu0
  %v10640 = vadd.f32 0.0, %v10639
  %v10641 = vpop.f32.mrb[0].mxu0
  %10642 = vmatprep.mubr.f32.mxu0 %v625
  %10643 = vmatmul.mubr.f32.gmra.mrb[0].mxu0 %v228
  %v10644 = vpop.f32.mrb[0].mxu0
  %v10645 = vadd.f32 0.0, %v10644
  %v10646 = vpop.f32.mrb[0].mxu0
  %10647 = vmatprep.mubr.f32.mxu0 %v628
  %10648 = vmatmul.mubr.f32.gmra.mrb[0].mxu0 %v230
  %v10649 = vpop.f32.mrb[0].mxu0
  %v10650 = vadd.f32 0.0, %v10649
  %v10651 = vpop.f32.mrb[0].mxu0
  %10652 = vmatprep.mubr.f32.mxu0 %v631
  %10653 = vmatmul.mubr.f32.gmra.mrb[0].mxu0 %v232
  %v10654 = vpop.f32.mrb[0].mxu0
  %v10655 = vadd.f32 0.0, %v10654
  %v10656 = vpop.f32.mrb[0].mxu0
  %10657 = vmatprep.mubr.f32.mxu0 %v634
  %10658 = vmatmul.mubr.f32.gmra.mrb[0].mxu0 %v234
  %v10659 = vpop.f32.mrb[0].mxu0
  %v10660 = vadd.f32 0.0, %v10659
  %v10661 = vpop.f32.mrb[0].mxu0
  %10662 = vmatprep.mubr.f32.mxu0 %v637
  %10663 = vmatmul.mubr.f32.gmra.mrb[0].mxu0 %v236
  %v10664 = vpop.f32.mrb[0].mxu0
  %v10665 = vadd.f32 0.0, %v10664
  %v10666 = vpop.f32.mrb[0].mxu0
  %10667 = vmatprep.mubr.f32.mxu0 %v640
  %10668 = vmatmul.mubr.f32.gmra.mrb[0].mxu0 %v238
  %v10669 = vpop.f32.mrb[0].mxu0
  %v10670 = vadd.f32 0.0, %v10669
  %v10671 = vpop.f32.mrb[0].mxu0
  %10672 = vmatprep.mubr.f32.mxu0 %v643
  %10673 = vmatmul.mubr.f32.gmra.mrb[0].mxu0 %v240
  %v10674 = vpop.f32.mrb[0].mxu0
  %v10675 = vadd.f32 0.0, %v10674
  %v10676 = vpop.f32.mrb[0].mxu0
  %10677 = vmatprep.mubr.f32.mxu0 %v646
  %10678 = vmatmul.mubr.f32.gmra.mrb[0].mxu0 %v242
  %v10679 = vpop.f32.mrb[0].mxu0
  %v10680 = vadd.f32 0.0, %v10679
  %v10681 = vpop.f32.mrb[0].mxu0
  %10682 = vmatprep.mubr.f32.mxu0 %v649
  %10683 = vmatmul.mubr.f32.gmra.mrb[0].mxu0 %v244
  %v10684 = vpop.f32.mrb[0].mxu0
  %v10685 = vadd.f32 0.0, %v10684
  %v10686 = vpop.f32.mrb[0].mxu0
  %10687 = vmatprep.mubr.f32.mxu0 %v652
  %10688 = vmatmul.mubr.f32.gmra.mrb[0].mxu0 %v246
  %v10689 = vpop.f32.mrb[0].mxu0
  %v10690 = vadd.f32 0.0, %v10689
  %v10691 = vpop.f32.mrb[0].mxu0
  %10692 = vmatprep.mubr.f32.mxu0 %v655
  %10693 = vmatmul.mubr.f32.gmra.mrb[0].mxu0 %v248
  %v10694 = vpop.f32.mrb[0].mxu0
  %v10695 = vadd.f32 0.0, %v10694
  %v10696 = vpop.f32.mrb[0].mxu0
  %10697 = vmatprep.mubr.f32.mxu0 %v658
  %10698 = vmatmul.mubr.f32.gmra.mrb[0].mxu0 %v250
  %v10699 = vpop.f32.mrb[0].mxu0
  %v10700 = vadd.f32 0.0, %v10699
  %v10701 = vpop.f32.mrb[0].mxu0
  %10702 = vmatprep.mubr.f32.mxu0 %v661
  %10703 = vmatmul.mubr.f32.gmra.mrb[0].mxu0 %v252
  %v10704 = vpop.f32.mrb[0].mxu0
  %v10705 = vadd.f32 0.0, %v10704
  %v10706 = vpop.f32.mrb[0].mxu0
  %10707 = vmatprep.mubr.f32.mxu0 %v664
  %10708 = vmatmul.mubr.f32.gmra.mrb[0].mxu0 %v254
  %v10709 = vpop.f32.mrb[0].mxu0
  %v10710 = vadd.f32 0.0, %v10709
  %v10711 = vpop.f32.mrb[0].mxu0
  %10712 = vmatprep.mubr.f32.mxu0 %v667
  %10713 = vmatmul.mubr.f32.gmra.mrb[0].mxu0 %v256
  %v10714 = vpop.f32.mrb[0].mxu0
  %v10715 = vadd.f32 0.0, %v10714
  %v10716 = vpop.f32.mrb[0].mxu0
  %10717 = vmatprep.mubr.f32.mxu0 %v670
  %10718 = vmatmul.mubr.f32.gmra.mrb[0].mxu0 %v258
  %v10719 = vpop.f32.mrb[0].mxu0
  %v10720 = vadd.f32 0.0, %v10719
  %v10721 = vpop.f32.mrb[0].mxu0
  %10722 = vdwg.mxu0
  %v10723 = vmax.f32 %v10125, %v10275
  %v10724 = vmax.f32 %v10130, %v10280
  %v10725 = vmax.f32 %v10135, %v10285
  %v10726 = vmax.f32 %v10140, %v10290
  %v10727 = vmax.f32 %v10145, %v10295
  %v10728 = vmax.f32 %v10150, %v10300
  %v10729 = vmax.f32 %v10155, %v10305
  %v10730 = vmax.f32 %v10160, %v10310
  %v10731 = vmax.f32 %v10165, %v10315
  %v10732 = vmax.f32 %v10170, %v10320
  %v10733 = vmax.f32 %v10175, %v10325
  %v10734 = vmax.f32 %v10180, %v10330
  %v10735 = vmax.f32 %v10185, %v10335
  %v10736 = vmax.f32 %v10190, %v10340
  %v10737 = vmax.f32 %v10195, %v10345
  %v10738 = vmax.f32 %v10200, %v10350
  %v10739 = vmax.f32 %v10205, %v10355
  %v10740 = vmax.f32 %v10210, %v10360
  %v10741 = vmax.f32 %v10215, %v10365
  %v10742 = vmax.f32 %v10220, %v10370
  %v10743 = vmax.f32 %v10225, %v10375
  %v10744 = vmax.f32 %v10230, %v10380
  %v10745 = vmax.f32 %v10235, %v10385
  %v10746 = vmax.f32 %v10240, %v10390
  %v10747 = vmax.f32 %v10245, %v10395
  %v10748 = vmax.f32 %v10250, %v10400
  %v10749 = vmax.f32 %v10255, %v10405
  %v10750 = vmax.f32 %v10260, %v10410
  %v10751 = vmax.f32 %v10265, %v10415
  %v10752 = vmax.f32 %v10270, %v10420
  %v10753 = vmax.f32 %v10425, %v10575
  %v10754 = vmax.f32 %v10430, %v10580
  %v10755 = vmax.f32 %v10435, %v10585
  %v10756 = vmax.f32 %v10440, %v10590
  %v10757 = vmax.f32 %v10445, %v10595
  %v10758 = vmax.f32 %v10450, %v10600
  %v10759 = vmax.f32 %v10455, %v10605
  %v10760 = vmax.f32 %v10460, %v10610
  %v10761 = vmax.f32 %v10465, %v10615
  %v10762 = vmax.f32 %v10470, %v10620
  %v10763 = vmax.f32 %v10475, %v10625
  %v10764 = vmax.f32 %v10480, %v10630
  %v10765 = vmax.f32 %v10485, %v10635
  %v10766 = vmax.f32 %v10490, %v10640
  %v10767 = vmax.f32 %v10495, %v10645
  %v10768 = vmax.f32 %v10500, %v10650
  %v10769 = vmax.f32 %v10505, %v10655
  %v10770 = vmax.f32 %v10510, %v10660
  %v10771 = vmax.f32 %v10515, %v10665
  %v10772 = vmax.f32 %v10520, %v10670
  %v10773 = vmax.f32 %v10525, %v10675
  %v10774 = vmax.f32 %v10530, %v10680
  %v10775 = vmax.f32 %v10535, %v10685
  %v10776 = vmax.f32 %v10540, %v10690
  %v10777 = vmax.f32 %v10545, %v10695
  %v10778 = vmax.f32 %v10550, %v10700
  %v10779 = vmax.f32 %v10555, %v10705
  %v10780 = vmax.f32 %v10560, %v10710
  %v10781 = vmax.f32 %v10565, %v10715
  %v10782 = vmax.f32 %v10570, %v10720
  %v10783 = vmax.f32 %v10723, %v10753
  %v10784 = vmax.f32 %v10724, %v10754
  %v10785 = vmax.f32 %v10725, %v10755
  %v10786 = vmax.f32 %v10726, %v10756
  %v10787 = vmax.f32 %v10727, %v10757
  %v10788 = vmax.f32 %v10728, %v10758
  %v10789 = vmax.f32 %v10729, %v10759
  %v10790 = vmax.f32 %v10730, %v10760
  %v10791 = vmax.f32 %v10731, %v10761
  %v10792 = vmax.f32 %v10732, %v10762
  %v10793 = vmax.f32 %v10733, %v10763
  %v10794 = vmax.f32 %v10734, %v10764
  %v10795 = vmax.f32 %v10735, %v10765
  %v10796 = vmax.f32 %v10736, %v10766
  %v10797 = vmax.f32 %v10737, %v10767
  %v10798 = vmax.f32 %v10738, %v10768
  %v10799 = vmax.f32 %v10739, %v10769
  %v10800 = vmax.f32 %v10740, %v10770
  %v10801 = vmax.f32 %v10741, %v10771
  %v10802 = vmax.f32 %v10742, %v10772
  %v10803 = vmax.f32 %v10743, %v10773
  %v10804 = vmax.f32 %v10744, %v10774
  %v10805 = vmax.f32 %v10745, %v10775
  %v10806 = vmax.f32 %v10746, %v10776
  %v10807 = vmax.f32 %v10747, %v10777
  %v10808 = vmax.f32 %v10748, %v10778
  %v10809 = vmax.f32 %v10749, %v10779
  %v10810 = vmax.f32 %v10750, %v10780
  %v10811 = vmax.f32 %v10751, %v10781
  %v10812 = vmax.f32 %v10752, %v10782
  %v10813 = vadd.f32 %v10783, %v1430
  %v10814 = vadd.f32 %v10784, %v1435
  %v10815 = vadd.f32 %v10785, %v1440
  %v10816 = vadd.f32 %v10786, %v1445
  %v10817 = vadd.f32 %v10787, %v1450
  %v10818 = vadd.f32 %v10788, %v1455
  %v10819 = vadd.f32 %v10789, %v1460
  %v10820 = vadd.f32 %v10790, %v1465
  %v10821 = vadd.f32 %v10791, %v1470
  %v10822 = vadd.f32 %v10792, %v1475
  %v10823 = vadd.f32 %v10793, %v1480
  %v10824 = vadd.f32 %v10794, %v1485
  %v10825 = vadd.f32 %v10795, %v1490
  %v10826 = vadd.f32 %v10796, %v1495
  %v10827 = vadd.f32 %v10797, %v1500
  %v10828 = vadd.f32 %v10798, %v1505
  %v10829 = vadd.f32 %v10799, %v1510
  %v10830 = vadd.f32 %v10800, %v1515
  %v10831 = vadd.f32 %v10801, %v1520
  %v10832 = vadd.f32 %v10802, %v1525
  %v10833 = vadd.f32 %v10803, %v1530
  %v10834 = vadd.f32 %v10804, %v1535
  %v10835 = vadd.f32 %v10805, %v1540
  %v10836 = vadd.f32 %v10806, %v1545
  %v10837 = vadd.f32 %v10807, %v1550
  %v10838 = vadd.f32 %v10808, %v1555
  %v10839 = vadd.f32 %v10809, %v1560
  %v10840 = vadd.f32 %v10810, %v1565
  %v10841 = vadd.f32 %v10811, %v1570
  %v10842 = vadd.f32 %v10812, %v1575
  %v10843 = vmax.f32 %v10813, 0.0
  %v10844 = vmax.f32 %v10814, 0.0
  %v10845 = vmax.f32 %v10815, 0.0
  %v10846 = vmax.f32 %v10816, 0.0
  %v10847 = vmax.f32 %v10817, 0.0
  %v10848 = vmax.f32 %v10818, 0.0
  %v10849 = vmax.f32 %v10819, 0.0
  %v10850 = vmax.f32 %v10820, 0.0
  %v10851 = vmax.f32 %v10821, 0.0
  %v10852 = vmax.f32 %v10822, 0.0
  %v10853 = vmax.f32 %v10823, 0.0
  %v10854 = vmax.f32 %v10824, 0.0
  %v10855 = vmax.f32 %v10825, 0.0
  %v10856 = vmax.f32 %v10826, 0.0
  %v10857 = vmax.f32 %v10827, 0.0
  %v10858 = vmax.f32 %v10828, 0.0
  %v10859 = vmax.f32 %v10829, 0.0
  %v10860 = vmax.f32 %v10830, 0.0
  %v10861 = vmax.f32 %v10831, 0.0
  %v10862 = vmax.f32 %v10832, 0.0
  %v10863 = vmax.f32 %v10833, 0.0
  %v10864 = vmax.f32 %v10834, 0.0
  %v10865 = vmax.f32 %v10835, 0.0
  %v10866 = vmax.f32 %v10836, 0.0
  %v10867 = vmax.f32 %v10837, 0.0
  %v10868 = vmax.f32 %v10838, 0.0
  %v10869 = vmax.f32 %v10839, 0.0
  %v10870 = vmax.f32 %v10840, 0.0
  %v10871 = vmax.f32 %v10841, 0.0
  %v10872 = vmax.f32 %v10842, 0.0
  %s10873 = scalar_lea.vmem %s3, 320
  %v10874 = vld [vmem:[%s10873] sm:$0xff]
  %v10875 = vld [vmem:[%s10873 + $0x8] sm:$0xff]
  %v10876 = vld [vmem:[%s10873 + $0x10] sm:$0x3]
  %v10877 = vld [vmem:[%s10873 + $0x18] sm:$0x3]
  %v10879 = vsel %vm2482, %v10875, 0
  %v10882 = vsel %vm2482, %v10877, 0
  %10884 = vmatprep.subr.mxu0 0.0
  %10885 = vmatpush1.msra.mxu0 %v10843
  %10886 = vmatprep.subr.mxu0 0.0
  %10887 = vmatpush1.msra.mxu0 %v10844
  %10888 = vmatprep.subr.mxu0 0.0
  %10889 = vmatpush1.msra.mxu0 %v10845
  %10890 = vmatprep.subr.mxu0 0.0
  %10891 = vmatpush1.msra.mxu0 %v10846
  %10892 = vmatprep.subr.mxu0 0.0
  %10893 = vmatpush1.msra.mxu0 %v10847
  %10894 = vmatprep.subr.mxu0 0.0
  %10895 = vmatpush1.msra.mxu0 %v10848
  %10896 = vmatprep.subr.mxu0 0.0
  %10897 = vmatpush1.msra.mxu0 %v10849
  %10898 = vmatprep.subr.mxu0 0.0
  %10899 = vmatpush1.msra.mxu0 %v10850
  %10900 = vmatprep.subr.mxu0 0.0
  %10901 = vmatpush1.msra.mxu0 %v10851
  %10902 = vmatprep.subr.mxu0 0.0
  %10903 = vmatpush1.msra.mxu0 %v10852
  %10904 = vmatprep.subr.mxu0 0.0
  %10905 = vmatpush1.msra.mxu0 %v10853
  %10906 = vmatprep.subr.mxu0 0.0
  %10907 = vmatpush1.msra.mxu0 %v10854
  %10908 = vmatprep.subr.mxu0 0.0
  %10909 = vmatpush1.msra.mxu0 %v10855
  %10910 = vmatprep.subr.mxu0 0.0
  %10911 = vmatpush1.msra.mxu0 %v10856
  %10912 = vmatprep.subr.mxu0 0.0
  %10913 = vmatpush1.msra.mxu0 %v10857
  %10914 = vmatprep.subr.mxu0 0.0
  %10915 = vmatpush1.msra.mxu0 %v10858
  %10916 = vmatprep.subr.mxu0 0.0
  %10917 = vmatpush1.msra.mxu0 %v10859
  %10918 = vmatprep.subr.mxu0 0.0
  %10919 = vmatpush1.msra.mxu0 %v10860
  %10920 = vmatprep.subr.mxu0 0.0
  %10921 = vmatpush1.msra.mxu0 %v10861
  %10922 = vmatprep.subr.mxu0 0.0
  %10923 = vmatpush1.msra.mxu0 %v10862
  %10924 = vmatprep.subr.mxu0 0.0
  %10925 = vmatpush1.msra.mxu0 %v10863
  %10926 = vmatprep.subr.mxu0 0.0
  %10927 = vmatpush1.msra.mxu0 %v10864
  %10928 = vmatprep.subr.mxu0 0.0
  %10929 = vmatpush1.msra.mxu0 %v10865
  %10930 = vmatprep.subr.mxu0 0.0
  %10931 = vmatpush1.msra.mxu0 %v10866
  %10932 = vmatprep.subr.mxu0 0.0
  %10933 = vmatpush1.msra.mxu0 %v10867
  %10934 = vmatprep.subr.mxu0 0.0
  %10935 = vmatpush1.msra.mxu0 %v10868
  %10936 = vmatprep.subr.mxu0 0.0
  %10937 = vmatpush1.msra.mxu0 %v10869
  %10938 = vmatprep.subr.mxu0 0.0
  %10939 = vmatpush1.msra.mxu0 %v10870
  %10940 = vmatprep.subr.mxu0 0.0
  %10941 = vmatpush1.msra.mxu0 %v10871
  %10942 = vmatprep.subr.mxu0 0.0
  %10943 = vmatpush1.msra.mxu0 %v10872
  %10944 = vmatprep.subr.mxu0 0.0
  %10945 = vmatpush1.msra.mxu0 0.0
  %10946 = vmatprep.subr.mxu0 0.0
  %10947 = vmatpush1.msra.mxu0 0.0
  %10948 = vmatprep.mubr.f32.mxu0 %v10879
  %10949 = vmatmul.mubr.f32.gmra.mrb[0].mxu0 %v10874
  %v10950 = vpop.f32.mrb[0].mxu0
  %v10951 = vadd.f32 0.0, %v10950
  %v10952 = vpop.f32.mrb[0].mxu0
  %10953 = vmatprep.mubr.f32.mxu0 %v10882
  %10954 = vmatmul.mubr.f32.gmra.mrb[0].mxu0 %v10876
  %v10955 = vpop.f32.mrb[0].mxu0
  %v10956 = vadd.f32 0.0, %v10955
  %v10957 = vpop.f32.mrb[0].mxu0
  %10958 = vdwg.mxu0
  %v10959 = vadd.f32 %v10035, %v10951
  %v10960 = vadd.f32 %v10036, %v10956
  %v10961 = vld [vmem:[%s0 + $0x268] sm:$0xff]
  %v10962 = vld [vmem:[%s0 + $0x270] sm:$0xff]
  %v10963 = vld [vmem:[%s0 + $0x278] sm:$0xff]
  %v10964 = vld [vmem:[%s0 + $0x280] sm:$0xff]
  %v10965 = vld [vmem:[%s0 + $0x288] sm:$0xff]
  %v10966 = vld [vmem:[%s0 + $0x290] sm:$0xff]
  %v10967 = vld [vmem:[%s0 + $0x298] sm:$0xff]
  %v10968 = vld [vmem:[%s0 + $0x2a0] sm:$0xff]
  %v10969 = vld [vmem:[%s0 + $0x2a8] sm:$0xff]
  %v10970 = vld [vmem:[%s0 + $0x2b0] sm:$0xff]
  %v10971 = vld [vmem:[%s0 + $0x2b8] sm:$0xff]
  %v10972 = vld [vmem:[%s0 + $0x2c0] sm:$0xff]
  %v10973 = vld [vmem:[%s0 + $0x2c8] sm:$0xff]
  %v10974 = vld [vmem:[%s0 + $0x2d0] sm:$0xff]
  %v10975 = vld [vmem:[%s0 + $0x2d8] sm:$0xff]
  %v10976 = vld [vmem:[%s0 + $0x2e0] sm:$0xff]
  %v10977 = vld [vmem:[%s0 + $0x2e8] sm:$0xff]
  %v10978 = vld [vmem:[%s0 + $0x2f0] sm:$0xff]
  %v10979 = vld [vmem:[%s0 + $0x2f8] sm:$0xff]
  %v10980 = vld [vmem:[%s0 + $0x300] sm:$0xff]
  %v10981 = vld [vmem:[%s0 + $0x308] sm:$0xff]
  %10982 = vmatprep.subr.mxu0 0.0
  %10983 = vmatpush1.msra.mxu0 %v10961
  %10984 = vmatprep.subr.mxu0 0.0
  %10985 = vmatpush1.msra.mxu0 %v10962
  %10986 = vmatprep.subr.mxu0 0.0
  %10987 = vmatpush1.msra.mxu0 %v10963
  %10988 = vmatprep.subr.mxu0 0.0
  %10989 = vmatpush1.msra.mxu0 %v10964
  %10990 = vmatprep.subr.mxu0 0.0
  %10991 = vmatpush1.msra.mxu0 %v10965
  %10992 = vmatprep.subr.mxu0 0.0
  %10993 = vmatpush1.msra.mxu0 %v10966
  %10994 = vmatprep.subr.mxu0 0.0
  %10995 = vmatpush1.msra.mxu0 %v10967
  %10996 = vmatprep.subr.mxu0 0.0
  %10997 = vmatpush1.msra.mxu0 %v10968
  %10998 = vmatprep.subr.mxu0 0.0
  %10999 = vmatpush1.msra.mxu0 %v10969
  %11000 = vmatprep.subr.mxu0 0.0
  %11001 = vmatpush1.msra.mxu0 %v10970
  %11002 = vmatprep.subr.mxu0 0.0
  %11003 = vmatpush1.msra.mxu0 %v10971
  %11004 = vmatprep.subr.mxu0 0.0
  %11005 = vmatpush1.msra.mxu0 %v10972
  %11006 = vmatprep.subr.mxu0 0.0
  %11007 = vmatpush1.msra.mxu0 %v10973
  %11008 = vmatprep.subr.mxu0 0.0
  %11009 = vmatpush1.msra.mxu0 %v10974
  %11010 = vmatprep.subr.mxu0 0.0
  %11011 = vmatpush1.msra.mxu0 %v10975
  %11012 = vmatprep.subr.mxu0 0.0
  %11013 = vmatpush1.msra.mxu0 %v10976
  %11014 = vmatprep.subr.mxu0 0.0
  %11015 = vmatpush1.msra.mxu0 %v10977
  %11016 = vmatprep.subr.mxu0 0.0
  %11017 = vmatpush1.msra.mxu0 %v10978
  %11018 = vmatprep.subr.mxu0 0.0
  %11019 = vmatpush1.msra.mxu0 %v10979
  %11020 = vmatprep.subr.mxu0 0.0
  %11021 = vmatpush1.msra.mxu0 %v10980
  %11022 = vmatprep.subr.mxu0 0.0
  %11023 = vmatpush1.msra.mxu0 %v10981
  %11024 = vmatprep.subr.mxu0 0.0
  %11025 = vmatpush1.msra.mxu0 0.0
  %11026 = vmatprep.subr.mxu0 0.0
  %11027 = vmatpush1.msra.mxu0 0.0
  %11028 = vmatprep.subr.mxu0 0.0
  %11029 = vmatpush1.msra.mxu0 0.0
  %11030 = vmatprep.subr.mxu0 0.0
  %11031 = vmatpush1.msra.mxu0 0.0
  %11032 = vmatprep.subr.mxu0 0.0
  %11033 = vmatpush1.msra.mxu0 0.0
  %11034 = vmatprep.subr.mxu0 0.0
  %11035 = vmatpush1.msra.mxu0 0.0
  %11036 = vmatprep.subr.mxu0 0.0
  %11037 = vmatpush1.msra.mxu0 0.0
  %11038 = vmatprep.subr.mxu0 0.0
  %11039 = vmatpush1.msra.mxu0 0.0
  %11040 = vmatprep.subr.mxu0 0.0
  %11041 = vmatpush1.msra.mxu0 0.0
  %11042 = vmatprep.subr.mxu0 0.0
  %11043 = vmatpush1.msra.mxu0 0.0
  %11044 = vmatprep.subr.mxu0 0.0
  %11045 = vmatpush1.msra.mxu0 0.0
  %11046 = vmatprep.mubr.f32.mxu0 %v313
  %11047 = vmatmul.mubr.f32.gmra.mrb[0].mxu0 %v20
  %v11048 = vpop.f32.mrb[0].mxu0
  %v11049 = vadd.f32 0.0, %v11048
  %v11050 = vpop.f32.mrb[0].mxu0
  %11051 = vmatprep.mubr.f32.mxu0 %v316
  %11052 = vmatmul.mubr.f32.gmra.mrb[0].mxu0 %v22
  %v11053 = vpop.f32.mrb[0].mxu0
  %v11054 = vadd.f32 0.0, %v11053
  %v11055 = vpop.f32.mrb[0].mxu0
  %11056 = vmatprep.mubr.f32.mxu0 %v319
  %11057 = vmatmul.mubr.f32.gmra.mrb[0].mxu0 %v24
  %v11058 = vpop.f32.mrb[0].mxu0
  %v11059 = vadd.f32 0.0, %v11058
  %v11060 = vpop.f32.mrb[0].mxu0
  %11061 = vmatprep.mubr.f32.mxu0 %v322
  %11062 = vmatmul.mubr.f32.gmra.mrb[0].mxu0 %v26
  %v11063 = vpop.f32.mrb[0].mxu0
  %v11064 = vadd.f32 0.0, %v11063
  %v11065 = vpop.f32.mrb[0].mxu0
  %11066 = vmatprep.mubr.f32.mxu0 %v325
  %11067 = vmatmul.mubr.f32.gmra.mrb[0].mxu0 %v28
  %v11068 = vpop.f32.mrb[0].mxu0
  %v11069 = vadd.f32 0.0, %v11068
  %v11070 = vpop.f32.mrb[0].mxu0
  %11071 = vmatprep.mubr.f32.mxu0 %v328
  %11072 = vmatmul.mubr.f32.gmra.mrb[0].mxu0 %v30
  %v11073 = vpop.f32.mrb[0].mxu0
  %v11074 = vadd.f32 0.0, %v11073
  %v11075 = vpop.f32.mrb[0].mxu0
  %11076 = vmatprep.mubr.f32.mxu0 %v331
  %11077 = vmatmul.mubr.f32.gmra.mrb[0].mxu0 %v32
  %v11078 = vpop.f32.mrb[0].mxu0
  %v11079 = vadd.f32 0.0, %v11078
  %v11080 = vpop.f32.mrb[0].mxu0
  %11081 = vmatprep.mubr.f32.mxu0 %v334
  %11082 = vmatmul.mubr.f32.gmra.mrb[0].mxu0 %v34
  %v11083 = vpop.f32.mrb[0].mxu0
  %v11084 = vadd.f32 0.0, %v11083
  %v11085 = vpop.f32.mrb[0].mxu0
  %11086 = vmatprep.mubr.f32.mxu0 %v337
  %11087 = vmatmul.mubr.f32.gmra.mrb[0].mxu0 %v36
  %v11088 = vpop.f32.mrb[0].mxu0
  %v11089 = vadd.f32 0.0, %v11088
  %v11090 = vpop.f32.mrb[0].mxu0
  %11091 = vmatprep.mubr.f32.mxu0 %v340
  %11092 = vmatmul.mubr.f32.gmra.mrb[0].mxu0 %v38
  %v11093 = vpop.f32.mrb[0].mxu0
  %v11094 = vadd.f32 0.0, %v11093
  %v11095 = vpop.f32.mrb[0].mxu0
  %11096 = vmatprep.mubr.f32.mxu0 %v343
  %11097 = vmatmul.mubr.f32.gmra.mrb[0].mxu0 %v40
  %v11098 = vpop.f32.mrb[0].mxu0
  %v11099 = vadd.f32 0.0, %v11098
  %v11100 = vpop.f32.mrb[0].mxu0
  %11101 = vmatprep.mubr.f32.mxu0 %v346
  %11102 = vmatmul.mubr.f32.gmra.mrb[0].mxu0 %v42
  %v11103 = vpop.f32.mrb[0].mxu0
  %v11104 = vadd.f32 0.0, %v11103
  %v11105 = vpop.f32.mrb[0].mxu0
  %11106 = vmatprep.mubr.f32.mxu0 %v349
  %11107 = vmatmul.mubr.f32.gmra.mrb[0].mxu0 %v44
  %v11108 = vpop.f32.mrb[0].mxu0
  %v11109 = vadd.f32 0.0, %v11108
  %v11110 = vpop.f32.mrb[0].mxu0
  %11111 = vmatprep.mubr.f32.mxu0 %v352
  %11112 = vmatmul.mubr.f32.gmra.mrb[0].mxu0 %v46
  %v11113 = vpop.f32.mrb[0].mxu0
  %v11114 = vadd.f32 0.0, %v11113
  %v11115 = vpop.f32.mrb[0].mxu0
  %11116 = vmatprep.mubr.f32.mxu0 %v355
  %11117 = vmatmul.mubr.f32.gmra.mrb[0].mxu0 %v48
  %v11118 = vpop.f32.mrb[0].mxu0
  %v11119 = vadd.f32 0.0, %v11118
  %v11120 = vpop.f32.mrb[0].mxu0
  %11121 = vmatprep.mubr.f32.mxu0 %v358
  %11122 = vmatmul.mubr.f32.gmra.mrb[0].mxu0 %v50
  %v11123 = vpop.f32.mrb[0].mxu0
  %v11124 = vadd.f32 0.0, %v11123
  %v11125 = vpop.f32.mrb[0].mxu0
  %11126 = vmatprep.mubr.f32.mxu0 %v361
  %11127 = vmatmul.mubr.f32.gmra.mrb[0].mxu0 %v52
  %v11128 = vpop.f32.mrb[0].mxu0
  %v11129 = vadd.f32 0.0, %v11128
  %v11130 = vpop.f32.mrb[0].mxu0
  %11131 = vmatprep.mubr.f32.mxu0 %v364
  %11132 = vmatmul.mubr.f32.gmra.mrb[0].mxu0 %v54
  %v11133 = vpop.f32.mrb[0].mxu0
  %v11134 = vadd.f32 0.0, %v11133
  %v11135 = vpop.f32.mrb[0].mxu0
  %11136 = vmatprep.mubr.f32.mxu0 %v367
  %11137 = vmatmul.mubr.f32.gmra.mrb[0].mxu0 %v56
  %v11138 = vpop.f32.mrb[0].mxu0
  %v11139 = vadd.f32 0.0, %v11138
  %v11140 = vpop.f32.mrb[0].mxu0
  %11141 = vmatprep.mubr.f32.mxu0 %v370
  %11142 = vmatmul.mubr.f32.gmra.mrb[0].mxu0 %v58
  %v11143 = vpop.f32.mrb[0].mxu0
  %v11144 = vadd.f32 0.0, %v11143
  %v11145 = vpop.f32.mrb[0].mxu0
  %11146 = vmatprep.mubr.f32.mxu0 %v373
  %11147 = vmatmul.mubr.f32.gmra.mrb[0].mxu0 %v60
  %v11148 = vpop.f32.mrb[0].mxu0
  %v11149 = vadd.f32 0.0, %v11148
  %v11150 = vpop.f32.mrb[0].mxu0
  %11151 = vmatprep.mubr.f32.mxu0 %v376
  %11152 = vmatmul.mubr.f32.gmra.mrb[0].mxu0 %v62
  %v11153 = vpop.f32.mrb[0].mxu0
  %v11154 = vadd.f32 0.0, %v11153
  %v11155 = vpop.f32.mrb[0].mxu0
  %11156 = vmatprep.mubr.f32.mxu0 %v379
  %11157 = vmatmul.mubr.f32.gmra.mrb[0].mxu0 %v64
  %v11158 = vpop.f32.mrb[0].mxu0
  %v11159 = vadd.f32 0.0, %v11158
  %v11160 = vpop.f32.mrb[0].mxu0
  %11161 = vmatprep.mubr.f32.mxu0 %v382
  %11162 = vmatmul.mubr.f32.gmra.mrb[0].mxu0 %v66
  %v11163 = vpop.f32.mrb[0].mxu0
  %v11164 = vadd.f32 0.0, %v11163
  %v11165 = vpop.f32.mrb[0].mxu0
  %11166 = vmatprep.mubr.f32.mxu0 %v385
  %11167 = vmatmul.mubr.f32.gmra.mrb[0].mxu0 %v68
  %v11168 = vpop.f32.mrb[0].mxu0
  %v11169 = vadd.f32 0.0, %v11168
  %v11170 = vpop.f32.mrb[0].mxu0
  %11171 = vmatprep.mubr.f32.mxu0 %v388
  %11172 = vmatmul.mubr.f32.gmra.mrb[0].mxu0 %v70
  %v11173 = vpop.f32.mrb[0].mxu0
  %v11174 = vadd.f32 0.0, %v11173
  %v11175 = vpop.f32.mrb[0].mxu0
  %11176 = vmatprep.mubr.f32.mxu0 %v391
  %11177 = vmatmul.mubr.f32.gmra.mrb[0].mxu0 %v72
  %v11178 = vpop.f32.mrb[0].mxu0
  %v11179 = vadd.f32 0.0, %v11178
  %v11180 = vpop.f32.mrb[0].mxu0
  %11181 = vmatprep.mubr.f32.mxu0 %v394
  %11182 = vmatmul.mubr.f32.gmra.mrb[0].mxu0 %v74
  %v11183 = vpop.f32.mrb[0].mxu0
  %v11184 = vadd.f32 0.0, %v11183
  %v11185 = vpop.f32.mrb[0].mxu0
  %11186 = vmatprep.mubr.f32.mxu0 %v397
  %11187 = vmatmul.mubr.f32.gmra.mrb[0].mxu0 %v76
  %v11188 = vpop.f32.mrb[0].mxu0
  %v11189 = vadd.f32 0.0, %v11188
  %v11190 = vpop.f32.mrb[0].mxu0
  %11191 = vmatprep.mubr.f32.mxu0 %v400
  %11192 = vmatmul.mubr.f32.gmra.mrb[0].mxu0 %v78
  %v11193 = vpop.f32.mrb[0].mxu0
  %v11194 = vadd.f32 0.0, %v11193
  %v11195 = vpop.f32.mrb[0].mxu0
  %11196 = vmatprep.mubr.f32.mxu0 %v403
  %11197 = vmatmul.mubr.f32.gmra.mrb[0].mxu0 %v80
  %v11198 = vpop.f32.mrb[0].mxu0
  %v11199 = vadd.f32 0.0, %v11198
  %v11200 = vpop.f32.mrb[0].mxu0
  %11201 = vmatprep.mubr.f32.mxu0 %v406
  %11202 = vmatmul.mubr.f32.gmra.mrb[0].mxu0 %v82
  %v11203 = vpop.f32.mrb[0].mxu0
  %v11204 = vadd.f32 0.0, %v11203
  %v11205 = vpop.f32.mrb[0].mxu0
  %11206 = vmatprep.mubr.f32.mxu0 %v409
  %11207 = vmatmul.mubr.f32.gmra.mrb[0].mxu0 %v84
  %v11208 = vpop.f32.mrb[0].mxu0
  %v11209 = vadd.f32 0.0, %v11208
  %v11210 = vpop.f32.mrb[0].mxu0
  %11211 = vmatprep.mubr.f32.mxu0 %v412
  %11212 = vmatmul.mubr.f32.gmra.mrb[0].mxu0 %v86
  %v11213 = vpop.f32.mrb[0].mxu0
  %v11214 = vadd.f32 0.0, %v11213
  %v11215 = vpop.f32.mrb[0].mxu0
  %11216 = vmatprep.mubr.f32.mxu0 %v415
  %11217 = vmatmul.mubr.f32.gmra.mrb[0].mxu0 %v88
  %v11218 = vpop.f32.mrb[0].mxu0
  %v11219 = vadd.f32 0.0, %v11218
  %v11220 = vpop.f32.mrb[0].mxu0
  %11221 = vmatprep.mubr.f32.mxu0 %v418
  %11222 = vmatmul.mubr.f32.gmra.mrb[0].mxu0 %v90
  %v11223 = vpop.f32.mrb[0].mxu0
  %v11224 = vadd.f32 0.0, %v11223
  %v11225 = vpop.f32.mrb[0].mxu0
  %11226 = vmatprep.mubr.f32.mxu0 %v421
  %11227 = vmatmul.mubr.f32.gmra.mrb[0].mxu0 %v92
  %v11228 = vpop.f32.mrb[0].mxu0
  %v11229 = vadd.f32 0.0, %v11228
  %v11230 = vpop.f32.mrb[0].mxu0
  %11231 = vmatprep.mubr.f32.mxu0 %v424
  %11232 = vmatmul.mubr.f32.gmra.mrb[0].mxu0 %v94
  %v11233 = vpop.f32.mrb[0].mxu0
  %v11234 = vadd.f32 0.0, %v11233
  %v11235 = vpop.f32.mrb[0].mxu0
  %11236 = vmatprep.mubr.f32.mxu0 %v427
  %11237 = vmatmul.mubr.f32.gmra.mrb[0].mxu0 %v96
  %v11238 = vpop.f32.mrb[0].mxu0
  %v11239 = vadd.f32 0.0, %v11238
  %v11240 = vpop.f32.mrb[0].mxu0
  %11241 = vmatprep.mubr.f32.mxu0 %v430
  %11242 = vmatmul.mubr.f32.gmra.mrb[0].mxu0 %v98
  %v11243 = vpop.f32.mrb[0].mxu0
  %v11244 = vadd.f32 0.0, %v11243
  %v11245 = vpop.f32.mrb[0].mxu0
  %11246 = vmatprep.mubr.f32.mxu0 %v433
  %11247 = vmatmul.mubr.f32.gmra.mrb[0].mxu0 %v100
  %v11248 = vpop.f32.mrb[0].mxu0
  %v11249 = vadd.f32 0.0, %v11248
  %v11250 = vpop.f32.mrb[0].mxu0
  %11251 = vmatprep.mubr.f32.mxu0 %v436
  %11252 = vmatmul.mubr.f32.gmra.mrb[0].mxu0 %v102
  %v11253 = vpop.f32.mrb[0].mxu0
  %v11254 = vadd.f32 0.0, %v11253
  %v11255 = vpop.f32.mrb[0].mxu0
  %11256 = vmatprep.mubr.f32.mxu0 %v439
  %11257 = vmatmul.mubr.f32.gmra.mrb[0].mxu0 %v104
  %v11258 = vpop.f32.mrb[0].mxu0
  %v11259 = vadd.f32 0.0, %v11258
  %v11260 = vpop.f32.mrb[0].mxu0
  %11261 = vmatprep.mubr.f32.mxu0 %v442
  %11262 = vmatmul.mubr.f32.gmra.mrb[0].mxu0 %v106
  %v11263 = vpop.f32.mrb[0].mxu0
  %v11264 = vadd.f32 0.0, %v11263
  %v11265 = vpop.f32.mrb[0].mxu0
  %11266 = vmatprep.mubr.f32.mxu0 %v445
  %11267 = vmatmul.mubr.f32.gmra.mrb[0].mxu0 %v108
  %v11268 = vpop.f32.mrb[0].mxu0
  %v11269 = vadd.f32 0.0, %v11268
  %v11270 = vpop.f32.mrb[0].mxu0
  %11271 = vmatprep.mubr.f32.mxu0 %v448
  %11272 = vmatmul.mubr.f32.gmra.mrb[0].mxu0 %v110
  %v11273 = vpop.f32.mrb[0].mxu0
  %v11274 = vadd.f32 0.0, %v11273
  %v11275 = vpop.f32.mrb[0].mxu0
  %11276 = vmatprep.mubr.f32.mxu0 %v451
  %11277 = vmatmul.mubr.f32.gmra.mrb[0].mxu0 %v112
  %v11278 = vpop.f32.mrb[0].mxu0
  %v11279 = vadd.f32 0.0, %v11278
  %v11280 = vpop.f32.mrb[0].mxu0
  %11281 = vmatprep.mubr.f32.mxu0 %v454
  %11282 = vmatmul.mubr.f32.gmra.mrb[0].mxu0 %v114
  %v11283 = vpop.f32.mrb[0].mxu0
  %v11284 = vadd.f32 0.0, %v11283
  %v11285 = vpop.f32.mrb[0].mxu0
  %11286 = vmatprep.mubr.f32.mxu0 %v457
  %11287 = vmatmul.mubr.f32.gmra.mrb[0].mxu0 %v116
  %v11288 = vpop.f32.mrb[0].mxu0
  %v11289 = vadd.f32 0.0, %v11288
  %v11290 = vpop.f32.mrb[0].mxu0
  %11291 = vmatprep.mubr.f32.mxu0 %v460
  %11292 = vmatmul.mubr.f32.gmra.mrb[0].mxu0 %v118
  %v11293 = vpop.f32.mrb[0].mxu0
  %v11294 = vadd.f32 0.0, %v11293
  %v11295 = vpop.f32.mrb[0].mxu0
  %11296 = vmatprep.mubr.f32.mxu0 %v463
  %11297 = vmatmul.mubr.f32.gmra.mrb[0].mxu0 %v120
  %v11298 = vpop.f32.mrb[0].mxu0
  %v11299 = vadd.f32 0.0, %v11298
  %v11300 = vpop.f32.mrb[0].mxu0
  %11301 = vmatprep.mubr.f32.mxu0 %v466
  %11302 = vmatmul.mubr.f32.gmra.mrb[0].mxu0 %v122
  %v11303 = vpop.f32.mrb[0].mxu0
  %v11304 = vadd.f32 0.0, %v11303
  %v11305 = vpop.f32.mrb[0].mxu0
  %11306 = vmatprep.mubr.f32.mxu0 %v469
  %11307 = vmatmul.mubr.f32.gmra.mrb[0].mxu0 %v124
  %v11308 = vpop.f32.mrb[0].mxu0
  %v11309 = vadd.f32 0.0, %v11308
  %v11310 = vpop.f32.mrb[0].mxu0
  %11311 = vmatprep.mubr.f32.mxu0 %v472
  %11312 = vmatmul.mubr.f32.gmra.mrb[0].mxu0 %v126
  %v11313 = vpop.f32.mrb[0].mxu0
  %v11314 = vadd.f32 0.0, %v11313
  %v11315 = vpop.f32.mrb[0].mxu0
  %11316 = vmatprep.mubr.f32.mxu0 %v475
  %11317 = vmatmul.mubr.f32.gmra.mrb[0].mxu0 %v128
  %v11318 = vpop.f32.mrb[0].mxu0
  %v11319 = vadd.f32 0.0, %v11318
  %v11320 = vpop.f32.mrb[0].mxu0
  %11321 = vmatprep.mubr.f32.mxu0 %v478
  %11322 = vmatmul.mubr.f32.gmra.mrb[0].mxu0 %v130
  %v11323 = vpop.f32.mrb[0].mxu0
  %v11324 = vadd.f32 0.0, %v11323
  %v11325 = vpop.f32.mrb[0].mxu0
  %11326 = vmatprep.mubr.f32.mxu0 %v481
  %11327 = vmatmul.mubr.f32.gmra.mrb[0].mxu0 %v132
  %v11328 = vpop.f32.mrb[0].mxu0
  %v11329 = vadd.f32 0.0, %v11328
  %v11330 = vpop.f32.mrb[0].mxu0
  %11331 = vmatprep.mubr.f32.mxu0 %v484
  %11332 = vmatmul.mubr.f32.gmra.mrb[0].mxu0 %v134
  %v11333 = vpop.f32.mrb[0].mxu0
  %v11334 = vadd.f32 0.0, %v11333
  %v11335 = vpop.f32.mrb[0].mxu0
  %11336 = vmatprep.mubr.f32.mxu0 %v487
  %11337 = vmatmul.mubr.f32.gmra.mrb[0].mxu0 %v136
  %v11338 = vpop.f32.mrb[0].mxu0
  %v11339 = vadd.f32 0.0, %v11338
  %v11340 = vpop.f32.mrb[0].mxu0
  %11341 = vmatprep.mubr.f32.mxu0 %v490
  %11342 = vmatmul.mubr.f32.gmra.mrb[0].mxu0 %v138
  %v11343 = vpop.f32.mrb[0].mxu0
  %v11344 = vadd.f32 0.0, %v11343
  %v11345 = vpop.f32.mrb[0].mxu0
  %11346 = vmatprep.mubr.f32.mxu0 %v493
  %11347 = vmatmul.mubr.f32.gmra.mrb[0].mxu0 %v140
  %v11348 = vpop.f32.mrb[0].mxu0
  %v11349 = vadd.f32 0.0, %v11348
  %v11350 = vpop.f32.mrb[0].mxu0
  %11351 = vmatprep.mubr.f32.mxu0 %v496
  %11352 = vmatmul.mubr.f32.gmra.mrb[0].mxu0 %v142
  %v11353 = vpop.f32.mrb[0].mxu0
  %v11354 = vadd.f32 0.0, %v11353
  %v11355 = vpop.f32.mrb[0].mxu0
  %11356 = vmatprep.mubr.f32.mxu0 %v499
  %11357 = vmatmul.mubr.f32.gmra.mrb[0].mxu0 %v144
  %v11358 = vpop.f32.mrb[0].mxu0
  %v11359 = vadd.f32 0.0, %v11358
  %v11360 = vpop.f32.mrb[0].mxu0
  %11361 = vmatprep.mubr.f32.mxu0 %v502
  %11362 = vmatmul.mubr.f32.gmra.mrb[0].mxu0 %v146
  %v11363 = vpop.f32.mrb[0].mxu0
  %v11364 = vadd.f32 0.0, %v11363
  %v11365 = vpop.f32.mrb[0].mxu0
  %11366 = vmatprep.mubr.f32.mxu0 %v505
  %11367 = vmatmul.mubr.f32.gmra.mrb[0].mxu0 %v148
  %v11368 = vpop.f32.mrb[0].mxu0
  %v11369 = vadd.f32 0.0, %v11368
  %v11370 = vpop.f32.mrb[0].mxu0
  %11371 = vmatprep.mubr.f32.mxu0 %v508
  %11372 = vmatmul.mubr.f32.gmra.mrb[0].mxu0 %v150
  %v11373 = vpop.f32.mrb[0].mxu0
  %v11374 = vadd.f32 0.0, %v11373
  %v11375 = vpop.f32.mrb[0].mxu0
  %11376 = vmatprep.mubr.f32.mxu0 %v511
  %11377 = vmatmul.mubr.f32.gmra.mrb[0].mxu0 %v152
  %v11378 = vpop.f32.mrb[0].mxu0
  %v11379 = vadd.f32 0.0, %v11378
  %v11380 = vpop.f32.mrb[0].mxu0
  %11381 = vmatprep.mubr.f32.mxu0 %v514
  %11382 = vmatmul.mubr.f32.gmra.mrb[0].mxu0 %v154
  %v11383 = vpop.f32.mrb[0].mxu0
  %v11384 = vadd.f32 0.0, %v11383
  %v11385 = vpop.f32.mrb[0].mxu0
  %11386 = vmatprep.mubr.f32.mxu0 %v517
  %11387 = vmatmul.mubr.f32.gmra.mrb[0].mxu0 %v156
  %v11388 = vpop.f32.mrb[0].mxu0
  %v11389 = vadd.f32 0.0, %v11388
  %v11390 = vpop.f32.mrb[0].mxu0
  %11391 = vmatprep.mubr.f32.mxu0 %v520
  %11392 = vmatmul.mubr.f32.gmra.mrb[0].mxu0 %v158
  %v11393 = vpop.f32.mrb[0].mxu0
  %v11394 = vadd.f32 0.0, %v11393
  %v11395 = vpop.f32.mrb[0].mxu0
  %11396 = vmatprep.mubr.f32.mxu0 %v523
  %11397 = vmatmul.mubr.f32.gmra.mrb[0].mxu0 %v160
  %v11398 = vpop.f32.mrb[0].mxu0
  %v11399 = vadd.f32 0.0, %v11398
  %v11400 = vpop.f32.mrb[0].mxu0
  %11401 = vmatprep.mubr.f32.mxu0 %v526
  %11402 = vmatmul.mubr.f32.gmra.mrb[0].mxu0 %v162
  %v11403 = vpop.f32.mrb[0].mxu0
  %v11404 = vadd.f32 0.0, %v11403
  %v11405 = vpop.f32.mrb[0].mxu0
  %11406 = vmatprep.mubr.f32.mxu0 %v529
  %11407 = vmatmul.mubr.f32.gmra.mrb[0].mxu0 %v164
  %v11408 = vpop.f32.mrb[0].mxu0
  %v11409 = vadd.f32 0.0, %v11408
  %v11410 = vpop.f32.mrb[0].mxu0
  %11411 = vmatprep.mubr.f32.mxu0 %v532
  %11412 = vmatmul.mubr.f32.gmra.mrb[0].mxu0 %v166
  %v11413 = vpop.f32.mrb[0].mxu0
  %v11414 = vadd.f32 0.0, %v11413
  %v11415 = vpop.f32.mrb[0].mxu0
  %11416 = vmatprep.mubr.f32.mxu0 %v535
  %11417 = vmatmul.mubr.f32.gmra.mrb[0].mxu0 %v168
  %v11418 = vpop.f32.mrb[0].mxu0
  %v11419 = vadd.f32 0.0, %v11418
  %v11420 = vpop.f32.mrb[0].mxu0
  %11421 = vmatprep.mubr.f32.mxu0 %v538
  %11422 = vmatmul.mubr.f32.gmra.mrb[0].mxu0 %v170
  %v11423 = vpop.f32.mrb[0].mxu0
  %v11424 = vadd.f32 0.0, %v11423
  %v11425 = vpop.f32.mrb[0].mxu0
  %11426 = vmatprep.mubr.f32.mxu0 %v541
  %11427 = vmatmul.mubr.f32.gmra.mrb[0].mxu0 %v172
  %v11428 = vpop.f32.mrb[0].mxu0
  %v11429 = vadd.f32 0.0, %v11428
  %v11430 = vpop.f32.mrb[0].mxu0
  %11431 = vmatprep.mubr.f32.mxu0 %v544
  %11432 = vmatmul.mubr.f32.gmra.mrb[0].mxu0 %v174
  %v11433 = vpop.f32.mrb[0].mxu0
  %v11434 = vadd.f32 0.0, %v11433
  %v11435 = vpop.f32.mrb[0].mxu0
  %11436 = vmatprep.mubr.f32.mxu0 %v547
  %11437 = vmatmul.mubr.f32.gmra.mrb[0].mxu0 %v176
  %v11438 = vpop.f32.mrb[0].mxu0
  %v11439 = vadd.f32 0.0, %v11438
  %v11440 = vpop.f32.mrb[0].mxu0
  %11441 = vmatprep.mubr.f32.mxu0 %v550
  %11442 = vmatmul.mubr.f32.gmra.mrb[0].mxu0 %v178
  %v11443 = vpop.f32.mrb[0].mxu0
  %v11444 = vadd.f32 0.0, %v11443
  %v11445 = vpop.f32.mrb[0].mxu0
  %11446 = vmatprep.mubr.f32.mxu0 %v553
  %11447 = vmatmul.mubr.f32.gmra.mrb[0].mxu0 %v180
  %v11448 = vpop.f32.mrb[0].mxu0
  %v11449 = vadd.f32 0.0, %v11448
  %v11450 = vpop.f32.mrb[0].mxu0
  %11451 = vmatprep.mubr.f32.mxu0 %v556
  %11452 = vmatmul.mubr.f32.gmra.mrb[0].mxu0 %v182
  %v11453 = vpop.f32.mrb[0].mxu0
  %v11454 = vadd.f32 0.0, %v11453
  %v11455 = vpop.f32.mrb[0].mxu0
  %11456 = vmatprep.mubr.f32.mxu0 %v559
  %11457 = vmatmul.mubr.f32.gmra.mrb[0].mxu0 %v184
  %v11458 = vpop.f32.mrb[0].mxu0
  %v11459 = vadd.f32 0.0, %v11458
  %v11460 = vpop.f32.mrb[0].mxu0
  %11461 = vmatprep.mubr.f32.mxu0 %v562
  %11462 = vmatmul.mubr.f32.gmra.mrb[0].mxu0 %v186
  %v11463 = vpop.f32.mrb[0].mxu0
  %v11464 = vadd.f32 0.0, %v11463
  %v11465 = vpop.f32.mrb[0].mxu0
  %11466 = vmatprep.mubr.f32.mxu0 %v565
  %11467 = vmatmul.mubr.f32.gmra.mrb[0].mxu0 %v188
  %v11468 = vpop.f32.mrb[0].mxu0
  %v11469 = vadd.f32 0.0, %v11468
  %v11470 = vpop.f32.mrb[0].mxu0
  %11471 = vmatprep.mubr.f32.mxu0 %v568
  %11472 = vmatmul.mubr.f32.gmra.mrb[0].mxu0 %v190
  %v11473 = vpop.f32.mrb[0].mxu0
  %v11474 = vadd.f32 0.0, %v11473
  %v11475 = vpop.f32.mrb[0].mxu0
  %11476 = vmatprep.mubr.f32.mxu0 %v571
  %11477 = vmatmul.mubr.f32.gmra.mrb[0].mxu0 %v192
  %v11478 = vpop.f32.mrb[0].mxu0
  %v11479 = vadd.f32 0.0, %v11478
  %v11480 = vpop.f32.mrb[0].mxu0
  %11481 = vmatprep.mubr.f32.mxu0 %v574
  %11482 = vmatmul.mubr.f32.gmra.mrb[0].mxu0 %v194
  %v11483 = vpop.f32.mrb[0].mxu0
  %v11484 = vadd.f32 0.0, %v11483
  %v11485 = vpop.f32.mrb[0].mxu0
  %11486 = vmatprep.mubr.f32.mxu0 %v577
  %11487 = vmatmul.mubr.f32.gmra.mrb[0].mxu0 %v196
  %v11488 = vpop.f32.mrb[0].mxu0
  %v11489 = vadd.f32 0.0, %v11488
  %v11490 = vpop.f32.mrb[0].mxu0
  %11491 = vmatprep.mubr.f32.mxu0 %v580
  %11492 = vmatmul.mubr.f32.gmra.mrb[0].mxu0 %v198
  %v11493 = vpop.f32.mrb[0].mxu0
  %v11494 = vadd.f32 0.0, %v11493
  %v11495 = vpop.f32.mrb[0].mxu0
  %11496 = vmatprep.mubr.f32.mxu0 %v583
  %11497 = vmatmul.mubr.f32.gmra.mrb[0].mxu0 %v200
  %v11498 = vpop.f32.mrb[0].mxu0
  %v11499 = vadd.f32 0.0, %v11498
  %v11500 = vpop.f32.mrb[0].mxu0
  %11501 = vmatprep.mubr.f32.mxu0 %v586
  %11502 = vmatmul.mubr.f32.gmra.mrb[0].mxu0 %v202
  %v11503 = vpop.f32.mrb[0].mxu0
  %v11504 = vadd.f32 0.0, %v11503
  %v11505 = vpop.f32.mrb[0].mxu0
  %11506 = vmatprep.mubr.f32.mxu0 %v589
  %11507 = vmatmul.mubr.f32.gmra.mrb[0].mxu0 %v204
  %v11508 = vpop.f32.mrb[0].mxu0
  %v11509 = vadd.f32 0.0, %v11508
  %v11510 = vpop.f32.mrb[0].mxu0
  %11511 = vmatprep.mubr.f32.mxu0 %v592
  %11512 = vmatmul.mubr.f32.gmra.mrb[0].mxu0 %v206
  %v11513 = vpop.f32.mrb[0].mxu0
  %v11514 = vadd.f32 0.0, %v11513
  %v11515 = vpop.f32.mrb[0].mxu0
  %11516 = vmatprep.mubr.f32.mxu0 %v595
  %11517 = vmatmul.mubr.f32.gmra.mrb[0].mxu0 %v208
  %v11518 = vpop.f32.mrb[0].mxu0
  %v11519 = vadd.f32 0.0, %v11518
  %v11520 = vpop.f32.mrb[0].mxu0
  %11521 = vmatprep.mubr.f32.mxu0 %v598
  %11522 = vmatmul.mubr.f32.gmra.mrb[0].mxu0 %v210
  %v11523 = vpop.f32.mrb[0].mxu0
  %v11524 = vadd.f32 0.0, %v11523
  %v11525 = vpop.f32.mrb[0].mxu0
  %11526 = vmatprep.mubr.f32.mxu0 %v601
  %11527 = vmatmul.mubr.f32.gmra.mrb[0].mxu0 %v212
  %v11528 = vpop.f32.mrb[0].mxu0
  %v11529 = vadd.f32 0.0, %v11528
  %v11530 = vpop.f32.mrb[0].mxu0
  %11531 = vmatprep.mubr.f32.mxu0 %v604
  %11532 = vmatmul.mubr.f32.gmra.mrb[0].mxu0 %v214
  %v11533 = vpop.f32.mrb[0].mxu0
  %v11534 = vadd.f32 0.0, %v11533
  %v11535 = vpop.f32.mrb[0].mxu0
  %11536 = vmatprep.mubr.f32.mxu0 %v607
  %11537 = vmatmul.mubr.f32.gmra.mrb[0].mxu0 %v216
  %v11538 = vpop.f32.mrb[0].mxu0
  %v11539 = vadd.f32 0.0, %v11538
  %v11540 = vpop.f32.mrb[0].mxu0
  %11541 = vmatprep.mubr.f32.mxu0 %v610
  %11542 = vmatmul.mubr.f32.gmra.mrb[0].mxu0 %v218
  %v11543 = vpop.f32.mrb[0].mxu0
  %v11544 = vadd.f32 0.0, %v11543
  %v11545 = vpop.f32.mrb[0].mxu0
  %11546 = vmatprep.mubr.f32.mxu0 %v613
  %11547 = vmatmul.mubr.f32.gmra.mrb[0].mxu0 %v220
  %v11548 = vpop.f32.mrb[0].mxu0
  %v11549 = vadd.f32 0.0, %v11548
  %v11550 = vpop.f32.mrb[0].mxu0
  %11551 = vmatprep.mubr.f32.mxu0 %v616
  %11552 = vmatmul.mubr.f32.gmra.mrb[0].mxu0 %v222
  %v11553 = vpop.f32.mrb[0].mxu0
  %v11554 = vadd.f32 0.0, %v11553
  %v11555 = vpop.f32.mrb[0].mxu0
  %11556 = vmatprep.mubr.f32.mxu0 %v619
  %11557 = vmatmul.mubr.f32.gmra.mrb[0].mxu0 %v224
  %v11558 = vpop.f32.mrb[0].mxu0
  %v11559 = vadd.f32 0.0, %v11558
  %v11560 = vpop.f32.mrb[0].mxu0
  %11561 = vmatprep.mubr.f32.mxu0 %v622
  %11562 = vmatmul.mubr.f32.gmra.mrb[0].mxu0 %v226
  %v11563 = vpop.f32.mrb[0].mxu0
  %v11564 = vadd.f32 0.0, %v11563
  %v11565 = vpop.f32.mrb[0].mxu0
  %11566 = vmatprep.mubr.f32.mxu0 %v625
  %11567 = vmatmul.mubr.f32.gmra.mrb[0].mxu0 %v228
  %v11568 = vpop.f32.mrb[0].mxu0
  %v11569 = vadd.f32 0.0, %v11568
  %v11570 = vpop.f32.mrb[0].mxu0
  %11571 = vmatprep.mubr.f32.mxu0 %v628
  %11572 = vmatmul.mubr.f32.gmra.mrb[0].mxu0 %v230
  %v11573 = vpop.f32.mrb[0].mxu0
  %v11574 = vadd.f32 0.0, %v11573
  %v11575 = vpop.f32.mrb[0].mxu0
  %11576 = vmatprep.mubr.f32.mxu0 %v631
  %11577 = vmatmul.mubr.f32.gmra.mrb[0].mxu0 %v232
  %v11578 = vpop.f32.mrb[0].mxu0
  %v11579 = vadd.f32 0.0, %v11578
  %v11580 = vpop.f32.mrb[0].mxu0
  %11581 = vmatprep.mubr.f32.mxu0 %v634
  %11582 = vmatmul.mubr.f32.gmra.mrb[0].mxu0 %v234
  %v11583 = vpop.f32.mrb[0].mxu0
  %v11584 = vadd.f32 0.0, %v11583
  %v11585 = vpop.f32.mrb[0].mxu0
  %11586 = vmatprep.mubr.f32.mxu0 %v637
  %11587 = vmatmul.mubr.f32.gmra.mrb[0].mxu0 %v236
  %v11588 = vpop.f32.mrb[0].mxu0
  %v11589 = vadd.f32 0.0, %v11588
  %v11590 = vpop.f32.mrb[0].mxu0
  %11591 = vmatprep.mubr.f32.mxu0 %v640
  %11592 = vmatmul.mubr.f32.gmra.mrb[0].mxu0 %v238
  %v11593 = vpop.f32.mrb[0].mxu0
  %v11594 = vadd.f32 0.0, %v11593
  %v11595 = vpop.f32.mrb[0].mxu0
  %11596 = vmatprep.mubr.f32.mxu0 %v643
  %11597 = vmatmul.mubr.f32.gmra.mrb[0].mxu0 %v240
  %v11598 = vpop.f32.mrb[0].mxu0
  %v11599 = vadd.f32 0.0, %v11598
  %v11600 = vpop.f32.mrb[0].mxu0
  %11601 = vmatprep.mubr.f32.mxu0 %v646
  %11602 = vmatmul.mubr.f32.gmra.mrb[0].mxu0 %v242
  %v11603 = vpop.f32.mrb[0].mxu0
  %v11604 = vadd.f32 0.0, %v11603
  %v11605 = vpop.f32.mrb[0].mxu0
  %11606 = vmatprep.mubr.f32.mxu0 %v649
  %11607 = vmatmul.mubr.f32.gmra.mrb[0].mxu0 %v244
  %v11608 = vpop.f32.mrb[0].mxu0
  %v11609 = vadd.f32 0.0, %v11608
  %v11610 = vpop.f32.mrb[0].mxu0
  %11611 = vmatprep.mubr.f32.mxu0 %v652
  %11612 = vmatmul.mubr.f32.gmra.mrb[0].mxu0 %v246
  %v11613 = vpop.f32.mrb[0].mxu0
  %v11614 = vadd.f32 0.0, %v11613
  %v11615 = vpop.f32.mrb[0].mxu0
  %11616 = vmatprep.mubr.f32.mxu0 %v655
  %11617 = vmatmul.mubr.f32.gmra.mrb[0].mxu0 %v248
  %v11618 = vpop.f32.mrb[0].mxu0
  %v11619 = vadd.f32 0.0, %v11618
  %v11620 = vpop.f32.mrb[0].mxu0
  %11621 = vmatprep.mubr.f32.mxu0 %v658
  %11622 = vmatmul.mubr.f32.gmra.mrb[0].mxu0 %v250
  %v11623 = vpop.f32.mrb[0].mxu0
  %v11624 = vadd.f32 0.0, %v11623
  %v11625 = vpop.f32.mrb[0].mxu0
  %11626 = vmatprep.mubr.f32.mxu0 %v661
  %11627 = vmatmul.mubr.f32.gmra.mrb[0].mxu0 %v252
  %v11628 = vpop.f32.mrb[0].mxu0
  %v11629 = vadd.f32 0.0, %v11628
  %v11630 = vpop.f32.mrb[0].mxu0
  %11631 = vmatprep.mubr.f32.mxu0 %v664
  %11632 = vmatmul.mubr.f32.gmra.mrb[0].mxu0 %v254
  %v11633 = vpop.f32.mrb[0].mxu0
  %v11634 = vadd.f32 0.0, %v11633
  %v11635 = vpop.f32.mrb[0].mxu0
  %11636 = vmatprep.mubr.f32.mxu0 %v667
  %11637 = vmatmul.mubr.f32.gmra.mrb[0].mxu0 %v256
  %v11638 = vpop.f32.mrb[0].mxu0
  %v11639 = vadd.f32 0.0, %v11638
  %v11640 = vpop.f32.mrb[0].mxu0
  %11641 = vmatprep.mubr.f32.mxu0 %v670
  %11642 = vmatmul.mubr.f32.gmra.mrb[0].mxu0 %v258
  %v11643 = vpop.f32.mrb[0].mxu0
  %v11644 = vadd.f32 0.0, %v11643
  %v11645 = vpop.f32.mrb[0].mxu0
  %11646 = vdwg.mxu0
  %v11647 = vmax.f32 %v11049, %v11199
  %v11648 = vmax.f32 %v11054, %v11204
  %v11649 = vmax.f32 %v11059, %v11209
  %v11650 = vmax.f32 %v11064, %v11214
  %v11651 = vmax.f32 %v11069, %v11219
  %v11652 = vmax.f32 %v11074, %v11224
  %v11653 = vmax.f32 %v11079, %v11229
  %v11654 = vmax.f32 %v11084, %v11234
  %v11655 = vmax.f32 %v11089, %v11239
  %v11656 = vmax.f32 %v11094, %v11244
  %v11657 = vmax.f32 %v11099, %v11249
  %v11658 = vmax.f32 %v11104, %v11254
  %v11659 = vmax.f32 %v11109, %v11259
  %v11660 = vmax.f32 %v11114, %v11264
  %v11661 = vmax.f32 %v11119, %v11269
  %v11662 = vmax.f32 %v11124, %v11274
  %v11663 = vmax.f32 %v11129, %v11279
  %v11664 = vmax.f32 %v11134, %v11284
  %v11665 = vmax.f32 %v11139, %v11289
  %v11666 = vmax.f32 %v11144, %v11294
  %v11667 = vmax.f32 %v11149, %v11299
  %v11668 = vmax.f32 %v11154, %v11304
  %v11669 = vmax.f32 %v11159, %v11309
  %v11670 = vmax.f32 %v11164, %v11314
  %v11671 = vmax.f32 %v11169, %v11319
  %v11672 = vmax.f32 %v11174, %v11324
  %v11673 = vmax.f32 %v11179, %v11329
  %v11674 = vmax.f32 %v11184, %v11334
  %v11675 = vmax.f32 %v11189, %v11339
  %v11676 = vmax.f32 %v11194, %v11344
  %v11677 = vmax.f32 %v11349, %v11499
  %v11678 = vmax.f32 %v11354, %v11504
  %v11679 = vmax.f32 %v11359, %v11509
  %v11680 = vmax.f32 %v11364, %v11514
  %v11681 = vmax.f32 %v11369, %v11519
  %v11682 = vmax.f32 %v11374, %v11524
  %v11683 = vmax.f32 %v11379, %v11529
  %v11684 = vmax.f32 %v11384, %v11534
  %v11685 = vmax.f32 %v11389, %v11539
  %v11686 = vmax.f32 %v11394, %v11544
  %v11687 = vmax.f32 %v11399, %v11549
  %v11688 = vmax.f32 %v11404, %v11554
  %v11689 = vmax.f32 %v11409, %v11559
  %v11690 = vmax.f32 %v11414, %v11564
  %v11691 = vmax.f32 %v11419, %v11569
  %v11692 = vmax.f32 %v11424, %v11574
  %v11693 = vmax.f32 %v11429, %v11579
  %v11694 = vmax.f32 %v11434, %v11584
  %v11695 = vmax.f32 %v11439, %v11589
  %v11696 = vmax.f32 %v11444, %v11594
  %v11697 = vmax.f32 %v11449, %v11599
  %v11698 = vmax.f32 %v11454, %v11604
  %v11699 = vmax.f32 %v11459, %v11609
  %v11700 = vmax.f32 %v11464, %v11614
  %v11701 = vmax.f32 %v11469, %v11619
  %v11702 = vmax.f32 %v11474, %v11624
  %v11703 = vmax.f32 %v11479, %v11629
  %v11704 = vmax.f32 %v11484, %v11634
  %v11705 = vmax.f32 %v11489, %v11639
  %v11706 = vmax.f32 %v11494, %v11644
  %v11707 = vmax.f32 %v11647, %v11677
  %v11708 = vmax.f32 %v11648, %v11678
  %v11709 = vmax.f32 %v11649, %v11679
  %v11710 = vmax.f32 %v11650, %v11680
  %v11711 = vmax.f32 %v11651, %v11681
  %v11712 = vmax.f32 %v11652, %v11682
  %v11713 = vmax.f32 %v11653, %v11683
  %v11714 = vmax.f32 %v11654, %v11684
  %v11715 = vmax.f32 %v11655, %v11685
  %v11716 = vmax.f32 %v11656, %v11686
  %v11717 = vmax.f32 %v11657, %v11687
  %v11718 = vmax.f32 %v11658, %v11688
  %v11719 = vmax.f32 %v11659, %v11689
  %v11720 = vmax.f32 %v11660, %v11690
  %v11721 = vmax.f32 %v11661, %v11691
  %v11722 = vmax.f32 %v11662, %v11692
  %v11723 = vmax.f32 %v11663, %v11693
  %v11724 = vmax.f32 %v11664, %v11694
  %v11725 = vmax.f32 %v11665, %v11695
  %v11726 = vmax.f32 %v11666, %v11696
  %v11727 = vmax.f32 %v11667, %v11697
  %v11728 = vmax.f32 %v11668, %v11698
  %v11729 = vmax.f32 %v11669, %v11699
  %v11730 = vmax.f32 %v11670, %v11700
  %v11731 = vmax.f32 %v11671, %v11701
  %v11732 = vmax.f32 %v11672, %v11702
  %v11733 = vmax.f32 %v11673, %v11703
  %v11734 = vmax.f32 %v11674, %v11704
  %v11735 = vmax.f32 %v11675, %v11705
  %v11736 = vmax.f32 %v11676, %v11706
  %v11737 = vadd.f32 %v11707, %v1430
  %v11738 = vadd.f32 %v11708, %v1435
  %v11739 = vadd.f32 %v11709, %v1440
  %v11740 = vadd.f32 %v11710, %v1445
  %v11741 = vadd.f32 %v11711, %v1450
  %v11742 = vadd.f32 %v11712, %v1455
  %v11743 = vadd.f32 %v11713, %v1460
  %v11744 = vadd.f32 %v11714, %v1465
  %v11745 = vadd.f32 %v11715, %v1470
  %v11746 = vadd.f32 %v11716, %v1475
  %v11747 = vadd.f32 %v11717, %v1480
  %v11748 = vadd.f32 %v11718, %v1485
  %v11749 = vadd.f32 %v11719, %v1490
  %v11750 = vadd.f32 %v11720, %v1495
  %v11751 = vadd.f32 %v11721, %v1500
  %v11752 = vadd.f32 %v11722, %v1505
  %v11753 = vadd.f32 %v11723, %v1510
  %v11754 = vadd.f32 %v11724, %v1515
  %v11755 = vadd.f32 %v11725, %v1520
  %v11756 = vadd.f32 %v11726, %v1525
  %v11757 = vadd.f32 %v11727, %v1530
  %v11758 = vadd.f32 %v11728, %v1535
  %v11759 = vadd.f32 %v11729, %v1540
  %v11760 = vadd.f32 %v11730, %v1545
  %v11761 = vadd.f32 %v11731, %v1550
  %v11762 = vadd.f32 %v11732, %v1555
  %v11763 = vadd.f32 %v11733, %v1560
  %v11764 = vadd.f32 %v11734, %v1565
  %v11765 = vadd.f32 %v11735, %v1570
  %v11766 = vadd.f32 %v11736, %v1575
  %v11767 = vmax.f32 %v11737, 0.0
  %v11768 = vmax.f32 %v11738, 0.0
  %v11769 = vmax.f32 %v11739, 0.0
  %v11770 = vmax.f32 %v11740, 0.0
  %v11771 = vmax.f32 %v11741, 0.0
  %v11772 = vmax.f32 %v11742, 0.0
  %v11773 = vmax.f32 %v11743, 0.0
  %v11774 = vmax.f32 %v11744, 0.0
  %v11775 = vmax.f32 %v11745, 0.0
  %v11776 = vmax.f32 %v11746, 0.0
  %v11777 = vmax.f32 %v11747, 0.0
  %v11778 = vmax.f32 %v11748, 0.0
  %v11779 = vmax.f32 %v11749, 0.0
  %v11780 = vmax.f32 %v11750, 0.0
  %v11781 = vmax.f32 %v11751, 0.0
  %v11782 = vmax.f32 %v11752, 0.0
  %v11783 = vmax.f32 %v11753, 0.0
  %v11784 = vmax.f32 %v11754, 0.0
  %v11785 = vmax.f32 %v11755, 0.0
  %v11786 = vmax.f32 %v11756, 0.0
  %v11787 = vmax.f32 %v11757, 0.0
  %v11788 = vmax.f32 %v11758, 0.0
  %v11789 = vmax.f32 %v11759, 0.0
  %v11790 = vmax.f32 %v11760, 0.0
  %v11791 = vmax.f32 %v11761, 0.0
  %v11792 = vmax.f32 %v11762, 0.0
  %v11793 = vmax.f32 %v11763, 0.0
  %v11794 = vmax.f32 %v11764, 0.0
  %v11795 = vmax.f32 %v11765, 0.0
  %v11796 = vmax.f32 %v11766, 0.0
  %s11797 = scalar_lea.vmem %s3, 352
  %v11798 = vld [vmem:[%s11797] sm:$0xff]
  %v11799 = vld [vmem:[%s11797 + $0x8] sm:$0xff]
  %v11800 = vld [vmem:[%s11797 + $0x10] sm:$0x3]
  %v11801 = vld [vmem:[%s11797 + $0x18] sm:$0x3]
  %v11803 = vsel %vm2482, %v11799, 0
  %v11806 = vsel %vm2482, %v11801, 0
  %11808 = vmatprep.subr.mxu0 0.0
  %11809 = vmatpush1.msra.mxu0 %v11767
  %11810 = vmatprep.subr.mxu0 0.0
  %11811 = vmatpush1.msra.mxu0 %v11768
  %11812 = vmatprep.subr.mxu0 0.0
  %11813 = vmatpush1.msra.mxu0 %v11769
  %11814 = vmatprep.subr.mxu0 0.0
  %11815 = vmatpush1.msra.mxu0 %v11770
  %11816 = vmatprep.subr.mxu0 0.0
  %11817 = vmatpush1.msra.mxu0 %v11771
  %11818 = vmatprep.subr.mxu0 0.0
  %11819 = vmatpush1.msra.mxu0 %v11772
  %11820 = vmatprep.subr.mxu0 0.0
  %11821 = vmatpush1.msra.mxu0 %v11773
  %11822 = vmatprep.subr.mxu0 0.0
  %11823 = vmatpush1.msra.mxu0 %v11774
  %11824 = vmatprep.subr.mxu0 0.0
  %11825 = vmatpush1.msra.mxu0 %v11775
  %11826 = vmatprep.subr.mxu0 0.0
  %11827 = vmatpush1.msra.mxu0 %v11776
  %11828 = vmatprep.subr.mxu0 0.0
  %11829 = vmatpush1.msra.mxu0 %v11777
  %11830 = vmatprep.subr.mxu0 0.0
  %11831 = vmatpush1.msra.mxu0 %v11778
  %11832 = vmatprep.subr.mxu0 0.0
  %11833 = vmatpush1.msra.mxu0 %v11779
  %11834 = vmatprep.subr.mxu0 0.0
  %11835 = vmatpush1.msra.mxu0 %v11780
  %11836 = vmatprep.subr.mxu0 0.0
  %11837 = vmatpush1.msra.mxu0 %v11781
  %11838 = vmatprep.subr.mxu0 0.0
  %11839 = vmatpush1.msra.mxu0 %v11782
  %11840 = vmatprep.subr.mxu0 0.0
  %11841 = vmatpush1.msra.mxu0 %v11783
  %11842 = vmatprep.subr.mxu0 0.0
  %11843 = vmatpush1.msra.mxu0 %v11784
  %11844 = vmatprep.subr.mxu0 0.0
  %11845 = vmatpush1.msra.mxu0 %v11785
  %11846 = vmatprep.subr.mxu0 0.0
  %11847 = vmatpush1.msra.mxu0 %v11786
  %11848 = vmatprep.subr.mxu0 0.0
  %11849 = vmatpush1.msra.mxu0 %v11787
  %11850 = vmatprep.subr.mxu0 0.0
  %11851 = vmatpush1.msra.mxu0 %v11788
  %11852 = vmatprep.subr.mxu0 0.0
  %11853 = vmatpush1.msra.mxu0 %v11789
  %11854 = vmatprep.subr.mxu0 0.0
  %11855 = vmatpush1.msra.mxu0 %v11790
  %11856 = vmatprep.subr.mxu0 0.0
  %11857 = vmatpush1.msra.mxu0 %v11791
  %11858 = vmatprep.subr.mxu0 0.0
  %11859 = vmatpush1.msra.mxu0 %v11792
  %11860 = vmatprep.subr.mxu0 0.0
  %11861 = vmatpush1.msra.mxu0 %v11793
  %11862 = vmatprep.subr.mxu0 0.0
  %11863 = vmatpush1.msra.mxu0 %v11794
  %11864 = vmatprep.subr.mxu0 0.0
  %11865 = vmatpush1.msra.mxu0 %v11795
  %11866 = vmatprep.subr.mxu0 0.0
  %11867 = vmatpush1.msra.mxu0 %v11796
  %11868 = vmatprep.subr.mxu0 0.0
  %11869 = vmatpush1.msra.mxu0 0.0
  %11870 = vmatprep.subr.mxu0 0.0
  %11871 = vmatpush1.msra.mxu0 0.0
  %11872 = vmatprep.mubr.f32.mxu0 %v11803
  %11873 = vmatmul.mubr.f32.gmra.mrb[0].mxu0 %v11798
  %v11874 = vpop.f32.mrb[0].mxu0
  %v11875 = vadd.f32 0.0, %v11874
  %v11876 = vpop.f32.mrb[0].mxu0
  %11877 = vmatprep.mubr.f32.mxu0 %v11806
  %11878 = vmatmul.mubr.f32.gmra.mrb[0].mxu0 %v11800
  %v11879 = vpop.f32.mrb[0].mxu0
  %v11880 = vadd.f32 0.0, %v11879
  %v11881 = vpop.f32.mrb[0].mxu0
  %11882 = vdwg.mxu0
  %v11883 = vadd.f32 %v10959, %v11875
  %v11884 = vadd.f32 %v10960, %v11880
  %v11885 = vld [vmem:[%s4] sm:$0xff]
  %v11886 = vld [vmem:[%s4 + $0x8] sm:$0x3]
  %11888 = vset.pattern.permute.xlu0 0
  %11889 = vperm.xlu0 %11888, %v11885
  %v11890 = vpop.permute.xlu0 %11889
  %11893 = vset.pattern.permute.xlu0 0
  %11894 = vperm.xlu0 %11893, %v11886
  %v11895 = vpop.permute.xlu0 %11894
  %v11897 = vadd.f32 %v11883, %v11890
  %v11898 = vadd.f32 %v11884, %v11895
  %11899 = vst [vmem:[%s5] sm:$0xff] %v11897
  %11900 = vst [vmem:[%s5 + $0x8] sm:$0x3] %v11898
  // Predicated region
  $region22: #{cnn_forward.1} parent=0 // pred_check
    _
  $region23: #{cnn_forward.1} parent=0 // pred_check_branch
    %11902 = sbr.rel (0) target = $region25
  $region24: #{cnn_forward.1} parent=0 // pred_region
    _
  $region25: #{cnn_forward.1} parent=0 // pred_fallthru
    _
  // Predicated region
  $region26: #{cnn_forward.1} parent=0 // pred_check
    _
  $region27: #{cnn_forward.1} parent=0 // pred_check_branch
    %11904 = sbr.rel (0) target = $region29
  $region28: #{cnn_forward.1} parent=0 // pred_region
    _
  $region29: #{cnn_forward.1} parent=0 // pred_fallthru
    _

</llo_original>
